<compile_context>
chip_gen: v5e
topology: v5e:2x2
jax: 0.10.0
libtpu: 0.0.40
codegen_flags: <defaults>
</compile_context>

<pallas_src>
import numpy as np
import jax
import jax.numpy as jnp
from jax import lax
from jax.experimental import pallas as pl
from jax.experimental.pallas import tpu as pltpu

L = 400            # conv sequence length (implied by fc in-features 6400 = (400//4)*64)
CONV1_OUT = 32
CONV2_OUT = 64
POOL = 4
T = L // POOL      # 100 LSTM steps
HID = 64
FC1_IN = T * HID   # 6400 == 12800 // 2
FC1_OUT = 1024
NUM_CLASSES = 41

CHUNK = 10         # LSTM steps per streamed Wfc1 chunk (10 x 64 x 1024 bf16 = 1.25 MiB DMA)
assert T % CHUNK == 0

_VMEM = pl.BlockSpec(memory_space=pltpu.MemorySpace.VMEM)


# ----------------------------- Pallas kernels -----------------------------

def conv_xproj_kernel(xin_ref, w1_ref, b1_ref, w2cat_ref, b2_ref, wih_ref, blstm_ref,
                      xproj_ref, cat_sc, y3_sc):
    # xin_ref  : (T+2, B*4) phase-major input with one halo row each side:
    #            xin[1+t, b*4+m] = x[b, 4t+m]; rows 0 and T+1 are zero (conv1 padding).
    # w1_ref   : (3, 32) conv1 weight, tap-major;  b1_ref: (1, 32)
    # w2cat_ref: (96, 64) conv2 weight, rows = [tap0 cin | tap1 cin | tap2 cin]; b2_ref: (1, 64)
    # wih_ref  : (64, 256) LSTM W_ih^T (g-gate cols pre-scaled by 2); blstm_ref: (1, 256)
    # xproj_ref: (T, B, 256) time-major LSTM gate pre-activations from the input path
    # cat_sc   : (B*4*T, 96) conv2 im2col scratch (no memset needed: fully overwritten)
    # y3_sc    : (B*T, 64) pooled+tanh activations
    Tn = xproj_ref.shape[0]
    Bn = xproj_ref.shape[1]

    w1t0 = w1_ref[0:1, :]
    w1t1 = w1_ref[1:2, :]
    w1t2 = w1_ref[2:3, :]
    b1v = b1_ref[...]
    zrow = jnp.zeros((1, CONV1_OUT), jnp.float32)

    def xcol(b, mp):
        # (Tn, 1) column of x[b, 4*t + mp] for t = 0..Tn-1   (mp in -1..4 via halo rows)
        r0 = 1 + (mp // POOL)
        lane = b * POOL + (mp % POOL)
        return xin_ref[pl.ds(r0, Tn), lane:lane + 1]

    for b in range(Bn):
        # ---- Conv1d(1->32, k=3, pad=1) + ReLU, phase-major: y1p[m][t] = y1[4t + m] ----
        y1p = []
        for m in range(POOL):
            a = (xcol(b, m - 1) * w1t0 + xcol(b, m) * w1t1 + xcol(b, m + 1) * w1t2 + b1v)
            y1p.append(jnp.maximum(a, 0.0))                        # (Tn, 32)

        # ---- assemble conv2 im2col: cat_sc[(b*4+j)*Tn + t, 32k:32k+32] = y1[4t+j+k-1] ----
        for j in range(POOL):
            r0 = (b * POOL + j) * Tn
            for k in range(3):
                mprime = j + k - 1
                c0, c1 = k * CONV1_OUT, (k + 1) * CONV1_OUT
                if mprime == -1:         # y1[4t-1]; zero at t=0 (conv2 zero padding of y1)
                    cat_sc[r0:r0 + 1, c0:c1] = zrow
                    cat_sc[r0 + 1:r0 + Tn, c0:c1] = y1p[3][:Tn - 1, :]
                elif mprime == POOL:     # y1[4t+4]; zero at t=Tn-1
                    cat_sc[r0:r0 + Tn - 1, c0:c1] = y1p[0][1:, :]
                    cat_sc[r0 + Tn - 1:r0 + Tn, c0:c1] = zrow
                else:
                    cat_sc[r0:r0 + Tn, c0:c1] = y1p[mprime]

    # ---- Conv1d(32->64, k=3, pad=1): one (B*4*T, 96) @ (96, 64) MXU contraction ----
    y2 = (jnp.dot(cat_sc[...], w2cat_ref[...], preferred_element_type=jnp.float32)
          + b2_ref[...])                                           # (B*4*Tn, 64)

    # ---- MaxPool1d(4) over the 4 phase slabs + Tanh (Dropout = identity, eval mode) ----
    for b in range(Bn):
        o = b * POOL * Tn
        m01 = jnp.maximum(y2[o + 0 * Tn:o + 1 * Tn, :], y2[o + 1 * Tn:o + 2 * Tn, :])
        m23 = jnp.maximum(y2[o + 2 * Tn:o + 3 * Tn, :], y2[o + 3 * Tn:o + 4 * Tn, :])
        y3_sc[b * Tn:(b + 1) * Tn, :] = jnp.tanh(jnp.maximum(m01, m23))

    # ---- hoisted LSTM input projection: one (B*T, 64) @ (64, 256) matmul ----
    proj = (jnp.dot(y3_sc[...], wih_ref[...], preferred_element_type=jnp.float32)
            + blstm_ref[...])                                      # (B*Tn, 256)
    for b in range(Bn):
        xproj_ref[:, b, :] = proj[b * Tn:(b + 1) * Tn, :]          # time-major output


def lstm_fc_kernel(xproj_ref, whh_ref, wfc1_hbm, bfc1_ref, wfc2_ref, bfc2_ref,
                   out_ref, wbuf, dma_sem, h_sc, c_sc, acc_sc):
    # xproj_ref: (T, B, 4H) f32  precomputed x_t @ W_ih + b (time-major, g cols x2)
    # whh_ref  : (H, 4H)    f32  (g cols x2)
    # wfc1_hbm : (T, H, 1024) bf16 in HBM (memory_space=pl.ANY) -- streamed in chunks
    # bfc1_ref : (1, 1024); wfc2_ref: (1024, 41); bfc2_ref: (1, 41)
    # out_ref  : (B, 41)
    # wbuf     : VMEM (2, CHUNK, H, 1024) bf16 double buffer; dma_sem: DMA((2,))
    # h_sc,c_sc: (B, H) f32; acc_sc: (B, 1024) f32 fused-FC1 accumulator
    Tn = xproj_ref.shape[0]
    H = whh_ref.shape[0]
    n_chunks = Tn // CHUNK
    whh = whh_ref[...]

    h_sc[...] = jnp.zeros_like(h_sc)
    c_sc[...] = jnp.zeros_like(c_sc)
    acc_sc[...] = jnp.zeros_like(acc_sc)

    def wfc1_copy(c, slot):
        return pltpu.make_async_copy(wfc1_hbm.at[pl.ds(c * CHUNK, CHUNK)],
                                     wbuf.at[slot], dma_sem.at[slot])

    # Prime chunk 0 (the only DMA whose latency is exposed).
    wfc1_copy(0, 0).start()

    def chunk_body(c, carry):
        slot = lax.rem(c, 2)

        # Prefetch the next chunk first; it lands while this chunk's CHUNK steps run.
        @pl.when(c + 1 < n_chunks)
        def _():
            wfc1_copy(c + 1, 1 - slot).start()

        # One wait per chunk (matching descriptor -> matching byte count).
        wfc1_copy(c, slot).wait()

        def step_body(i, carry2):
            t = c * CHUNK + i
            # Recurrence: only h @ W_hh remains in the loop (x-projection hoisted).
            gates = xproj_ref[t] + jnp.dot(h_sc[...], whh,
                                           preferred_element_type=jnp.float32)  # (B, 4H)
            # g-gate columns pre-scaled by 2 => one full-width sigmoid covers all gates:
            # tanh(z) = 2*sigmoid(2z) - 1.
            s = jax.nn.sigmoid(gates)
            i_g = s[:, 0 * H:1 * H]           # PyTorch gate order i, f, g, o
            f_g = s[:, 1 * H:2 * H]
            g_g = 2.0 * s[:, 2 * H:3 * H] - 1.0
            o_g = s[:, 3 * H:4 * H]
            c_new = f_g * c_sc[...] + i_g * g_g
            h_new = o_g * jnp.tanh(c_new)
            c_sc[...] = c_new
            h_sc[...] = h_new
            # Fused FC1: acc += h_t @ Wfc1[t]  (bf16 weights, f32 accumulation)
            acc_sc[...] += jnp.dot(h_new.astype(wbuf.dtype), wbuf[slot, i],
                                   preferred_element_type=jnp.float32)
            return carry2

        lax.fori_loop(0, CHUNK, step_body, 0, unroll=True)
        return carry

    lax.fori_loop(0, n_chunks, chunk_body, 0)

    # Epilogue: Tanh + Linear(1024 -> 41); hidden states / (B,6400) flatten never hit HBM.
    z1 = jnp.tanh(acc_sc[...] + bfc1_ref[...])
    out_ref[...] = (jnp.dot(z1, wfc2_ref[...], preferred_element_type=jnp.float32)
                    + bfc2_ref[...])


# ----------------------------- wrappers -----------------------------

def conv_xproj_forward(xin, p, batch):
    return pl.pallas_call(
        conv_xproj_kernel,
        out_shape=jax.ShapeDtypeStruct((T, batch, 4 * HID), jnp.float32),
        in_specs=[_VMEM] * 7,
        out_specs=_VMEM,
        scratch_shapes=[
            pltpu.VMEM((batch * POOL * T, 3 * CONV1_OUT), jnp.float32),  # conv2 im2col
            pltpu.VMEM((batch * T, CONV2_OUT), jnp.float32),             # pooled+tanh acts
        ],
    )(xin, p["w1m"], p["b1"], p["w2cat"], p["b2"], p["wih_t_g2"], p["b_lstm_g2"])


def lstm_fc_forward(xproj_tm, p):
    T_, B_, _ = xproj_tm.shape
    ce = pl.CostEstimate(
        flops=(2 * B_ * T_ * HID * 4 * HID          # h @ W_hh
               + 2 * B_ * T_ * HID * FC1_OUT        # fused FC1
               + 2 * B_ * FC1_OUT * NUM_CLASSES),   # FC2
        transcendentals=B_ * T_ * (4 * HID + HID) + B_ * FC1_OUT,
        bytes_accessed=(p["wfc1_r"].size * 2 + xproj_tm.size * 4
                        + p["wfc2_t"].size * 4 + p["whh_t_g2"].size * 4),
    )
    return pl.pallas_call(
        lstm_fc_kernel,
        out_shape=jax.ShapeDtypeStruct((B_, NUM_CLASSES), jnp.float32),
        in_specs=[_VMEM, _VMEM, pl.BlockSpec(memory_space=pl.ANY),
                  _VMEM, _VMEM, _VMEM],
        out_specs=_VMEM,
        scratch_shapes=[
            pltpu.VMEM((2, CHUNK, HID, FC1_OUT), jnp.bfloat16),   # streamed Wfc1 buffers
            pltpu.SemaphoreType.DMA((2,)),
            pltpu.VMEM((B_, HID), jnp.float32),                   # h
            pltpu.VMEM((B_, HID), jnp.float32),                   # c
            pltpu.VMEM((B_, FC1_OUT), jnp.float32),               # fused FC1 accumulator
        ],
        cost_estimate=ce,
    )(xproj_tm, p["whh_t_g2"], p["wfc1_r"], p["bfc1"], p["wfc2_t"], p["bfc2"])


def cnn_lstm_forward(x, p):
    B = x.shape[0]
    # tiny glue (3 KB): phase-major, time-on-sublanes layout with a one-row halo each side:
    #   xin[1 + t, b*4 + m] = x[b, 0, 4t + m];  rows 0 and T+1 are zero (conv1 padding).
    xr = x[:, 0, :].reshape(B, T, POOL)
    xin = jnp.pad(jnp.transpose(xr, (1, 0, 2)).reshape(T, B * POOL), ((1, 1), (0, 0)))

    xproj = conv_xproj_forward(xin, p, B)     # (T, B, 4H), already time-major
    return lstm_fc_forward(xproj, p)          # (B, 41)


# ----------------------------- params & reference -----------------------------

def init_params(key):
    ks = jax.random.split(key, 12)

    def u(k, shape, fan_in):
        bound = 1.0 / np.sqrt(fan_in)
        return jax.random.uniform(k, shape, jnp.float32, -bound, bound)

    w1 = u(ks[0], (CONV1_OUT, 1, 3), 3)                 # PyTorch Conv1d weight (out, in, k)
    b1 = u(ks[1], (CONV1_OUT,), 3)
    w2 = u(ks[2], (CONV2_OUT, CONV1_OUT, 3), 3 * CONV1_OUT)
    b2 = u(ks[3], (CONV2_OUT,), 3 * CONV1_OUT)
    wih = u(ks[4], (4 * HID, CONV2_OUT), HID)           # PyTorch LSTM weight_ih_l0
    whh = u(ks[5], (4 * HID, HID), HID)
    bih = u(ks[6], (4 * HID,), HID)
    bhh = u(ks[7], (4 * HID,), HID)
    wfc1 = u(ks[8], (FC1_OUT, FC1_IN), FC1_IN)
    bfc1 = u(ks[9], (FC1_OUT,), FC1_IN)
    wfc2 = u(ks[10], (NUM_CLASSES, FC1_OUT), FC1_OUT)
    bfc2 = u(ks[11], (NUM_CLASSES,), FC1_OUT)

    # g-gate columns pre-scaled by 2 so the kernel uses one full-width sigmoid
    # (tanh(z) = 2*sigmoid(2z) - 1).
    gscale = jnp.ones((1, 4 * HID), jnp.float32).at[:, 2 * HID:3 * HID].set(2.0)
    b_lstm = (bih + bhh).reshape(1, 4 * HID)

    return dict(
        # --- kernel-layout params ---
        w1m=jnp.transpose(w1[:, 0, :], (1, 0)),                      # (3, 32) tap-major
        b1=b1.reshape(1, CONV1_OUT),
        w2cat=jnp.transpose(w2, (2, 1, 0)).reshape(3 * CONV1_OUT, CONV2_OUT),  # (96, 64)
        b2=b2.reshape(1, CONV2_OUT),
        wih_t_g2=wih.T * gscale,                                     # (64, 256)
        whh_t_g2=whh.T * gscale,                                     # (64, 256)
        b_lstm_g2=b_lstm * gscale,                                   # (1, 256)
        # FC1 weight per LSTM timestep, bf16, streamed from HBM inside the LSTM kernel.
        wfc1_r=wfc1.T.reshape(T, HID, FC1_OUT).astype(jnp.bfloat16),
        bfc1=bfc1.reshape(1, FC1_OUT),
        wfc2_t=wfc2.T, bfc2=bfc2.reshape(1, NUM_CLASSES),
        # --- unscaled copies for the pure-JAX reference ---
        wih_t=wih.T, whh_t=whh.T, b_lstm=b_lstm,
    )


def reference_forward(x, p):
    """Pure-JAX reference of the same math (sanity check)."""
    B = x.shape[0]
    xs = x[:, 0, :]
    xp = jnp.pad(xs, ((0, 0), (1, 1)))
    patches1 = jnp.stack([xp[:, 0:L], xp[:, 1:L + 1], xp[:, 2:L + 2]],
                         axis=-1).reshape(B * L, 3)
    y1 = jnp.maximum(patches1 @ p["w1m"] + p["b1"], 0.0).reshape(B, L, CONV1_OUT)
    y1p = jnp.pad(y1, ((0, 0), (1, 1), (0, 0)))
    patches2 = jnp.concatenate(
        [y1p[:, 0:L], y1p[:, 1:L + 1], y1p[:, 2:L + 2]], axis=-1).reshape(B * L, 3 * CONV1_OUT)
    y2 = (patches2 @ p["w2cat"] + p["b2"]).reshape(B, L, CONV2_OUT)
    y3 = jnp.tanh(jnp.max(y2.reshape(B, T, POOL, CONV2_OUT), axis=2))          # (B, T, 64)

    def step(carry, x_t):
        h, c = carry
        gates = x_t @ p["wih_t"] + h @ p["whh_t"] + p["b_lstm"]
        i, f, g, o = jnp.split(gates, 4, axis=-1)
        c = jax.nn.sigmoid(f) * c + jax.nn.sigmoid(i) * jnp.tanh(g)
        h = jax.nn.sigmoid(o) * jnp.tanh(c)
        return (h, c), h

    h0 = jnp.zeros((B, HID), jnp.float32)
    c0 = jnp.zeros((B, HID), jnp.float32)
    _, hs = lax.scan(step, (h0, c0), y3.transpose(1, 0, 2))                    # (T, B, H)
    flat = hs.transpose(1, 0, 2).reshape(B, FC1_IN)
    wfc1_t = p["wfc1_r"].astype(jnp.float32).reshape(FC1_IN, FC1_OUT)
    z1 = jnp.tanh(flat @ wfc1_t + p["bfc1"])
    return z1 @ p["wfc2_t"] + p["bfc2"]


if __name__ == "__main__":
    key = jax.random.PRNGKey(0)
    kx, kp = jax.random.split(key)
    B = 2
    x = jax.random.normal(kx, (B, 1, L), jnp.float32)    # matches PyTorch NCW input (B, 1, 400)
    params = init_params(kp)

    out = jax.jit(cnn_lstm_forward)(x, params)
    out = jax.block_until_ready(out)
    assert out.shape == (B, NUM_CLASSES)

    ref = reference_forward(x, params)
    np.testing.assert_allclose(np.asarray(out), np.asarray(ref), rtol=2e-2, atol=2e-2)

    print("KERNEL_OK")
</pallas_src>

<mosaic_0001>
module attributes {stable_mosaic.version = 11 : i64} {
  func.func @conv_xproj_kernel(%arg0: memref<102x8xf32, #tpu.memory_space<vmem>>, %arg1: memref<3x32xf32, #tpu.memory_space<vmem>>, %arg2: memref<1x32xf32, #tpu.memory_space<vmem>>, %arg3: memref<96x64xf32, #tpu.memory_space<vmem>>, %arg4: memref<1x64xf32, #tpu.memory_space<vmem>>, %arg5: memref<64x256xf32, #tpu.memory_space<vmem>>, %arg6: memref<1x256xf32, #tpu.memory_space<vmem>>, %arg7: memref<100x2x256xf32, #tpu.memory_space<vmem>>, %arg8: memref<800x96xf32, #tpu.memory_space<vmem>>, %arg9: memref<200x64xf32, #tpu.memory_space<vmem>>) attributes {dimension_semantics = [], scalar_prefetch = 0 : i64, scratch_operands = 2 : i64, tpu.core_type = #tpu.core_type<tc>} {
    %c0 = arith.constant 0 : index
    %c0_0 = arith.constant 0 : index
    %0 = vector.load %arg1[%c0, %c0_0] : memref<3x32xf32, #tpu.memory_space<vmem>>, vector<1x32xf32>
    %c1 = arith.constant 1 : index
    %c0_1 = arith.constant 0 : index
    %1 = vector.load %arg1[%c1, %c0_1] : memref<3x32xf32, #tpu.memory_space<vmem>>, vector<1x32xf32>
    %c2 = arith.constant 2 : index
    %c0_2 = arith.constant 0 : index
    %2 = vector.load %arg1[%c2, %c0_2] : memref<3x32xf32, #tpu.memory_space<vmem>>, vector<1x32xf32>
    %c0_3 = arith.constant 0 : index
    %c0_4 = arith.constant 0 : index
    %3 = vector.load %arg2[%c0_3, %c0_4] : memref<1x32xf32, #tpu.memory_space<vmem>>, vector<1x32xf32>
    %cst = arith.constant 0.000000e+00 : f32
    %4 = vector.broadcast %cst : f32 to vector<1x32xf32>
    %c0_5 = arith.constant 0 : index
    %c3 = arith.constant 3 : index
    %5 = vector.load %arg0[%c0_5, %c3] : memref<102x8xf32, #tpu.memory_space<vmem>>, vector<100x1xf32>
    %6 = vector.broadcast %5 : vector<100x1xf32> to vector<100x32xf32>
    %7 = vector.broadcast %0 : vector<1x32xf32> to vector<100x32xf32>
    %8 = arith.mulf %6, %7 : vector<100x32xf32>
    %c1_6 = arith.constant 1 : index
    %c0_7 = arith.constant 0 : index
    %9 = vector.load %arg0[%c1_6, %c0_7] : memref<102x8xf32, #tpu.memory_space<vmem>>, vector<100x1xf32>
    %10 = vector.broadcast %9 : vector<100x1xf32> to vector<100x32xf32>
    %11 = vector.broadcast %1 : vector<1x32xf32> to vector<100x32xf32>
    %12 = arith.mulf %10, %11 : vector<100x32xf32>
    %13 = arith.addf %8, %12 : vector<100x32xf32>
    %c1_8 = arith.constant 1 : index
    %c1_9 = arith.constant 1 : index
    %14 = vector.load %arg0[%c1_8, %c1_9] : memref<102x8xf32, #tpu.memory_space<vmem>>, vector<100x1xf32>
    %15 = vector.broadcast %14 : vector<100x1xf32> to vector<100x32xf32>
    %16 = vector.broadcast %2 : vector<1x32xf32> to vector<100x32xf32>
    %17 = arith.mulf %15, %16 : vector<100x32xf32>
    %18 = arith.addf %13, %17 : vector<100x32xf32>
    %19 = vector.broadcast %3 : vector<1x32xf32> to vector<100x32xf32>
    %20 = arith.addf %18, %19 : vector<100x32xf32>
    %cst_10 = arith.constant 0.000000e+00 : f32
    %21 = vector.broadcast %cst_10 : f32 to vector<100x32xf32>
    %22 = arith.maximumf %20, %21 : vector<100x32xf32>
    %c1_11 = arith.constant 1 : index
    %c0_12 = arith.constant 0 : index
    %23 = vector.load %arg0[%c1_11, %c0_12] : memref<102x8xf32, #tpu.memory_space<vmem>>, vector<100x1xf32>
    %24 = vector.broadcast %23 : vector<100x1xf32> to vector<100x32xf32>
    %25 = vector.broadcast %0 : vector<1x32xf32> to vector<100x32xf32>
    %26 = arith.mulf %24, %25 : vector<100x32xf32>
    %c1_13 = arith.constant 1 : index
    %c1_14 = arith.constant 1 : index
    %27 = vector.load %arg0[%c1_13, %c1_14] : memref<102x8xf32, #tpu.memory_space<vmem>>, vector<100x1xf32>
    %28 = vector.broadcast %27 : vector<100x1xf32> to vector<100x32xf32>
    %29 = vector.broadcast %1 : vector<1x32xf32> to vector<100x32xf32>
    %30 = arith.mulf %28, %29 : vector<100x32xf32>
    %31 = arith.addf %26, %30 : vector<100x32xf32>
    %c1_15 = arith.constant 1 : index
    %c2_16 = arith.constant 2 : index
    %32 = vector.load %arg0[%c1_15, %c2_16] : memref<102x8xf32, #tpu.memory_space<vmem>>, vector<100x1xf32>
    %33 = vector.broadcast %32 : vector<100x1xf32> to vector<100x32xf32>
    %34 = vector.broadcast %2 : vector<1x32xf32> to vector<100x32xf32>
    %35 = arith.mulf %33, %34 : vector<100x32xf32>
    %36 = arith.addf %31, %35 : vector<100x32xf32>
    %37 = vector.broadcast %3 : vector<1x32xf32> to vector<100x32xf32>
    %38 = arith.addf %36, %37 : vector<100x32xf32>
    %cst_17 = arith.constant 0.000000e+00 : f32
    %39 = vector.broadcast %cst_17 : f32 to vector<100x32xf32>
    %40 = arith.maximumf %38, %39 : vector<100x32xf32>
    %c1_18 = arith.constant 1 : index
    %c1_19 = arith.constant 1 : index
    %41 = vector.load %arg0[%c1_18, %c1_19] : memref<102x8xf32, #tpu.memory_space<vmem>>, vector<100x1xf32>
    %42 = vector.broadcast %41 : vector<100x1xf32> to vector<100x32xf32>
    %43 = vector.broadcast %0 : vector<1x32xf32> to vector<100x32xf32>
    %44 = arith.mulf %42, %43 : vector<100x32xf32>
    %c1_20 = arith.constant 1 : index
    %c2_21 = arith.constant 2 : index
    %45 = vector.load %arg0[%c1_20, %c2_21] : memref<102x8xf32, #tpu.memory_space<vmem>>, vector<100x1xf32>
    %46 = vector.broadcast %45 : vector<100x1xf32> to vector<100x32xf32>
    %47 = vector.broadcast %1 : vector<1x32xf32> to vector<100x32xf32>
    %48 = arith.mulf %46, %47 : vector<100x32xf32>
    %49 = arith.addf %44, %48 : vector<100x32xf32>
    %c1_22 = arith.constant 1 : index
    %c3_23 = arith.constant 3 : index
    %50 = vector.load %arg0[%c1_22, %c3_23] : memref<102x8xf32, #tpu.memory_space<vmem>>, vector<100x1xf32>
    %51 = vector.broadcast %50 : vector<100x1xf32> to vector<100x32xf32>
    %52 = vector.broadcast %2 : vector<1x32xf32> to vector<100x32xf32>
    %53 = arith.mulf %51, %52 : vector<100x32xf32>
    %54 = arith.addf %49, %53 : vector<100x32xf32>
    %55 = vector.broadcast %3 : vector<1x32xf32> to vector<100x32xf32>
    %56 = arith.addf %54, %55 : vector<100x32xf32>
    %cst_24 = arith.constant 0.000000e+00 : f32
    %57 = vector.broadcast %cst_24 : f32 to vector<100x32xf32>
    %58 = arith.maximumf %56, %57 : vector<100x32xf32>
    %c1_25 = arith.constant 1 : index
    %c2_26 = arith.constant 2 : index
    %59 = vector.load %arg0[%c1_25, %c2_26] : memref<102x8xf32, #tpu.memory_space<vmem>>, vector<100x1xf32>
    %60 = vector.broadcast %59 : vector<100x1xf32> to vector<100x32xf32>
    %61 = vector.broadcast %0 : vector<1x32xf32> to vector<100x32xf32>
    %62 = arith.mulf %60, %61 : vector<100x32xf32>
    %c1_27 = arith.constant 1 : index
    %c3_28 = arith.constant 3 : index
    %63 = vector.load %arg0[%c1_27, %c3_28] : memref<102x8xf32, #tpu.memory_space<vmem>>, vector<100x1xf32>
    %64 = vector.broadcast %63 : vector<100x1xf32> to vector<100x32xf32>
    %65 = vector.broadcast %1 : vector<1x32xf32> to vector<100x32xf32>
    %66 = arith.mulf %64, %65 : vector<100x32xf32>
    %67 = arith.addf %62, %66 : vector<100x32xf32>
    %c2_29 = arith.constant 2 : index
    %c0_30 = arith.constant 0 : index
    %68 = vector.load %arg0[%c2_29, %c0_30] : memref<102x8xf32, #tpu.memory_space<vmem>>, vector<100x1xf32>
    %69 = vector.broadcast %68 : vector<100x1xf32> to vector<100x32xf32>
    %70 = vector.broadcast %2 : vector<1x32xf32> to vector<100x32xf32>
    %71 = arith.mulf %69, %70 : vector<100x32xf32>
    %72 = arith.addf %67, %71 : vector<100x32xf32>
    %73 = vector.broadcast %3 : vector<1x32xf32> to vector<100x32xf32>
    %74 = arith.addf %72, %73 : vector<100x32xf32>
    %cst_31 = arith.constant 0.000000e+00 : f32
    %75 = vector.broadcast %cst_31 : f32 to vector<100x32xf32>
    %76 = arith.maximumf %74, %75 : vector<100x32xf32>
    %c0_32 = arith.constant 0 : index
    %c0_33 = arith.constant 0 : index
    %77 = vector.load %arg8[%c0_32, %c0_33] : memref<800x96xf32, #tpu.memory_space<vmem>>, vector<1x32xf32>
    tpu.vector_store %arg8[%c0_32, %c0_33], %4 {strides = array<i32>} : memref<800x96xf32, #tpu.memory_space<vmem>>, vector<1x32xf32>,
    %78 = vector.extract_strided_slice %76 {offsets = [0, 0], sizes = [99, 32], strides = [1, 1]} : vector<100x32xf32> to vector<99x32xf32>
    %c1_34 = arith.constant 1 : index
    %c0_35 = arith.constant 0 : index
    %79 = vector.load %arg8[%c1_34, %c0_35] : memref<800x96xf32, #tpu.memory_space<vmem>>, vector<99x32xf32>
    tpu.vector_store %arg8[%c1_34, %c0_35], %78 {strides = array<i32>} : memref<800x96xf32, #tpu.memory_space<vmem>>, vector<99x32xf32>,
    %c0_36 = arith.constant 0 : index
    %c32 = arith.constant 32 : index
    %80 = vector.load %arg8[%c0_36, %c32] : memref<800x96xf32, #tpu.memory_space<vmem>>, vector<100x32xf32>
    tpu.vector_store %arg8[%c0_36, %c32], %22 {strides = array<i32>} : memref<800x96xf32, #tpu.memory_space<vmem>>, vector<100x32xf32>,
    %c0_37 = arith.constant 0 : index
    %c64 = arith.constant 64 : index
    %81 = vector.load %arg8[%c0_37, %c64] : memref<800x96xf32, #tpu.memory_space<vmem>>, vector<100x32xf32>
    tpu.vector_store %arg8[%c0_37, %c64], %40 {strides = array<i32>} : memref<800x96xf32, #tpu.memory_space<vmem>>, vector<100x32xf32>,
    %c100 = arith.constant 100 : index
    %c0_38 = arith.constant 0 : index
    %82 = vector.load %arg8[%c100, %c0_38] : memref<800x96xf32, #tpu.memory_space<vmem>>, vector<100x32xf32>
    tpu.vector_store %arg8[%c100, %c0_38], %22 {strides = array<i32>} : memref<800x96xf32, #tpu.memory_space<vmem>>, vector<100x32xf32>,
    %c100_39 = arith.constant 100 : index
    %c32_40 = arith.constant 32 : index
    %83 = vector.load %arg8[%c100_39, %c32_40] : memref<800x96xf32, #tpu.memory_space<vmem>>, vector<100x32xf32>
    tpu.vector_store %arg8[%c100_39, %c32_40], %40 {strides = array<i32>} : memref<800x96xf32, #tpu.memory_space<vmem>>, vector<100x32xf32>,
    %c100_41 = arith.constant 100 : index
    %c64_42 = arith.constant 64 : index
    %84 = vector.load %arg8[%c100_41, %c64_42] : memref<800x96xf32, #tpu.memory_space<vmem>>, vector<100x32xf32>
    tpu.vector_store %arg8[%c100_41, %c64_42], %58 {strides = array<i32>} : memref<800x96xf32, #tpu.memory_space<vmem>>, vector<100x32xf32>,
    %c200 = arith.constant 200 : index
    %c0_43 = arith.constant 0 : index
    %85 = vector.load %arg8[%c200, %c0_43] : memref<800x96xf32, #tpu.memory_space<vmem>>, vector<100x32xf32>
    tpu.vector_store %arg8[%c200, %c0_43], %40 {strides = array<i32>} : memref<800x96xf32, #tpu.memory_space<vmem>>, vector<100x32xf32>,
    %c200_44 = arith.constant 200 : index
    %c32_45 = arith.constant 32 : index
    %86 = vector.load %arg8[%c200_44, %c32_45] : memref<800x96xf32, #tpu.memory_space<vmem>>, vector<100x32xf32>
    tpu.vector_store %arg8[%c200_44, %c32_45], %58 {strides = array<i32>} : memref<800x96xf32, #tpu.memory_space<vmem>>, vector<100x32xf32>,
    %c200_46 = arith.constant 200 : index
    %c64_47 = arith.constant 64 : index
    %87 = vector.load %arg8[%c200_46, %c64_47] : memref<800x96xf32, #tpu.memory_space<vmem>>, vector<100x32xf32>
    tpu.vector_store %arg8[%c200_46, %c64_47], %76 {strides = array<i32>} : memref<800x96xf32, #tpu.memory_space<vmem>>, vector<100x32xf32>,
    %c300 = arith.constant 300 : index
    %c0_48 = arith.constant 0 : index
    %88 = vector.load %arg8[%c300, %c0_48] : memref<800x96xf32, #tpu.memory_space<vmem>>, vector<100x32xf32>
    tpu.vector_store %arg8[%c300, %c0_48], %58 {strides = array<i32>} : memref<800x96xf32, #tpu.memory_space<vmem>>, vector<100x32xf32>,
    %c300_49 = arith.constant 300 : index
    %c32_50 = arith.constant 32 : index
    %89 = vector.load %arg8[%c300_49, %c32_50] : memref<800x96xf32, #tpu.memory_space<vmem>>, vector<100x32xf32>
    tpu.vector_store %arg8[%c300_49, %c32_50], %76 {strides = array<i32>} : memref<800x96xf32, #tpu.memory_space<vmem>>, vector<100x32xf32>,
    %90 = vector.extract_strided_slice %22 {offsets = [1, 0], sizes = [99, 32], strides = [1, 1]} : vector<100x32xf32> to vector<99x32xf32>
    %c300_51 = arith.constant 300 : index
    %c64_52 = arith.constant 64 : index
    %91 = vector.load %arg8[%c300_51, %c64_52] : memref<800x96xf32, #tpu.memory_space<vmem>>, vector<99x32xf32>
    tpu.vector_store %arg8[%c300_51, %c64_52], %90 {strides = array<i32>} : memref<800x96xf32, #tpu.memory_space<vmem>>, vector<99x32xf32>,
    %c399 = arith.constant 399 : index
    %c64_53 = arith.constant 64 : index
    %92 = vector.load %arg8[%c399, %c64_53] : memref<800x96xf32, #tpu.memory_space<vmem>>, vector<1x32xf32>
    tpu.vector_store %arg8[%c399, %c64_53], %4 {strides = array<i32>} : memref<800x96xf32, #tpu.memory_space<vmem>>, vector<1x32xf32>,
    %c0_54 = arith.constant 0 : index
    %c7 = arith.constant 7 : index
    %93 = vector.load %arg0[%c0_54, %c7] : memref<102x8xf32, #tpu.memory_space<vmem>>, vector<100x1xf32>
    %94 = vector.broadcast %93 : vector<100x1xf32> to vector<100x32xf32>
    %95 = vector.broadcast %0 : vector<1x32xf32> to vector<100x32xf32>
    %96 = arith.mulf %94, %95 : vector<100x32xf32>
    %c1_55 = arith.constant 1 : index
    %c4 = arith.constant 4 : index
    %97 = vector.load %arg0[%c1_55, %c4] : memref<102x8xf32, #tpu.memory_space<vmem>>, vector<100x1xf32>
    %98 = vector.broadcast %97 : vector<100x1xf32> to vector<100x32xf32>
    %99 = vector.broadcast %1 : vector<1x32xf32> to vector<100x32xf32>
    %100 = arith.mulf %98, %99 : vector<100x32xf32>
    %101 = arith.addf %96, %100 : vector<100x32xf32>
    %c1_56 = arith.constant 1 : index
    %c5 = arith.constant 5 : index
    %102 = vector.load %arg0[%c1_56, %c5] : memref<102x8xf32, #tpu.memory_space<vmem>>, vector<100x1xf32>
    %103 = vector.broadcast %102 : vector<100x1xf32> to vector<100x32xf32>
    %104 = vector.broadcast %2 : vector<1x32xf32> to vector<100x32xf32>
    %105 = arith.mulf %103, %104 : vector<100x32xf32>
    %106 = arith.addf %101, %105 : vector<100x32xf32>
    %107 = vector.broadcast %3 : vector<1x32xf32> to vector<100x32xf32>
    %108 = arith.addf %106, %107 : vector<100x32xf32>
    %cst_57 = arith.constant 0.000000e+00 : f32
    %109 = vector.broadcast %cst_57 : f32 to vector<100x32xf32>
    %110 = arith.maximumf %108, %109 : vector<100x32xf32>
    %c1_58 = arith.constant 1 : index
    %c4_59 = arith.constant 4 : index
    %111 = vector.load %arg0[%c1_58, %c4_59] : memref<102x8xf32, #tpu.memory_space<vmem>>, vector<100x1xf32>
    %112 = vector.broadcast %111 : vector<100x1xf32> to vector<100x32xf32>
    %113 = vector.broadcast %0 : vector<1x32xf32> to vector<100x32xf32>
    %114 = arith.mulf %112, %113 : vector<100x32xf32>
    %c1_60 = arith.constant 1 : index
    %c5_61 = arith.constant 5 : index
    %115 = vector.load %arg0[%c1_60, %c5_61] : memref<102x8xf32, #tpu.memory_space<vmem>>, vector<100x1xf32>
    %116 = vector.broadcast %115 : vector<100x1xf32> to vector<100x32xf32>
    %117 = vector.broadcast %1 : vector<1x32xf32> to vector<100x32xf32>
    %118 = arith.mulf %116, %117 : vector<100x32xf32>
    %119 = arith.addf %114, %118 : vector<100x32xf32>
    %c1_62 = arith.constant 1 : index
    %c6 = arith.constant 6 : index
    %120 = vector.load %arg0[%c1_62, %c6] : memref<102x8xf32, #tpu.memory_space<vmem>>, vector<100x1xf32>
    %121 = vector.broadcast %120 : vector<100x1xf32> to vector<100x32xf32>
    %122 = vector.broadcast %2 : vector<1x32xf32> to vector<100x32xf32>
    %123 = arith.mulf %121, %122 : vector<100x32xf32>
    %124 = arith.addf %119, %123 : vector<100x32xf32>
    %125 = vector.broadcast %3 : vector<1x32xf32> to vector<100x32xf32>
    %126 = arith.addf %124, %125 : vector<100x32xf32>
    %cst_63 = arith.constant 0.000000e+00 : f32
    %127 = vector.broadcast %cst_63 : f32 to vector<100x32xf32>
    %128 = arith.maximumf %126, %127 : vector<100x32xf32>
    %c1_64 = arith.constant 1 : index
    %c5_65 = arith.constant 5 : index
    %129 = vector.load %arg0[%c1_64, %c5_65] : memref<102x8xf32, #tpu.memory_space<vmem>>, vector<100x1xf32>
    %130 = vector.broadcast %129 : vector<100x1xf32> to vector<100x32xf32>
    %131 = vector.broadcast %0 : vector<1x32xf32> to vector<100x32xf32>
    %132 = arith.mulf %130, %131 : vector<100x32xf32>
    %c1_66 = arith.constant 1 : index
    %c6_67 = arith.constant 6 : index
    %133 = vector.load %arg0[%c1_66, %c6_67] : memref<102x8xf32, #tpu.memory_space<vmem>>, vector<100x1xf32>
    %134 = vector.broadcast %133 : vector<100x1xf32> to vector<100x32xf32>
    %135 = vector.broadcast %1 : vector<1x32xf32> to vector<100x32xf32>
    %136 = arith.mulf %134, %135 : vector<100x32xf32>
    %137 = arith.addf %132, %136 : vector<100x32xf32>
    %c1_68 = arith.constant 1 : index
    %c7_69 = arith.constant 7 : index
    %138 = vector.load %arg0[%c1_68, %c7_69] : memref<102x8xf32, #tpu.memory_space<vmem>>, vector<100x1xf32>
    %139 = vector.broadcast %138 : vector<100x1xf32> to vector<100x32xf32>
    %140 = vector.broadcast %2 : vector<1x32xf32> to vector<100x32xf32>
    %141 = arith.mulf %139, %140 : vector<100x32xf32>
    %142 = arith.addf %137, %141 : vector<100x32xf32>
    %143 = vector.broadcast %3 : vector<1x32xf32> to vector<100x32xf32>
    %144 = arith.addf %142, %143 : vector<100x32xf32>
    %cst_70 = arith.constant 0.000000e+00 : f32
    %145 = vector.broadcast %cst_70 : f32 to vector<100x32xf32>
    %146 = arith.maximumf %144, %145 : vector<100x32xf32>
    %c1_71 = arith.constant 1 : index
    %c6_72 = arith.constant 6 : index
    %147 = vector.load %arg0[%c1_71, %c6_72] : memref<102x8xf32, #tpu.memory_space<vmem>>, vector<100x1xf32>
    %148 = vector.broadcast %147 : vector<100x1xf32> to vector<100x32xf32>
    %149 = vector.broadcast %0 : vector<1x32xf32> to vector<100x32xf32>
    %150 = arith.mulf %148, %149 : vector<100x32xf32>
    %c1_73 = arith.constant 1 : index
    %c7_74 = arith.constant 7 : index
    %151 = vector.load %arg0[%c1_73, %c7_74] : memref<102x8xf32, #tpu.memory_space<vmem>>, vector<100x1xf32>
    %152 = vector.broadcast %151 : vector<100x1xf32> to vector<100x32xf32>
    %153 = vector.broadcast %1 : vector<1x32xf32> to vector<100x32xf32>
    %154 = arith.mulf %152, %153 : vector<100x32xf32>
    %155 = arith.addf %150, %154 : vector<100x32xf32>
    %c2_75 = arith.constant 2 : index
    %c4_76 = arith.constant 4 : index
    %156 = vector.load %arg0[%c2_75, %c4_76] : memref<102x8xf32, #tpu.memory_space<vmem>>, vector<100x1xf32>
    %157 = vector.broadcast %156 : vector<100x1xf32> to vector<100x32xf32>
    %158 = vector.broadcast %2 : vector<1x32xf32> to vector<100x32xf32>
    %159 = arith.mulf %157, %158 : vector<100x32xf32>
    %160 = arith.addf %155, %159 : vector<100x32xf32>
    %161 = vector.broadcast %3 : vector<1x32xf32> to vector<100x32xf32>
    %162 = arith.addf %160, %161 : vector<100x32xf32>
    %cst_77 = arith.constant 0.000000e+00 : f32
    %163 = vector.broadcast %cst_77 : f32 to vector<100x32xf32>
    %164 = arith.maximumf %162, %163 : vector<100x32xf32>
    %c400 = arith.constant 400 : index
    %c0_78 = arith.constant 0 : index
    %165 = vector.load %arg8[%c400, %c0_78] : memref<800x96xf32, #tpu.memory_space<vmem>>, vector<1x32xf32>
    tpu.vector_store %arg8[%c400, %c0_78], %4 {strides = array<i32>} : memref<800x96xf32, #tpu.memory_space<vmem>>, vector<1x32xf32>,
    %166 = vector.extract_strided_slice %164 {offsets = [0, 0], sizes = [99, 32], strides = [1, 1]} : vector<100x32xf32> to vector<99x32xf32>
    %c401 = arith.constant 401 : index
    %c0_79 = arith.constant 0 : index
    %167 = vector.load %arg8[%c401, %c0_79] : memref<800x96xf32, #tpu.memory_space<vmem>>, vector<99x32xf32>
    tpu.vector_store %arg8[%c401, %c0_79], %166 {strides = array<i32>} : memref<800x96xf32, #tpu.memory_space<vmem>>, vector<99x32xf32>,
    %c400_80 = arith.constant 400 : index
    %c32_81 = arith.constant 32 : index
    %168 = vector.load %arg8[%c400_80, %c32_81] : memref<800x96xf32, #tpu.memory_space<vmem>>, vector<100x32xf32>
    tpu.vector_store %arg8[%c400_80, %c32_81], %110 {strides = array<i32>} : memref<800x96xf32, #tpu.memory_space<vmem>>, vector<100x32xf32>,
    %c400_82 = arith.constant 400 : index
    %c64_83 = arith.constant 64 : index
    %169 = vector.load %arg8[%c400_82, %c64_83] : memref<800x96xf32, #tpu.memory_space<vmem>>, vector<100x32xf32>
    tpu.vector_store %arg8[%c400_82, %c64_83], %128 {strides = array<i32>} : memref<800x96xf32, #tpu.memory_space<vmem>>, vector<100x32xf32>,
    %c500 = arith.constant 500 : index
    %c0_84 = arith.constant 0 : index
    %170 = vector.load %arg8[%c500, %c0_84] : memref<800x96xf32, #tpu.memory_space<vmem>>, vector<100x32xf32>
    tpu.vector_store %arg8[%c500, %c0_84], %110 {strides = array<i32>} : memref<800x96xf32, #tpu.memory_space<vmem>>, vector<100x32xf32>,
    %c500_85 = arith.constant 500 : index
    %c32_86 = arith.constant 32 : index
    %171 = vector.load %arg8[%c500_85, %c32_86] : memref<800x96xf32, #tpu.memory_space<vmem>>, vector<100x32xf32>
    tpu.vector_store %arg8[%c500_85, %c32_86], %128 {strides = array<i32>} : memref<800x96xf32, #tpu.memory_space<vmem>>, vector<100x32xf32>,
    %c500_87 = arith.constant 500 : index
    %c64_88 = arith.constant 64 : index
    %172 = vector.load %arg8[%c500_87, %c64_88] : memref<800x96xf32, #tpu.memory_space<vmem>>, vector<100x32xf32>
    tpu.vector_store %arg8[%c500_87, %c64_88], %146 {strides = array<i32>} : memref<800x96xf32, #tpu.memory_space<vmem>>, vector<100x32xf32>,
    %c600 = arith.constant 600 : index
    %c0_89 = arith.constant 0 : index
    %173 = vector.load %arg8[%c600, %c0_89] : memref<800x96xf32, #tpu.memory_space<vmem>>, vector<100x32xf32>
    tpu.vector_store %arg8[%c600, %c0_89], %128 {strides = array<i32>} : memref<800x96xf32, #tpu.memory_space<vmem>>, vector<100x32xf32>,
    %c600_90 = arith.constant 600 : index
    %c32_91 = arith.constant 32 : index
    %174 = vector.load %arg8[%c600_90, %c32_91] : memref<800x96xf32, #tpu.memory_space<vmem>>, vector<100x32xf32>
    tpu.vector_store %arg8[%c600_90, %c32_91], %146 {strides = array<i32>} : memref<800x96xf32, #tpu.memory_space<vmem>>, vector<100x32xf32>,
    %c600_92 = arith.constant 600 : index
    %c64_93 = arith.constant 64 : index
    %175 = vector.load %arg8[%c600_92, %c64_93] : memref<800x96xf32, #tpu.memory_space<vmem>>, vector<100x32xf32>
    tpu.vector_store %arg8[%c600_92, %c64_93], %164 {strides = array<i32>} : memref<800x96xf32, #tpu.memory_space<vmem>>, vector<100x32xf32>,
    %c700 = arith.constant 700 : index
    %c0_94 = arith.constant 0 : index
    %176 = vector.load %arg8[%c700, %c0_94] : memref<800x96xf32, #tpu.memory_space<vmem>>, vector<100x32xf32>
    tpu.vector_store %arg8[%c700, %c0_94], %146 {strides = array<i32>} : memref<800x96xf32, #tpu.memory_space<vmem>>, vector<100x32xf32>,
    %c700_95 = arith.constant 700 : index
    %c32_96 = arith.constant 32 : index
    %177 = vector.load %arg8[%c700_95, %c32_96] : memref<800x96xf32, #tpu.memory_space<vmem>>, vector<100x32xf32>
    tpu.vector_store %arg8[%c700_95, %c32_96], %164 {strides = array<i32>} : memref<800x96xf32, #tpu.memory_space<vmem>>, vector<100x32xf32>,
    %178 = vector.extract_strided_slice %110 {offsets = [1, 0], sizes = [99, 32], strides = [1, 1]} : vector<100x32xf32> to vector<99x32xf32>
    %c700_97 = arith.constant 700 : index
    %c64_98 = arith.constant 64 : index
    %179 = vector.load %arg8[%c700_97, %c64_98] : memref<800x96xf32, #tpu.memory_space<vmem>>, vector<99x32xf32>
    tpu.vector_store %arg8[%c700_97, %c64_98], %178 {strides = array<i32>} : memref<800x96xf32, #tpu.memory_space<vmem>>, vector<99x32xf32>,
    %c799 = arith.constant 799 : index
    %c64_99 = arith.constant 64 : index
    %180 = vector.load %arg8[%c799, %c64_99] : memref<800x96xf32, #tpu.memory_space<vmem>>, vector<1x32xf32>
    tpu.vector_store %arg8[%c799, %c64_99], %4 {strides = array<i32>} : memref<800x96xf32, #tpu.memory_space<vmem>>, vector<1x32xf32>,
    %c0_100 = arith.constant 0 : index
    %c0_101 = arith.constant 0 : index
    %181 = vector.load %arg8[%c0_100, %c0_101] : memref<800x96xf32, #tpu.memory_space<vmem>>, vector<800x96xf32>
    %c0_102 = arith.constant 0 : index
    %c0_103 = arith.constant 0 : index
    %182 = vector.load %arg3[%c0_102, %c0_103] : memref<96x64xf32, #tpu.memory_space<vmem>>, vector<96x64xf32>
    %cst_104 = arith.constant dense<0.000000e+00> : vector<800x64xf32>
    %183 = tpu.matmul %181, %182, %cst_104 {dimension_numbers = #tpu.dot_dimension_numbers<[1], [0], [0], [1], [0, 0, 1, 1], [], []>} : vector<800x96xf32>, vector<96x64xf32>, vector<800x64xf32> -> vector<800x64xf32>
    %c0_105 = arith.constant 0 : index
    %c0_106 = arith.constant 0 : index
    %184 = vector.load %arg4[%c0_105, %c0_106] : memref<1x64xf32, #tpu.memory_space<vmem>>, vector<1x64xf32>
    %185 = vector.broadcast %184 : vector<1x64xf32> to vector<800x64xf32>
    %186 = arith.addf %183, %185 : vector<800x64xf32>
    %187 = vector.extract_strided_slice %186 {offsets = [0, 0], sizes = [100, 64], strides = [1, 1]} : vector<800x64xf32> to vector<100x64xf32>
    %188 = vector.extract_strided_slice %186 {offsets = [100, 0], sizes = [100, 64], strides = [1, 1]} : vector<800x64xf32> to vector<100x64xf32>
    %189 = arith.maximumf %187, %188 : vector<100x64xf32>
    %190 = vector.extract_strided_slice %186 {offsets = [200, 0], sizes = [100, 64], strides = [1, 1]} : vector<800x64xf32> to vector<100x64xf32>
    %191 = vector.extract_strided_slice %186 {offsets = [300, 0], sizes = [100, 64], strides = [1, 1]} : vector<800x64xf32> to vector<100x64xf32>
    %192 = arith.maximumf %190, %191 : vector<100x64xf32>
    %193 = arith.maximumf %189, %192 : vector<100x64xf32>
    %194 = math.tanh %193 : vector<100x64xf32>
    %c0_107 = arith.constant 0 : index
    %c0_108 = arith.constant 0 : index
    %195 = vector.load %arg9[%c0_107, %c0_108] : memref<200x64xf32, #tpu.memory_space<vmem>>, vector<100x64xf32>
    tpu.vector_store %arg9[%c0_107, %c0_108], %194 {strides = array<i32>} : memref<200x64xf32, #tpu.memory_space<vmem>>, vector<100x64xf32>,
    %196 = vector.extract_strided_slice %186 {offsets = [400, 0], sizes = [100, 64], strides = [1, 1]} : vector<800x64xf32> to vector<100x64xf32>
    %197 = vector.extract_strided_slice %186 {offsets = [500, 0], sizes = [100, 64], strides = [1, 1]} : vector<800x64xf32> to vector<100x64xf32>
    %198 = arith.maximumf %196, %197 : vector<100x64xf32>
    %199 = vector.extract_strided_slice %186 {offsets = [600, 0], sizes = [100, 64], strides = [1, 1]} : vector<800x64xf32> to vector<100x64xf32>
    %200 = vector.extract_strided_slice %186 {offsets = [700, 0], sizes = [100, 64], strides = [1, 1]} : vector<800x64xf32> to vector<100x64xf32>
    %201 = arith.maximumf %199, %200 : vector<100x64xf32>
    %202 = arith.maximumf %198, %201 : vector<100x64xf32>
    %203 = math.tanh %202 : vector<100x64xf32>
    %c100_109 = arith.constant 100 : index
    %c0_110 = arith.constant 0 : index
    %204 = vector.load %arg9[%c100_109, %c0_110] : memref<200x64xf32, #tpu.memory_space<vmem>>, vector<100x64xf32>
    tpu.vector_store %arg9[%c100_109, %c0_110], %203 {strides = array<i32>} : memref<200x64xf32, #tpu.memory_space<vmem>>, vector<100x64xf32>,
    %c0_111 = arith.constant 0 : index
    %c0_112 = arith.constant 0 : index
    %205 = vector.load %arg9[%c0_111, %c0_112] : memref<200x64xf32, #tpu.memory_space<vmem>>, vector<200x64xf32>
    %c0_113 = arith.constant 0 : index
    %c0_114 = arith.constant 0 : index
    %206 = vector.load %arg5[%c0_113, %c0_114] : memref<64x256xf32, #tpu.memory_space<vmem>>, vector<64x256xf32>
    %cst_115 = arith.constant dense<0.000000e+00> : vector<200x256xf32>
    %207 = tpu.matmul %205, %206, %cst_115 {dimension_numbers = #tpu.dot_dimension_numbers<[1], [0], [0], [1], [0, 0, 1, 1], [], []>} : vector<200x64xf32>, vector<64x256xf32>, vector<200x256xf32> -> vector<200x256xf32>
    %c0_116 = arith.constant 0 : index
    %c0_117 = arith.constant 0 : index
    %208 = vector.load %arg6[%c0_116, %c0_117] : memref<1x256xf32, #tpu.memory_space<vmem>>, vector<1x256xf32>
    %209 = vector.broadcast %208 : vector<1x256xf32> to vector<200x256xf32>
    %210 = arith.addf %207, %209 : vector<200x256xf32>
    %211 = vector.extract_strided_slice %210 {offsets = [0, 0], sizes = [100, 256], strides = [1, 1]} : vector<200x256xf32> to vector<100x256xf32>
    %c0_118 = arith.constant 0 : index
    %c0_119 = arith.constant 0 : index
    %c0_120 = arith.constant 0 : index
    %212 = vector.load %arg7[%c0_118, %c0_119, %c0_120] : memref<100x2x256xf32, #tpu.memory_space<vmem>>, vector<100x1x256xf32>
    %213 = vector.shape_cast %212 : vector<100x1x256xf32> to vector<100x256xf32>
    %214 = vector.shape_cast %211 : vector<100x256xf32> to vector<100x1x256xf32>
    tpu.vector_store %arg7[%c0_118, %c0_119, %c0_120], %214 {strides = array<i32>} : memref<100x2x256xf32, #tpu.memory_space<vmem>>, vector<100x1x256xf32>,
    %215 = vector.extract_strided_slice %210 {offsets = [100, 0], sizes = [100, 256], strides = [1, 1]} : vector<200x256xf32> to vector<100x256xf32>
    %c0_121 = arith.constant 0 : index
    %c1_122 = arith.constant 1 : index
    %c0_123 = arith.constant 0 : index
    %216 = vector.load %arg7[%c0_121, %c1_122, %c0_123] : memref<100x2x256xf32, #tpu.memory_space<vmem>>, vector<100x1x256xf32>
    %217 = vector.shape_cast %216 : vector<100x1x256xf32> to vector<100x256xf32>
    %218 = vector.shape_cast %215 : vector<100x256xf32> to vector<100x1x256xf32>
    tpu.vector_store %arg7[%c0_121, %c1_122, %c0_123], %218 {strides = array<i32>} : memref<100x2x256xf32, #tpu.memory_space<vmem>>, vector<100x1x256xf32>,
    return
  }
}

module attributes {stable_mosaic.version = 11 : i64} {
  func.func @lstm_fc_kernel(%arg0: memref<100x2x256xf32, #tpu.memory_space<vmem>>, %arg1: memref<64x256xf32, #tpu.memory_space<vmem>>, %arg2: memref<100x64x1024xbf16, #tpu.memory_space<any>>, %arg3: memref<1x1024xf32, #tpu.memory_space<vmem>>, %arg4: memref<1024x41xf32, #tpu.memory_space<vmem>>, %arg5: memref<1x41xf32, #tpu.memory_space<vmem>>, %arg6: memref<2x41xf32, #tpu.memory_space<vmem>>, %arg7: memref<2x10x64x1024xbf16, #tpu.memory_space<vmem>>, %arg8: memref<2x!tpu.dma_semaphore, #tpu.memory_space<semaphore_mem>>, %arg9: memref<2x64xf32, #tpu.memory_space<vmem>>, %arg10: memref<2x64xf32, #tpu.memory_space<vmem>>, %arg11: memref<2x1024xf32, #tpu.memory_space<vmem>>) attributes {dimension_semantics = [], scalar_prefetch = 0 : i64, scratch_operands = 5 : i64, tpu.core_type = #tpu.core_type<tc>} {
    %c0 = arith.constant 0 : index
    %c0_0 = arith.constant 0 : index
    %0 = vector.load %arg1[%c0, %c0_0] : memref<64x256xf32, #tpu.memory_space<vmem>>, vector<64x256xf32>
    %cst = arith.constant 0.000000e+00 : f32
    %1 = vector.broadcast %cst : f32 to vector<2x64xf32>
    %c0_1 = arith.constant 0 : index
    %c0_2 = arith.constant 0 : index
    %2 = vector.load %arg9[%c0_1, %c0_2] : memref<2x64xf32, #tpu.memory_space<vmem>>, vector<2x64xf32>
    tpu.vector_store %arg9[%c0_1, %c0_2], %1 {strides = array<i32>} : memref<2x64xf32, #tpu.memory_space<vmem>>, vector<2x64xf32>,
    %cst_3 = arith.constant 0.000000e+00 : f32
    %3 = vector.broadcast %cst_3 : f32 to vector<2x64xf32>
    %c0_4 = arith.constant 0 : index
    %c0_5 = arith.constant 0 : index
    %4 = vector.load %arg10[%c0_4, %c0_5] : memref<2x64xf32, #tpu.memory_space<vmem>>, vector<2x64xf32>
    tpu.vector_store %arg10[%c0_4, %c0_5], %3 {strides = array<i32>} : memref<2x64xf32, #tpu.memory_space<vmem>>, vector<2x64xf32>,
    %cst_6 = arith.constant 0.000000e+00 : f32
    %5 = vector.broadcast %cst_6 : f32 to vector<2x1024xf32>
    %c0_7 = arith.constant 0 : index
    %c0_8 = arith.constant 0 : index
    %6 = vector.load %arg11[%c0_7, %c0_8] : memref<2x1024xf32, #tpu.memory_space<vmem>>, vector<2x1024xf32>
    tpu.vector_store %arg11[%c0_7, %c0_8], %5 {strides = array<i32>} : memref<2x1024xf32, #tpu.memory_space<vmem>>, vector<2x1024xf32>,
    %c0_i32 = arith.constant 0 : i32
    %c0_i32_9 = arith.constant 0 : i32
    %c0_i32_10 = arith.constant 0 : i32
    %c0_i32_11 = arith.constant 0 : i32
    %c0_i32_12 = arith.constant 0 : i32
    %7 = tpu.memref_slice %arg2[%c0_i32_10, %c0_i32_11, %c0_i32_12] : memref<100x64x1024xbf16, #tpu.memory_space<any>> -> memref<10x64x1024xbf16, #tpu.memory_space<any>>
    %c0_i32_13 = arith.constant 0 : i32
    %c0_i32_14 = arith.constant 0 : i32
    %c0_i32_15 = arith.constant 0 : i32
    %8 = tpu.memref_slice %arg7[%c0_i32, %c0_i32_13, %c0_i32_14, %c0_i32_15] : memref<2x10x64x1024xbf16, #tpu.memory_space<vmem>> -> memref<1x10x64x1024xbf16, #tpu.memory_space<vmem>>
    %9 = tpu.memref_squeeze %8 : memref<1x10x64x1024xbf16, #tpu.memory_space<vmem>> -> memref<10x64x1024xbf16, #tpu.memory_space<vmem>>
    %10 = tpu.memref_slice %arg8[%c0_i32_9] : memref<2x!tpu.dma_semaphore, #tpu.memory_space<semaphore_mem>> -> memref<1x!tpu.dma_semaphore, #tpu.memory_space<semaphore_mem>>
    %11 = tpu.memref_squeeze %10 : memref<1x!tpu.dma_semaphore, #tpu.memory_space<semaphore_mem>> -> memref<!tpu.dma_semaphore, #tpu.memory_space<semaphore_mem>>
    tpu.enqueue_dma source(%7 : memref<10x64x1024xbf16, #tpu.memory_space<any>>) target(%9 : memref<10x64x1024xbf16, #tpu.memory_space<vmem>>) target_semaphore(%11 : memref<!tpu.dma_semaphore, #tpu.memory_space<semaphore_mem>>)
    %c0_i32_16 = arith.constant 0 : i32
    %c10_i32 = arith.constant 10 : i32
    %12 = arith.addi %c0_i32_16, %c10_i32 : i32
    %c1_i32 = arith.constant 1 : i32
    scf.for %arg12 = %c0_i32_16 to %12 step %c1_i32  : i32 {
      %c2_i32 = arith.constant 2 : i32
      %24 = arith.remsi %arg12, %c2_i32 : i32
      %c1_i32_29 = arith.constant 1 : i32
      %25 = arith.addi %arg12, %c1_i32_29 : i32
      %c10_i32_30 = arith.constant 10 : i32
      %26 = arith.cmpi slt, %25, %c10_i32_30 : i32
      %27 = arith.extui %26 : i1 to i32
      %c0_i32_31 = arith.constant 0 : i32
      %28 = arith.cmpi ne, %27, %c0_i32_31 : i32
      scf.if %28 {
        %c1_i32_262 = arith.constant 1 : i32
        %415 = arith.addi %arg12, %c1_i32_262 : i32
        %c1_i32_263 = arith.constant 1 : i32
        %416 = arith.subi %c1_i32_263, %24 : i32
        %c10_i32_264 = arith.constant 10 : i32
        %417 = arith.muli %415, %c10_i32_264 : i32
        %c0_i32_265 = arith.constant 0 : i32
        %c0_i32_266 = arith.constant 0 : i32
        %418 = tpu.memref_slice %arg2[%417, %c0_i32_265, %c0_i32_266] : memref<100x64x1024xbf16, #tpu.memory_space<any>> -> memref<10x64x1024xbf16, #tpu.memory_space<any>>
        %c0_i32_267 = arith.constant 0 : i32
        %c0_i32_268 = arith.constant 0 : i32
        %c0_i32_269 = arith.constant 0 : i32
        %419 = tpu.memref_slice %arg7[%416, %c0_i32_267, %c0_i32_268, %c0_i32_269] : memref<2x10x64x1024xbf16, #tpu.memory_space<vmem>> -> memref<1x10x64x1024xbf16, #tpu.memory_space<vmem>>
        %420 = tpu.memref_squeeze %419 : memref<1x10x64x1024xbf16, #tpu.memory_space<vmem>> -> memref<10x64x1024xbf16, #tpu.memory_space<vmem>>
        %421 = tpu.memref_slice %arg8[%416] : memref<2x!tpu.dma_semaphore, #tpu.memory_space<semaphore_mem>> -> memref<1x!tpu.dma_semaphore, #tpu.memory_space<semaphore_mem>>
        %422 = tpu.memref_squeeze %421 : memref<1x!tpu.dma_semaphore, #tpu.memory_space<semaphore_mem>> -> memref<!tpu.dma_semaphore, #tpu.memory_space<semaphore_mem>>
        tpu.enqueue_dma source(%418 : memref<10x64x1024xbf16, #tpu.memory_space<any>>) target(%420 : memref<10x64x1024xbf16, #tpu.memory_space<vmem>>) target_semaphore(%422 : memref<!tpu.dma_semaphore, #tpu.memory_space<semaphore_mem>>)
      } else {
      }
      %c10_i32_32 = arith.constant 10 : i32
      %29 = arith.muli %arg12, %c10_i32_32 : i32
      %c0_i32_33 = arith.constant 0 : i32
      %c0_i32_34 = arith.constant 0 : i32
      %30 = tpu.memref_slice %arg2[%29, %c0_i32_33, %c0_i32_34] : memref<100x64x1024xbf16, #tpu.memory_space<any>> -> memref<10x64x1024xbf16, #tpu.memory_space<any>>
      %c0_i32_35 = arith.constant 0 : i32
      %c0_i32_36 = arith.constant 0 : i32
      %c0_i32_37 = arith.constant 0 : i32
      %31 = tpu.memref_slice %arg7[%24, %c0_i32_35, %c0_i32_36, %c0_i32_37] : memref<2x10x64x1024xbf16, #tpu.memory_space<vmem>> -> memref<1x10x64x1024xbf16, #tpu.memory_space<vmem>>
      %32 = tpu.memref_squeeze %31 : memref<1x10x64x1024xbf16, #tpu.memory_space<vmem>> -> memref<10x64x1024xbf16, #tpu.memory_space<vmem>>
      %33 = tpu.memref_slice %arg8[%24] : memref<2x!tpu.dma_semaphore, #tpu.memory_space<semaphore_mem>> -> memref<1x!tpu.dma_semaphore, #tpu.memory_space<semaphore_mem>>
      %34 = tpu.memref_squeeze %33 : memref<1x!tpu.dma_semaphore, #tpu.memory_space<semaphore_mem>> -> memref<!tpu.dma_semaphore, #tpu.memory_space<semaphore_mem>>
      tpu.wait_dma2 semaphore(%34 : memref<!tpu.dma_semaphore, #tpu.memory_space<semaphore_mem>>) src(%30 : memref<10x64x1024xbf16, #tpu.memory_space<any>>) dst(%32 : memref<10x64x1024xbf16, #tpu.memory_space<vmem>>)
      %c0_i32_38 = arith.constant 0 : i32
      %c10_i32_39 = arith.constant 10 : i32
      %35 = arith.muli %arg12, %c10_i32_39 : i32
      %36 = arith.addi %35, %c0_i32_38 : i32
      %37 = arith.index_cast %36 : i32 to index
      %c0_40 = arith.constant 0 : index
      %c0_41 = arith.constant 0 : index
      %38 = vector.load %arg0[%37, %c0_40, %c0_41] : memref<100x2x256xf32, #tpu.memory_space<vmem>>, vector<1x2x256xf32>
      %39 = vector.shape_cast %38 : vector<1x2x256xf32> to vector<2x256xf32>
      %c0_42 = arith.constant 0 : index
      %c0_43 = arith.constant 0 : index
      %40 = vector.load %arg9[%c0_42, %c0_43] : memref<2x64xf32, #tpu.memory_space<vmem>>, vector<2x64xf32>
      %cst_44 = arith.constant dense<0.000000e+00> : vector<2x256xf32>
      %41 = tpu.matmul %40, %0, %cst_44 {dimension_numbers = #tpu.dot_dimension_numbers<[1], [0], [0], [1], [0, 0, 1, 1], [], []>} : vector<2x64xf32>, vector<64x256xf32>, vector<2x256xf32> -> vector<2x256xf32>
      %42 = arith.addf %39, %41 : vector<2x256xf32>
      %43 = arith.negf %42 : vector<2x256xf32>
      %44 = math.exp %43 : vector<2x256xf32>
      %cst_45 = arith.constant 1.000000e+00 : f32
      %45 = vector.broadcast %cst_45 : f32 to vector<2x256xf32>
      %46 = arith.addf %45, %44 : vector<2x256xf32>
      %47 = arith.divf %45, %46 : vector<2x256xf32>
      %48 = vector.extract_strided_slice %47 {offsets = [0, 0], sizes = [2, 64], strides = [1, 1]} : vector<2x256xf32> to vector<2x64xf32>
      %49 = vector.extract_strided_slice %47 {offsets = [0, 64], sizes = [2, 64], strides = [1, 1]} : vector<2x256xf32> to vector<2x64xf32>
      %50 = vector.extract_strided_slice %47 {offsets = [0, 128], sizes = [2, 64], strides = [1, 1]} : vector<2x256xf32> to vector<2x64xf32>
      %cst_46 = arith.constant 2.000000e+00 : f32
      %51 = vector.broadcast %cst_46 : f32 to vector<2x64xf32>
      %52 = arith.mulf %51, %50 : vector<2x64xf32>
      %cst_47 = arith.constant 1.000000e+00 : f32
      %53 = vector.broadcast %cst_47 : f32 to vector<2x64xf32>
      %54 = arith.subf %52, %53 : vector<2x64xf32>
      %55 = vector.extract_strided_slice %47 {offsets = [0, 192], sizes = [2, 64], strides = [1, 1]} : vector<2x256xf32> to vector<2x64xf32>
      %c0_48 = arith.constant 0 : index
      %c0_49 = arith.constant 0 : index
      %56 = vector.load %arg10[%c0_48, %c0_49] : memref<2x64xf32, #tpu.memory_space<vmem>>, vector<2x64xf32>
      %57 = arith.mulf %49, %56 : vector<2x64xf32>
      %58 = arith.mulf %48, %54 : vector<2x64xf32>
      %59 = arith.addf %57, %58 : vector<2x64xf32>
      %60 = math.tanh %59 : vector<2x64xf32>
      %61 = arith.mulf %55, %60 : vector<2x64xf32>
      %c0_50 = arith.constant 0 : index
      %c0_51 = arith.constant 0 : index
      %62 = vector.load %arg10[%c0_50, %c0_51] : memref<2x64xf32, #tpu.memory_space<vmem>>, vector<2x64xf32>
      tpu.vector_store %arg10[%c0_50, %c0_51], %59 {strides = array<i32>} : memref<2x64xf32, #tpu.memory_space<vmem>>, vector<2x64xf32>,
      %c0_52 = arith.constant 0 : index
      %c0_53 = arith.constant 0 : index
      %63 = vector.load %arg9[%c0_52, %c0_53] : memref<2x64xf32, #tpu.memory_space<vmem>>, vector<2x64xf32>
      tpu.vector_store %arg9[%c0_52, %c0_53], %61 {strides = array<i32>} : memref<2x64xf32, #tpu.memory_space<vmem>>, vector<2x64xf32>,
      %c0_54 = arith.constant 0 : index
      %c0_55 = arith.constant 0 : index
      %64 = vector.load %arg11[%c0_54, %c0_55] : memref<2x1024xf32, #tpu.memory_space<vmem>>, vector<2x1024xf32>
      %65 = arith.truncf %61 : vector<2x64xf32> to vector<2x64xbf16>
      %66 = arith.index_cast %24 : i32 to index
      %67 = arith.index_cast %c0_i32_38 : i32 to index
      %c0_56 = arith.constant 0 : index
      %c0_57 = arith.constant 0 : index
      %68 = vector.load %arg7[%66, %67, %c0_56, %c0_57] : memref<2x10x64x1024xbf16, #tpu.memory_space<vmem>>, vector<1x1x64x1024xbf16>
      %69 = vector.shape_cast %68 : vector<1x1x64x1024xbf16> to vector<64x1024xbf16>
      %cst_58 = arith.constant dense<0.000000e+00> : vector<2x1024xf32>
      %70 = tpu.matmul %65, %69, %cst_58 {dimension_numbers = #tpu.dot_dimension_numbers<[1], [0], [0], [1], [0, 0, 1, 1], [], []>} : vector<2x64xbf16>, vector<64x1024xbf16>, vector<2x1024xf32> -> vector<2x1024xf32>
      %71 = arith.addf %64, %70 : vector<2x1024xf32>
      %c0_59 = arith.constant 0 : index
      %c0_60 = arith.constant 0 : index
      %72 = vector.load %arg11[%c0_59, %c0_60] : memref<2x1024xf32, #tpu.memory_space<vmem>>, vector<2x1024xf32>
      tpu.vector_store %arg11[%c0_59, %c0_60], %71 {strides = array<i32>} : memref<2x1024xf32, #tpu.memory_space<vmem>>, vector<2x1024xf32>,
      %c1_i32_61 = arith.constant 1 : i32
      %c10_i32_62 = arith.constant 10 : i32
      %73 = arith.muli %arg12, %c10_i32_62 : i32
      %74 = arith.addi %73, %c1_i32_61 : i32
      %75 = arith.index_cast %74 : i32 to index
      %c0_63 = arith.constant 0 : index
      %c0_64 = arith.constant 0 : index
      %76 = vector.load %arg0[%75, %c0_63, %c0_64] : memref<100x2x256xf32, #tpu.memory_space<vmem>>, vector<1x2x256xf32>
      %77 = vector.shape_cast %76 : vector<1x2x256xf32> to vector<2x256xf32>
      %c0_65 = arith.constant 0 : index
      %c0_66 = arith.constant 0 : index
      %78 = vector.load %arg9[%c0_65, %c0_66] : memref<2x64xf32, #tpu.memory_space<vmem>>, vector<2x64xf32>
      %cst_67 = arith.constant dense<0.000000e+00> : vector<2x256xf32>
      %79 = tpu.matmul %78, %0, %cst_67 {dimension_numbers = #tpu.dot_dimension_numbers<[1], [0], [0], [1], [0, 0, 1, 1], [], []>} : vector<2x64xf32>, vector<64x256xf32>, vector<2x256xf32> -> vector<2x256xf32>
      %80 = arith.addf %77, %79 : vector<2x256xf32>
      %81 = arith.negf %80 : vector<2x256xf32>
      %82 = math.exp %81 : vector<2x256xf32>
      %cst_68 = arith.constant 1.000000e+00 : f32
      %83 = vector.broadcast %cst_68 : f32 to vector<2x256xf32>
      %84 = arith.addf %83, %82 : vector<2x256xf32>
      %85 = arith.divf %83, %84 : vector<2x256xf32>
      %86 = vector.extract_strided_slice %85 {offsets = [0, 0], sizes = [2, 64], strides = [1, 1]} : vector<2x256xf32> to vector<2x64xf32>
      %87 = vector.extract_strided_slice %85 {offsets = [0, 64], sizes = [2, 64], strides = [1, 1]} : vector<2x256xf32> to vector<2x64xf32>
      %88 = vector.extract_strided_slice %85 {offsets = [0, 128], sizes = [2, 64], strides = [1, 1]} : vector<2x256xf32> to vector<2x64xf32>
      %cst_69 = arith.constant 2.000000e+00 : f32
      %89 = vector.broadcast %cst_69 : f32 to vector<2x64xf32>
      %90 = arith.mulf %89, %88 : vector<2x64xf32>
      %cst_70 = arith.constant 1.000000e+00 : f32
      %91 = vector.broadcast %cst_70 : f32 to vector<2x64xf32>
      %92 = arith.subf %90, %91 : vector<2x64xf32>
      %93 = vector.extract_strided_slice %85 {offsets = [0, 192], sizes = [2, 64], strides = [1, 1]} : vector<2x256xf32> to vector<2x64xf32>
      %c0_71 = arith.constant 0 : index
      %c0_72 = arith.constant 0 : index
      %94 = vector.load %arg10[%c0_71, %c0_72] : memref<2x64xf32, #tpu.memory_space<vmem>>, vector<2x64xf32>
      %95 = arith.mulf %87, %94 : vector<2x64xf32>
      %96 = arith.mulf %86, %92 : vector<2x64xf32>
      %97 = arith.addf %95, %96 : vector<2x64xf32>
      %98 = math.tanh %97 : vector<2x64xf32>
      %99 = arith.mulf %93, %98 : vector<2x64xf32>
      %c0_73 = arith.constant 0 : index
      %c0_74 = arith.constant 0 : index
      %100 = vector.load %arg10[%c0_73, %c0_74] : memref<2x64xf32, #tpu.memory_space<vmem>>, vector<2x64xf32>
      tpu.vector_store %arg10[%c0_73, %c0_74], %97 {strides = array<i32>} : memref<2x64xf32, #tpu.memory_space<vmem>>, vector<2x64xf32>,
      %c0_75 = arith.constant 0 : index
      %c0_76 = arith.constant 0 : index
      %101 = vector.load %arg9[%c0_75, %c0_76] : memref<2x64xf32, #tpu.memory_space<vmem>>, vector<2x64xf32>
      tpu.vector_store %arg9[%c0_75, %c0_76], %99 {strides = array<i32>} : memref<2x64xf32, #tpu.memory_space<vmem>>, vector<2x64xf32>,
      %c0_77 = arith.constant 0 : index
      %c0_78 = arith.constant 0 : index
      %102 = vector.load %arg11[%c0_77, %c0_78] : memref<2x1024xf32, #tpu.memory_space<vmem>>, vector<2x1024xf32>
      %103 = arith.truncf %99 : vector<2x64xf32> to vector<2x64xbf16>
      %104 = arith.index_cast %24 : i32 to index
      %105 = arith.index_cast %c1_i32_61 : i32 to index
      %c0_79 = arith.constant 0 : index
      %c0_80 = arith.constant 0 : index
      %106 = vector.load %arg7[%104, %105, %c0_79, %c0_80] : memref<2x10x64x1024xbf16, #tpu.memory_space<vmem>>, vector<1x1x64x1024xbf16>
      %107 = vector.shape_cast %106 : vector<1x1x64x1024xbf16> to vector<64x1024xbf16>
      %cst_81 = arith.constant dense<0.000000e+00> : vector<2x1024xf32>
      %108 = tpu.matmul %103, %107, %cst_81 {dimension_numbers = #tpu.dot_dimension_numbers<[1], [0], [0], [1], [0, 0, 1, 1], [], []>} : vector<2x64xbf16>, vector<64x1024xbf16>, vector<2x1024xf32> -> vector<2x1024xf32>
      %109 = arith.addf %102, %108 : vector<2x1024xf32>
      %c0_82 = arith.constant 0 : index
      %c0_83 = arith.constant 0 : index
      %110 = vector.load %arg11[%c0_82, %c0_83] : memref<2x1024xf32, #tpu.memory_space<vmem>>, vector<2x1024xf32>
      tpu.vector_store %arg11[%c0_82, %c0_83], %109 {strides = array<i32>} : memref<2x1024xf32, #tpu.memory_space<vmem>>, vector<2x1024xf32>,
      %c2_i32_84 = arith.constant 2 : i32
      %c10_i32_85 = arith.constant 10 : i32
      %111 = arith.muli %arg12, %c10_i32_85 : i32
      %112 = arith.addi %111, %c2_i32_84 : i32
      %113 = arith.index_cast %112 : i32 to index
      %c0_86 = arith.constant 0 : index
      %c0_87 = arith.constant 0 : index
      %114 = vector.load %arg0[%113, %c0_86, %c0_87] : memref<100x2x256xf32, #tpu.memory_space<vmem>>, vector<1x2x256xf32>
      %115 = vector.shape_cast %114 : vector<1x2x256xf32> to vector<2x256xf32>
      %c0_88 = arith.constant 0 : index
      %c0_89 = arith.constant 0 : index
      %116 = vector.load %arg9[%c0_88, %c0_89] : memref<2x64xf32, #tpu.memory_space<vmem>>, vector<2x64xf32>
      %cst_90 = arith.constant dense<0.000000e+00> : vector<2x256xf32>
      %117 = tpu.matmul %116, %0, %cst_90 {dimension_numbers = #tpu.dot_dimension_numbers<[1], [0], [0], [1], [0, 0, 1, 1], [], []>} : vector<2x64xf32>, vector<64x256xf32>, vector<2x256xf32> -> vector<2x256xf32>
      %118 = arith.addf %115, %117 : vector<2x256xf32>
      %119 = arith.negf %118 : vector<2x256xf32>
      %120 = math.exp %119 : vector<2x256xf32>
      %cst_91 = arith.constant 1.000000e+00 : f32
      %121 = vector.broadcast %cst_91 : f32 to vector<2x256xf32>
      %122 = arith.addf %121, %120 : vector<2x256xf32>
      %123 = arith.divf %121, %122 : vector<2x256xf32>
      %124 = vector.extract_strided_slice %123 {offsets = [0, 0], sizes = [2, 64], strides = [1, 1]} : vector<2x256xf32> to vector<2x64xf32>
      %125 = vector.extract_strided_slice %123 {offsets = [0, 64], sizes = [2, 64], strides = [1, 1]} : vector<2x256xf32> to vector<2x64xf32>
      %126 = vector.extract_strided_slice %123 {offsets = [0, 128], sizes = [2, 64], strides = [1, 1]} : vector<2x256xf32> to vector<2x64xf32>
      %cst_92 = arith.constant 2.000000e+00 : f32
      %127 = vector.broadcast %cst_92 : f32 to vector<2x64xf32>
      %128 = arith.mulf %127, %126 : vector<2x64xf32>
      %cst_93 = arith.constant 1.000000e+00 : f32
      %129 = vector.broadcast %cst_93 : f32 to vector<2x64xf32>
      %130 = arith.subf %128, %129 : vector<2x64xf32>
      %131 = vector.extract_strided_slice %123 {offsets = [0, 192], sizes = [2, 64], strides = [1, 1]} : vector<2x256xf32> to vector<2x64xf32>
      %c0_94 = arith.constant 0 : index
      %c0_95 = arith.constant 0 : index
      %132 = vector.load %arg10[%c0_94, %c0_95] : memref<2x64xf32, #tpu.memory_space<vmem>>, vector<2x64xf32>
      %133 = arith.mulf %125, %132 : vector<2x64xf32>
      %134 = arith.mulf %124, %130 : vector<2x64xf32>
      %135 = arith.addf %133, %134 : vector<2x64xf32>
      %136 = math.tanh %135 : vector<2x64xf32>
      %137 = arith.mulf %131, %136 : vector<2x64xf32>
      %c0_96 = arith.constant 0 : index
      %c0_97 = arith.constant 0 : index
      %138 = vector.load %arg10[%c0_96, %c0_97] : memref<2x64xf32, #tpu.memory_space<vmem>>, vector<2x64xf32>
      tpu.vector_store %arg10[%c0_96, %c0_97], %135 {strides = array<i32>} : memref<2x64xf32, #tpu.memory_space<vmem>>, vector<2x64xf32>,
      %c0_98 = arith.constant 0 : index
      %c0_99 = arith.constant 0 : index
      %139 = vector.load %arg9[%c0_98, %c0_99] : memref<2x64xf32, #tpu.memory_space<vmem>>, vector<2x64xf32>
      tpu.vector_store %arg9[%c0_98, %c0_99], %137 {strides = array<i32>} : memref<2x64xf32, #tpu.memory_space<vmem>>, vector<2x64xf32>,
      %c0_100 = arith.constant 0 : index
      %c0_101 = arith.constant 0 : index
      %140 = vector.load %arg11[%c0_100, %c0_101] : memref<2x1024xf32, #tpu.memory_space<vmem>>, vector<2x1024xf32>
      %141 = arith.truncf %137 : vector<2x64xf32> to vector<2x64xbf16>
      %142 = arith.index_cast %24 : i32 to index
      %143 = arith.index_cast %c2_i32_84 : i32 to index
      %c0_102 = arith.constant 0 : index
      %c0_103 = arith.constant 0 : index
      %144 = vector.load %arg7[%142, %143, %c0_102, %c0_103] : memref<2x10x64x1024xbf16, #tpu.memory_space<vmem>>, vector<1x1x64x1024xbf16>
      %145 = vector.shape_cast %144 : vector<1x1x64x1024xbf16> to vector<64x1024xbf16>
      %cst_104 = arith.constant dense<0.000000e+00> : vector<2x1024xf32>
      %146 = tpu.matmul %141, %145, %cst_104 {dimension_numbers = #tpu.dot_dimension_numbers<[1], [0], [0], [1], [0, 0, 1, 1], [], []>} : vector<2x64xbf16>, vector<64x1024xbf16>, vector<2x1024xf32> -> vector<2x1024xf32>
      %147 = arith.addf %140, %146 : vector<2x1024xf32>
      %c0_105 = arith.constant 0 : index
      %c0_106 = arith.constant 0 : index
      %148 = vector.load %arg11[%c0_105, %c0_106] : memref<2x1024xf32, #tpu.memory_space<vmem>>, vector<2x1024xf32>
      tpu.vector_store %arg11[%c0_105, %c0_106], %147 {strides = array<i32>} : memref<2x1024xf32, #tpu.memory_space<vmem>>, vector<2x1024xf32>,
      %c3_i32 = arith.constant 3 : i32
      %c10_i32_107 = arith.constant 10 : i32
      %149 = arith.muli %arg12, %c10_i32_107 : i32
      %150 = arith.addi %149, %c3_i32 : i32
      %151 = arith.index_cast %150 : i32 to index
      %c0_108 = arith.constant 0 : index
      %c0_109 = arith.constant 0 : index
      %152 = vector.load %arg0[%151, %c0_108, %c0_109] : memref<100x2x256xf32, #tpu.memory_space<vmem>>, vector<1x2x256xf32>
      %153 = vector.shape_cast %152 : vector<1x2x256xf32> to vector<2x256xf32>
      %c0_110 = arith.constant 0 : index
      %c0_111 = arith.constant 0 : index
      %154 = vector.load %arg9[%c0_110, %c0_111] : memref<2x64xf32, #tpu.memory_space<vmem>>, vector<2x64xf32>
      %cst_112 = arith.constant dense<0.000000e+00> : vector<2x256xf32>
      %155 = tpu.matmul %154, %0, %cst_112 {dimension_numbers = #tpu.dot_dimension_numbers<[1], [0], [0], [1], [0, 0, 1, 1], [], []>} : vector<2x64xf32>, vector<64x256xf32>, vector<2x256xf32> -> vector<2x256xf32>
      %156 = arith.addf %153, %155 : vector<2x256xf32>
      %157 = arith.negf %156 : vector<2x256xf32>
      %158 = math.exp %157 : vector<2x256xf32>
      %cst_113 = arith.constant 1.000000e+00 : f32
      %159 = vector.broadcast %cst_113 : f32 to vector<2x256xf32>
      %160 = arith.addf %159, %158 : vector<2x256xf32>
      %161 = arith.divf %159, %160 : vector<2x256xf32>
      %162 = vector.extract_strided_slice %161 {offsets = [0, 0], sizes = [2, 64], strides = [1, 1]} : vector<2x256xf32> to vector<2x64xf32>
      %163 = vector.extract_strided_slice %161 {offsets = [0, 64], sizes = [2, 64], strides = [1, 1]} : vector<2x256xf32> to vector<2x64xf32>
      %164 = vector.extract_strided_slice %161 {offsets = [0, 128], sizes = [2, 64], strides = [1, 1]} : vector<2x256xf32> to vector<2x64xf32>
      %cst_114 = arith.constant 2.000000e+00 : f32
      %165 = vector.broadcast %cst_114 : f32 to vector<2x64xf32>
      %166 = arith.mulf %165, %164 : vector<2x64xf32>
      %cst_115 = arith.constant 1.000000e+00 : f32
      %167 = vector.broadcast %cst_115 : f32 to vector<2x64xf32>
      %168 = arith.subf %166, %167 : vector<2x64xf32>
      %169 = vector.extract_strided_slice %161 {offsets = [0, 192], sizes = [2, 64], strides = [1, 1]} : vector<2x256xf32> to vector<2x64xf32>
      %c0_116 = arith.constant 0 : index
      %c0_117 = arith.constant 0 : index
      %170 = vector.load %arg10[%c0_116, %c0_117] : memref<2x64xf32, #tpu.memory_space<vmem>>, vector<2x64xf32>
      %171 = arith.mulf %163, %170 : vector<2x64xf32>
      %172 = arith.mulf %162, %168 : vector<2x64xf32>
      %173 = arith.addf %171, %172 : vector<2x64xf32>
      %174 = math.tanh %173 : vector<2x64xf32>
      %175 = arith.mulf %169, %174 : vector<2x64xf32>
      %c0_118 = arith.constant 0 : index
      %c0_119 = arith.constant 0 : index
      %176 = vector.load %arg10[%c0_118, %c0_119] : memref<2x64xf32, #tpu.memory_space<vmem>>, vector<2x64xf32>
      tpu.vector_store %arg10[%c0_118, %c0_119], %173 {strides = array<i32>} : memref<2x64xf32, #tpu.memory_space<vmem>>, vector<2x64xf32>,
      %c0_120 = arith.constant 0 : index
      %c0_121 = arith.constant 0 : index
      %177 = vector.load %arg9[%c0_120, %c0_121] : memref<2x64xf32, #tpu.memory_space<vmem>>, vector<2x64xf32>
      tpu.vector_store %arg9[%c0_120, %c0_121], %175 {strides = array<i32>} : memref<2x64xf32, #tpu.memory_space<vmem>>, vector<2x64xf32>,
      %c0_122 = arith.constant 0 : index
      %c0_123 = arith.constant 0 : index
      %178 = vector.load %arg11[%c0_122, %c0_123] : memref<2x1024xf32, #tpu.memory_space<vmem>>, vector<2x1024xf32>
      %179 = arith.truncf %175 : vector<2x64xf32> to vector<2x64xbf16>
      %180 = arith.index_cast %24 : i32 to index
      %181 = arith.index_cast %c3_i32 : i32 to index
      %c0_124 = arith.constant 0 : index
      %c0_125 = arith.constant 0 : index
      %182 = vector.load %arg7[%180, %181, %c0_124, %c0_125] : memref<2x10x64x1024xbf16, #tpu.memory_space<vmem>>, vector<1x1x64x1024xbf16>
      %183 = vector.shape_cast %182 : vector<1x1x64x1024xbf16> to vector<64x1024xbf16>
      %cst_126 = arith.constant dense<0.000000e+00> : vector<2x1024xf32>
      %184 = tpu.matmul %179, %183, %cst_126 {dimension_numbers = #tpu.dot_dimension_numbers<[1], [0], [0], [1], [0, 0, 1, 1], [], []>} : vector<2x64xbf16>, vector<64x1024xbf16>, vector<2x1024xf32> -> vector<2x1024xf32>
      %185 = arith.addf %178, %184 : vector<2x1024xf32>
      %c0_127 = arith.constant 0 : index
      %c0_128 = arith.constant 0 : index
      %186 = vector.load %arg11[%c0_127, %c0_128] : memref<2x1024xf32, #tpu.memory_space<vmem>>, vector<2x1024xf32>
      tpu.vector_store %arg11[%c0_127, %c0_128], %185 {strides = array<i32>} : memref<2x1024xf32, #tpu.memory_space<vmem>>, vector<2x1024xf32>,
      %c4_i32 = arith.constant 4 : i32
      %c10_i32_129 = arith.constant 10 : i32
      %187 = arith.muli %arg12, %c10_i32_129 : i32
      %188 = arith.addi %187, %c4_i32 : i32
      %189 = arith.index_cast %188 : i32 to index
      %c0_130 = arith.constant 0 : index
      %c0_131 = arith.constant 0 : index
      %190 = vector.load %arg0[%189, %c0_130, %c0_131] : memref<100x2x256xf32, #tpu.memory_space<vmem>>, vector<1x2x256xf32>
      %191 = vector.shape_cast %190 : vector<1x2x256xf32> to vector<2x256xf32>
      %c0_132 = arith.constant 0 : index
      %c0_133 = arith.constant 0 : index
      %192 = vector.load %arg9[%c0_132, %c0_133] : memref<2x64xf32, #tpu.memory_space<vmem>>, vector<2x64xf32>
      %cst_134 = arith.constant dense<0.000000e+00> : vector<2x256xf32>
      %193 = tpu.matmul %192, %0, %cst_134 {dimension_numbers = #tpu.dot_dimension_numbers<[1], [0], [0], [1], [0, 0, 1, 1], [], []>} : vector<2x64xf32>, vector<64x256xf32>, vector<2x256xf32> -> vector<2x256xf32>
      %194 = arith.addf %191, %193 : vector<2x256xf32>
      %195 = arith.negf %194 : vector<2x256xf32>
      %196 = math.exp %195 : vector<2x256xf32>
      %cst_135 = arith.constant 1.000000e+00 : f32
      %197 = vector.broadcast %cst_135 : f32 to vector<2x256xf32>
      %198 = arith.addf %197, %196 : vector<2x256xf32>
      %199 = arith.divf %197, %198 : vector<2x256xf32>
      %200 = vector.extract_strided_slice %199 {offsets = [0, 0], sizes = [2, 64], strides = [1, 1]} : vector<2x256xf32> to vector<2x64xf32>
      %201 = vector.extract_strided_slice %199 {offsets = [0, 64], sizes = [2, 64], strides = [1, 1]} : vector<2x256xf32> to vector<2x64xf32>
      %202 = vector.extract_strided_slice %199 {offsets = [0, 128], sizes = [2, 64], strides = [1, 1]} : vector<2x256xf32> to vector<2x64xf32>
      %cst_136 = arith.constant 2.000000e+00 : f32
      %203 = vector.broadcast %cst_136 : f32 to vector<2x64xf32>
      %204 = arith.mulf %203, %202 : vector<2x64xf32>
      %cst_137 = arith.constant 1.000000e+00 : f32
      %205 = vector.broadcast %cst_137 : f32 to vector<2x64xf32>
      %206 = arith.subf %204, %205 : vector<2x64xf32>
      %207 = vector.extract_strided_slice %199 {offsets = [0, 192], sizes = [2, 64], strides = [1, 1]} : vector<2x256xf32> to vector<2x64xf32>
      %c0_138 = arith.constant 0 : index
      %c0_139 = arith.constant 0 : index
      %208 = vector.load %arg10[%c0_138, %c0_139] : memref<2x64xf32, #tpu.memory_space<vmem>>, vector<2x64xf32>
      %209 = arith.mulf %201, %208 : vector<2x64xf32>
      %210 = arith.mulf %200, %206 : vector<2x64xf32>
      %211 = arith.addf %209, %210 : vector<2x64xf32>
      %212 = math.tanh %211 : vector<2x64xf32>
      %213 = arith.mulf %207, %212 : vector<2x64xf32>
      %c0_140 = arith.constant 0 : index
      %c0_141 = arith.constant 0 : index
      %214 = vector.load %arg10[%c0_140, %c0_141] : memref<2x64xf32, #tpu.memory_space<vmem>>, vector<2x64xf32>
      tpu.vector_store %arg10[%c0_140, %c0_141], %211 {strides = array<i32>} : memref<2x64xf32, #tpu.memory_space<vmem>>, vector<2x64xf32>,
      %c0_142 = arith.constant 0 : index
      %c0_143 = arith.constant 0 : index
      %215 = vector.load %arg9[%c0_142, %c0_143] : memref<2x64xf32, #tpu.memory_space<vmem>>, vector<2x64xf32>
      tpu.vector_store %arg9[%c0_142, %c0_143], %213 {strides = array<i32>} : memref<2x64xf32, #tpu.memory_space<vmem>>, vector<2x64xf32>,
      %c0_144 = arith.constant 0 : index
      %c0_145 = arith.constant 0 : index
      %216 = vector.load %arg11[%c0_144, %c0_145] : memref<2x1024xf32, #tpu.memory_space<vmem>>, vector<2x1024xf32>
      %217 = arith.truncf %213 : vector<2x64xf32> to vector<2x64xbf16>
      %218 = arith.index_cast %24 : i32 to index
      %219 = arith.index_cast %c4_i32 : i32 to index
      %c0_146 = arith.constant 0 : index
      %c0_147 = arith.constant 0 : index
      %220 = vector.load %arg7[%218, %219, %c0_146, %c0_147] : memref<2x10x64x1024xbf16, #tpu.memory_space<vmem>>, vector<1x1x64x1024xbf16>
      %221 = vector.shape_cast %220 : vector<1x1x64x1024xbf16> to vector<64x1024xbf16>
      %cst_148 = arith.constant dense<0.000000e+00> : vector<2x1024xf32>
      %222 = tpu.matmul %217, %221, %cst_148 {dimension_numbers = #tpu.dot_dimension_numbers<[1], [0], [0], [1], [0, 0, 1, 1], [], []>} : vector<2x64xbf16>, vector<64x1024xbf16>, vector<2x1024xf32> -> vector<2x1024xf32>
      %223 = arith.addf %216, %222 : vector<2x1024xf32>
      %c0_149 = arith.constant 0 : index
      %c0_150 = arith.constant 0 : index
      %224 = vector.load %arg11[%c0_149, %c0_150] : memref<2x1024xf32, #tpu.memory_space<vmem>>, vector<2x1024xf32>
      tpu.vector_store %arg11[%c0_149, %c0_150], %223 {strides = array<i32>} : memref<2x1024xf32, #tpu.memory_space<vmem>>, vector<2x1024xf32>,
      %c5_i32 = arith.constant 5 : i32
      %c10_i32_151 = arith.constant 10 : i32
      %225 = arith.muli %arg12, %c10_i32_151 : i32
      %226 = arith.addi %225, %c5_i32 : i32
      %227 = arith.index_cast %226 : i32 to index
      %c0_152 = arith.constant 0 : index
      %c0_153 = arith.constant 0 : index
      %228 = vector.load %arg0[%227, %c0_152, %c0_153] : memref<100x2x256xf32, #tpu.memory_space<vmem>>, vector<1x2x256xf32>
      %229 = vector.shape_cast %228 : vector<1x2x256xf32> to vector<2x256xf32>
      %c0_154 = arith.constant 0 : index
      %c0_155 = arith.constant 0 : index
      %230 = vector.load %arg9[%c0_154, %c0_155] : memref<2x64xf32, #tpu.memory_space<vmem>>, vector<2x64xf32>
      %cst_156 = arith.constant dense<0.000000e+00> : vector<2x256xf32>
      %231 = tpu.matmul %230, %0, %cst_156 {dimension_numbers = #tpu.dot_dimension_numbers<[1], [0], [0], [1], [0, 0, 1, 1], [], []>} : vector<2x64xf32>, vector<64x256xf32>, vector<2x256xf32> -> vector<2x256xf32>
      %232 = arith.addf %229, %231 : vector<2x256xf32>
      %233 = arith.negf %232 : vector<2x256xf32>
      %234 = math.exp %233 : vector<2x256xf32>
      %cst_157 = arith.constant 1.000000e+00 : f32
      %235 = vector.broadcast %cst_157 : f32 to vector<2x256xf32>
      %236 = arith.addf %235, %234 : vector<2x256xf32>
      %237 = arith.divf %235, %236 : vector<2x256xf32>
      %238 = vector.extract_strided_slice %237 {offsets = [0, 0], sizes = [2, 64], strides = [1, 1]} : vector<2x256xf32> to vector<2x64xf32>
      %239 = vector.extract_strided_slice %237 {offsets = [0, 64], sizes = [2, 64], strides = [1, 1]} : vector<2x256xf32> to vector<2x64xf32>
      %240 = vector.extract_strided_slice %237 {offsets = [0, 128], sizes = [2, 64], strides = [1, 1]} : vector<2x256xf32> to vector<2x64xf32>
      %cst_158 = arith.constant 2.000000e+00 : f32
      %241 = vector.broadcast %cst_158 : f32 to vector<2x64xf32>
      %242 = arith.mulf %241, %240 : vector<2x64xf32>
      %cst_159 = arith.constant 1.000000e+00 : f32
      %243 = vector.broadcast %cst_159 : f32 to vector<2x64xf32>
      %244 = arith.subf %242, %243 : vector<2x64xf32>
      %245 = vector.extract_strided_slice %237 {offsets = [0, 192], sizes = [2, 64], strides = [1, 1]} : vector<2x256xf32> to vector<2x64xf32>
      %c0_160 = arith.constant 0 : index
      %c0_161 = arith.constant 0 : index
      %246 = vector.load %arg10[%c0_160, %c0_161] : memref<2x64xf32, #tpu.memory_space<vmem>>, vector<2x64xf32>
      %247 = arith.mulf %239, %246 : vector<2x64xf32>
      %248 = arith.mulf %238, %244 : vector<2x64xf32>
      %249 = arith.addf %247, %248 : vector<2x64xf32>
      %250 = math.tanh %249 : vector<2x64xf32>
      %251 = arith.mulf %245, %250 : vector<2x64xf32>
      %c0_162 = arith.constant 0 : index
      %c0_163 = arith.constant 0 : index
      %252 = vector.load %arg10[%c0_162, %c0_163] : memref<2x64xf32, #tpu.memory_space<vmem>>, vector<2x64xf32>
      tpu.vector_store %arg10[%c0_162, %c0_163], %249 {strides = array<i32>} : memref<2x64xf32, #tpu.memory_space<vmem>>, vector<2x64xf32>,
      %c0_164 = arith.constant 0 : index
      %c0_165 = arith.constant 0 : index
      %253 = vector.load %arg9[%c0_164, %c0_165] : memref<2x64xf32, #tpu.memory_space<vmem>>, vector<2x64xf32>
      tpu.vector_store %arg9[%c0_164, %c0_165], %251 {strides = array<i32>} : memref<2x64xf32, #tpu.memory_space<vmem>>, vector<2x64xf32>,
      %c0_166 = arith.constant 0 : index
      %c0_167 = arith.constant 0 : index
      %254 = vector.load %arg11[%c0_166, %c0_167] : memref<2x1024xf32, #tpu.memory_space<vmem>>, vector<2x1024xf32>
      %255 = arith.truncf %251 : vector<2x64xf32> to vector<2x64xbf16>
      %256 = arith.index_cast %24 : i32 to index
      %257 = arith.index_cast %c5_i32 : i32 to index
      %c0_168 = arith.constant 0 : index
      %c0_169 = arith.constant 0 : index
      %258 = vector.load %arg7[%256, %257, %c0_168, %c0_169] : memref<2x10x64x1024xbf16, #tpu.memory_space<vmem>>, vector<1x1x64x1024xbf16>
      %259 = vector.shape_cast %258 : vector<1x1x64x1024xbf16> to vector<64x1024xbf16>
      %cst_170 = arith.constant dense<0.000000e+00> : vector<2x1024xf32>
      %260 = tpu.matmul %255, %259, %cst_170 {dimension_numbers = #tpu.dot_dimension_numbers<[1], [0], [0], [1], [0, 0, 1, 1], [], []>} : vector<2x64xbf16>, vector<64x1024xbf16>, vector<2x1024xf32> -> vector<2x1024xf32>
      %261 = arith.addf %254, %260 : vector<2x1024xf32>
      %c0_171 = arith.constant 0 : index
      %c0_172 = arith.constant 0 : index
      %262 = vector.load %arg11[%c0_171, %c0_172] : memref<2x1024xf32, #tpu.memory_space<vmem>>, vector<2x1024xf32>
      tpu.vector_store %arg11[%c0_171, %c0_172], %261 {strides = array<i32>} : memref<2x1024xf32, #tpu.memory_space<vmem>>, vector<2x1024xf32>,
      %c6_i32 = arith.constant 6 : i32
      %c10_i32_173 = arith.constant 10 : i32
      %263 = arith.muli %arg12, %c10_i32_173 : i32
      %264 = arith.addi %263, %c6_i32 : i32
      %265 = arith.index_cast %264 : i32 to index
      %c0_174 = arith.constant 0 : index
      %c0_175 = arith.constant 0 : index
      %266 = vector.load %arg0[%265, %c0_174, %c0_175] : memref<100x2x256xf32, #tpu.memory_space<vmem>>, vector<1x2x256xf32>
      %267 = vector.shape_cast %266 : vector<1x2x256xf32> to vector<2x256xf32>
      %c0_176 = arith.constant 0 : index
      %c0_177 = arith.constant 0 : index
      %268 = vector.load %arg9[%c0_176, %c0_177] : memref<2x64xf32, #tpu.memory_space<vmem>>, vector<2x64xf32>
      %cst_178 = arith.constant dense<0.000000e+00> : vector<2x256xf32>
      %269 = tpu.matmul %268, %0, %cst_178 {dimension_numbers = #tpu.dot_dimension_numbers<[1], [0], [0], [1], [0, 0, 1, 1], [], []>} : vector<2x64xf32>, vector<64x256xf32>, vector<2x256xf32> -> vector<2x256xf32>
      %270 = arith.addf %267, %269 : vector<2x256xf32>
      %271 = arith.negf %270 : vector<2x256xf32>
      %272 = math.exp %271 : vector<2x256xf32>
      %cst_179 = arith.constant 1.000000e+00 : f32
      %273 = vector.broadcast %cst_179 : f32 to vector<2x256xf32>
      %274 = arith.addf %273, %272 : vector<2x256xf32>
      %275 = arith.divf %273, %274 : vector<2x256xf32>
      %276 = vector.extract_strided_slice %275 {offsets = [0, 0], sizes = [2, 64], strides = [1, 1]} : vector<2x256xf32> to vector<2x64xf32>
      %277 = vector.extract_strided_slice %275 {offsets = [0, 64], sizes = [2, 64], strides = [1, 1]} : vector<2x256xf32> to vector<2x64xf32>
      %278 = vector.extract_strided_slice %275 {offsets = [0, 128], sizes = [2, 64], strides = [1, 1]} : vector<2x256xf32> to vector<2x64xf32>
      %cst_180 = arith.constant 2.000000e+00 : f32
      %279 = vector.broadcast %cst_180 : f32 to vector<2x64xf32>
      %280 = arith.mulf %279, %278 : vector<2x64xf32>
      %cst_181 = arith.constant 1.000000e+00 : f32
      %281 = vector.broadcast %cst_181 : f32 to vector<2x64xf32>
      %282 = arith.subf %280, %281 : vector<2x64xf32>
      %283 = vector.extract_strided_slice %275 {offsets = [0, 192], sizes = [2, 64], strides = [1, 1]} : vector<2x256xf32> to vector<2x64xf32>
      %c0_182 = arith.constant 0 : index
      %c0_183 = arith.constant 0 : index
      %284 = vector.load %arg10[%c0_182, %c0_183] : memref<2x64xf32, #tpu.memory_space<vmem>>, vector<2x64xf32>
      %285 = arith.mulf %277, %284 : vector<2x64xf32>
      %286 = arith.mulf %276, %282 : vector<2x64xf32>
      %287 = arith.addf %285, %286 : vector<2x64xf32>
      %288 = math.tanh %287 : vector<2x64xf32>
      %289 = arith.mulf %283, %288 : vector<2x64xf32>
      %c0_184 = arith.constant 0 : index
      %c0_185 = arith.constant 0 : index
      %290 = vector.load %arg10[%c0_184, %c0_185] : memref<2x64xf32, #tpu.memory_space<vmem>>, vector<2x64xf32>
      tpu.vector_store %arg10[%c0_184, %c0_185], %287 {strides = array<i32>} : memref<2x64xf32, #tpu.memory_space<vmem>>, vector<2x64xf32>,
      %c0_186 = arith.constant 0 : index
      %c0_187 = arith.constant 0 : index
      %291 = vector.load %arg9[%c0_186, %c0_187] : memref<2x64xf32, #tpu.memory_space<vmem>>, vector<2x64xf32>
      tpu.vector_store %arg9[%c0_186, %c0_187], %289 {strides = array<i32>} : memref<2x64xf32, #tpu.memory_space<vmem>>, vector<2x64xf32>,
      %c0_188 = arith.constant 0 : index
      %c0_189 = arith.constant 0 : index
      %292 = vector.load %arg11[%c0_188, %c0_189] : memref<2x1024xf32, #tpu.memory_space<vmem>>, vector<2x1024xf32>
      %293 = arith.truncf %289 : vector<2x64xf32> to vector<2x64xbf16>
      %294 = arith.index_cast %24 : i32 to index
      %295 = arith.index_cast %c6_i32 : i32 to index
      %c0_190 = arith.constant 0 : index
      %c0_191 = arith.constant 0 : index
      %296 = vector.load %arg7[%294, %295, %c0_190, %c0_191] : memref<2x10x64x1024xbf16, #tpu.memory_space<vmem>>, vector<1x1x64x1024xbf16>
      %297 = vector.shape_cast %296 : vector<1x1x64x1024xbf16> to vector<64x1024xbf16>
      %cst_192 = arith.constant dense<0.000000e+00> : vector<2x1024xf32>
      %298 = tpu.matmul %293, %297, %cst_192 {dimension_numbers = #tpu.dot_dimension_numbers<[1], [0], [0], [1], [0, 0, 1, 1], [], []>} : vector<2x64xbf16>, vector<64x1024xbf16>, vector<2x1024xf32> -> vector<2x1024xf32>
      %299 = arith.addf %292, %298 : vector<2x1024xf32>
      %c0_193 = arith.constant 0 : index
      %c0_194 = arith.constant 0 : index
      %300 = vector.load %arg11[%c0_193, %c0_194] : memref<2x1024xf32, #tpu.memory_space<vmem>>, vector<2x1024xf32>
      tpu.vector_store %arg11[%c0_193, %c0_194], %299 {strides = array<i32>} : memref<2x1024xf32, #tpu.memory_space<vmem>>, vector<2x1024xf32>,
      %c7_i32 = arith.constant 7 : i32
      %c10_i32_195 = arith.constant 10 : i32
      %301 = arith.muli %arg12, %c10_i32_195 : i32
      %302 = arith.addi %301, %c7_i32 : i32
      %303 = arith.index_cast %302 : i32 to index
      %c0_196 = arith.constant 0 : index
      %c0_197 = arith.constant 0 : index
      %304 = vector.load %arg0[%303, %c0_196, %c0_197] : memref<100x2x256xf32, #tpu.memory_space<vmem>>, vector<1x2x256xf32>
      %305 = vector.shape_cast %304 : vector<1x2x256xf32> to vector<2x256xf32>
      %c0_198 = arith.constant 0 : index
      %c0_199 = arith.constant 0 : index
      %306 = vector.load %arg9[%c0_198, %c0_199] : memref<2x64xf32, #tpu.memory_space<vmem>>, vector<2x64xf32>
      %cst_200 = arith.constant dense<0.000000e+00> : vector<2x256xf32>
      %307 = tpu.matmul %306, %0, %cst_200 {dimension_numbers = #tpu.dot_dimension_numbers<[1], [0], [0], [1], [0, 0, 1, 1], [], []>} : vector<2x64xf32>, vector<64x256xf32>, vector<2x256xf32> -> vector<2x256xf32>
      %308 = arith.addf %305, %307 : vector<2x256xf32>
      %309 = arith.negf %308 : vector<2x256xf32>
      %310 = math.exp %309 : vector<2x256xf32>
      %cst_201 = arith.constant 1.000000e+00 : f32
      %311 = vector.broadcast %cst_201 : f32 to vector<2x256xf32>
      %312 = arith.addf %311, %310 : vector<2x256xf32>
      %313 = arith.divf %311, %312 : vector<2x256xf32>
      %314 = vector.extract_strided_slice %313 {offsets = [0, 0], sizes = [2, 64], strides = [1, 1]} : vector<2x256xf32> to vector<2x64xf32>
      %315 = vector.extract_strided_slice %313 {offsets = [0, 64], sizes = [2, 64], strides = [1, 1]} : vector<2x256xf32> to vector<2x64xf32>
      %316 = vector.extract_strided_slice %313 {offsets = [0, 128], sizes = [2, 64], strides = [1, 1]} : vector<2x256xf32> to vector<2x64xf32>
      %cst_202 = arith.constant 2.000000e+00 : f32
      %317 = vector.broadcast %cst_202 : f32 to vector<2x64xf32>
      %318 = arith.mulf %317, %316 : vector<2x64xf32>
      %cst_203 = arith.constant 1.000000e+00 : f32
      %319 = vector.broadcast %cst_203 : f32 to vector<2x64xf32>
      %320 = arith.subf %318, %319 : vector<2x64xf32>
      %321 = vector.extract_strided_slice %313 {offsets = [0, 192], sizes = [2, 64], strides = [1, 1]} : vector<2x256xf32> to vector<2x64xf32>
      %c0_204 = arith.constant 0 : index
      %c0_205 = arith.constant 0 : index
      %322 = vector.load %arg10[%c0_204, %c0_205] : memref<2x64xf32, #tpu.memory_space<vmem>>, vector<2x64xf32>
      %323 = arith.mulf %315, %322 : vector<2x64xf32>
      %324 = arith.mulf %314, %320 : vector<2x64xf32>
      %325 = arith.addf %323, %324 : vector<2x64xf32>
      %326 = math.tanh %325 : vector<2x64xf32>
      %327 = arith.mulf %321, %326 : vector<2x64xf32>
      %c0_206 = arith.constant 0 : index
      %c0_207 = arith.constant 0 : index
      %328 = vector.load %arg10[%c0_206, %c0_207] : memref<2x64xf32, #tpu.memory_space<vmem>>, vector<2x64xf32>
      tpu.vector_store %arg10[%c0_206, %c0_207], %325 {strides = array<i32>} : memref<2x64xf32, #tpu.memory_space<vmem>>, vector<2x64xf32>,
      %c0_208 = arith.constant 0 : index
      %c0_209 = arith.constant 0 : index
      %329 = vector.load %arg9[%c0_208, %c0_209] : memref<2x64xf32, #tpu.memory_space<vmem>>, vector<2x64xf32>
      tpu.vector_store %arg9[%c0_208, %c0_209], %327 {strides = array<i32>} : memref<2x64xf32, #tpu.memory_space<vmem>>, vector<2x64xf32>,
      %c0_210 = arith.constant 0 : index
      %c0_211 = arith.constant 0 : index
      %330 = vector.load %arg11[%c0_210, %c0_211] : memref<2x1024xf32, #tpu.memory_space<vmem>>, vector<2x1024xf32>
      %331 = arith.truncf %327 : vector<2x64xf32> to vector<2x64xbf16>
      %332 = arith.index_cast %24 : i32 to index
      %333 = arith.index_cast %c7_i32 : i32 to index
      %c0_212 = arith.constant 0 : index
      %c0_213 = arith.constant 0 : index
      %334 = vector.load %arg7[%332, %333, %c0_212, %c0_213] : memref<2x10x64x1024xbf16, #tpu.memory_space<vmem>>, vector<1x1x64x1024xbf16>
      %335 = vector.shape_cast %334 : vector<1x1x64x1024xbf16> to vector<64x1024xbf16>
      %cst_214 = arith.constant dense<0.000000e+00> : vector<2x1024xf32>
      %336 = tpu.matmul %331, %335, %cst_214 {dimension_numbers = #tpu.dot_dimension_numbers<[1], [0], [0], [1], [0, 0, 1, 1], [], []>} : vector<2x64xbf16>, vector<64x1024xbf16>, vector<2x1024xf32> -> vector<2x1024xf32>
      %337 = arith.addf %330, %336 : vector<2x1024xf32>
      %c0_215 = arith.constant 0 : index
      %c0_216 = arith.constant 0 : index
      %338 = vector.load %arg11[%c0_215, %c0_216] : memref<2x1024xf32, #tpu.memory_space<vmem>>, vector<2x1024xf32>
      tpu.vector_store %arg11[%c0_215, %c0_216], %337 {strides = array<i32>} : memref<2x1024xf32, #tpu.memory_space<vmem>>, vector<2x1024xf32>,
      %c8_i32 = arith.constant 8 : i32
      %c10_i32_217 = arith.constant 10 : i32
      %339 = arith.muli %arg12, %c10_i32_217 : i32
      %340 = arith.addi %339, %c8_i32 : i32
      %341 = arith.index_cast %340 : i32 to index
      %c0_218 = arith.constant 0 : index
      %c0_219 = arith.constant 0 : index
      %342 = vector.load %arg0[%341, %c0_218, %c0_219] : memref<100x2x256xf32, #tpu.memory_space<vmem>>, vector<1x2x256xf32>
      %343 = vector.shape_cast %342 : vector<1x2x256xf32> to vector<2x256xf32>
      %c0_220 = arith.constant 0 : index
      %c0_221 = arith.constant 0 : index
      %344 = vector.load %arg9[%c0_220, %c0_221] : memref<2x64xf32, #tpu.memory_space<vmem>>, vector<2x64xf32>
      %cst_222 = arith.constant dense<0.000000e+00> : vector<2x256xf32>
      %345 = tpu.matmul %344, %0, %cst_222 {dimension_numbers = #tpu.dot_dimension_numbers<[1], [0], [0], [1], [0, 0, 1, 1], [], []>} : vector<2x64xf32>, vector<64x256xf32>, vector<2x256xf32> -> vector<2x256xf32>
      %346 = arith.addf %343, %345 : vector<2x256xf32>
      %347 = arith.negf %346 : vector<2x256xf32>
      %348 = math.exp %347 : vector<2x256xf32>
      %cst_223 = arith.constant 1.000000e+00 : f32
      %349 = vector.broadcast %cst_223 : f32 to vector<2x256xf32>
      %350 = arith.addf %349, %348 : vector<2x256xf32>
      %351 = arith.divf %349, %350 : vector<2x256xf32>
      %352 = vector.extract_strided_slice %351 {offsets = [0, 0], sizes = [2, 64], strides = [1, 1]} : vector<2x256xf32> to vector<2x64xf32>
      %353 = vector.extract_strided_slice %351 {offsets = [0, 64], sizes = [2, 64], strides = [1, 1]} : vector<2x256xf32> to vector<2x64xf32>
      %354 = vector.extract_strided_slice %351 {offsets = [0, 128], sizes = [2, 64], strides = [1, 1]} : vector<2x256xf32> to vector<2x64xf32>
      %cst_224 = arith.constant 2.000000e+00 : f32
      %355 = vector.broadcast %cst_224 : f32 to vector<2x64xf32>
      %356 = arith.mulf %355, %354 : vector<2x64xf32>
      %cst_225 = arith.constant 1.000000e+00 : f32
      %357 = vector.broadcast %cst_225 : f32 to vector<2x64xf32>
      %358 = arith.subf %356, %357 : vector<2x64xf32>
      %359 = vector.extract_strided_slice %351 {offsets = [0, 192], sizes = [2, 64], strides = [1, 1]} : vector<2x256xf32> to vector<2x64xf32>
      %c0_226 = arith.constant 0 : index
      %c0_227 = arith.constant 0 : index
      %360 = vector.load %arg10[%c0_226, %c0_227] : memref<2x64xf32, #tpu.memory_space<vmem>>, vector<2x64xf32>
      %361 = arith.mulf %353, %360 : vector<2x64xf32>
      %362 = arith.mulf %352, %358 : vector<2x64xf32>
      %363 = arith.addf %361, %362 : vector<2x64xf32>
      %364 = math.tanh %363 : vector<2x64xf32>
      %365 = arith.mulf %359, %364 : vector<2x64xf32>
      %c0_228 = arith.constant 0 : index
      %c0_229 = arith.constant 0 : index
      %366 = vector.load %arg10[%c0_228, %c0_229] : memref<2x64xf32, #tpu.memory_space<vmem>>, vector<2x64xf32>
      tpu.vector_store %arg10[%c0_228, %c0_229], %363 {strides = array<i32>} : memref<2x64xf32, #tpu.memory_space<vmem>>, vector<2x64xf32>,
      %c0_230 = arith.constant 0 : index
      %c0_231 = arith.constant 0 : index
      %367 = vector.load %arg9[%c0_230, %c0_231] : memref<2x64xf32, #tpu.memory_space<vmem>>, vector<2x64xf32>
      tpu.vector_store %arg9[%c0_230, %c0_231], %365 {strides = array<i32>} : memref<2x64xf32, #tpu.memory_space<vmem>>, vector<2x64xf32>,
      %c0_232 = arith.constant 0 : index
      %c0_233 = arith.constant 0 : index
      %368 = vector.load %arg11[%c0_232, %c0_233] : memref<2x1024xf32, #tpu.memory_space<vmem>>, vector<2x1024xf32>
      %369 = arith.truncf %365 : vector<2x64xf32> to vector<2x64xbf16>
      %370 = arith.index_cast %24 : i32 to index
      %371 = arith.index_cast %c8_i32 : i32 to index
      %c0_234 = arith.constant 0 : index
      %c0_235 = arith.constant 0 : index
      %372 = vector.load %arg7[%370, %371, %c0_234, %c0_235] : memref<2x10x64x1024xbf16, #tpu.memory_space<vmem>>, vector<1x1x64x1024xbf16>
      %373 = vector.shape_cast %372 : vector<1x1x64x1024xbf16> to vector<64x1024xbf16>
      %cst_236 = arith.constant dense<0.000000e+00> : vector<2x1024xf32>
      %374 = tpu.matmul %369, %373, %cst_236 {dimension_numbers = #tpu.dot_dimension_numbers<[1], [0], [0], [1], [0, 0, 1, 1], [], []>} : vector<2x64xbf16>, vector<64x1024xbf16>, vector<2x1024xf32> -> vector<2x1024xf32>
      %375 = arith.addf %368, %374 : vector<2x1024xf32>
      %c0_237 = arith.constant 0 : index
      %c0_238 = arith.constant 0 : index
      %376 = vector.load %arg11[%c0_237, %c0_238] : memref<2x1024xf32, #tpu.memory_space<vmem>>, vector<2x1024xf32>
      tpu.vector_store %arg11[%c0_237, %c0_238], %375 {strides = array<i32>} : memref<2x1024xf32, #tpu.memory_space<vmem>>, vector<2x1024xf32>,
      %c9_i32 = arith.constant 9 : i32
      %c10_i32_239 = arith.constant 10 : i32
      %377 = arith.muli %arg12, %c10_i32_239 : i32
      %378 = arith.addi %377, %c9_i32 : i32
      %379 = arith.index_cast %378 : i32 to index
      %c0_240 = arith.constant 0 : index
      %c0_241 = arith.constant 0 : index
      %380 = vector.load %arg0[%379, %c0_240, %c0_241] : memref<100x2x256xf32, #tpu.memory_space<vmem>>, vector<1x2x256xf32>
      %381 = vector.shape_cast %380 : vector<1x2x256xf32> to vector<2x256xf32>
      %c0_242 = arith.constant 0 : index
      %c0_243 = arith.constant 0 : index
      %382 = vector.load %arg9[%c0_242, %c0_243] : memref<2x64xf32, #tpu.memory_space<vmem>>, vector<2x64xf32>
      %cst_244 = arith.constant dense<0.000000e+00> : vector<2x256xf32>
      %383 = tpu.matmul %382, %0, %cst_244 {dimension_numbers = #tpu.dot_dimension_numbers<[1], [0], [0], [1], [0, 0, 1, 1], [], []>} : vector<2x64xf32>, vector<64x256xf32>, vector<2x256xf32> -> vector<2x256xf32>
      %384 = arith.addf %381, %383 : vector<2x256xf32>
      %385 = arith.negf %384 : vector<2x256xf32>
      %386 = math.exp %385 : vector<2x256xf32>
      %cst_245 = arith.constant 1.000000e+00 : f32
      %387 = vector.broadcast %cst_245 : f32 to vector<2x256xf32>
      %388 = arith.addf %387, %386 : vector<2x256xf32>
      %389 = arith.divf %387, %388 : vector<2x256xf32>
      %390 = vector.extract_strided_slice %389 {offsets = [0, 0], sizes = [2, 64], strides = [1, 1]} : vector<2x256xf32> to vector<2x64xf32>
      %391 = vector.extract_strided_slice %389 {offsets = [0, 64], sizes = [2, 64], strides = [1, 1]} : vector<2x256xf32> to vector<2x64xf32>
      %392 = vector.extract_strided_slice %389 {offsets = [0, 128], sizes = [2, 64], strides = [1, 1]} : vector<2x256xf32> to vector<2x64xf32>
      %cst_246 = arith.constant 2.000000e+00 : f32
      %393 = vector.broadcast %cst_246 : f32 to vector<2x64xf32>
      %394 = arith.mulf %393, %392 : vector<2x64xf32>
      %cst_247 = arith.constant 1.000000e+00 : f32
      %395 = vector.broadcast %cst_247 : f32 to vector<2x64xf32>
      %396 = arith.subf %394, %395 : vector<2x64xf32>
      %397 = vector.extract_strided_slice %389 {offsets = [0, 192], sizes = [2, 64], strides = [1, 1]} : vector<2x256xf32> to vector<2x64xf32>
      %c0_248 = arith.constant 0 : index
      %c0_249 = arith.constant 0 : index
      %398 = vector.load %arg10[%c0_248, %c0_249] : memref<2x64xf32, #tpu.memory_space<vmem>>, vector<2x64xf32>
      %399 = arith.mulf %391, %398 : vector<2x64xf32>
      %400 = arith.mulf %390, %396 : vector<2x64xf32>
      %401 = arith.addf %399, %400 : vector<2x64xf32>
      %402 = math.tanh %401 : vector<2x64xf32>
      %403 = arith.mulf %397, %402 : vector<2x64xf32>
      %c0_250 = arith.constant 0 : index
      %c0_251 = arith.constant 0 : index
      %404 = vector.load %arg10[%c0_250, %c0_251] : memref<2x64xf32, #tpu.memory_space<vmem>>, vector<2x64xf32>
      tpu.vector_store %arg10[%c0_250, %c0_251], %401 {strides = array<i32>} : memref<2x64xf32, #tpu.memory_space<vmem>>, vector<2x64xf32>,
      %c0_252 = arith.constant 0 : index
      %c0_253 = arith.constant 0 : index
      %405 = vector.load %arg9[%c0_252, %c0_253] : memref<2x64xf32, #tpu.memory_space<vmem>>, vector<2x64xf32>
      tpu.vector_store %arg9[%c0_252, %c0_253], %403 {strides = array<i32>} : memref<2x64xf32, #tpu.memory_space<vmem>>, vector<2x64xf32>,
      %c0_254 = arith.constant 0 : index
      %c0_255 = arith.constant 0 : index
      %406 = vector.load %arg11[%c0_254, %c0_255] : memref<2x1024xf32, #tpu.memory_space<vmem>>, vector<2x1024xf32>
      %407 = arith.truncf %403 : vector<2x64xf32> to vector<2x64xbf16>
      %408 = arith.index_cast %24 : i32 to index
      %409 = arith.index_cast %c9_i32 : i32 to index
      %c0_256 = arith.constant 0 : index
      %c0_257 = arith.constant 0 : index
      %410 = vector.load %arg7[%408, %409, %c0_256, %c0_257] : memref<2x10x64x1024xbf16, #tpu.memory_space<vmem>>, vector<1x1x64x1024xbf16>
      %411 = vector.shape_cast %410 : vector<1x1x64x1024xbf16> to vector<64x1024xbf16>
      %cst_258 = arith.constant dense<0.000000e+00> : vector<2x1024xf32>
      %412 = tpu.matmul %407, %411, %cst_258 {dimension_numbers = #tpu.dot_dimension_numbers<[1], [0], [0], [1], [0, 0, 1, 1], [], []>} : vector<2x64xbf16>, vector<64x1024xbf16>, vector<2x1024xf32> -> vector<2x1024xf32>
      %413 = arith.addf %406, %412 : vector<2x1024xf32>
      %c0_259 = arith.constant 0 : index
      %c0_260 = arith.constant 0 : index
      %414 = vector.load %arg11[%c0_259, %c0_260] : memref<2x1024xf32, #tpu.memory_space<vmem>>, vector<2x1024xf32>
      tpu.vector_store %arg11[%c0_259, %c0_260], %413 {strides = array<i32>} : memref<2x1024xf32, #tpu.memory_space<vmem>>, vector<2x1024xf32>,
      %c10_i32_261 = arith.constant 10 : i32
    }
    %c10_i32_17 = arith.constant 10 : i32
    %c0_18 = arith.constant 0 : index
    %c0_19 = arith.constant 0 : index
    %13 = vector.load %arg11[%c0_18, %c0_19] : memref<2x1024xf32, #tpu.memory_space<vmem>>, vector<2x1024xf32>
    %c0_20 = arith.constant 0 : index
    %c0_21 = arith.constant 0 : index
    %14 = vector.load %arg3[%c0_20, %c0_21] : memref<1x1024xf32, #tpu.memory_space<vmem>>, vector<1x1024xf32>
    %15 = vector.broadcast %14 : vector<1x1024xf32> to vector<2x1024xf32>
    %16 = arith.addf %13, %15 : vector<2x1024xf32>
    %17 = math.tanh %16 : vector<2x1024xf32>
    %c0_22 = arith.constant 0 : index
    %c0_23 = arith.constant 0 : index
    %18 = vector.load %arg4[%c0_22, %c0_23] : memref<1024x41xf32, #tpu.memory_space<vmem>>, vector<1024x41xf32>
    %cst_24 = arith.constant dense<0.000000e+00> : vector<2x41xf32>
    %19 = tpu.matmul %17, %18, %cst_24 {dimension_numbers = #tpu.dot_dimension_numbers<[1], [0], [0], [1], [0, 0, 1, 1], [], []>} : vector<2x1024xf32>, vector<1024x41xf32>, vector<2x41xf32> -> vector<2x41xf32>
    %c0_25 = arith.constant 0 : index
    %c0_26 = arith.constant 0 : index
    %20 = vector.load %arg5[%c0_25, %c0_26] : memref<1x41xf32, #tpu.memory_space<vmem>>, vector<1x41xf32>
    %21 = vector.broadcast %20 : vector<1x41xf32> to vector<2x41xf32>
    %22 = arith.addf %19, %21 : vector<2x41xf32>
    %c0_27 = arith.constant 0 : index
    %c0_28 = arith.constant 0 : index
    %23 = vector.load %arg6[%c0_27, %c0_28] : memref<2x41xf32, #tpu.memory_space<vmem>>, vector<2x41xf32>
    tpu.vector_store %arg6[%c0_27, %c0_28], %22 {strides = array<i32>} : memref<2x41xf32, #tpu.memory_space<vmem>>, vector<2x41xf32>,
    return
  }
}

</mosaic_0001>

<llo_original>
// kernel: squeeze.1
$region0: #{squeeze.1}
  %s0 = inlined_call_operand.vmem [shape: f32[2,400], index: 0, kind: input, shape index: {}]
  %s1 = inlined_call_operand.vmem [shape: f32[2,100,4], index: 1, kind: output, shape index: {}]
  $region1: #{squeeze.1} parent=0
    #allocation0 [shape = 'u8[16384]{0}', space=vmem, size = 0x4000, scoped, tag = 'scoped mem for input reshape']
    %s3 = ssub.s32 4, 1
    %s4 = scalar_lea.vmem %s0, 6
    %v5 = vld [vmem:[%s4] sm:%s3]
    %s6 = scalar_lea.vmem [#allocation0], 24
    %7 = vst [vmem:[%s6] sm:%s3] %v5
    %s8 = scalar_lea.vmem %s0, 4
    %v9 = vld [vmem:[%s8] sm:%s3]
    %s10 = scalar_lea.vmem [#allocation0], 16
    %11 = vst [vmem:[%s10] sm:%s3] %v9
    %s12 = scalar_lea.vmem %s0, 2
    %v13 = vld [vmem:[%s12] sm:%s3]
    %s14 = scalar_lea.vmem [#allocation0], 8
    %15 = vst [vmem:[%s14] sm:%s3] %v13
    %v16 = vld [vmem:[%s0] sm:%s3]
    %17 = vst [vmem:[#allocation0] sm:%s3] %v16
    %v18 = vld [vmem:[#allocation0] sm:$0x3]
    %vm19 = vcmask 31744
    %20 = vst.msk [vmem:[%s1] ss:$104 sm:$0x3] %vm19, %v18
    %s21 = scalar_lea.vmem [#allocation0], 8
    %v22 = vld [vmem:[%s21] sm:$0x3]
    %vm23 = vcmask 31744
    %s24 = scalar_lea.vmem %s1, 32
    %25 = vst.msk [vmem:[%s24] ss:$104 sm:$0x3] %vm23, %v22
    %s26 = scalar_lea.vmem [#allocation0], 16
    %v27 = vld [vmem:[%s26] sm:$0x3]
    %vm28 = vcmask 31744
    %s29 = scalar_lea.vmem %s1, 64
    %30 = vst.msk [vmem:[%s29] ss:$104 sm:$0x3] %vm28, %v27
    %s31 = scalar_lea.vmem [#allocation0], 24
    %v32 = vld [vmem:[%s31] sm:$0x3]
    %vm33 = vcmask 31744
    %s34 = scalar_lea.vmem %s1, 96
    %35 = vst.msk [vmem:[%s34] ss:$104 sm:$0x3] %vm33, %v32
    %v36 = vld.sshfl [vmem:[#allocation0] sm:$0xff pattern:$0x99999810]
    %s37 = scalar_lea.vmem [#allocation0], 16
    %v38 = vld.sshfl [vmem:[%s37] sm:$0xff pattern:$0x98100000]
    %vm39 = vcmask 1047556
    %v40 = vsel %vm39, %v38, %v36
    %41 = vrot.lane.b32.xlu0 %v40, 124
    %v42 = vpop.permute.xlu0 %41
    %vm43 = vcmask 31744
    %s44 = scalar_lea.vmem %s1, 1
    %45 = vst.msk [vmem:[%s44] ss:$104 sm:$0x3] %vm43, %v42
    %s46 = scalar_lea.vmem %s1, 4294967121
    %47 = vst.msk [vmem:[%s46] ss:$104 sm:$0xc] %vm43, %v42
    %s48 = scalar_lea.vmem %s1, 4294966945
    %49 = vst.msk [vmem:[%s48] ss:$104 sm:$0x30] %vm43, %v42
    %s50 = scalar_lea.vmem %s1, 4294966769
    %51 = vst.msk [vmem:[%s50] ss:$104 sm:$0xc0] %vm43, %v42
    %v52 = vld.sshfl [vmem:[#allocation0] sm:$0xff pattern:$0x99999810]
    %s53 = scalar_lea.vmem [#allocation0], 16
    %v54 = vld.sshfl [vmem:[%s53] sm:$0xff pattern:$0x98100000]
    %vm55 = vcmask 1047556
    %v56 = vsel %vm55, %v54, %v52
    %57 = vrot.lane.b32.xlu0 %v56, 120
    %v58 = vpop.permute.xlu0 %57
    %vm59 = vcmask 31744
    %s60 = scalar_lea.vmem %s1, 2
    %61 = vst.msk [vmem:[%s60] ss:$104 sm:$0x3] %vm59, %v58
    %s62 = scalar_lea.vmem %s1, 4294967122
    %63 = vst.msk [vmem:[%s62] ss:$104 sm:$0xc] %vm59, %v58
    %s64 = scalar_lea.vmem %s1, 4294966946
    %65 = vst.msk [vmem:[%s64] ss:$104 sm:$0x30] %vm59, %v58
    %s66 = scalar_lea.vmem %s1, 4294966770
    %67 = vst.msk [vmem:[%s66] ss:$104 sm:$0xc0] %vm59, %v58
    %v68 = vld.sshfl [vmem:[#allocation0] sm:$0xff pattern:$0x99999810]
    %s69 = scalar_lea.vmem [#allocation0], 16
    %v70 = vld.sshfl [vmem:[%s69] sm:$0xff pattern:$0x98100000]
    %vm71 = vcmask 1047556
    %v72 = vsel %vm71, %v70, %v68
    %73 = vrot.lane.b32.xlu0 %v72, 116
    %v74 = vpop.permute.xlu0 %73
    %vm75 = vcmask 31744
    %s76 = scalar_lea.vmem %s1, 3
    %77 = vst.msk [vmem:[%s76] ss:$104 sm:$0x3] %vm75, %v74
    %s78 = scalar_lea.vmem %s1, 4294967123
    %79 = vst.msk [vmem:[%s78] ss:$104 sm:$0xc] %vm75, %v74
    %s80 = scalar_lea.vmem %s1, 4294966947
    %81 = vst.msk [vmem:[%s80] ss:$104 sm:$0x30] %vm75, %v74
    %s82 = scalar_lea.vmem %s1, 4294966771
    %83 = vst.msk [vmem:[%s82] ss:$104 sm:$0xc0] %vm75, %v74
    %v84 = vld.sshfl [vmem:[#allocation0] sm:$0xff pattern:$0x99999810]
    %s85 = scalar_lea.vmem [#allocation0], 12
    %v86 = vld [vmem:[%s85] sm:$0x30]
    %vm87 = vcmask 1045508
    %v88 = vsel %vm87, %v86, %v84
    %89 = vrot.lane.b32.xlu0 %v88, 112
    %v90 = vpop.permute.xlu0 %89
    %vm91 = vcmask 31744
    %s92 = scalar_lea.vmem %s1, 4
    %93 = vst.msk [vmem:[%s92] ss:$104 sm:$0x3] %vm91, %v90
    %s94 = scalar_lea.vmem %s1, 4294967124
    %95 = vst.msk [vmem:[%s94] ss:$104 sm:$0xc] %vm91, %v90
    %s96 = scalar_lea.vmem %s1, 4294966948
    %97 = vst.msk [vmem:[%s96] ss:$104 sm:$0x30] %vm91, %v90
    %v98 = vld.sshfl [vmem:[#allocation0] sm:$0xff pattern:$0x99999810]
    %s99 = scalar_lea.vmem [#allocation0], 12
    %v100 = vld [vmem:[%s99] sm:$0x30]
    %vm101 = vcmask 1045508
    %v102 = vsel %vm101, %v100, %v98
    %103 = vrot.lane.b32.xlu0 %v102, 108
    %v104 = vpop.permute.xlu0 %103
    %vm105 = vcmask 31744
    %s106 = scalar_lea.vmem %s1, 5
    %107 = vst.msk [vmem:[%s106] ss:$104 sm:$0x3] %vm105, %v104
    %s108 = scalar_lea.vmem %s1, 4294967125
    %109 = vst.msk [vmem:[%s108] ss:$104 sm:$0xc] %vm105, %v104
    %s110 = scalar_lea.vmem %s1, 4294966949
    %111 = vst.msk [vmem:[%s110] ss:$104 sm:$0x30] %vm105, %v104
    %v112 = vld.sshfl [vmem:[#allocation0] sm:$0xff pattern:$0x99999810]
    %s113 = scalar_lea.vmem [#allocation0], 12
    %v114 = vld [vmem:[%s113] sm:$0x30]
    %vm115 = vcmask 1045508
    %v116 = vsel %vm115, %v114, %v112
    %117 = vrot.lane.b32.xlu0 %v116, 104
    %v118 = vpop.permute.xlu0 %117
    %vm119 = vcmask 31744
    %s120 = scalar_lea.vmem %s1, 6
    %121 = vst.msk [vmem:[%s120] ss:$104 sm:$0x3] %vm119, %v118
    %s122 = scalar_lea.vmem %s1, 4294967126
    %123 = vst.msk [vmem:[%s122] ss:$104 sm:$0xc] %vm119, %v118
    %s124 = scalar_lea.vmem %s1, 4294966950
    %125 = vst.msk [vmem:[%s124] ss:$104 sm:$0x30] %vm119, %v118
    %v126 = vld.sshfl [vmem:[#allocation0] sm:$0xff pattern:$0x99999810]
    %s127 = scalar_lea.vmem [#allocation0], 12
    %v128 = vld [vmem:[%s127] sm:$0x30]
    %vm129 = vcmask 1045508
    %v130 = vsel %vm129, %v128, %v126
    %131 = vrot.lane.b32.xlu0 %v130, 100
    %v132 = vpop.permute.xlu0 %131
    %vm133 = vcmask 31744
    %s134 = scalar_lea.vmem %s1, 7
    %135 = vst.msk [vmem:[%s134] ss:$104 sm:$0x3] %vm133, %v132
    %s136 = scalar_lea.vmem %s1, 4294967127
    %137 = vst.msk [vmem:[%s136] ss:$104 sm:$0xc] %vm133, %v132
    %s138 = scalar_lea.vmem %s1, 4294966951
    %139 = vst.msk [vmem:[%s138] ss:$104 sm:$0x30] %vm133, %v132
    %v140 = vld.sshfl [vmem:[#allocation0] sm:$0xff pattern:$0x99999810]
    %s141 = scalar_lea.vmem [#allocation0], 12
    %v142 = vld [vmem:[%s141] sm:$0x30]
    %vm143 = vcmask 1045508
    %v144 = vsel %vm143, %v142, %v140
    %145 = vrot.lane.b32.xlu0 %v144, 96
    %v146 = vpop.permute.xlu0 %145
    %vm147 = vcmask 31744
    %s148 = scalar_lea.vmem %s1, 8
    %149 = vst.msk [vmem:[%s148] ss:$104 sm:$0x3] %vm147, %v146
    %s150 = scalar_lea.vmem %s1, 4294967128
    %151 = vst.msk [vmem:[%s150] ss:$104 sm:$0xc] %vm147, %v146
    %s152 = scalar_lea.vmem %s1, 4294966952
    %153 = vst.msk [vmem:[%s152] ss:$104 sm:$0x30] %vm147, %v146
    %v154 = vld.sshfl [vmem:[#allocation0] sm:$0xff pattern:$0x99999810]
    %s155 = scalar_lea.vmem [#allocation0], 12
    %v156 = vld [vmem:[%s155] sm:$0x30]
    %vm157 = vcmask 1045508
    %v158 = vsel %vm157, %v156, %v154
    %159 = vrot.lane.b32.xlu0 %v158, 92
    %v160 = vpop.permute.xlu0 %159
    %vm161 = vcmask 31744
    %s162 = scalar_lea.vmem %s1, 9
    %163 = vst.msk [vmem:[%s162] ss:$104 sm:$0x3] %vm161, %v160
    %s164 = scalar_lea.vmem %s1, 4294967129
    %165 = vst.msk [vmem:[%s164] ss:$104 sm:$0xc] %vm161, %v160
    %s166 = scalar_lea.vmem %s1, 4294966953
    %167 = vst.msk [vmem:[%s166] ss:$104 sm:$0x30] %vm161, %v160
    %v168 = vld.sshfl [vmem:[#allocation0] sm:$0xff pattern:$0x99999810]
    %s169 = scalar_lea.vmem [#allocation0], 12
    %v170 = vld [vmem:[%s169] sm:$0x30]
    %vm171 = vcmask 1045508
    %v172 = vsel %vm171, %v170, %v168
    %173 = vrot.lane.b32.xlu0 %v172, 88
    %v174 = vpop.permute.xlu0 %173
    %vm175 = vcmask 31744
    %s176 = scalar_lea.vmem %s1, 10
    %177 = vst.msk [vmem:[%s176] ss:$104 sm:$0x3] %vm175, %v174
    %s178 = scalar_lea.vmem %s1, 4294967130
    %179 = vst.msk [vmem:[%s178] ss:$104 sm:$0xc] %vm175, %v174
    %s180 = scalar_lea.vmem %s1, 4294966954
    %181 = vst.msk [vmem:[%s180] ss:$104 sm:$0x30] %vm175, %v174
    %v182 = vld.sshfl [vmem:[#allocation0] sm:$0xff pattern:$0x99999810]
    %s183 = scalar_lea.vmem [#allocation0], 12
    %v184 = vld [vmem:[%s183] sm:$0x30]
    %vm185 = vcmask 1045508
    %v186 = vsel %vm185, %v184, %v182
    %187 = vrot.lane.b32.xlu0 %v186, 84
    %v188 = vpop.permute.xlu0 %187
    %vm189 = vcmask 31744
    %s190 = scalar_lea.vmem %s1, 11
    %191 = vst.msk [vmem:[%s190] ss:$104 sm:$0x3] %vm189, %v188
    %s192 = scalar_lea.vmem %s1, 4294967131
    %193 = vst.msk [vmem:[%s192] ss:$104 sm:$0xc] %vm189, %v188
    %s194 = scalar_lea.vmem %s1, 4294966955
    %195 = vst.msk [vmem:[%s194] ss:$104 sm:$0x30] %vm189, %v188
    %v196 = vld.sshfl [vmem:[#allocation0] sm:$0xff pattern:$0x99999810]
    %s197 = scalar_lea.vmem [#allocation0], 12
    %v198 = vld [vmem:[%s197] sm:$0x30]
    %vm199 = vcmask 1045508
    %v200 = vsel %vm199, %v198, %v196
    %201 = vrot.lane.b32.xlu0 %v200, 80
    %v202 = vpop.permute.xlu0 %201
    %vm203 = vcmask 31744
    %s204 = scalar_lea.vmem %s1, 12
    %205 = vst.msk [vmem:[%s204] ss:$104 sm:$0x3] %vm203, %v202
    %s206 = scalar_lea.vmem %s1, 4294967132
    %207 = vst.msk [vmem:[%s206] ss:$104 sm:$0xc] %vm203, %v202
    %s208 = scalar_lea.vmem %s1, 4294966956
    %209 = vst.msk [vmem:[%s208] ss:$104 sm:$0x30] %vm203, %v202
    %v210 = vld.sshfl [vmem:[#allocation0] sm:$0xff pattern:$0x99999810]
    %s211 = scalar_lea.vmem [#allocation0], 12
    %v212 = vld [vmem:[%s211] sm:$0x30]
    %vm213 = vcmask 1045508
    %v214 = vsel %vm213, %v212, %v210
    %215 = vrot.lane.b32.xlu0 %v214, 76
    %v216 = vpop.permute.xlu0 %215
    %vm217 = vcmask 31744
    %s218 = scalar_lea.vmem %s1, 13
    %219 = vst.msk [vmem:[%s218] ss:$104 sm:$0x3] %vm217, %v216
    %s220 = scalar_lea.vmem %s1, 4294967133
    %221 = vst.msk [vmem:[%s220] ss:$104 sm:$0xc] %vm217, %v216
    %s222 = scalar_lea.vmem %s1, 4294966957
    %223 = vst.msk [vmem:[%s222] ss:$104 sm:$0x30] %vm217, %v216
    %v224 = vld.sshfl [vmem:[#allocation0] sm:$0xff pattern:$0x99999810]
    %s225 = scalar_lea.vmem [#allocation0], 12
    %v226 = vld [vmem:[%s225] sm:$0x30]
    %vm227 = vcmask 1045508
    %v228 = vsel %vm227, %v226, %v224
    %229 = vrot.lane.b32.xlu0 %v228, 72
    %v230 = vpop.permute.xlu0 %229
    %vm231 = vcmask 31744
    %s232 = scalar_lea.vmem %s1, 14
    %233 = vst.msk [vmem:[%s232] ss:$104 sm:$0x3] %vm231, %v230
    %s234 = scalar_lea.vmem %s1, 4294967134
    %235 = vst.msk [vmem:[%s234] ss:$104 sm:$0xc] %vm231, %v230
    %s236 = scalar_lea.vmem %s1, 4294966958
    %237 = vst.msk [vmem:[%s236] ss:$104 sm:$0x30] %vm231, %v230
    %v238 = vld.sshfl [vmem:[#allocation0] sm:$0xff pattern:$0x99999810]
    %s239 = scalar_lea.vmem [#allocation0], 12
    %v240 = vld [vmem:[%s239] sm:$0x30]
    %vm241 = vcmask 1045508
    %v242 = vsel %vm241, %v240, %v238
    %243 = vrot.lane.b32.xlu0 %v242, 68
    %v244 = vpop.permute.xlu0 %243
    %vm245 = vcmask 31744
    %s246 = scalar_lea.vmem %s1, 15
    %247 = vst.msk [vmem:[%s246] ss:$104 sm:$0x3] %vm245, %v244
    %s248 = scalar_lea.vmem %s1, 4294967135
    %249 = vst.msk [vmem:[%s248] ss:$104 sm:$0xc] %vm245, %v244
    %s250 = scalar_lea.vmem %s1, 4294966959
    %251 = vst.msk [vmem:[%s250] ss:$104 sm:$0x30] %vm245, %v244
    %v252 = vld.sshfl [vmem:[#allocation0] sm:$0xff pattern:$0x99999810]
    %s253 = scalar_lea.vmem [#allocation0], 12
    %v254 = vld [vmem:[%s253] sm:$0x30]
    %vm255 = vcmask 1045508
    %v256 = vsel %vm255, %v254, %v252
    %257 = vrot.lane.b32.xlu0 %v256, 64
    %v258 = vpop.permute.xlu0 %257
    %vm259 = vcmask 31744
    %s260 = scalar_lea.vmem %s1, 16
    %261 = vst.msk [vmem:[%s260] ss:$104 sm:$0x3] %vm259, %v258
    %s262 = scalar_lea.vmem %s1, 4294967136
    %263 = vst.msk [vmem:[%s262] ss:$104 sm:$0xc] %vm259, %v258
    %s264 = scalar_lea.vmem %s1, 4294966960
    %265 = vst.msk [vmem:[%s264] ss:$104 sm:$0x30] %vm259, %v258
    %v266 = vld.sshfl [vmem:[#allocation0] sm:$0xff pattern:$0x99999810]
    %s267 = scalar_lea.vmem [#allocation0], 12
    %v268 = vld [vmem:[%s267] sm:$0x30]
    %vm269 = vcmask 1045508
    %v270 = vsel %vm269, %v268, %v266
    %271 = vrot.lane.b32.xlu0 %v270, 60
    %v272 = vpop.permute.xlu0 %271
    %vm273 = vcmask 31744
    %s274 = scalar_lea.vmem %s1, 17
    %275 = vst.msk [vmem:[%s274] ss:$104 sm:$0x3] %vm273, %v272
    %s276 = scalar_lea.vmem %s1, 4294967137
    %277 = vst.msk [vmem:[%s276] ss:$104 sm:$0xc] %vm273, %v272
    %s278 = scalar_lea.vmem %s1, 4294966961
    %279 = vst.msk [vmem:[%s278] ss:$104 sm:$0x30] %vm273, %v272
    %v280 = vld.sshfl [vmem:[#allocation0] sm:$0xff pattern:$0x99999810]
    %s281 = scalar_lea.vmem [#allocation0], 12
    %v282 = vld [vmem:[%s281] sm:$0x30]
    %vm283 = vcmask 1045508
    %v284 = vsel %vm283, %v282, %v280
    %285 = vrot.lane.b32.xlu0 %v284, 56
    %v286 = vpop.permute.xlu0 %285
    %vm287 = vcmask 31744
    %s288 = scalar_lea.vmem %s1, 18
    %289 = vst.msk [vmem:[%s288] ss:$104 sm:$0x3] %vm287, %v286
    %s290 = scalar_lea.vmem %s1, 4294967138
    %291 = vst.msk [vmem:[%s290] ss:$104 sm:$0xc] %vm287, %v286
    %s292 = scalar_lea.vmem %s1, 4294966962
    %293 = vst.msk [vmem:[%s292] ss:$104 sm:$0x30] %vm287, %v286
    %v294 = vld.sshfl [vmem:[#allocation0] sm:$0xff pattern:$0x99999810]
    %s295 = scalar_lea.vmem [#allocation0], 12
    %v296 = vld [vmem:[%s295] sm:$0x30]
    %vm297 = vcmask 1045508
    %v298 = vsel %vm297, %v296, %v294
    %299 = vrot.lane.b32.xlu0 %v298, 52
    %v300 = vpop.permute.xlu0 %299
    %vm301 = vcmask 31744
    %s302 = scalar_lea.vmem %s1, 19
    %303 = vst.msk [vmem:[%s302] ss:$104 sm:$0x3] %vm301, %v300
    %s304 = scalar_lea.vmem %s1, 4294967139
    %305 = vst.msk [vmem:[%s304] ss:$104 sm:$0xc] %vm301, %v300
    %s306 = scalar_lea.vmem %s1, 4294966963
    %307 = vst.msk [vmem:[%s306] ss:$104 sm:$0x30] %vm301, %v300
    %v308 = vld.sshfl [vmem:[#allocation0] sm:$0xff pattern:$0x99999810]
    %s309 = scalar_lea.vmem [#allocation0], 12
    %v310 = vld [vmem:[%s309] sm:$0x30]
    %vm311 = vcmask 1045508
    %v312 = vsel %vm311, %v310, %v308
    %313 = vrot.lane.b32.xlu0 %v312, 48
    %v314 = vpop.permute.xlu0 %313
    %vm315 = vcmask 31744
    %s316 = scalar_lea.vmem %s1, 20
    %317 = vst.msk [vmem:[%s316] ss:$104 sm:$0x3] %vm315, %v314
    %s318 = scalar_lea.vmem %s1, 4294967140
    %319 = vst.msk [vmem:[%s318] ss:$104 sm:$0xc] %vm315, %v314
    %s320 = scalar_lea.vmem %s1, 4294966964
    %321 = vst.msk [vmem:[%s320] ss:$104 sm:$0x30] %vm315, %v314
    %v322 = vld.sshfl [vmem:[#allocation0] sm:$0xff pattern:$0x99999810]
    %s323 = scalar_lea.vmem [#allocation0], 12
    %v324 = vld [vmem:[%s323] sm:$0x30]
    %vm325 = vcmask 1045508
    %v326 = vsel %vm325, %v324, %v322
    %327 = vrot.lane.b32.xlu0 %v326, 44
    %v328 = vpop.permute.xlu0 %327
    %vm329 = vcmask 31744
    %s330 = scalar_lea.vmem %s1, 21
    %331 = vst.msk [vmem:[%s330] ss:$104 sm:$0x3] %vm329, %v328
    %s332 = scalar_lea.vmem %s1, 4294967141
    %333 = vst.msk [vmem:[%s332] ss:$104 sm:$0xc] %vm329, %v328
    %s334 = scalar_lea.vmem %s1, 4294966965
    %335 = vst.msk [vmem:[%s334] ss:$104 sm:$0x30] %vm329, %v328
    %v336 = vld.sshfl [vmem:[#allocation0] sm:$0xff pattern:$0x99999810]
    %s337 = scalar_lea.vmem [#allocation0], 12
    %v338 = vld [vmem:[%s337] sm:$0x30]
    %vm339 = vcmask 1045508
    %v340 = vsel %vm339, %v338, %v336
    %341 = vrot.lane.b32.xlu0 %v340, 40
    %v342 = vpop.permute.xlu0 %341
    %vm343 = vcmask 31744
    %s344 = scalar_lea.vmem %s1, 22
    %345 = vst.msk [vmem:[%s344] ss:$104 sm:$0x3] %vm343, %v342
    %s346 = scalar_lea.vmem %s1, 4294967142
    %347 = vst.msk [vmem:[%s346] ss:$104 sm:$0xc] %vm343, %v342
    %s348 = scalar_lea.vmem %s1, 4294966966
    %349 = vst.msk [vmem:[%s348] ss:$104 sm:$0x30] %vm343, %v342
    %v350 = vld.sshfl [vmem:[#allocation0] sm:$0xff pattern:$0x99999810]
    %s351 = scalar_lea.vmem [#allocation0], 12
    %v352 = vld [vmem:[%s351] sm:$0x30]
    %vm353 = vcmask 1045508
    %v354 = vsel %vm353, %v352, %v350
    %355 = vrot.lane.b32.xlu0 %v354, 36
    %v356 = vpop.permute.xlu0 %355
    %vm357 = vcmask 31744
    %s358 = scalar_lea.vmem %s1, 23
    %359 = vst.msk [vmem:[%s358] ss:$104 sm:$0x3] %vm357, %v356
    %s360 = scalar_lea.vmem %s1, 4294967143
    %361 = vst.msk [vmem:[%s360] ss:$104 sm:$0xc] %vm357, %v356
    %s362 = scalar_lea.vmem %s1, 4294966967
    %363 = vst.msk [vmem:[%s362] ss:$104 sm:$0x30] %vm357, %v356
    %v364 = vld.sshfl [vmem:[#allocation0] sm:$0xff pattern:$0x88888901]
    %s365 = scalar_lea.vmem [#allocation0], 21
    %s366 = smov 48
    %v367 = vld [vmem:[%s365] ss:$-1 sm:%s366]
    %vm368 = vcmask 1045508
    %v369 = vsel %vm368, %v367, %v364
    %370 = vrot.lane.b32.xlu0 %v369, 32
    %v371 = vpop.permute.xlu0 %370
    %vm372 = vcmask 31744
    %s373 = scalar_lea.vmem %s1, 128
    %374 = vst.msk [vmem:[%s373] ss:$-104 sm:$0x3] %vm372, %v371
    %s375 = scalar_lea.vmem %s1, 368
    %376 = vst.msk [vmem:[%s375] ss:$-104 sm:$0xc] %vm372, %v371
    %s377 = scalar_lea.vmem %s1, 608
    %378 = vst.msk [vmem:[%s377] ss:$-104 sm:$0x30] %vm372, %v371
    %v379 = vld.sshfl [vmem:[#allocation0] sm:$0xff pattern:$0x88888901]
    %s380 = scalar_lea.vmem [#allocation0], 21
    %s381 = smov 48
    %v382 = vld [vmem:[%s380] ss:$-1 sm:%s381]
    %vm383 = vcmask 1045508
    %v384 = vsel %vm383, %v382, %v379
    %385 = vrot.lane.b32.xlu0 %v384, 28
    %v386 = vpop.permute.xlu0 %385
    %vm387 = vcmask 31744
    %s388 = scalar_lea.vmem %s1, 129
    %389 = vst.msk [vmem:[%s388] ss:$-104 sm:$0x3] %vm387, %v386
    %s390 = scalar_lea.vmem %s1, 369
    %391 = vst.msk [vmem:[%s390] ss:$-104 sm:$0xc] %vm387, %v386
    %s392 = scalar_lea.vmem %s1, 609
    %393 = vst.msk [vmem:[%s392] ss:$-104 sm:$0x30] %vm387, %v386
    %v394 = vld.sshfl [vmem:[#allocation0] sm:$0xff pattern:$0x88888901]
    %s395 = scalar_lea.vmem [#allocation0], 21
    %s396 = smov 48
    %v397 = vld [vmem:[%s395] ss:$-1 sm:%s396]
    %vm398 = vcmask 1045508
    %v399 = vsel %vm398, %v397, %v394
    %400 = vrot.lane.b32.xlu0 %v399, 24
    %v401 = vpop.permute.xlu0 %400
    %vm402 = vcmask 31744
    %s403 = scalar_lea.vmem %s1, 130
    %404 = vst.msk [vmem:[%s403] ss:$-104 sm:$0x3] %vm402, %v401
    %s405 = scalar_lea.vmem %s1, 370
    %406 = vst.msk [vmem:[%s405] ss:$-104 sm:$0xc] %vm402, %v401
    %s407 = scalar_lea.vmem %s1, 610
    %408 = vst.msk [vmem:[%s407] ss:$-104 sm:$0x30] %vm402, %v401
    %v409 = vld.sshfl [vmem:[#allocation0] sm:$0xff pattern:$0x88888901]
    %s410 = scalar_lea.vmem [#allocation0], 21
    %s411 = smov 48
    %v412 = vld [vmem:[%s410] ss:$-1 sm:%s411]
    %vm413 = vcmask 1045508
    %v414 = vsel %vm413, %v412, %v409
    %415 = vrot.lane.b32.xlu0 %v414, 20
    %v416 = vpop.permute.xlu0 %415
    %vm417 = vcmask 31744
    %s418 = scalar_lea.vmem %s1, 131
    %419 = vst.msk [vmem:[%s418] ss:$-104 sm:$0x3] %vm417, %v416
    %s420 = scalar_lea.vmem %s1, 371
    %421 = vst.msk [vmem:[%s420] ss:$-104 sm:$0xc] %vm417, %v416
    %s422 = scalar_lea.vmem %s1, 611
    %423 = vst.msk [vmem:[%s422] ss:$-104 sm:$0x30] %vm417, %v416
    %v424 = vld.sshfl [vmem:[#allocation0] sm:$0xff pattern:$0x88888901]
    %s425 = scalar_lea.vmem [#allocation0], 21
    %s426 = smov 48
    %v427 = vld [vmem:[%s425] ss:$-1 sm:%s426]
    %vm428 = vcmask 1045508
    %v429 = vsel %vm428, %v427, %v424
    %430 = vrot.lane.b32.xlu0 %v429, 16
    %v431 = vpop.permute.xlu0 %430
    %vm432 = vcmask 31744
    %s433 = scalar_lea.vmem %s1, 132
    %434 = vst.msk [vmem:[%s433] ss:$-104 sm:$0x3] %vm432, %v431
    %s435 = scalar_lea.vmem %s1, 372
    %436 = vst.msk [vmem:[%s435] ss:$-104 sm:$0xc] %vm432, %v431
    %s437 = scalar_lea.vmem %s1, 612
    %438 = vst.msk [vmem:[%s437] ss:$-104 sm:$0x30] %vm432, %v431
    %v439 = vld.sshfl [vmem:[#allocation0] sm:$0xff pattern:$0x88888901]
    %s440 = scalar_lea.vmem [#allocation0], 21
    %s441 = smov 48
    %v442 = vld [vmem:[%s440] ss:$-1 sm:%s441]
    %vm443 = vcmask 1045508
    %v444 = vsel %vm443, %v442, %v439
    %445 = vrot.lane.b32.xlu0 %v444, 12
    %v446 = vpop.permute.xlu0 %445
    %vm447 = vcmask 31744
    %s448 = scalar_lea.vmem %s1, 133
    %449 = vst.msk [vmem:[%s448] ss:$-104 sm:$0x3] %vm447, %v446
    %s450 = scalar_lea.vmem %s1, 373
    %451 = vst.msk [vmem:[%s450] ss:$-104 sm:$0xc] %vm447, %v446
    %s452 = scalar_lea.vmem %s1, 613
    %453 = vst.msk [vmem:[%s452] ss:$-104 sm:$0x30] %vm447, %v446
    %v454 = vld.sshfl [vmem:[#allocation0] sm:$0xff pattern:$0x88888901]
    %s455 = scalar_lea.vmem [#allocation0], 21
    %s456 = smov 48
    %v457 = vld [vmem:[%s455] ss:$-1 sm:%s456]
    %vm458 = vcmask 1045508
    %v459 = vsel %vm458, %v457, %v454
    %460 = vrot.lane.b32.xlu0 %v459, 8
    %v461 = vpop.permute.xlu0 %460
    %vm462 = vcmask 31744
    %s463 = scalar_lea.vmem %s1, 134
    %464 = vst.msk [vmem:[%s463] ss:$-104 sm:$0x3] %vm462, %v461
    %s465 = scalar_lea.vmem %s1, 374
    %466 = vst.msk [vmem:[%s465] ss:$-104 sm:$0xc] %vm462, %v461
    %s467 = scalar_lea.vmem %s1, 614
    %468 = vst.msk [vmem:[%s467] ss:$-104 sm:$0x30] %vm462, %v461
    %v469 = vld.sshfl [vmem:[#allocation0] sm:$0xff pattern:$0x88888901]
    %s470 = scalar_lea.vmem [#allocation0], 21
    %s471 = smov 48
    %v472 = vld [vmem:[%s470] ss:$-1 sm:%s471]
    %vm473 = vcmask 1045508
    %v474 = vsel %vm473, %v472, %v469
    %475 = vrot.lane.b32.xlu0 %v474, 4
    %v476 = vpop.permute.xlu0 %475
    %vm477 = vcmask 31744
    %s478 = scalar_lea.vmem %s1, 135
    %479 = vst.msk [vmem:[%s478] ss:$-104 sm:$0x3] %vm477, %v476
    %s480 = scalar_lea.vmem %s1, 375
    %481 = vst.msk [vmem:[%s480] ss:$-104 sm:$0xc] %vm477, %v476
    %s482 = scalar_lea.vmem %s1, 615
    %483 = vst.msk [vmem:[%s482] ss:$-104 sm:$0x30] %vm477, %v476

// kernel: cnn_lstm_forward.3
$region0: #{cnn_lstm_forward.3}
  #allocation0 [shape = 'u32[]', space=smem, size = 0x4, offset = 0x4, fixed_abs, tag = 'smem constant byte address 0x4 - core index']
  #allocation1 [shape = 'u32[72,128]{1,0:T(1,128)}', space=vmem, size = 0x9000, scoped, tag = 'internal scratch']
  #allocation2 [shape = 'bf16[2,10,64,1024]{3,2,1,0:T(8,128)(2,1)}', space=vmem, size = 0x280000, scoped, tag = 'scratch operand']
  #allocation3 [shape = 's32[2]{0}', space=sflag, size = 0x8, scoped, tag = 'scratch operand']
  #allocation4 [shape = 'f32[2,64]{1,0:T(2,128)}', space=vmem, size = 0x400, scoped, tag = 'scratch operand']
  #allocation5 [shape = 'f32[2,64]{1,0:T(2,128)}', space=vmem, size = 0x400, scoped, tag = 'scratch operand']
  #allocation6 [shape = 'f32[2,1024]{1,0:T(2,128)}', space=vmem, size = 0x2000, scoped, tag = 'scratch operand']
  #allocation14 [shape = 's32[]', space=sflag, size = 0x4, offset = 0, fixed_abs, tag = 'sflag constant byte address 0x0 - dummy sync flag']
  #allocation15 [shape = 's32[]', space=sflag, size = 0x4, offset = 0, fixed_abs, tag = 'sflag constant byte address 0x0 - dummy sync flag']
  #allocation16 [shape = 'u32[]', space=smem, size = 0x4, offset = 0x44, fixed_abs, tag = 'smem constant byte address 0x44 - assertion arg 0']
  #allocation17 [shape = 'u32[]', space=smem, size = 0x4, offset = 0x48, fixed_abs, tag = 'smem constant byte address 0x48 - assertion arg 1']
  #allocation18 [shape = 's32[]', space=sflag, size = 0x4, offset = 0, fixed_abs, tag = 'sflag constant byte address 0x0 - dummy sync flag']
  #allocation19 [shape = 's32[]', space=sflag, size = 0x4, offset = 0, fixed_abs, tag = 'sflag constant byte address 0x0 - dummy sync flag']
  %s0 = inlined_call_operand.vmem [shape: f32[100,2,256], index: 0, kind: input, shape index: {}]
  %s1 = inlined_call_operand.hbm [shape: f32[64,256], index: 1, kind: input, shape index: {}]
  %s2 = inlined_call_operand.hbm [shape: bf16[100,64,1024], index: 2, kind: input, shape index: {}]
  %s3 = inlined_call_operand.hbm [shape: f32[1,1024], index: 3, kind: input, shape index: {}]
  %s4 = inlined_call_operand.vmem [shape: f32[1024,41], index: 4, kind: input, shape index: {}]
  %s5 = inlined_call_operand.hbm [shape: f32[1,41], index: 5, kind: input, shape index: {}]
  %s6 = inlined_call_operand.hbm [shape: f32[2,41], index: 6, kind: output, shape index: {}]
  %s7 = sld [smem:[#allocation0]]
  $region61: #{cnn_lstm_forward.3} parent=0
    _
  %s9 = ssub.s32 1, %s7
  %s10 = scalar_select 0, %s9, %s7
  $region1: #{cnn_lstm_forward.3} parent=0
    #allocation7 [shape = 'u8[65536]{0}', space=vmem, size = 0x10000, scoped, tag = 'input window, operand 1, single buffered']
    #allocation8 [shape = 's32[1]{0}', space=sflag, size = 0x4, scoped, tag = 'scoped memory for cnn_lstm_forward.3']
    #allocation9 [shape = 's32[1]{0}', space=sflag, size = 0x4, scoped, tag = 'scoped memory for cnn_lstm_forward.3']
    #allocation10 [shape = 'u8[4096]{0}', space=vmem, size = 0x1000, scoped, tag = 'input window, operand 3, single buffered']
    #allocation11 [shape = 's32[1]{0}', space=sflag, size = 0x4, scoped, tag = 'scoped memory for cnn_lstm_forward.3']
    #allocation12 [shape = 'u8[512]{0}', space=vmem, size = 0x400, scoped, tag = 'input window, operand 5, single buffered']
    #allocation13 [shape = 'u8[1024]{0}', space=vmem, size = 0x400, scoped, tag = 'output window, operand 0, single buffered']
    %11 = vsyncpa [#allocation8], 0
    %12 = vsyncpa [#allocation11], 0
    %13 = vsyncpa [#allocation9], 0
    // Predicated region
    $region2: #{cnn_lstm_forward.3} parent=1 // pred_check
      _
    $region3: #{cnn_lstm_forward.3} parent=1 // pred_check_branch
      %15 = sbr.rel (0) target = $region5
    $region4: #{cnn_lstm_forward.3} parent=1 // pred_region
      _
    $region5: #{cnn_lstm_forward.3} parent=1 // pred_fallthru
      _
    // Predicated region
    $region6: #{cnn_lstm_forward.3} parent=1 // pred_check
      _
    $region7: #{cnn_lstm_forward.3} parent=1 // pred_check_branch
      %17 = sbr.rel (0) target = $region9
    $region8: #{cnn_lstm_forward.3} parent=1 // pred_region
      %19 = vsyncadd [#allocation8], 0
      %s20 = sshll.u32 %s1, 4
      %s21 = int_to_ptr.hbm [resolvable:$true] %s20
      %s22 = sshll.u32 [#allocation7], 4
      %s23 = int_to_ptr.vmem [resolvable:$true] %s22
      %28 = dma.hbm_to_vmem [thread:$0]  %s21, 2048, %s23, [#allocation8], 256, 256, 16
    $region9: #{cnn_lstm_forward.3} parent=1 // pred_fallthru
      _
    // Predicated region
    $region10: #{cnn_lstm_forward.3} parent=1 // pred_check
      _
    $region11: #{cnn_lstm_forward.3} parent=1 // pred_check_branch
      %30 = sbr.rel (0) target = $region13
    $region12: #{cnn_lstm_forward.3} parent=1 // pred_region
      %32 = vsyncadd [#allocation11], 0
      %s34 = sshll.u32 %s3, 4
      %s35 = int_to_ptr.hbm [resolvable:$true] %s34
      %s36 = sshll.u32 [#allocation10], 4
      %s37 = int_to_ptr.vmem [resolvable:$true] %s36
      %39 = dma.hbm_to_vmem [thread:$0]  %s35, 128, %s37, [#allocation11]
    $region13: #{cnn_lstm_forward.3} parent=1 // pred_fallthru
      _
    // Predicated region
    $region14: #{cnn_lstm_forward.3} parent=1 // pred_check
      _
    $region15: #{cnn_lstm_forward.3} parent=1 // pred_check_branch
      %41 = sbr.rel (0) target = $region17
    $region16: #{cnn_lstm_forward.3} parent=1 // pred_region
      _
    $region17: #{cnn_lstm_forward.3} parent=1 // pred_fallthru
      _
    // Predicated region
    $region18: #{cnn_lstm_forward.3} parent=1 // pred_check
      _
    $region19: #{cnn_lstm_forward.3} parent=1 // pred_check_branch
      %43 = sbr.rel (0) target = $region21
    $region20: #{cnn_lstm_forward.3} parent=1 // pred_region
      %45 = vsyncadd [#allocation11], 0
      %s47 = sshll.u32 %s5, 4
      %s48 = int_to_ptr.hbm [resolvable:$true] %s47
      %s49 = sshll.u32 [#allocation12], 4
      %s50 = int_to_ptr.vmem [resolvable:$true] %s49
      %52 = dma.hbm_to_vmem [thread:$0]  %s48, 16, %s50, [#allocation11]
    $region21: #{cnn_lstm_forward.3} parent=1 // pred_fallthru
      _
    // Predicated region
    $region22: #{cnn_lstm_forward.3} parent=1 // pred_check
      _
    $region23: #{cnn_lstm_forward.3} parent=1 // pred_check_branch
      %54 = sbr.rel (0) target = $region25
    $region24: #{cnn_lstm_forward.3} parent=1 // pred_region
      %56 = dma.done [#allocation8], 2048
    $region25: #{cnn_lstm_forward.3} parent=1 // pred_fallthru
      _
    // Predicated region
    $region26: #{cnn_lstm_forward.3} parent=1 // pred_check
      _
    $region27: #{cnn_lstm_forward.3} parent=1 // pred_check_branch
      %58 = sbr.rel (0) target = $region29
    $region28: #{cnn_lstm_forward.3} parent=1 // pred_region
      %60 = dma.done [#allocation11], 128
    $region29: #{cnn_lstm_forward.3} parent=1 // pred_fallthru
      _
    // Predicated region
    $region30: #{cnn_lstm_forward.3} parent=1 // pred_check
      _
    $region31: #{cnn_lstm_forward.3} parent=1 // pred_check_branch
      %62 = sbr.rel (0) target = $region33
    $region32: #{cnn_lstm_forward.3} parent=1 // pred_region
      %64 = dma.done [#allocation11], 16
    $region33: #{cnn_lstm_forward.3} parent=1 // pred_fallthru
      _
    %v66 = vld [vmem:[#allocation7] sm:$0xff]
    %v67 = vld [vmem:[#allocation7 + $0x8] sm:$0xff]
    %v68 = vld [vmem:[#allocation7 + $0x10] sm:$0xff]
    %v69 = vld [vmem:[#allocation7 + $0x18] sm:$0xff]
    %v70 = vld [vmem:[#allocation7 + $0x20] sm:$0xff]
    %v71 = vld [vmem:[#allocation7 + $0x28] sm:$0xff]
    %v72 = vld [vmem:[#allocation7 + $0x30] sm:$0xff]
    %v73 = vld [vmem:[#allocation7 + $0x38] sm:$0xff]
    %v74 = vld [vmem:[#allocation7 + $0x40] sm:$0xff]
    %v75 = vld [vmem:[#allocation7 + $0x48] sm:$0xff]
    %v76 = vld [vmem:[#allocation7 + $0x50] sm:$0xff]
    %v77 = vld [vmem:[#allocation7 + $0x58] sm:$0xff]
    %v78 = vld [vmem:[#allocation7 + $0x60] sm:$0xff]
    %v79 = vld [vmem:[#allocation7 + $0x68] sm:$0xff]
    %v80 = vld [vmem:[#allocation7 + $0x70] sm:$0xff]
    %v81 = vld [vmem:[#allocation7 + $0x78] sm:$0xff]
    %vm82 = vcmask 517120
    %83 = vst.msk [vmem:[#allocation4] sm:$0x3] %vm82, 0.0
    %84 = vst.msk [vmem:[#allocation5] sm:$0x3] %vm82, 0.0
    %85 = vst [vmem:[#allocation6] sm:$0xff] 0.0
    %86 = vst [vmem:[#allocation6 + $0x8] sm:$0xff] 0.0
    // Predicated region
    $region34: #{cnn_lstm_forward.3} parent=1 // pred_check
      _
    $region35: #{cnn_lstm_forward.3} parent=1 // pred_check_branch
      %88 = sbr.rel target = $region37
    $region36: #{cnn_lstm_forward.3} parent=1 // pred_region
      %89 = sst [smem:[#allocation16]] [#allocation15]
      %90 = sst [smem:[#allocation17]] [#allocation14]
    $region37: #{cnn_lstm_forward.3} parent=1 // pred_fallthru
      _
    %92 = shalt.err (0)
    %s94 = sshll.u32 %s2, 4
    %s95 = int_to_ptr.hbm [resolvable:$true] %s94
    %s96 = sshll.u32 [#allocation2], 4
    %s97 = int_to_ptr.vmem [resolvable:$true] %s96
    %99 = dma.hbm_to_vmem [thread:$0]  %s95, 40960, %s97, [#allocation3]
    loop: start=0, step=1, limit=10
    $region38: #{cnn_lstm_forward.3} parent=1 // loop_pre_header
      _
    $region39: #{cnn_lstm_forward.3} parent=1 // loop_header
      %s101 = sphi 0, %s105
      %p102 = scmp.ge.s32.totalorder %s101, 10
    $region40: #{cnn_lstm_forward.3} parent=1 // loop_header_branch
      %104 = sbr.rel (%p102) target = $region44
    $region41: #{cnn_lstm_forward.3} parent=1 // loop_body
      %p106 = scmp.lt.s32.totalorder %s101, 0
      %s107 = ssub.s32 0, %s101
      %s108 = scalar_select %p106, %s107, %s101
      %s109 = sand.u32 %s108, 1
      %s110 = ssub.s32 0, %s109
      %s111 = scalar_select %p106, %s110, %s109
      %s112 = sadd.s32 %s101, 1
      %p113 = scmp.lt.s32.totalorder %s112, 10
      // Predicated region
      $region45: #{cnn_lstm_forward.3} parent=41 // pred_check
        %p114 = pneg %p113
      $region46: #{cnn_lstm_forward.3} parent=41 // pred_check_branch
        %116 = sbr.rel (%p114) target = $region48
      $region47: #{cnn_lstm_forward.3} parent=41 // pred_region
        %s117 = ssub.s32 1, %s111
        %s118 = smul.u32 %s112, 10
        %s119 = smul.u32 %s118, 64
        %s120 = smul.addr %s119, 4
        %s121 = scalar_lea.hbm %s2, %s120
        %s122 = smul.u32 %s117, 640
        %s123 = smul.addr %s122, 4
        %s124 = scalar_lea.vmem [#allocation2], %s123
        %s125 = scalar_lea.sflag [#allocation3], %s117
        // Predicated region
        $region49: #{cnn_lstm_forward.3} parent=47 // pred_check
          _
        $region50: #{cnn_lstm_forward.3} parent=47 // pred_check_branch
          %127 = sbr.rel target = $region52
        $region51: #{cnn_lstm_forward.3} parent=47 // pred_region
          %128 = sst [smem:[#allocation16]] [#allocation19]
          %129 = sst [smem:[#allocation17]] [#allocation18]
        $region52: #{cnn_lstm_forward.3} parent=47 // pred_fallthru
          _
        %131 = shalt.err (0)
        %s133 = sshll.u32 %s121, 4
        %s134 = int_to_ptr.hbm [resolvable:$true] %s133
        %s135 = sshll.u32 %s124, 4
        %s136 = int_to_ptr.vmem [resolvable:$true] %s135
        %138 = dma.hbm_to_vmem [thread:$0]  %s134, 40960, %s136, %s125
      $region48: #{cnn_lstm_forward.3} parent=41 // pred_fallthru
        _
      %s139 = smul.u32 %s101, 10
      %s140 = scalar_lea.sflag [#allocation3], %s111
      %s141 = smul.u32 4, 10
      %s142 = smul.u32 %s141, 8
      %s143 = smul.u32 %s142, 8
      %s144 = sshll.u32 %s143, 4
      %145 = dma.done %s140, %s144
      %s146 = smul.u32 %s139, 2
      %s147 = smul.addr %s146, 2
      %s148 = scalar_lea.vmem %s0, %s147
      %v149 = vld [vmem:[%s148] sm:$0xf]
      %v150 = vld [vmem:[#allocation4] sm:$0x3]
      %vm151 = vcmask 523264
      %v153 = vsel %vm151, %v150, 0
      %155 = vmatpush.msra.mxu0 0.0
      %156 = vmatpush.msra.mxu0 0.0
      %157 = vmatpush.msra.mxu0 0.0
      %158 = vmatpush.msra.mxu0 0.0
      %159 = vmatpush.msra.mxu0 0.0
      %160 = vmatpush.msra.mxu0 0.0
      %161 = vmatpush.msra.mxu0 0.0
      %162 = vmatpush.msra.mxu0 0.0
      %163 = vmatpush.msra.mxu0 %v80
      %164 = vmatpush.msra.mxu0 %v78
      %165 = vmatpush.msra.mxu0 %v76
      %166 = vmatpush.msra.mxu0 %v74
      %167 = vmatpush.msra.mxu0 %v72
      %168 = vmatpush.msra.mxu0 %v70
      %169 = vmatpush.msra.mxu0 %v68
      %170 = vmatpush.msra.mxu0 %v66
      %171 = vmatmul.f32.gmra.mxu0 %v153
      %v172 = vpop.f32.mrf.mxu0
      %v173 = vadd.f32 0.0, %v172
      %174 = vdwg.mxu0
      %175 = vmatpush.msra.mxu0 0.0
      %176 = vmatpush.msra.mxu0 0.0
      %177 = vmatpush.msra.mxu0 0.0
      %178 = vmatpush.msra.mxu0 0.0
      %179 = vmatpush.msra.mxu0 0.0
      %180 = vmatpush.msra.mxu0 0.0
      %181 = vmatpush.msra.mxu0 0.0
      %182 = vmatpush.msra.mxu0 0.0
      %183 = vmatpush.msra.mxu0 %v81
      %184 = vmatpush.msra.mxu0 %v79
      %185 = vmatpush.msra.mxu0 %v77
      %186 = vmatpush.msra.mxu0 %v75
      %187 = vmatpush.msra.mxu0 %v73
      %188 = vmatpush.msra.mxu0 %v71
      %189 = vmatpush.msra.mxu0 %v69
      %190 = vmatpush.msra.mxu0 %v67
      %191 = vmatmul.f32.gmra.mxu0 %v153
      %v192 = vpop.f32.mrf.mxu0
      %v193 = vadd.f32 0.0, %v192
      %194 = vdwg.mxu0
      %v197 = vrot.slane %v193, 6
      %vm198 = vcmask 1041408
      %v199 = vsel %vm198, %v173, %v197
      %v201 = vadd.f32 %v149, %v199
      %v202 = vxor.u32 %v201, 2147483648
      %v203 = vmul.f32 %v202, 1.442695
      %v204 = vpow.pop %v203
      %v205 = vadd.f32 %v204, 1.0
      %v206 = vrcp.pop %v205
      %v207 = vmul.f32 %v205, %v206
      %v208 = vsub.f32 1.0, %v207
      %v209 = vmul.f32 %v206, %v208
      %v210 = vadd.f32 %v206, %v209
      %vm211 = vweird.f32 %v205
      %vm212 = vweird.f32 %v206
      %vm213 = vmor %vm211, %vm212
      %v214 = vsel %vm213, %v206, %v210
      %v215 = vand.u32 2147483647, %v205
      %vm216 = vcmp.eq.f32.partialorder %v215, 8.507059e+37
      %v217 = vand.u32 %v205, 2147483648
      %v218 = vor.u32 1.1754944e-38, %v217
      %v219 = vsel %vm216, %v218, %v214
      %v220 = vmul.f32 1.0, %v219
      %v222 = vrot.slane %v220, 2
      %v224 = vmul.f32 %v222, 2.0
      %v225 = vsub.f32 %v224, 1.0
      %v226 = vld [vmem:[#allocation5] sm:$0x3]
      %228 = vrot.lane.b32.xlu0 %v226, 64
      %v229 = vpop.permute.xlu0 %228
      %v231 = vmul.f32 %v220, %v229
      %v232 = vmul.f32 %v220, %v225
      %234 = vrot.lane.b32.xlu0 %v232, 64
      %v235 = vpop.permute.xlu0 %234
      %v237 = vadd.f32 %v231, %v235
      %v238 = vtanh.pop %v237
      %239 = vrot.lane.b32.xlu0 %v220, 64
      %v240 = vpop.permute.xlu0 %239
      %v241 = vrot.slane %v240, 2
      %244 = vrot.lane.b32.xlu0 %v238, 64
      %v245 = vpop.permute.xlu0 %244
      %v247 = vmul.f32 %v241, %v245
      %249 = vst [vmem:[#allocation1] ss:$4 sm:$0xff] %v237
      %v250 = vld.sshfl [vmem:[#allocation1] sm:$0xff pattern:$0x73625140]
      %251 = vrot.lane.b32.xlu0 %v250, 64
      %v252 = vpop.permute.xlu0 %251
      %254 = vst.msk [vmem:[#allocation5] sm:$0x3] %vm82, %v252
      %255 = vst.msk [vmem:[#allocation4] sm:$0x3] %vm82, %v247
      %v256 = vld [vmem:[#allocation6] sm:$0xff]
      %v257 = vld [vmem:[#allocation6 + $0x8] sm:$0xff]
      %v258 = vpack.c.bf16 %v247, %v247
      %s259 = smul.u32 %s111, 640
      %s260 = smul.addr %s259, 4
      %s261 = scalar_lea.vmem [#allocation2], %s260
      %v262 = vld [vmem:[%s261] sm:$0xff]
      %v263 = vld [vmem:[%s261 + $0x8] sm:$0xff]
      %v264 = vld [vmem:[%s261 + $0x10] sm:$0xff]
      %v265 = vld [vmem:[%s261 + $0x18] sm:$0xff]
      %v266 = vld [vmem:[%s261 + $0x20] sm:$0xff]
      %v267 = vld [vmem:[%s261 + $0x28] sm:$0xff]
      %v268 = vld [vmem:[%s261 + $0x30] sm:$0xff]
      %v269 = vld [vmem:[%s261 + $0x38] sm:$0xff]
      %v270 = vld [vmem:[%s261 + $0x40] sm:$0xff]
      %v271 = vld [vmem:[%s261 + $0x48] sm:$0xff]
      %v272 = vld [vmem:[%s261 + $0x50] sm:$0xff]
      %v273 = vld [vmem:[%s261 + $0x58] sm:$0xff]
      %v274 = vld [vmem:[%s261 + $0x60] sm:$0xff]
      %v275 = vld [vmem:[%s261 + $0x68] sm:$0xff]
      %v276 = vld [vmem:[%s261 + $0x70] sm:$0xff]
      %v277 = vld [vmem:[%s261 + $0x78] sm:$0xff]
      %v278 = vld [vmem:[%s261 + $0x80] sm:$0xff]
      %v279 = vld [vmem:[%s261 + $0x88] sm:$0xff]
      %v280 = vld [vmem:[%s261 + $0x90] sm:$0xff]
      %v281 = vld [vmem:[%s261 + $0x98] sm:$0xff]
      %v282 = vld [vmem:[%s261 + $0xa0] sm:$0xff]
      %v283 = vld [vmem:[%s261 + $0xa8] sm:$0xff]
      %v284 = vld [vmem:[%s261 + $0xb0] sm:$0xff]
      %v285 = vld [vmem:[%s261 + $0xb8] sm:$0xff]
      %v286 = vld [vmem:[%s261 + $0xc0] sm:$0xff]
      %v287 = vld [vmem:[%s261 + $0xc8] sm:$0xff]
      %v288 = vld [vmem:[%s261 + $0xd0] sm:$0xff]
      %v289 = vld [vmem:[%s261 + $0xd8] sm:$0xff]
      %v290 = vld [vmem:[%s261 + $0xe0] sm:$0xff]
      %v291 = vld [vmem:[%s261 + $0xe8] sm:$0xff]
      %v292 = vld [vmem:[%s261 + $0xf0] sm:$0xff]
      %v293 = vld [vmem:[%s261 + $0xf8] sm:$0xff]
      %v326 = vunpack.c.l.b16 %v262
      %v327 = vunpack.c.h.b16 %v262
      %v328 = vunpack.c.l.b16 %v263
      %v329 = vunpack.c.h.b16 %v263
      %v330 = vunpack.c.l.b16 %v264
      %v331 = vunpack.c.h.b16 %v264
      %v332 = vunpack.c.l.b16 %v265
      %v333 = vunpack.c.h.b16 %v265
      %v334 = vunpack.c.l.b16 %v266
      %v335 = vunpack.c.h.b16 %v266
      %v336 = vunpack.c.l.b16 %v267
      %v337 = vunpack.c.h.b16 %v267
      %v338 = vunpack.c.l.b16 %v268
      %v339 = vunpack.c.h.b16 %v268
      %v340 = vunpack.c.l.b16 %v269
      %v341 = vunpack.c.h.b16 %v269
      %v342 = vunpack.c.l.b16 %v270
      %v343 = vunpack.c.h.b16 %v270
      %v344 = vunpack.c.l.b16 %v271
      %v345 = vunpack.c.h.b16 %v271
      %v346 = vunpack.c.l.b16 %v272
      %v347 = vunpack.c.h.b16 %v272
      %v348 = vunpack.c.l.b16 %v273
      %v349 = vunpack.c.h.b16 %v273
      %v350 = vunpack.c.l.b16 %v274
      %v351 = vunpack.c.h.b16 %v274
      %v352 = vunpack.c.l.b16 %v275
      %v353 = vunpack.c.h.b16 %v275
      %v354 = vunpack.c.l.b16 %v276
      %v355 = vunpack.c.h.b16 %v276
      %v356 = vunpack.c.l.b16 %v277
      %v357 = vunpack.c.h.b16 %v277
      %v358 = vunpack.c.l.b16 %v278
      %v359 = vunpack.c.h.b16 %v278
      %v360 = vunpack.c.l.b16 %v279
      %v361 = vunpack.c.h.b16 %v279
      %v362 = vunpack.c.l.b16 %v280
      %v363 = vunpack.c.h.b16 %v280
      %v364 = vunpack.c.l.b16 %v281
      %v365 = vunpack.c.h.b16 %v281
      %v366 = vunpack.c.l.b16 %v282
      %v367 = vunpack.c.h.b16 %v282
      %v368 = vunpack.c.l.b16 %v283
      %v369 = vunpack.c.h.b16 %v283
      %v370 = vunpack.c.l.b16 %v284
      %v371 = vunpack.c.h.b16 %v284
      %v372 = vunpack.c.l.b16 %v285
      %v373 = vunpack.c.h.b16 %v285
      %v374 = vunpack.c.l.b16 %v286
      %v375 = vunpack.c.h.b16 %v286
      %v376 = vunpack.c.l.b16 %v287
      %v377 = vunpack.c.h.b16 %v287
      %v378 = vunpack.c.l.b16 %v288
      %v379 = vunpack.c.h.b16 %v288
      %v380 = vunpack.c.l.b16 %v289
      %v381 = vunpack.c.h.b16 %v289
      %v382 = vunpack.c.l.b16 %v290
      %v383 = vunpack.c.h.b16 %v290
      %v384 = vunpack.c.l.b16 %v291
      %v385 = vunpack.c.h.b16 %v291
      %v386 = vunpack.c.l.b16 %v292
      %v387 = vunpack.c.h.b16 %v292
      %v388 = vunpack.c.l.b16 %v293
      %v389 = vunpack.c.h.b16 %v293
      %v390 = vpack.c.b16 %v334, %v326
      %v391 = vpack.c.b16 %v335, %v327
      %v392 = vpack.c.b16 %v336, %v328
      %v393 = vpack.c.b16 %v337, %v329
      %v394 = vpack.c.b16 %v338, %v330
      %v395 = vpack.c.b16 %v339, %v331
      %v396 = vpack.c.b16 %v340, %v332
      %v397 = vpack.c.b16 %v341, %v333
      %v398 = vpack.c.b16 %v350, %v342
      %v399 = vpack.c.b16 %v351, %v343
      %v400 = vpack.c.b16 %v352, %v344
      %v401 = vpack.c.b16 %v353, %v345
      %v402 = vpack.c.b16 %v354, %v346
      %v403 = vpack.c.b16 %v355, %v347
      %v404 = vpack.c.b16 %v356, %v348
      %v405 = vpack.c.b16 %v357, %v349
      %v406 = vpack.c.b16 %v366, %v358
      %v407 = vpack.c.b16 %v367, %v359
      %v408 = vpack.c.b16 %v368, %v360
      %v409 = vpack.c.b16 %v369, %v361
      %v410 = vpack.c.b16 %v370, %v362
      %v411 = vpack.c.b16 %v371, %v363
      %v412 = vpack.c.b16 %v372, %v364
      %v413 = vpack.c.b16 %v373, %v365
      %v414 = vpack.c.b16 %v382, %v374
      %v415 = vpack.c.b16 %v383, %v375
      %v416 = vpack.c.b16 %v384, %v376
      %v417 = vpack.c.b16 %v385, %v377
      %v418 = vpack.c.b16 %v386, %v378
      %v419 = vpack.c.b16 %v387, %v379
      %v420 = vpack.c.b16 %v388, %v380
      %v421 = vpack.c.b16 %v389, %v381
      %v455 = vsel %vm151, %v258, 0
      %457 = vmatpush.bf16.msra.mxu0 0
      %458 = vmatpush.bf16.msra.mxu0 0
      %459 = vmatpush.bf16.msra.mxu0 0
      %460 = vmatpush.bf16.msra.mxu0 0
      %461 = vmatpush.bf16.msra.mxu0 %v414
      %462 = vmatpush.bf16.msra.mxu0 %v406
      %463 = vmatpush.bf16.msra.mxu0 %v398
      %464 = vmatpush.bf16.msra.mxu0 %v390
      %465 = vmatmul.bf16.gmra.mxu0 %v455
      %v466 = vpop.f32.mrf.mxu0
      %v467 = vadd.f32 0.0, %v466
      %v468 = vpop.f32.mrf.mxu0
      %469 = vdwg.mxu0
      %470 = vmatpush.bf16.msra.mxu0 0
      %471 = vmatpush.bf16.msra.mxu0 0
      %472 = vmatpush.bf16.msra.mxu0 0
      %473 = vmatpush.bf16.msra.mxu0 0
      %474 = vmatpush.bf16.msra.mxu0 %v415
      %475 = vmatpush.bf16.msra.mxu0 %v407
      %476 = vmatpush.bf16.msra.mxu0 %v399
      %477 = vmatpush.bf16.msra.mxu0 %v391
      %478 = vmatmul.bf16.gmra.mxu0 %v455
      %v479 = vpop.f32.mrf.mxu0
      %v480 = vadd.f32 0.0, %v479
      %v481 = vpop.f32.mrf.mxu0
      %482 = vdwg.mxu0
      %483 = vmatpush.bf16.msra.mxu0 0
      %484 = vmatpush.bf16.msra.mxu0 0
      %485 = vmatpush.bf16.msra.mxu0 0
      %486 = vmatpush.bf16.msra.mxu0 0
      %487 = vmatpush.bf16.msra.mxu0 %v416
      %488 = vmatpush.bf16.msra.mxu0 %v408
      %489 = vmatpush.bf16.msra.mxu0 %v400
      %490 = vmatpush.bf16.msra.mxu0 %v392
      %491 = vmatmul.bf16.gmra.mxu0 %v455
      %v492 = vpop.f32.mrf.mxu0
      %v493 = vadd.f32 0.0, %v492
      %v494 = vpop.f32.mrf.mxu0
      %495 = vdwg.mxu0
      %496 = vmatpush.bf16.msra.mxu0 0
      %497 = vmatpush.bf16.msra.mxu0 0
      %498 = vmatpush.bf16.msra.mxu0 0
      %499 = vmatpush.bf16.msra.mxu0 0
      %500 = vmatpush.bf16.msra.mxu0 %v417
      %501 = vmatpush.bf16.msra.mxu0 %v409
      %502 = vmatpush.bf16.msra.mxu0 %v401
      %503 = vmatpush.bf16.msra.mxu0 %v393
      %504 = vmatmul.bf16.gmra.mxu0 %v455
      %v505 = vpop.f32.mrf.mxu0
      %v506 = vadd.f32 0.0, %v505
      %v507 = vpop.f32.mrf.mxu0
      %508 = vdwg.mxu0
      %509 = vmatpush.bf16.msra.mxu0 0
      %510 = vmatpush.bf16.msra.mxu0 0
      %511 = vmatpush.bf16.msra.mxu0 0
      %512 = vmatpush.bf16.msra.mxu0 0
      %513 = vmatpush.bf16.msra.mxu0 %v418
      %514 = vmatpush.bf16.msra.mxu0 %v410
      %515 = vmatpush.bf16.msra.mxu0 %v402
      %516 = vmatpush.bf16.msra.mxu0 %v394
      %517 = vmatmul.bf16.gmra.mxu0 %v455
      %v518 = vpop.f32.mrf.mxu0
      %v519 = vadd.f32 0.0, %v518
      %v520 = vpop.f32.mrf.mxu0
      %521 = vdwg.mxu0
      %522 = vmatpush.bf16.msra.mxu0 0
      %523 = vmatpush.bf16.msra.mxu0 0
      %524 = vmatpush.bf16.msra.mxu0 0
      %525 = vmatpush.bf16.msra.mxu0 0
      %526 = vmatpush.bf16.msra.mxu0 %v419
      %527 = vmatpush.bf16.msra.mxu0 %v411
      %528 = vmatpush.bf16.msra.mxu0 %v403
      %529 = vmatpush.bf16.msra.mxu0 %v395
      %530 = vmatmul.bf16.gmra.mxu0 %v455
      %v531 = vpop.f32.mrf.mxu0
      %v532 = vadd.f32 0.0, %v531
      %v533 = vpop.f32.mrf.mxu0
      %534 = vdwg.mxu0
      %535 = vmatpush.bf16.msra.mxu0 0
      %536 = vmatpush.bf16.msra.mxu0 0
      %537 = vmatpush.bf16.msra.mxu0 0
      %538 = vmatpush.bf16.msra.mxu0 0
      %539 = vmatpush.bf16.msra.mxu0 %v420
      %540 = vmatpush.bf16.msra.mxu0 %v412
      %541 = vmatpush.bf16.msra.mxu0 %v404
      %542 = vmatpush.bf16.msra.mxu0 %v396
      %543 = vmatmul.bf16.gmra.mxu0 %v455
      %v544 = vpop.f32.mrf.mxu0
      %v545 = vadd.f32 0.0, %v544
      %v546 = vpop.f32.mrf.mxu0
      %547 = vdwg.mxu0
      %548 = vmatpush.bf16.msra.mxu0 0
      %549 = vmatpush.bf16.msra.mxu0 0
      %550 = vmatpush.bf16.msra.mxu0 0
      %551 = vmatpush.bf16.msra.mxu0 0
      %552 = vmatpush.bf16.msra.mxu0 %v421
      %553 = vmatpush.bf16.msra.mxu0 %v413
      %554 = vmatpush.bf16.msra.mxu0 %v405
      %555 = vmatpush.bf16.msra.mxu0 %v397
      %556 = vmatmul.bf16.gmra.mxu0 %v455
      %v557 = vpop.f32.mrf.mxu0
      %v558 = vadd.f32 0.0, %v557
      %v559 = vpop.f32.mrf.mxu0
      %560 = vdwg.mxu0
      %v569 = vrot.slane %v480, 6
      %v570 = vrot.slane %v493, 4
      %v571 = vrot.slane %v506, 2
      %v572 = vrot.slane %v532, 6
      %v573 = vrot.slane %v545, 4
      %v574 = vrot.slane %v558, 2
      %v575 = vsel %vm198, %v467, %v569
      %vm576 = vcmask 1045508
      %v577 = vsel %vm576, %v570, %v571
      %vm578 = vcmask 1043456
      %v579 = vsel %vm578, %v575, %v577
      %v580 = vsel %vm198, %v519, %v572
      %v581 = vsel %vm576, %v573, %v574
      %v582 = vsel %vm578, %v580, %v581
      %v585 = vadd.f32 %v256, %v579
      %v586 = vadd.f32 %v257, %v582
      %587 = vst [vmem:[#allocation6] sm:$0xff] %v585
      %588 = vst [vmem:[#allocation6 + $0x8] sm:$0xff] %v586
      %s589 = sadd.s32 %s139, 1
      %s590 = smul.u32 %s589, 2
      %s591 = smul.addr %s590, 2
      %s592 = scalar_lea.vmem %s0, %s591
      %v593 = vld [vmem:[%s592] sm:$0xf]
      %v594 = vld [vmem:[#allocation4] sm:$0x3]
      %v596 = vsel %vm151, %v594, 0
      %598 = vmatpush.msra.mxu0 0.0
      %599 = vmatpush.msra.mxu0 0.0
      %600 = vmatpush.msra.mxu0 0.0
      %601 = vmatpush.msra.mxu0 0.0
      %602 = vmatpush.msra.mxu0 0.0
      %603 = vmatpush.msra.mxu0 0.0
      %604 = vmatpush.msra.mxu0 0.0
      %605 = vmatpush.msra.mxu0 0.0
      %606 = vmatpush.msra.mxu0 %v80
      %607 = vmatpush.msra.mxu0 %v78
      %608 = vmatpush.msra.mxu0 %v76
      %609 = vmatpush.msra.mxu0 %v74
      %610 = vmatpush.msra.mxu0 %v72
      %611 = vmatpush.msra.mxu0 %v70
      %612 = vmatpush.msra.mxu0 %v68
      %613 = vmatpush.msra.mxu0 %v66
      %614 = vmatmul.f32.gmra.mxu0 %v596
      %v615 = vpop.f32.mrf.mxu0
      %v616 = vadd.f32 0.0, %v615
      %617 = vdwg.mxu0
      %618 = vmatpush.msra.mxu0 0.0
      %619 = vmatpush.msra.mxu0 0.0
      %620 = vmatpush.msra.mxu0 0.0
      %621 = vmatpush.msra.mxu0 0.0
      %622 = vmatpush.msra.mxu0 0.0
      %623 = vmatpush.msra.mxu0 0.0
      %624 = vmatpush.msra.mxu0 0.0
      %625 = vmatpush.msra.mxu0 0.0
      %626 = vmatpush.msra.mxu0 %v81
      %627 = vmatpush.msra.mxu0 %v79
      %628 = vmatpush.msra.mxu0 %v77
      %629 = vmatpush.msra.mxu0 %v75
      %630 = vmatpush.msra.mxu0 %v73
      %631 = vmatpush.msra.mxu0 %v71
      %632 = vmatpush.msra.mxu0 %v69
      %633 = vmatpush.msra.mxu0 %v67
      %634 = vmatmul.f32.gmra.mxu0 %v596
      %v635 = vpop.f32.mrf.mxu0
      %v636 = vadd.f32 0.0, %v635
      %637 = vdwg.mxu0
      %v640 = vrot.slane %v636, 6
      %v641 = vsel %vm198, %v616, %v640
      %v643 = vadd.f32 %v593, %v641
      %v644 = vxor.u32 %v643, 2147483648
      %v645 = vmul.f32 %v644, 1.442695
      %v646 = vpow.pop %v645
      %v647 = vadd.f32 %v646, 1.0
      %v648 = vrcp.pop %v647
      %v649 = vmul.f32 %v647, %v648
      %v650 = vsub.f32 1.0, %v649
      %v651 = vmul.f32 %v648, %v650
      %v652 = vadd.f32 %v648, %v651
      %vm653 = vweird.f32 %v647
      %vm654 = vweird.f32 %v648
      %vm655 = vmor %vm653, %vm654
      %v656 = vsel %vm655, %v648, %v652
      %v657 = vand.u32 2147483647, %v647
      %vm658 = vcmp.eq.f32.partialorder %v657, 8.507059e+37
      %v659 = vand.u32 %v647, 2147483648
      %v660 = vor.u32 1.1754944e-38, %v659
      %v661 = vsel %vm658, %v660, %v656
      %v662 = vmul.f32 1.0, %v661
      %v664 = vrot.slane %v662, 2
      %v666 = vmul.f32 %v664, 2.0
      %v667 = vsub.f32 %v666, 1.0
      %v668 = vld [vmem:[#allocation5] sm:$0x3]
      %670 = vrot.lane.b32.xlu0 %v668, 64
      %v671 = vpop.permute.xlu0 %670
      %v673 = vmul.f32 %v662, %v671
      %v674 = vmul.f32 %v662, %v667
      %676 = vrot.lane.b32.xlu0 %v674, 64
      %v677 = vpop.permute.xlu0 %676
      %v679 = vadd.f32 %v673, %v677
      %v680 = vtanh.pop %v679
      %681 = vrot.lane.b32.xlu0 %v662, 64
      %v682 = vpop.permute.xlu0 %681
      %v683 = vrot.slane %v682, 2
      %686 = vrot.lane.b32.xlu0 %v680, 64
      %v687 = vpop.permute.xlu0 %686
      %v689 = vmul.f32 %v683, %v687
      %691 = vst [vmem:[#allocation1] ss:$4 sm:$0xff] %v679
      %v692 = vld.sshfl [vmem:[#allocation1] sm:$0xff pattern:$0x73625140]
      %693 = vrot.lane.b32.xlu0 %v692, 64
      %v694 = vpop.permute.xlu0 %693
      %696 = vst.msk [vmem:[#allocation5] sm:$0x3] %vm82, %v694
      %697 = vst.msk [vmem:[#allocation4] sm:$0x3] %vm82, %v689
      %v698 = vld [vmem:[#allocation6] sm:$0xff]
      %v699 = vld [vmem:[#allocation6 + $0x8] sm:$0xff]
      %v700 = vpack.c.bf16 %v689, %v689
      %s701 = sadd.s32 64, %s259
      %s702 = smul.addr %s701, 4
      %s703 = scalar_lea.vmem [#allocation2], %s702
      %v704 = vld [vmem:[%s703] sm:$0xff]
      %v705 = vld [vmem:[%s703 + $0x8] sm:$0xff]
      %v706 = vld [vmem:[%s703 + $0x10] sm:$0xff]
      %v707 = vld [vmem:[%s703 + $0x18] sm:$0xff]
      %v708 = vld [vmem:[%s703 + $0x20] sm:$0xff]
      %v709 = vld [vmem:[%s703 + $0x28] sm:$0xff]
      %v710 = vld [vmem:[%s703 + $0x30] sm:$0xff]
      %v711 = vld [vmem:[%s703 + $0x38] sm:$0xff]
      %v712 = vld [vmem:[%s703 + $0x40] sm:$0xff]
      %v713 = vld [vmem:[%s703 + $0x48] sm:$0xff]
      %v714 = vld [vmem:[%s703 + $0x50] sm:$0xff]
      %v715 = vld [vmem:[%s703 + $0x58] sm:$0xff]
      %v716 = vld [vmem:[%s703 + $0x60] sm:$0xff]
      %v717 = vld [vmem:[%s703 + $0x68] sm:$0xff]
      %v718 = vld [vmem:[%s703 + $0x70] sm:$0xff]
      %v719 = vld [vmem:[%s703 + $0x78] sm:$0xff]
      %v720 = vld [vmem:[%s703 + $0x80] sm:$0xff]
      %v721 = vld [vmem:[%s703 + $0x88] sm:$0xff]
      %v722 = vld [vmem:[%s703 + $0x90] sm:$0xff]
      %v723 = vld [vmem:[%s703 + $0x98] sm:$0xff]
      %v724 = vld [vmem:[%s703 + $0xa0] sm:$0xff]
      %v725 = vld [vmem:[%s703 + $0xa8] sm:$0xff]
      %v726 = vld [vmem:[%s703 + $0xb0] sm:$0xff]
      %v727 = vld [vmem:[%s703 + $0xb8] sm:$0xff]
      %v728 = vld [vmem:[%s703 + $0xc0] sm:$0xff]
      %v729 = vld [vmem:[%s703 + $0xc8] sm:$0xff]
      %v730 = vld [vmem:[%s703 + $0xd0] sm:$0xff]
      %v731 = vld [vmem:[%s703 + $0xd8] sm:$0xff]
      %v732 = vld [vmem:[%s703 + $0xe0] sm:$0xff]
      %v733 = vld [vmem:[%s703 + $0xe8] sm:$0xff]
      %v734 = vld [vmem:[%s703 + $0xf0] sm:$0xff]
      %v735 = vld [vmem:[%s703 + $0xf8] sm:$0xff]
      %v768 = vunpack.c.l.b16 %v704
      %v769 = vunpack.c.h.b16 %v704
      %v770 = vunpack.c.l.b16 %v705
      %v771 = vunpack.c.h.b16 %v705
      %v772 = vunpack.c.l.b16 %v706
      %v773 = vunpack.c.h.b16 %v706
      %v774 = vunpack.c.l.b16 %v707
      %v775 = vunpack.c.h.b16 %v707
      %v776 = vunpack.c.l.b16 %v708
      %v777 = vunpack.c.h.b16 %v708
      %v778 = vunpack.c.l.b16 %v709
      %v779 = vunpack.c.h.b16 %v709
      %v780 = vunpack.c.l.b16 %v710
      %v781 = vunpack.c.h.b16 %v710
      %v782 = vunpack.c.l.b16 %v711
      %v783 = vunpack.c.h.b16 %v711
      %v784 = vunpack.c.l.b16 %v712
      %v785 = vunpack.c.h.b16 %v712
      %v786 = vunpack.c.l.b16 %v713
      %v787 = vunpack.c.h.b16 %v713
      %v788 = vunpack.c.l.b16 %v714
      %v789 = vunpack.c.h.b16 %v714
      %v790 = vunpack.c.l.b16 %v715
      %v791 = vunpack.c.h.b16 %v715
      %v792 = vunpack.c.l.b16 %v716
      %v793 = vunpack.c.h.b16 %v716
      %v794 = vunpack.c.l.b16 %v717
      %v795 = vunpack.c.h.b16 %v717
      %v796 = vunpack.c.l.b16 %v718
      %v797 = vunpack.c.h.b16 %v718
      %v798 = vunpack.c.l.b16 %v719
      %v799 = vunpack.c.h.b16 %v719
      %v800 = vunpack.c.l.b16 %v720
      %v801 = vunpack.c.h.b16 %v720
      %v802 = vunpack.c.l.b16 %v721
      %v803 = vunpack.c.h.b16 %v721
      %v804 = vunpack.c.l.b16 %v722
      %v805 = vunpack.c.h.b16 %v722
      %v806 = vunpack.c.l.b16 %v723
      %v807 = vunpack.c.h.b16 %v723
      %v808 = vunpack.c.l.b16 %v724
      %v809 = vunpack.c.h.b16 %v724
      %v810 = vunpack.c.l.b16 %v725
      %v811 = vunpack.c.h.b16 %v725
      %v812 = vunpack.c.l.b16 %v726
      %v813 = vunpack.c.h.b16 %v726
      %v814 = vunpack.c.l.b16 %v727
      %v815 = vunpack.c.h.b16 %v727
      %v816 = vunpack.c.l.b16 %v728
      %v817 = vunpack.c.h.b16 %v728
      %v818 = vunpack.c.l.b16 %v729
      %v819 = vunpack.c.h.b16 %v729
      %v820 = vunpack.c.l.b16 %v730
      %v821 = vunpack.c.h.b16 %v730
      %v822 = vunpack.c.l.b16 %v731
      %v823 = vunpack.c.h.b16 %v731
      %v824 = vunpack.c.l.b16 %v732
      %v825 = vunpack.c.h.b16 %v732
      %v826 = vunpack.c.l.b16 %v733
      %v827 = vunpack.c.h.b16 %v733
      %v828 = vunpack.c.l.b16 %v734
      %v829 = vunpack.c.h.b16 %v734
      %v830 = vunpack.c.l.b16 %v735
      %v831 = vunpack.c.h.b16 %v735
      %v832 = vpack.c.b16 %v776, %v768
      %v833 = vpack.c.b16 %v777, %v769
      %v834 = vpack.c.b16 %v778, %v770
      %v835 = vpack.c.b16 %v779, %v771
      %v836 = vpack.c.b16 %v780, %v772
      %v837 = vpack.c.b16 %v781, %v773
      %v838 = vpack.c.b16 %v782, %v774
      %v839 = vpack.c.b16 %v783, %v775
      %v840 = vpack.c.b16 %v792, %v784
      %v841 = vpack.c.b16 %v793, %v785
      %v842 = vpack.c.b16 %v794, %v786
      %v843 = vpack.c.b16 %v795, %v787
      %v844 = vpack.c.b16 %v796, %v788
      %v845 = vpack.c.b16 %v797, %v789
      %v846 = vpack.c.b16 %v798, %v790
      %v847 = vpack.c.b16 %v799, %v791
      %v848 = vpack.c.b16 %v808, %v800
      %v849 = vpack.c.b16 %v809, %v801
      %v850 = vpack.c.b16 %v810, %v802
      %v851 = vpack.c.b16 %v811, %v803
      %v852 = vpack.c.b16 %v812, %v804
      %v853 = vpack.c.b16 %v813, %v805
      %v854 = vpack.c.b16 %v814, %v806
      %v855 = vpack.c.b16 %v815, %v807
      %v856 = vpack.c.b16 %v824, %v816
      %v857 = vpack.c.b16 %v825, %v817
      %v858 = vpack.c.b16 %v826, %v818
      %v859 = vpack.c.b16 %v827, %v819
      %v860 = vpack.c.b16 %v828, %v820
      %v861 = vpack.c.b16 %v829, %v821
      %v862 = vpack.c.b16 %v830, %v822
      %v863 = vpack.c.b16 %v831, %v823
      %v897 = vsel %vm151, %v700, 0
      %899 = vmatpush.bf16.msra.mxu0 0
      %900 = vmatpush.bf16.msra.mxu0 0
      %901 = vmatpush.bf16.msra.mxu0 0
      %902 = vmatpush.bf16.msra.mxu0 0
      %903 = vmatpush.bf16.msra.mxu0 %v856
      %904 = vmatpush.bf16.msra.mxu0 %v848
      %905 = vmatpush.bf16.msra.mxu0 %v840
      %906 = vmatpush.bf16.msra.mxu0 %v832
      %907 = vmatmul.bf16.gmra.mxu0 %v897
      %v908 = vpop.f32.mrf.mxu0
      %v909 = vadd.f32 0.0, %v908
      %v910 = vpop.f32.mrf.mxu0
      %911 = vdwg.mxu0
      %912 = vmatpush.bf16.msra.mxu0 0
      %913 = vmatpush.bf16.msra.mxu0 0
      %914 = vmatpush.bf16.msra.mxu0 0
      %915 = vmatpush.bf16.msra.mxu0 0
      %916 = vmatpush.bf16.msra.mxu0 %v857
      %917 = vmatpush.bf16.msra.mxu0 %v849
      %918 = vmatpush.bf16.msra.mxu0 %v841
      %919 = vmatpush.bf16.msra.mxu0 %v833
      %920 = vmatmul.bf16.gmra.mxu0 %v897
      %v921 = vpop.f32.mrf.mxu0
      %v922 = vadd.f32 0.0, %v921
      %v923 = vpop.f32.mrf.mxu0
      %924 = vdwg.mxu0
      %925 = vmatpush.bf16.msra.mxu0 0
      %926 = vmatpush.bf16.msra.mxu0 0
      %927 = vmatpush.bf16.msra.mxu0 0
      %928 = vmatpush.bf16.msra.mxu0 0
      %929 = vmatpush.bf16.msra.mxu0 %v858
      %930 = vmatpush.bf16.msra.mxu0 %v850
      %931 = vmatpush.bf16.msra.mxu0 %v842
      %932 = vmatpush.bf16.msra.mxu0 %v834
      %933 = vmatmul.bf16.gmra.mxu0 %v897
      %v934 = vpop.f32.mrf.mxu0
      %v935 = vadd.f32 0.0, %v934
      %v936 = vpop.f32.mrf.mxu0
      %937 = vdwg.mxu0
      %938 = vmatpush.bf16.msra.mxu0 0
      %939 = vmatpush.bf16.msra.mxu0 0
      %940 = vmatpush.bf16.msra.mxu0 0
      %941 = vmatpush.bf16.msra.mxu0 0
      %942 = vmatpush.bf16.msra.mxu0 %v859
      %943 = vmatpush.bf16.msra.mxu0 %v851
      %944 = vmatpush.bf16.msra.mxu0 %v843
      %945 = vmatpush.bf16.msra.mxu0 %v835
      %946 = vmatmul.bf16.gmra.mxu0 %v897
      %v947 = vpop.f32.mrf.mxu0
      %v948 = vadd.f32 0.0, %v947
      %v949 = vpop.f32.mrf.mxu0
      %950 = vdwg.mxu0
      %951 = vmatpush.bf16.msra.mxu0 0
      %952 = vmatpush.bf16.msra.mxu0 0
      %953 = vmatpush.bf16.msra.mxu0 0
      %954 = vmatpush.bf16.msra.mxu0 0
      %955 = vmatpush.bf16.msra.mxu0 %v860
      %956 = vmatpush.bf16.msra.mxu0 %v852
      %957 = vmatpush.bf16.msra.mxu0 %v844
      %958 = vmatpush.bf16.msra.mxu0 %v836
      %959 = vmatmul.bf16.gmra.mxu0 %v897
      %v960 = vpop.f32.mrf.mxu0
      %v961 = vadd.f32 0.0, %v960
      %v962 = vpop.f32.mrf.mxu0
      %963 = vdwg.mxu0
      %964 = vmatpush.bf16.msra.mxu0 0
      %965 = vmatpush.bf16.msra.mxu0 0
      %966 = vmatpush.bf16.msra.mxu0 0
      %967 = vmatpush.bf16.msra.mxu0 0
      %968 = vmatpush.bf16.msra.mxu0 %v861
      %969 = vmatpush.bf16.msra.mxu0 %v853
      %970 = vmatpush.bf16.msra.mxu0 %v845
      %971 = vmatpush.bf16.msra.mxu0 %v837
      %972 = vmatmul.bf16.gmra.mxu0 %v897
      %v973 = vpop.f32.mrf.mxu0
      %v974 = vadd.f32 0.0, %v973
      %v975 = vpop.f32.mrf.mxu0
      %976 = vdwg.mxu0
      %977 = vmatpush.bf16.msra.mxu0 0
      %978 = vmatpush.bf16.msra.mxu0 0
      %979 = vmatpush.bf16.msra.mxu0 0
      %980 = vmatpush.bf16.msra.mxu0 0
      %981 = vmatpush.bf16.msra.mxu0 %v862
      %982 = vmatpush.bf16.msra.mxu0 %v854
      %983 = vmatpush.bf16.msra.mxu0 %v846
      %984 = vmatpush.bf16.msra.mxu0 %v838
      %985 = vmatmul.bf16.gmra.mxu0 %v897
      %v986 = vpop.f32.mrf.mxu0
      %v987 = vadd.f32 0.0, %v986
      %v988 = vpop.f32.mrf.mxu0
      %989 = vdwg.mxu0
      %990 = vmatpush.bf16.msra.mxu0 0
      %991 = vmatpush.bf16.msra.mxu0 0
      %992 = vmatpush.bf16.msra.mxu0 0
      %993 = vmatpush.bf16.msra.mxu0 0
      %994 = vmatpush.bf16.msra.mxu0 %v863
      %995 = vmatpush.bf16.msra.mxu0 %v855
      %996 = vmatpush.bf16.msra.mxu0 %v847
      %997 = vmatpush.bf16.msra.mxu0 %v839
      %998 = vmatmul.bf16.gmra.mxu0 %v897
      %v999 = vpop.f32.mrf.mxu0
      %v1000 = vadd.f32 0.0, %v999
      %v1001 = vpop.f32.mrf.mxu0
      %1002 = vdwg.mxu0
      %v1011 = vrot.slane %v922, 6
      %v1012 = vrot.slane %v935, 4
      %v1013 = vrot.slane %v948, 2
      %v1014 = vrot.slane %v974, 6
      %v1015 = vrot.slane %v987, 4
      %v1016 = vrot.slane %v1000, 2
      %v1017 = vsel %vm198, %v909, %v1011
      %v1018 = vsel %vm576, %v1012, %v1013
      %v1019 = vsel %vm578, %v1017, %v1018
      %v1020 = vsel %vm198, %v961, %v1014
      %v1021 = vsel %vm576, %v1015, %v1016
      %v1022 = vsel %vm578, %v1020, %v1021
      %v1025 = vadd.f32 %v698, %v1019
      %v1026 = vadd.f32 %v699, %v1022
      %1027 = vst [vmem:[#allocation6] sm:$0xff] %v1025
      %1028 = vst [vmem:[#allocation6 + $0x8] sm:$0xff] %v1026
      %s1029 = sadd.s32 %s139, 2
      %s1030 = smul.u32 %s1029, 2
      %s1031 = smul.addr %s1030, 2
      %s1032 = scalar_lea.vmem %s0, %s1031
      %v1033 = vld [vmem:[%s1032] sm:$0xf]
      %v1034 = vld [vmem:[#allocation4] sm:$0x3]
      %v1036 = vsel %vm151, %v1034, 0
      %1038 = vmatpush.msra.mxu0 0.0
      %1039 = vmatpush.msra.mxu0 0.0
      %1040 = vmatpush.msra.mxu0 0.0
      %1041 = vmatpush.msra.mxu0 0.0
      %1042 = vmatpush.msra.mxu0 0.0
      %1043 = vmatpush.msra.mxu0 0.0
      %1044 = vmatpush.msra.mxu0 0.0
      %1045 = vmatpush.msra.mxu0 0.0
      %1046 = vmatpush.msra.mxu0 %v80
      %1047 = vmatpush.msra.mxu0 %v78
      %1048 = vmatpush.msra.mxu0 %v76
      %1049 = vmatpush.msra.mxu0 %v74
      %1050 = vmatpush.msra.mxu0 %v72
      %1051 = vmatpush.msra.mxu0 %v70
      %1052 = vmatpush.msra.mxu0 %v68
      %1053 = vmatpush.msra.mxu0 %v66
      %1054 = vmatmul.f32.gmra.mxu0 %v1036
      %v1055 = vpop.f32.mrf.mxu0
      %v1056 = vadd.f32 0.0, %v1055
      %1057 = vdwg.mxu0
      %1058 = vmatpush.msra.mxu0 0.0
      %1059 = vmatpush.msra.mxu0 0.0
      %1060 = vmatpush.msra.mxu0 0.0
      %1061 = vmatpush.msra.mxu0 0.0
      %1062 = vmatpush.msra.mxu0 0.0
      %1063 = vmatpush.msra.mxu0 0.0
      %1064 = vmatpush.msra.mxu0 0.0
      %1065 = vmatpush.msra.mxu0 0.0
      %1066 = vmatpush.msra.mxu0 %v81
      %1067 = vmatpush.msra.mxu0 %v79
      %1068 = vmatpush.msra.mxu0 %v77
      %1069 = vmatpush.msra.mxu0 %v75
      %1070 = vmatpush.msra.mxu0 %v73
      %1071 = vmatpush.msra.mxu0 %v71
      %1072 = vmatpush.msra.mxu0 %v69
      %1073 = vmatpush.msra.mxu0 %v67
      %1074 = vmatmul.f32.gmra.mxu0 %v1036
      %v1075 = vpop.f32.mrf.mxu0
      %v1076 = vadd.f32 0.0, %v1075
      %1077 = vdwg.mxu0
      %v1080 = vrot.slane %v1076, 6
      %v1081 = vsel %vm198, %v1056, %v1080
      %v1083 = vadd.f32 %v1033, %v1081
      %v1084 = vxor.u32 %v1083, 2147483648
      %v1085 = vmul.f32 %v1084, 1.442695
      %v1086 = vpow.pop %v1085
      %v1087 = vadd.f32 %v1086, 1.0
      %v1088 = vrcp.pop %v1087
      %v1089 = vmul.f32 %v1087, %v1088
      %v1090 = vsub.f32 1.0, %v1089
      %v1091 = vmul.f32 %v1088, %v1090
      %v1092 = vadd.f32 %v1088, %v1091
      %vm1093 = vweird.f32 %v1087
      %vm1094 = vweird.f32 %v1088
      %vm1095 = vmor %vm1093, %vm1094
      %v1096 = vsel %vm1095, %v1088, %v1092
      %v1097 = vand.u32 2147483647, %v1087
      %vm1098 = vcmp.eq.f32.partialorder %v1097, 8.507059e+37
      %v1099 = vand.u32 %v1087, 2147483648
      %v1100 = vor.u32 1.1754944e-38, %v1099
      %v1101 = vsel %vm1098, %v1100, %v1096
      %v1102 = vmul.f32 1.0, %v1101
      %v1104 = vrot.slane %v1102, 2
      %v1106 = vmul.f32 %v1104, 2.0
      %v1107 = vsub.f32 %v1106, 1.0
      %v1108 = vld [vmem:[#allocation5] sm:$0x3]
      %1110 = vrot.lane.b32.xlu0 %v1108, 64
      %v1111 = vpop.permute.xlu0 %1110
      %v1113 = vmul.f32 %v1102, %v1111
      %v1114 = vmul.f32 %v1102, %v1107
      %1116 = vrot.lane.b32.xlu0 %v1114, 64
      %v1117 = vpop.permute.xlu0 %1116
      %v1119 = vadd.f32 %v1113, %v1117
      %v1120 = vtanh.pop %v1119
      %1121 = vrot.lane.b32.xlu0 %v1102, 64
      %v1122 = vpop.permute.xlu0 %1121
      %v1123 = vrot.slane %v1122, 2
      %1126 = vrot.lane.b32.xlu0 %v1120, 64
      %v1127 = vpop.permute.xlu0 %1126
      %v1129 = vmul.f32 %v1123, %v1127
      %1131 = vst [vmem:[#allocation1] ss:$4 sm:$0xff] %v1119
      %v1132 = vld.sshfl [vmem:[#allocation1] sm:$0xff pattern:$0x73625140]
      %1133 = vrot.lane.b32.xlu0 %v1132, 64
      %v1134 = vpop.permute.xlu0 %1133
      %1136 = vst.msk [vmem:[#allocation5] sm:$0x3] %vm82, %v1134
      %1137 = vst.msk [vmem:[#allocation4] sm:$0x3] %vm82, %v1129
      %v1138 = vld [vmem:[#allocation6] sm:$0xff]
      %v1139 = vld [vmem:[#allocation6 + $0x8] sm:$0xff]
      %v1140 = vpack.c.bf16 %v1129, %v1129
      %s1141 = sadd.s32 128, %s259
      %s1142 = smul.addr %s1141, 4
      %s1143 = scalar_lea.vmem [#allocation2], %s1142
      %v1144 = vld [vmem:[%s1143] sm:$0xff]
      %v1145 = vld [vmem:[%s1143 + $0x8] sm:$0xff]
      %v1146 = vld [vmem:[%s1143 + $0x10] sm:$0xff]
      %v1147 = vld [vmem:[%s1143 + $0x18] sm:$0xff]
      %v1148 = vld [vmem:[%s1143 + $0x20] sm:$0xff]
      %v1149 = vld [vmem:[%s1143 + $0x28] sm:$0xff]
      %v1150 = vld [vmem:[%s1143 + $0x30] sm:$0xff]
      %v1151 = vld [vmem:[%s1143 + $0x38] sm:$0xff]
      %v1152 = vld [vmem:[%s1143 + $0x40] sm:$0xff]
      %v1153 = vld [vmem:[%s1143 + $0x48] sm:$0xff]
      %v1154 = vld [vmem:[%s1143 + $0x50] sm:$0xff]
      %v1155 = vld [vmem:[%s1143 + $0x58] sm:$0xff]
      %v1156 = vld [vmem:[%s1143 + $0x60] sm:$0xff]
      %v1157 = vld [vmem:[%s1143 + $0x68] sm:$0xff]
      %v1158 = vld [vmem:[%s1143 + $0x70] sm:$0xff]
      %v1159 = vld [vmem:[%s1143 + $0x78] sm:$0xff]
      %v1160 = vld [vmem:[%s1143 + $0x80] sm:$0xff]
      %v1161 = vld [vmem:[%s1143 + $0x88] sm:$0xff]
      %v1162 = vld [vmem:[%s1143 + $0x90] sm:$0xff]
      %v1163 = vld [vmem:[%s1143 + $0x98] sm:$0xff]
      %v1164 = vld [vmem:[%s1143 + $0xa0] sm:$0xff]
      %v1165 = vld [vmem:[%s1143 + $0xa8] sm:$0xff]
      %v1166 = vld [vmem:[%s1143 + $0xb0] sm:$0xff]
      %v1167 = vld [vmem:[%s1143 + $0xb8] sm:$0xff]
      %v1168 = vld [vmem:[%s1143 + $0xc0] sm:$0xff]
      %v1169 = vld [vmem:[%s1143 + $0xc8] sm:$0xff]
      %v1170 = vld [vmem:[%s1143 + $0xd0] sm:$0xff]
      %v1171 = vld [vmem:[%s1143 + $0xd8] sm:$0xff]
      %v1172 = vld [vmem:[%s1143 + $0xe0] sm:$0xff]
      %v1173 = vld [vmem:[%s1143 + $0xe8] sm:$0xff]
      %v1174 = vld [vmem:[%s1143 + $0xf0] sm:$0xff]
      %v1175 = vld [vmem:[%s1143 + $0xf8] sm:$0xff]
      %v1208 = vunpack.c.l.b16 %v1144
      %v1209 = vunpack.c.h.b16 %v1144
      %v1210 = vunpack.c.l.b16 %v1145
      %v1211 = vunpack.c.h.b16 %v1145
      %v1212 = vunpack.c.l.b16 %v1146
      %v1213 = vunpack.c.h.b16 %v1146
      %v1214 = vunpack.c.l.b16 %v1147
      %v1215 = vunpack.c.h.b16 %v1147
      %v1216 = vunpack.c.l.b16 %v1148
      %v1217 = vunpack.c.h.b16 %v1148
      %v1218 = vunpack.c.l.b16 %v1149
      %v1219 = vunpack.c.h.b16 %v1149
      %v1220 = vunpack.c.l.b16 %v1150
      %v1221 = vunpack.c.h.b16 %v1150
      %v1222 = vunpack.c.l.b16 %v1151
      %v1223 = vunpack.c.h.b16 %v1151
      %v1224 = vunpack.c.l.b16 %v1152
      %v1225 = vunpack.c.h.b16 %v1152
      %v1226 = vunpack.c.l.b16 %v1153
      %v1227 = vunpack.c.h.b16 %v1153
      %v1228 = vunpack.c.l.b16 %v1154
      %v1229 = vunpack.c.h.b16 %v1154
      %v1230 = vunpack.c.l.b16 %v1155
      %v1231 = vunpack.c.h.b16 %v1155
      %v1232 = vunpack.c.l.b16 %v1156
      %v1233 = vunpack.c.h.b16 %v1156
      %v1234 = vunpack.c.l.b16 %v1157
      %v1235 = vunpack.c.h.b16 %v1157
      %v1236 = vunpack.c.l.b16 %v1158
      %v1237 = vunpack.c.h.b16 %v1158
      %v1238 = vunpack.c.l.b16 %v1159
      %v1239 = vunpack.c.h.b16 %v1159
      %v1240 = vunpack.c.l.b16 %v1160
      %v1241 = vunpack.c.h.b16 %v1160
      %v1242 = vunpack.c.l.b16 %v1161
      %v1243 = vunpack.c.h.b16 %v1161
      %v1244 = vunpack.c.l.b16 %v1162
      %v1245 = vunpack.c.h.b16 %v1162
      %v1246 = vunpack.c.l.b16 %v1163
      %v1247 = vunpack.c.h.b16 %v1163
      %v1248 = vunpack.c.l.b16 %v1164
      %v1249 = vunpack.c.h.b16 %v1164
      %v1250 = vunpack.c.l.b16 %v1165
      %v1251 = vunpack.c.h.b16 %v1165
      %v1252 = vunpack.c.l.b16 %v1166
      %v1253 = vunpack.c.h.b16 %v1166
      %v1254 = vunpack.c.l.b16 %v1167
      %v1255 = vunpack.c.h.b16 %v1167
      %v1256 = vunpack.c.l.b16 %v1168
      %v1257 = vunpack.c.h.b16 %v1168
      %v1258 = vunpack.c.l.b16 %v1169
      %v1259 = vunpack.c.h.b16 %v1169
      %v1260 = vunpack.c.l.b16 %v1170
      %v1261 = vunpack.c.h.b16 %v1170
      %v1262 = vunpack.c.l.b16 %v1171
      %v1263 = vunpack.c.h.b16 %v1171
      %v1264 = vunpack.c.l.b16 %v1172
      %v1265 = vunpack.c.h.b16 %v1172
      %v1266 = vunpack.c.l.b16 %v1173
      %v1267 = vunpack.c.h.b16 %v1173
      %v1268 = vunpack.c.l.b16 %v1174
      %v1269 = vunpack.c.h.b16 %v1174
      %v1270 = vunpack.c.l.b16 %v1175
      %v1271 = vunpack.c.h.b16 %v1175
      %v1272 = vpack.c.b16 %v1216, %v1208
      %v1273 = vpack.c.b16 %v1217, %v1209
      %v1274 = vpack.c.b16 %v1218, %v1210
      %v1275 = vpack.c.b16 %v1219, %v1211
      %v1276 = vpack.c.b16 %v1220, %v1212
      %v1277 = vpack.c.b16 %v1221, %v1213
      %v1278 = vpack.c.b16 %v1222, %v1214
      %v1279 = vpack.c.b16 %v1223, %v1215
      %v1280 = vpack.c.b16 %v1232, %v1224
      %v1281 = vpack.c.b16 %v1233, %v1225
      %v1282 = vpack.c.b16 %v1234, %v1226
      %v1283 = vpack.c.b16 %v1235, %v1227
      %v1284 = vpack.c.b16 %v1236, %v1228
      %v1285 = vpack.c.b16 %v1237, %v1229
      %v1286 = vpack.c.b16 %v1238, %v1230
      %v1287 = vpack.c.b16 %v1239, %v1231
      %v1288 = vpack.c.b16 %v1248, %v1240
      %v1289 = vpack.c.b16 %v1249, %v1241
      %v1290 = vpack.c.b16 %v1250, %v1242
      %v1291 = vpack.c.b16 %v1251, %v1243
      %v1292 = vpack.c.b16 %v1252, %v1244
      %v1293 = vpack.c.b16 %v1253, %v1245
      %v1294 = vpack.c.b16 %v1254, %v1246
      %v1295 = vpack.c.b16 %v1255, %v1247
      %v1296 = vpack.c.b16 %v1264, %v1256
      %v1297 = vpack.c.b16 %v1265, %v1257
      %v1298 = vpack.c.b16 %v1266, %v1258
      %v1299 = vpack.c.b16 %v1267, %v1259
      %v1300 = vpack.c.b16 %v1268, %v1260
      %v1301 = vpack.c.b16 %v1269, %v1261
      %v1302 = vpack.c.b16 %v1270, %v1262
      %v1303 = vpack.c.b16 %v1271, %v1263
      %v1337 = vsel %vm151, %v1140, 0
      %1339 = vmatpush.bf16.msra.mxu0 0
      %1340 = vmatpush.bf16.msra.mxu0 0
      %1341 = vmatpush.bf16.msra.mxu0 0
      %1342 = vmatpush.bf16.msra.mxu0 0
      %1343 = vmatpush.bf16.msra.mxu0 %v1296
      %1344 = vmatpush.bf16.msra.mxu0 %v1288
      %1345 = vmatpush.bf16.msra.mxu0 %v1280
      %1346 = vmatpush.bf16.msra.mxu0 %v1272
      %1347 = vmatmul.bf16.gmra.mxu0 %v1337
      %v1348 = vpop.f32.mrf.mxu0
      %v1349 = vadd.f32 0.0, %v1348
      %v1350 = vpop.f32.mrf.mxu0
      %1351 = vdwg.mxu0
      %1352 = vmatpush.bf16.msra.mxu0 0
      %1353 = vmatpush.bf16.msra.mxu0 0
      %1354 = vmatpush.bf16.msra.mxu0 0
      %1355 = vmatpush.bf16.msra.mxu0 0
      %1356 = vmatpush.bf16.msra.mxu0 %v1297
      %1357 = vmatpush.bf16.msra.mxu0 %v1289
      %1358 = vmatpush.bf16.msra.mxu0 %v1281
      %1359 = vmatpush.bf16.msra.mxu0 %v1273
      %1360 = vmatmul.bf16.gmra.mxu0 %v1337
      %v1361 = vpop.f32.mrf.mxu0
      %v1362 = vadd.f32 0.0, %v1361
      %v1363 = vpop.f32.mrf.mxu0
      %1364 = vdwg.mxu0
      %1365 = vmatpush.bf16.msra.mxu0 0
      %1366 = vmatpush.bf16.msra.mxu0 0
      %1367 = vmatpush.bf16.msra.mxu0 0
      %1368 = vmatpush.bf16.msra.mxu0 0
      %1369 = vmatpush.bf16.msra.mxu0 %v1298
      %1370 = vmatpush.bf16.msra.mxu0 %v1290
      %1371 = vmatpush.bf16.msra.mxu0 %v1282
      %1372 = vmatpush.bf16.msra.mxu0 %v1274
      %1373 = vmatmul.bf16.gmra.mxu0 %v1337
      %v1374 = vpop.f32.mrf.mxu0
      %v1375 = vadd.f32 0.0, %v1374
      %v1376 = vpop.f32.mrf.mxu0
      %1377 = vdwg.mxu0
      %1378 = vmatpush.bf16.msra.mxu0 0
      %1379 = vmatpush.bf16.msra.mxu0 0
      %1380 = vmatpush.bf16.msra.mxu0 0
      %1381 = vmatpush.bf16.msra.mxu0 0
      %1382 = vmatpush.bf16.msra.mxu0 %v1299
      %1383 = vmatpush.bf16.msra.mxu0 %v1291
      %1384 = vmatpush.bf16.msra.mxu0 %v1283
      %1385 = vmatpush.bf16.msra.mxu0 %v1275
      %1386 = vmatmul.bf16.gmra.mxu0 %v1337
      %v1387 = vpop.f32.mrf.mxu0
      %v1388 = vadd.f32 0.0, %v1387
      %v1389 = vpop.f32.mrf.mxu0
      %1390 = vdwg.mxu0
      %1391 = vmatpush.bf16.msra.mxu0 0
      %1392 = vmatpush.bf16.msra.mxu0 0
      %1393 = vmatpush.bf16.msra.mxu0 0
      %1394 = vmatpush.bf16.msra.mxu0 0
      %1395 = vmatpush.bf16.msra.mxu0 %v1300
      %1396 = vmatpush.bf16.msra.mxu0 %v1292
      %1397 = vmatpush.bf16.msra.mxu0 %v1284
      %1398 = vmatpush.bf16.msra.mxu0 %v1276
      %1399 = vmatmul.bf16.gmra.mxu0 %v1337
      %v1400 = vpop.f32.mrf.mxu0
      %v1401 = vadd.f32 0.0, %v1400
      %v1402 = vpop.f32.mrf.mxu0
      %1403 = vdwg.mxu0
      %1404 = vmatpush.bf16.msra.mxu0 0
      %1405 = vmatpush.bf16.msra.mxu0 0
      %1406 = vmatpush.bf16.msra.mxu0 0
      %1407 = vmatpush.bf16.msra.mxu0 0
      %1408 = vmatpush.bf16.msra.mxu0 %v1301
      %1409 = vmatpush.bf16.msra.mxu0 %v1293
      %1410 = vmatpush.bf16.msra.mxu0 %v1285
      %1411 = vmatpush.bf16.msra.mxu0 %v1277
      %1412 = vmatmul.bf16.gmra.mxu0 %v1337
      %v1413 = vpop.f32.mrf.mxu0
      %v1414 = vadd.f32 0.0, %v1413
      %v1415 = vpop.f32.mrf.mxu0
      %1416 = vdwg.mxu0
      %1417 = vmatpush.bf16.msra.mxu0 0
      %1418 = vmatpush.bf16.msra.mxu0 0
      %1419 = vmatpush.bf16.msra.mxu0 0
      %1420 = vmatpush.bf16.msra.mxu0 0
      %1421 = vmatpush.bf16.msra.mxu0 %v1302
      %1422 = vmatpush.bf16.msra.mxu0 %v1294
      %1423 = vmatpush.bf16.msra.mxu0 %v1286
      %1424 = vmatpush.bf16.msra.mxu0 %v1278
      %1425 = vmatmul.bf16.gmra.mxu0 %v1337
      %v1426 = vpop.f32.mrf.mxu0
      %v1427 = vadd.f32 0.0, %v1426
      %v1428 = vpop.f32.mrf.mxu0
      %1429 = vdwg.mxu0
      %1430 = vmatpush.bf16.msra.mxu0 0
      %1431 = vmatpush.bf16.msra.mxu0 0
      %1432 = vmatpush.bf16.msra.mxu0 0
      %1433 = vmatpush.bf16.msra.mxu0 0
      %1434 = vmatpush.bf16.msra.mxu0 %v1303
      %1435 = vmatpush.bf16.msra.mxu0 %v1295
      %1436 = vmatpush.bf16.msra.mxu0 %v1287
      %1437 = vmatpush.bf16.msra.mxu0 %v1279
      %1438 = vmatmul.bf16.gmra.mxu0 %v1337
      %v1439 = vpop.f32.mrf.mxu0
      %v1440 = vadd.f32 0.0, %v1439
      %v1441 = vpop.f32.mrf.mxu0
      %1442 = vdwg.mxu0
      %v1451 = vrot.slane %v1362, 6
      %v1452 = vrot.slane %v1375, 4
      %v1453 = vrot.slane %v1388, 2
      %v1454 = vrot.slane %v1414, 6
      %v1455 = vrot.slane %v1427, 4
      %v1456 = vrot.slane %v1440, 2
      %v1457 = vsel %vm198, %v1349, %v1451
      %v1458 = vsel %vm576, %v1452, %v1453
      %v1459 = vsel %vm578, %v1457, %v1458
      %v1460 = vsel %vm198, %v1401, %v1454
      %v1461 = vsel %vm576, %v1455, %v1456
      %v1462 = vsel %vm578, %v1460, %v1461
      %v1465 = vadd.f32 %v1138, %v1459
      %v1466 = vadd.f32 %v1139, %v1462
      %1467 = vst [vmem:[#allocation6] sm:$0xff] %v1465
      %1468 = vst [vmem:[#allocation6 + $0x8] sm:$0xff] %v1466
      %s1469 = sadd.s32 %s139, 3
      %s1470 = smul.u32 %s1469, 2
      %s1471 = smul.addr %s1470, 2
      %s1472 = scalar_lea.vmem %s0, %s1471
      %v1473 = vld [vmem:[%s1472] sm:$0xf]
      %v1474 = vld [vmem:[#allocation4] sm:$0x3]
      %v1476 = vsel %vm151, %v1474, 0
      %1478 = vmatpush.msra.mxu0 0.0
      %1479 = vmatpush.msra.mxu0 0.0
      %1480 = vmatpush.msra.mxu0 0.0
      %1481 = vmatpush.msra.mxu0 0.0
      %1482 = vmatpush.msra.mxu0 0.0
      %1483 = vmatpush.msra.mxu0 0.0
      %1484 = vmatpush.msra.mxu0 0.0
      %1485 = vmatpush.msra.mxu0 0.0
      %1486 = vmatpush.msra.mxu0 %v80
      %1487 = vmatpush.msra.mxu0 %v78
      %1488 = vmatpush.msra.mxu0 %v76
      %1489 = vmatpush.msra.mxu0 %v74
      %1490 = vmatpush.msra.mxu0 %v72
      %1491 = vmatpush.msra.mxu0 %v70
      %1492 = vmatpush.msra.mxu0 %v68
      %1493 = vmatpush.msra.mxu0 %v66
      %1494 = vmatmul.f32.gmra.mxu0 %v1476
      %v1495 = vpop.f32.mrf.mxu0
      %v1496 = vadd.f32 0.0, %v1495
      %1497 = vdwg.mxu0
      %1498 = vmatpush.msra.mxu0 0.0
      %1499 = vmatpush.msra.mxu0 0.0
      %1500 = vmatpush.msra.mxu0 0.0
      %1501 = vmatpush.msra.mxu0 0.0
      %1502 = vmatpush.msra.mxu0 0.0
      %1503 = vmatpush.msra.mxu0 0.0
      %1504 = vmatpush.msra.mxu0 0.0
      %1505 = vmatpush.msra.mxu0 0.0
      %1506 = vmatpush.msra.mxu0 %v81
      %1507 = vmatpush.msra.mxu0 %v79
      %1508 = vmatpush.msra.mxu0 %v77
      %1509 = vmatpush.msra.mxu0 %v75
      %1510 = vmatpush.msra.mxu0 %v73
      %1511 = vmatpush.msra.mxu0 %v71
      %1512 = vmatpush.msra.mxu0 %v69
      %1513 = vmatpush.msra.mxu0 %v67
      %1514 = vmatmul.f32.gmra.mxu0 %v1476
      %v1515 = vpop.f32.mrf.mxu0
      %v1516 = vadd.f32 0.0, %v1515
      %1517 = vdwg.mxu0
      %v1520 = vrot.slane %v1516, 6
      %v1521 = vsel %vm198, %v1496, %v1520
      %v1523 = vadd.f32 %v1473, %v1521
      %v1524 = vxor.u32 %v1523, 2147483648
      %v1525 = vmul.f32 %v1524, 1.442695
      %v1526 = vpow.pop %v1525
      %v1527 = vadd.f32 %v1526, 1.0
      %v1528 = vrcp.pop %v1527
      %v1529 = vmul.f32 %v1527, %v1528
      %v1530 = vsub.f32 1.0, %v1529
      %v1531 = vmul.f32 %v1528, %v1530
      %v1532 = vadd.f32 %v1528, %v1531
      %vm1533 = vweird.f32 %v1527
      %vm1534 = vweird.f32 %v1528
      %vm1535 = vmor %vm1533, %vm1534
      %v1536 = vsel %vm1535, %v1528, %v1532
      %v1537 = vand.u32 2147483647, %v1527
      %vm1538 = vcmp.eq.f32.partialorder %v1537, 8.507059e+37
      %v1539 = vand.u32 %v1527, 2147483648
      %v1540 = vor.u32 1.1754944e-38, %v1539
      %v1541 = vsel %vm1538, %v1540, %v1536
      %v1542 = vmul.f32 1.0, %v1541
      %v1544 = vrot.slane %v1542, 2
      %v1546 = vmul.f32 %v1544, 2.0
      %v1547 = vsub.f32 %v1546, 1.0
      %v1548 = vld [vmem:[#allocation5] sm:$0x3]
      %1550 = vrot.lane.b32.xlu0 %v1548, 64
      %v1551 = vpop.permute.xlu0 %1550
      %v1553 = vmul.f32 %v1542, %v1551
      %v1554 = vmul.f32 %v1542, %v1547
      %1556 = vrot.lane.b32.xlu0 %v1554, 64
      %v1557 = vpop.permute.xlu0 %1556
      %v1559 = vadd.f32 %v1553, %v1557
      %v1560 = vtanh.pop %v1559
      %1561 = vrot.lane.b32.xlu0 %v1542, 64
      %v1562 = vpop.permute.xlu0 %1561
      %v1563 = vrot.slane %v1562, 2
      %1566 = vrot.lane.b32.xlu0 %v1560, 64
      %v1567 = vpop.permute.xlu0 %1566
      %v1569 = vmul.f32 %v1563, %v1567
      %1571 = vst [vmem:[#allocation1] ss:$4 sm:$0xff] %v1559
      %v1572 = vld.sshfl [vmem:[#allocation1] sm:$0xff pattern:$0x73625140]
      %1573 = vrot.lane.b32.xlu0 %v1572, 64
      %v1574 = vpop.permute.xlu0 %1573
      %1576 = vst.msk [vmem:[#allocation5] sm:$0x3] %vm82, %v1574
      %1577 = vst.msk [vmem:[#allocation4] sm:$0x3] %vm82, %v1569
      %v1578 = vld [vmem:[#allocation6] sm:$0xff]
      %v1579 = vld [vmem:[#allocation6 + $0x8] sm:$0xff]
      %v1580 = vpack.c.bf16 %v1569, %v1569
      %s1581 = sadd.s32 192, %s259
      %s1582 = smul.addr %s1581, 4
      %s1583 = scalar_lea.vmem [#allocation2], %s1582
      %v1584 = vld [vmem:[%s1583] sm:$0xff]
      %v1585 = vld [vmem:[%s1583 + $0x8] sm:$0xff]
      %v1586 = vld [vmem:[%s1583 + $0x10] sm:$0xff]
      %v1587 = vld [vmem:[%s1583 + $0x18] sm:$0xff]
      %v1588 = vld [vmem:[%s1583 + $0x20] sm:$0xff]
      %v1589 = vld [vmem:[%s1583 + $0x28] sm:$0xff]
      %v1590 = vld [vmem:[%s1583 + $0x30] sm:$0xff]
      %v1591 = vld [vmem:[%s1583 + $0x38] sm:$0xff]
      %v1592 = vld [vmem:[%s1583 + $0x40] sm:$0xff]
      %v1593 = vld [vmem:[%s1583 + $0x48] sm:$0xff]
      %v1594 = vld [vmem:[%s1583 + $0x50] sm:$0xff]
      %v1595 = vld [vmem:[%s1583 + $0x58] sm:$0xff]
      %v1596 = vld [vmem:[%s1583 + $0x60] sm:$0xff]
      %v1597 = vld [vmem:[%s1583 + $0x68] sm:$0xff]
      %v1598 = vld [vmem:[%s1583 + $0x70] sm:$0xff]
      %v1599 = vld [vmem:[%s1583 + $0x78] sm:$0xff]
      %v1600 = vld [vmem:[%s1583 + $0x80] sm:$0xff]
      %v1601 = vld [vmem:[%s1583 + $0x88] sm:$0xff]
      %v1602 = vld [vmem:[%s1583 + $0x90] sm:$0xff]
      %v1603 = vld [vmem:[%s1583 + $0x98] sm:$0xff]
      %v1604 = vld [vmem:[%s1583 + $0xa0] sm:$0xff]
      %v1605 = vld [vmem:[%s1583 + $0xa8] sm:$0xff]
      %v1606 = vld [vmem:[%s1583 + $0xb0] sm:$0xff]
      %v1607 = vld [vmem:[%s1583 + $0xb8] sm:$0xff]
      %v1608 = vld [vmem:[%s1583 + $0xc0] sm:$0xff]
      %v1609 = vld [vmem:[%s1583 + $0xc8] sm:$0xff]
      %v1610 = vld [vmem:[%s1583 + $0xd0] sm:$0xff]
      %v1611 = vld [vmem:[%s1583 + $0xd8] sm:$0xff]
      %v1612 = vld [vmem:[%s1583 + $0xe0] sm:$0xff]
      %v1613 = vld [vmem:[%s1583 + $0xe8] sm:$0xff]
      %v1614 = vld [vmem:[%s1583 + $0xf0] sm:$0xff]
      %v1615 = vld [vmem:[%s1583 + $0xf8] sm:$0xff]
      %v1648 = vunpack.c.l.b16 %v1584
      %v1649 = vunpack.c.h.b16 %v1584
      %v1650 = vunpack.c.l.b16 %v1585
      %v1651 = vunpack.c.h.b16 %v1585
      %v1652 = vunpack.c.l.b16 %v1586
      %v1653 = vunpack.c.h.b16 %v1586
      %v1654 = vunpack.c.l.b16 %v1587
      %v1655 = vunpack.c.h.b16 %v1587
      %v1656 = vunpack.c.l.b16 %v1588
      %v1657 = vunpack.c.h.b16 %v1588
      %v1658 = vunpack.c.l.b16 %v1589
      %v1659 = vunpack.c.h.b16 %v1589
      %v1660 = vunpack.c.l.b16 %v1590
      %v1661 = vunpack.c.h.b16 %v1590
      %v1662 = vunpack.c.l.b16 %v1591
      %v1663 = vunpack.c.h.b16 %v1591
      %v1664 = vunpack.c.l.b16 %v1592
      %v1665 = vunpack.c.h.b16 %v1592
      %v1666 = vunpack.c.l.b16 %v1593
      %v1667 = vunpack.c.h.b16 %v1593
      %v1668 = vunpack.c.l.b16 %v1594
      %v1669 = vunpack.c.h.b16 %v1594
      %v1670 = vunpack.c.l.b16 %v1595
      %v1671 = vunpack.c.h.b16 %v1595
      %v1672 = vunpack.c.l.b16 %v1596
      %v1673 = vunpack.c.h.b16 %v1596
      %v1674 = vunpack.c.l.b16 %v1597
      %v1675 = vunpack.c.h.b16 %v1597
      %v1676 = vunpack.c.l.b16 %v1598
      %v1677 = vunpack.c.h.b16 %v1598
      %v1678 = vunpack.c.l.b16 %v1599
      %v1679 = vunpack.c.h.b16 %v1599
      %v1680 = vunpack.c.l.b16 %v1600
      %v1681 = vunpack.c.h.b16 %v1600
      %v1682 = vunpack.c.l.b16 %v1601
      %v1683 = vunpack.c.h.b16 %v1601
      %v1684 = vunpack.c.l.b16 %v1602
      %v1685 = vunpack.c.h.b16 %v1602
      %v1686 = vunpack.c.l.b16 %v1603
      %v1687 = vunpack.c.h.b16 %v1603
      %v1688 = vunpack.c.l.b16 %v1604
      %v1689 = vunpack.c.h.b16 %v1604
      %v1690 = vunpack.c.l.b16 %v1605
      %v1691 = vunpack.c.h.b16 %v1605
      %v1692 = vunpack.c.l.b16 %v1606
      %v1693 = vunpack.c.h.b16 %v1606
      %v1694 = vunpack.c.l.b16 %v1607
      %v1695 = vunpack.c.h.b16 %v1607
      %v1696 = vunpack.c.l.b16 %v1608
      %v1697 = vunpack.c.h.b16 %v1608
      %v1698 = vunpack.c.l.b16 %v1609
      %v1699 = vunpack.c.h.b16 %v1609
      %v1700 = vunpack.c.l.b16 %v1610
      %v1701 = vunpack.c.h.b16 %v1610
      %v1702 = vunpack.c.l.b16 %v1611
      %v1703 = vunpack.c.h.b16 %v1611
      %v1704 = vunpack.c.l.b16 %v1612
      %v1705 = vunpack.c.h.b16 %v1612
      %v1706 = vunpack.c.l.b16 %v1613
      %v1707 = vunpack.c.h.b16 %v1613
      %v1708 = vunpack.c.l.b16 %v1614
      %v1709 = vunpack.c.h.b16 %v1614
      %v1710 = vunpack.c.l.b16 %v1615
      %v1711 = vunpack.c.h.b16 %v1615
      %v1712 = vpack.c.b16 %v1656, %v1648
      %v1713 = vpack.c.b16 %v1657, %v1649
      %v1714 = vpack.c.b16 %v1658, %v1650
      %v1715 = vpack.c.b16 %v1659, %v1651
      %v1716 = vpack.c.b16 %v1660, %v1652
      %v1717 = vpack.c.b16 %v1661, %v1653
      %v1718 = vpack.c.b16 %v1662, %v1654
      %v1719 = vpack.c.b16 %v1663, %v1655
      %v1720 = vpack.c.b16 %v1672, %v1664
      %v1721 = vpack.c.b16 %v1673, %v1665
      %v1722 = vpack.c.b16 %v1674, %v1666
      %v1723 = vpack.c.b16 %v1675, %v1667
      %v1724 = vpack.c.b16 %v1676, %v1668
      %v1725 = vpack.c.b16 %v1677, %v1669
      %v1726 = vpack.c.b16 %v1678, %v1670
      %v1727 = vpack.c.b16 %v1679, %v1671
      %v1728 = vpack.c.b16 %v1688, %v1680
      %v1729 = vpack.c.b16 %v1689, %v1681
      %v1730 = vpack.c.b16 %v1690, %v1682
      %v1731 = vpack.c.b16 %v1691, %v1683
      %v1732 = vpack.c.b16 %v1692, %v1684
      %v1733 = vpack.c.b16 %v1693, %v1685
      %v1734 = vpack.c.b16 %v1694, %v1686
      %v1735 = vpack.c.b16 %v1695, %v1687
      %v1736 = vpack.c.b16 %v1704, %v1696
      %v1737 = vpack.c.b16 %v1705, %v1697
      %v1738 = vpack.c.b16 %v1706, %v1698
      %v1739 = vpack.c.b16 %v1707, %v1699
      %v1740 = vpack.c.b16 %v1708, %v1700
      %v1741 = vpack.c.b16 %v1709, %v1701
      %v1742 = vpack.c.b16 %v1710, %v1702
      %v1743 = vpack.c.b16 %v1711, %v1703
      %v1777 = vsel %vm151, %v1580, 0
      %1779 = vmatpush.bf16.msra.mxu0 0
      %1780 = vmatpush.bf16.msra.mxu0 0
      %1781 = vmatpush.bf16.msra.mxu0 0
      %1782 = vmatpush.bf16.msra.mxu0 0
      %1783 = vmatpush.bf16.msra.mxu0 %v1736
      %1784 = vmatpush.bf16.msra.mxu0 %v1728
      %1785 = vmatpush.bf16.msra.mxu0 %v1720
      %1786 = vmatpush.bf16.msra.mxu0 %v1712
      %1787 = vmatmul.bf16.gmra.mxu0 %v1777
      %v1788 = vpop.f32.mrf.mxu0
      %v1789 = vadd.f32 0.0, %v1788
      %v1790 = vpop.f32.mrf.mxu0
      %1791 = vdwg.mxu0
      %1792 = vmatpush.bf16.msra.mxu0 0
      %1793 = vmatpush.bf16.msra.mxu0 0
      %1794 = vmatpush.bf16.msra.mxu0 0
      %1795 = vmatpush.bf16.msra.mxu0 0
      %1796 = vmatpush.bf16.msra.mxu0 %v1737
      %1797 = vmatpush.bf16.msra.mxu0 %v1729
      %1798 = vmatpush.bf16.msra.mxu0 %v1721
      %1799 = vmatpush.bf16.msra.mxu0 %v1713
      %1800 = vmatmul.bf16.gmra.mxu0 %v1777
      %v1801 = vpop.f32.mrf.mxu0
      %v1802 = vadd.f32 0.0, %v1801
      %v1803 = vpop.f32.mrf.mxu0
      %1804 = vdwg.mxu0
      %1805 = vmatpush.bf16.msra.mxu0 0
      %1806 = vmatpush.bf16.msra.mxu0 0
      %1807 = vmatpush.bf16.msra.mxu0 0
      %1808 = vmatpush.bf16.msra.mxu0 0
      %1809 = vmatpush.bf16.msra.mxu0 %v1738
      %1810 = vmatpush.bf16.msra.mxu0 %v1730
      %1811 = vmatpush.bf16.msra.mxu0 %v1722
      %1812 = vmatpush.bf16.msra.mxu0 %v1714
      %1813 = vmatmul.bf16.gmra.mxu0 %v1777
      %v1814 = vpop.f32.mrf.mxu0
      %v1815 = vadd.f32 0.0, %v1814
      %v1816 = vpop.f32.mrf.mxu0
      %1817 = vdwg.mxu0
      %1818 = vmatpush.bf16.msra.mxu0 0
      %1819 = vmatpush.bf16.msra.mxu0 0
      %1820 = vmatpush.bf16.msra.mxu0 0
      %1821 = vmatpush.bf16.msra.mxu0 0
      %1822 = vmatpush.bf16.msra.mxu0 %v1739
      %1823 = vmatpush.bf16.msra.mxu0 %v1731
      %1824 = vmatpush.bf16.msra.mxu0 %v1723
      %1825 = vmatpush.bf16.msra.mxu0 %v1715
      %1826 = vmatmul.bf16.gmra.mxu0 %v1777
      %v1827 = vpop.f32.mrf.mxu0
      %v1828 = vadd.f32 0.0, %v1827
      %v1829 = vpop.f32.mrf.mxu0
      %1830 = vdwg.mxu0
      %1831 = vmatpush.bf16.msra.mxu0 0
      %1832 = vmatpush.bf16.msra.mxu0 0
      %1833 = vmatpush.bf16.msra.mxu0 0
      %1834 = vmatpush.bf16.msra.mxu0 0
      %1835 = vmatpush.bf16.msra.mxu0 %v1740
      %1836 = vmatpush.bf16.msra.mxu0 %v1732
      %1837 = vmatpush.bf16.msra.mxu0 %v1724
      %1838 = vmatpush.bf16.msra.mxu0 %v1716
      %1839 = vmatmul.bf16.gmra.mxu0 %v1777
      %v1840 = vpop.f32.mrf.mxu0
      %v1841 = vadd.f32 0.0, %v1840
      %v1842 = vpop.f32.mrf.mxu0
      %1843 = vdwg.mxu0
      %1844 = vmatpush.bf16.msra.mxu0 0
      %1845 = vmatpush.bf16.msra.mxu0 0
      %1846 = vmatpush.bf16.msra.mxu0 0
      %1847 = vmatpush.bf16.msra.mxu0 0
      %1848 = vmatpush.bf16.msra.mxu0 %v1741
      %1849 = vmatpush.bf16.msra.mxu0 %v1733
      %1850 = vmatpush.bf16.msra.mxu0 %v1725
      %1851 = vmatpush.bf16.msra.mxu0 %v1717
      %1852 = vmatmul.bf16.gmra.mxu0 %v1777
      %v1853 = vpop.f32.mrf.mxu0
      %v1854 = vadd.f32 0.0, %v1853
      %v1855 = vpop.f32.mrf.mxu0
      %1856 = vdwg.mxu0
      %1857 = vmatpush.bf16.msra.mxu0 0
      %1858 = vmatpush.bf16.msra.mxu0 0
      %1859 = vmatpush.bf16.msra.mxu0 0
      %1860 = vmatpush.bf16.msra.mxu0 0
      %1861 = vmatpush.bf16.msra.mxu0 %v1742
      %1862 = vmatpush.bf16.msra.mxu0 %v1734
      %1863 = vmatpush.bf16.msra.mxu0 %v1726
      %1864 = vmatpush.bf16.msra.mxu0 %v1718
      %1865 = vmatmul.bf16.gmra.mxu0 %v1777
      %v1866 = vpop.f32.mrf.mxu0
      %v1867 = vadd.f32 0.0, %v1866
      %v1868 = vpop.f32.mrf.mxu0
      %1869 = vdwg.mxu0
      %1870 = vmatpush.bf16.msra.mxu0 0
      %1871 = vmatpush.bf16.msra.mxu0 0
      %1872 = vmatpush.bf16.msra.mxu0 0
      %1873 = vmatpush.bf16.msra.mxu0 0
      %1874 = vmatpush.bf16.msra.mxu0 %v1743
      %1875 = vmatpush.bf16.msra.mxu0 %v1735
      %1876 = vmatpush.bf16.msra.mxu0 %v1727
      %1877 = vmatpush.bf16.msra.mxu0 %v1719
      %1878 = vmatmul.bf16.gmra.mxu0 %v1777
      %v1879 = vpop.f32.mrf.mxu0
      %v1880 = vadd.f32 0.0, %v1879
      %v1881 = vpop.f32.mrf.mxu0
      %1882 = vdwg.mxu0
      %v1891 = vrot.slane %v1802, 6
      %v1892 = vrot.slane %v1815, 4
      %v1893 = vrot.slane %v1828, 2
      %v1894 = vrot.slane %v1854, 6
      %v1895 = vrot.slane %v1867, 4
      %v1896 = vrot.slane %v1880, 2
      %v1897 = vsel %vm198, %v1789, %v1891
      %v1898 = vsel %vm576, %v1892, %v1893
      %v1899 = vsel %vm578, %v1897, %v1898
      %v1900 = vsel %vm198, %v1841, %v1894
      %v1901 = vsel %vm576, %v1895, %v1896
      %v1902 = vsel %vm578, %v1900, %v1901
      %v1905 = vadd.f32 %v1578, %v1899
      %v1906 = vadd.f32 %v1579, %v1902
      %1907 = vst [vmem:[#allocation6] sm:$0xff] %v1905
      %1908 = vst [vmem:[#allocation6 + $0x8] sm:$0xff] %v1906
      %s1909 = sadd.s32 %s139, 4
      %s1910 = smul.u32 %s1909, 2
      %s1911 = smul.addr %s1910, 2
      %s1912 = scalar_lea.vmem %s0, %s1911
      %v1913 = vld [vmem:[%s1912] sm:$0xf]
      %v1914 = vld [vmem:[#allocation4] sm:$0x3]
      %v1916 = vsel %vm151, %v1914, 0
      %1918 = vmatpush.msra.mxu0 0.0
      %1919 = vmatpush.msra.mxu0 0.0
      %1920 = vmatpush.msra.mxu0 0.0
      %1921 = vmatpush.msra.mxu0 0.0
      %1922 = vmatpush.msra.mxu0 0.0
      %1923 = vmatpush.msra.mxu0 0.0
      %1924 = vmatpush.msra.mxu0 0.0
      %1925 = vmatpush.msra.mxu0 0.0
      %1926 = vmatpush.msra.mxu0 %v80
      %1927 = vmatpush.msra.mxu0 %v78
      %1928 = vmatpush.msra.mxu0 %v76
      %1929 = vmatpush.msra.mxu0 %v74
      %1930 = vmatpush.msra.mxu0 %v72
      %1931 = vmatpush.msra.mxu0 %v70
      %1932 = vmatpush.msra.mxu0 %v68
      %1933 = vmatpush.msra.mxu0 %v66
      %1934 = vmatmul.f32.gmra.mxu0 %v1916
      %v1935 = vpop.f32.mrf.mxu0
      %v1936 = vadd.f32 0.0, %v1935
      %1937 = vdwg.mxu0
      %1938 = vmatpush.msra.mxu0 0.0
      %1939 = vmatpush.msra.mxu0 0.0
      %1940 = vmatpush.msra.mxu0 0.0
      %1941 = vmatpush.msra.mxu0 0.0
      %1942 = vmatpush.msra.mxu0 0.0
      %1943 = vmatpush.msra.mxu0 0.0
      %1944 = vmatpush.msra.mxu0 0.0
      %1945 = vmatpush.msra.mxu0 0.0
      %1946 = vmatpush.msra.mxu0 %v81
      %1947 = vmatpush.msra.mxu0 %v79
      %1948 = vmatpush.msra.mxu0 %v77
      %1949 = vmatpush.msra.mxu0 %v75
      %1950 = vmatpush.msra.mxu0 %v73
      %1951 = vmatpush.msra.mxu0 %v71
      %1952 = vmatpush.msra.mxu0 %v69
      %1953 = vmatpush.msra.mxu0 %v67
      %1954 = vmatmul.f32.gmra.mxu0 %v1916
      %v1955 = vpop.f32.mrf.mxu0
      %v1956 = vadd.f32 0.0, %v1955
      %1957 = vdwg.mxu0
      %v1960 = vrot.slane %v1956, 6
      %v1961 = vsel %vm198, %v1936, %v1960
      %v1963 = vadd.f32 %v1913, %v1961
      %v1964 = vxor.u32 %v1963, 2147483648
      %v1965 = vmul.f32 %v1964, 1.442695
      %v1966 = vpow.pop %v1965
      %v1967 = vadd.f32 %v1966, 1.0
      %v1968 = vrcp.pop %v1967
      %v1969 = vmul.f32 %v1967, %v1968
      %v1970 = vsub.f32 1.0, %v1969
      %v1971 = vmul.f32 %v1968, %v1970
      %v1972 = vadd.f32 %v1968, %v1971
      %vm1973 = vweird.f32 %v1967
      %vm1974 = vweird.f32 %v1968
      %vm1975 = vmor %vm1973, %vm1974
      %v1976 = vsel %vm1975, %v1968, %v1972
      %v1977 = vand.u32 2147483647, %v1967
      %vm1978 = vcmp.eq.f32.partialorder %v1977, 8.507059e+37
      %v1979 = vand.u32 %v1967, 2147483648
      %v1980 = vor.u32 1.1754944e-38, %v1979
      %v1981 = vsel %vm1978, %v1980, %v1976
      %v1982 = vmul.f32 1.0, %v1981
      %v1984 = vrot.slane %v1982, 2
      %v1986 = vmul.f32 %v1984, 2.0
      %v1987 = vsub.f32 %v1986, 1.0
      %v1988 = vld [vmem:[#allocation5] sm:$0x3]
      %1990 = vrot.lane.b32.xlu0 %v1988, 64
      %v1991 = vpop.permute.xlu0 %1990
      %v1993 = vmul.f32 %v1982, %v1991
      %v1994 = vmul.f32 %v1982, %v1987
      %1996 = vrot.lane.b32.xlu0 %v1994, 64
      %v1997 = vpop.permute.xlu0 %1996
      %v1999 = vadd.f32 %v1993, %v1997
      %v2000 = vtanh.pop %v1999
      %2001 = vrot.lane.b32.xlu0 %v1982, 64
      %v2002 = vpop.permute.xlu0 %2001
      %v2003 = vrot.slane %v2002, 2
      %2006 = vrot.lane.b32.xlu0 %v2000, 64
      %v2007 = vpop.permute.xlu0 %2006
      %v2009 = vmul.f32 %v2003, %v2007
      %2011 = vst [vmem:[#allocation1] ss:$4 sm:$0xff] %v1999
      %v2012 = vld.sshfl [vmem:[#allocation1] sm:$0xff pattern:$0x73625140]
      %2013 = vrot.lane.b32.xlu0 %v2012, 64
      %v2014 = vpop.permute.xlu0 %2013
      %2016 = vst.msk [vmem:[#allocation5] sm:$0x3] %vm82, %v2014
      %2017 = vst.msk [vmem:[#allocation4] sm:$0x3] %vm82, %v2009
      %v2018 = vld [vmem:[#allocation6] sm:$0xff]
      %v2019 = vld [vmem:[#allocation6 + $0x8] sm:$0xff]
      %v2020 = vpack.c.bf16 %v2009, %v2009
      %s2021 = sadd.s32 256, %s259
      %s2022 = smul.addr %s2021, 4
      %s2023 = scalar_lea.vmem [#allocation2], %s2022
      %v2024 = vld [vmem:[%s2023] sm:$0xff]
      %v2025 = vld [vmem:[%s2023 + $0x8] sm:$0xff]
      %v2026 = vld [vmem:[%s2023 + $0x10] sm:$0xff]
      %v2027 = vld [vmem:[%s2023 + $0x18] sm:$0xff]
      %v2028 = vld [vmem:[%s2023 + $0x20] sm:$0xff]
      %v2029 = vld [vmem:[%s2023 + $0x28] sm:$0xff]
      %v2030 = vld [vmem:[%s2023 + $0x30] sm:$0xff]
      %v2031 = vld [vmem:[%s2023 + $0x38] sm:$0xff]
      %v2032 = vld [vmem:[%s2023 + $0x40] sm:$0xff]
      %v2033 = vld [vmem:[%s2023 + $0x48] sm:$0xff]
      %v2034 = vld [vmem:[%s2023 + $0x50] sm:$0xff]
      %v2035 = vld [vmem:[%s2023 + $0x58] sm:$0xff]
      %v2036 = vld [vmem:[%s2023 + $0x60] sm:$0xff]
      %v2037 = vld [vmem:[%s2023 + $0x68] sm:$0xff]
      %v2038 = vld [vmem:[%s2023 + $0x70] sm:$0xff]
      %v2039 = vld [vmem:[%s2023 + $0x78] sm:$0xff]
      %v2040 = vld [vmem:[%s2023 + $0x80] sm:$0xff]
      %v2041 = vld [vmem:[%s2023 + $0x88] sm:$0xff]
      %v2042 = vld [vmem:[%s2023 + $0x90] sm:$0xff]
      %v2043 = vld [vmem:[%s2023 + $0x98] sm:$0xff]
      %v2044 = vld [vmem:[%s2023 + $0xa0] sm:$0xff]
      %v2045 = vld [vmem:[%s2023 + $0xa8] sm:$0xff]
      %v2046 = vld [vmem:[%s2023 + $0xb0] sm:$0xff]
      %v2047 = vld [vmem:[%s2023 + $0xb8] sm:$0xff]
      %v2048 = vld [vmem:[%s2023 + $0xc0] sm:$0xff]
      %v2049 = vld [vmem:[%s2023 + $0xc8] sm:$0xff]
      %v2050 = vld [vmem:[%s2023 + $0xd0] sm:$0xff]
      %v2051 = vld [vmem:[%s2023 + $0xd8] sm:$0xff]
      %v2052 = vld [vmem:[%s2023 + $0xe0] sm:$0xff]
      %v2053 = vld [vmem:[%s2023 + $0xe8] sm:$0xff]
      %v2054 = vld [vmem:[%s2023 + $0xf0] sm:$0xff]
      %v2055 = vld [vmem:[%s2023 + $0xf8] sm:$0xff]
      %v2088 = vunpack.c.l.b16 %v2024
      %v2089 = vunpack.c.h.b16 %v2024
      %v2090 = vunpack.c.l.b16 %v2025
      %v2091 = vunpack.c.h.b16 %v2025
      %v2092 = vunpack.c.l.b16 %v2026
      %v2093 = vunpack.c.h.b16 %v2026
      %v2094 = vunpack.c.l.b16 %v2027
      %v2095 = vunpack.c.h.b16 %v2027
      %v2096 = vunpack.c.l.b16 %v2028
      %v2097 = vunpack.c.h.b16 %v2028
      %v2098 = vunpack.c.l.b16 %v2029
      %v2099 = vunpack.c.h.b16 %v2029
      %v2100 = vunpack.c.l.b16 %v2030
      %v2101 = vunpack.c.h.b16 %v2030
      %v2102 = vunpack.c.l.b16 %v2031
      %v2103 = vunpack.c.h.b16 %v2031
      %v2104 = vunpack.c.l.b16 %v2032
      %v2105 = vunpack.c.h.b16 %v2032
      %v2106 = vunpack.c.l.b16 %v2033
      %v2107 = vunpack.c.h.b16 %v2033
      %v2108 = vunpack.c.l.b16 %v2034
      %v2109 = vunpack.c.h.b16 %v2034
      %v2110 = vunpack.c.l.b16 %v2035
      %v2111 = vunpack.c.h.b16 %v2035
      %v2112 = vunpack.c.l.b16 %v2036
      %v2113 = vunpack.c.h.b16 %v2036
      %v2114 = vunpack.c.l.b16 %v2037
      %v2115 = vunpack.c.h.b16 %v2037
      %v2116 = vunpack.c.l.b16 %v2038
      %v2117 = vunpack.c.h.b16 %v2038
      %v2118 = vunpack.c.l.b16 %v2039
      %v2119 = vunpack.c.h.b16 %v2039
      %v2120 = vunpack.c.l.b16 %v2040
      %v2121 = vunpack.c.h.b16 %v2040
      %v2122 = vunpack.c.l.b16 %v2041
      %v2123 = vunpack.c.h.b16 %v2041
      %v2124 = vunpack.c.l.b16 %v2042
      %v2125 = vunpack.c.h.b16 %v2042
      %v2126 = vunpack.c.l.b16 %v2043
      %v2127 = vunpack.c.h.b16 %v2043
      %v2128 = vunpack.c.l.b16 %v2044
      %v2129 = vunpack.c.h.b16 %v2044
      %v2130 = vunpack.c.l.b16 %v2045
      %v2131 = vunpack.c.h.b16 %v2045
      %v2132 = vunpack.c.l.b16 %v2046
      %v2133 = vunpack.c.h.b16 %v2046
      %v2134 = vunpack.c.l.b16 %v2047
      %v2135 = vunpack.c.h.b16 %v2047
      %v2136 = vunpack.c.l.b16 %v2048
      %v2137 = vunpack.c.h.b16 %v2048
      %v2138 = vunpack.c.l.b16 %v2049
      %v2139 = vunpack.c.h.b16 %v2049
      %v2140 = vunpack.c.l.b16 %v2050
      %v2141 = vunpack.c.h.b16 %v2050
      %v2142 = vunpack.c.l.b16 %v2051
      %v2143 = vunpack.c.h.b16 %v2051
      %v2144 = vunpack.c.l.b16 %v2052
      %v2145 = vunpack.c.h.b16 %v2052
      %v2146 = vunpack.c.l.b16 %v2053
      %v2147 = vunpack.c.h.b16 %v2053
      %v2148 = vunpack.c.l.b16 %v2054
      %v2149 = vunpack.c.h.b16 %v2054
      %v2150 = vunpack.c.l.b16 %v2055
      %v2151 = vunpack.c.h.b16 %v2055
      %v2152 = vpack.c.b16 %v2096, %v2088
      %v2153 = vpack.c.b16 %v2097, %v2089
      %v2154 = vpack.c.b16 %v2098, %v2090
      %v2155 = vpack.c.b16 %v2099, %v2091
      %v2156 = vpack.c.b16 %v2100, %v2092
      %v2157 = vpack.c.b16 %v2101, %v2093
      %v2158 = vpack.c.b16 %v2102, %v2094
      %v2159 = vpack.c.b16 %v2103, %v2095
      %v2160 = vpack.c.b16 %v2112, %v2104
      %v2161 = vpack.c.b16 %v2113, %v2105
      %v2162 = vpack.c.b16 %v2114, %v2106
      %v2163 = vpack.c.b16 %v2115, %v2107
      %v2164 = vpack.c.b16 %v2116, %v2108
      %v2165 = vpack.c.b16 %v2117, %v2109
      %v2166 = vpack.c.b16 %v2118, %v2110
      %v2167 = vpack.c.b16 %v2119, %v2111
      %v2168 = vpack.c.b16 %v2128, %v2120
      %v2169 = vpack.c.b16 %v2129, %v2121
      %v2170 = vpack.c.b16 %v2130, %v2122
      %v2171 = vpack.c.b16 %v2131, %v2123
      %v2172 = vpack.c.b16 %v2132, %v2124
      %v2173 = vpack.c.b16 %v2133, %v2125
      %v2174 = vpack.c.b16 %v2134, %v2126
      %v2175 = vpack.c.b16 %v2135, %v2127
      %v2176 = vpack.c.b16 %v2144, %v2136
      %v2177 = vpack.c.b16 %v2145, %v2137
      %v2178 = vpack.c.b16 %v2146, %v2138
      %v2179 = vpack.c.b16 %v2147, %v2139
      %v2180 = vpack.c.b16 %v2148, %v2140
      %v2181 = vpack.c.b16 %v2149, %v2141
      %v2182 = vpack.c.b16 %v2150, %v2142
      %v2183 = vpack.c.b16 %v2151, %v2143
      %v2217 = vsel %vm151, %v2020, 0
      %2219 = vmatpush.bf16.msra.mxu0 0
      %2220 = vmatpush.bf16.msra.mxu0 0
      %2221 = vmatpush.bf16.msra.mxu0 0
      %2222 = vmatpush.bf16.msra.mxu0 0
      %2223 = vmatpush.bf16.msra.mxu0 %v2176
      %2224 = vmatpush.bf16.msra.mxu0 %v2168
      %2225 = vmatpush.bf16.msra.mxu0 %v2160
      %2226 = vmatpush.bf16.msra.mxu0 %v2152
      %2227 = vmatmul.bf16.gmra.mxu0 %v2217
      %v2228 = vpop.f32.mrf.mxu0
      %v2229 = vadd.f32 0.0, %v2228
      %v2230 = vpop.f32.mrf.mxu0
      %2231 = vdwg.mxu0
      %2232 = vmatpush.bf16.msra.mxu0 0
      %2233 = vmatpush.bf16.msra.mxu0 0
      %2234 = vmatpush.bf16.msra.mxu0 0
      %2235 = vmatpush.bf16.msra.mxu0 0
      %2236 = vmatpush.bf16.msra.mxu0 %v2177
      %2237 = vmatpush.bf16.msra.mxu0 %v2169
      %2238 = vmatpush.bf16.msra.mxu0 %v2161
      %2239 = vmatpush.bf16.msra.mxu0 %v2153
      %2240 = vmatmul.bf16.gmra.mxu0 %v2217
      %v2241 = vpop.f32.mrf.mxu0
      %v2242 = vadd.f32 0.0, %v2241
      %v2243 = vpop.f32.mrf.mxu0
      %2244 = vdwg.mxu0
      %2245 = vmatpush.bf16.msra.mxu0 0
      %2246 = vmatpush.bf16.msra.mxu0 0
      %2247 = vmatpush.bf16.msra.mxu0 0
      %2248 = vmatpush.bf16.msra.mxu0 0
      %2249 = vmatpush.bf16.msra.mxu0 %v2178
      %2250 = vmatpush.bf16.msra.mxu0 %v2170
      %2251 = vmatpush.bf16.msra.mxu0 %v2162
      %2252 = vmatpush.bf16.msra.mxu0 %v2154
      %2253 = vmatmul.bf16.gmra.mxu0 %v2217
      %v2254 = vpop.f32.mrf.mxu0
      %v2255 = vadd.f32 0.0, %v2254
      %v2256 = vpop.f32.mrf.mxu0
      %2257 = vdwg.mxu0
      %2258 = vmatpush.bf16.msra.mxu0 0
      %2259 = vmatpush.bf16.msra.mxu0 0
      %2260 = vmatpush.bf16.msra.mxu0 0
      %2261 = vmatpush.bf16.msra.mxu0 0
      %2262 = vmatpush.bf16.msra.mxu0 %v2179
      %2263 = vmatpush.bf16.msra.mxu0 %v2171
      %2264 = vmatpush.bf16.msra.mxu0 %v2163
      %2265 = vmatpush.bf16.msra.mxu0 %v2155
      %2266 = vmatmul.bf16.gmra.mxu0 %v2217
      %v2267 = vpop.f32.mrf.mxu0
      %v2268 = vadd.f32 0.0, %v2267
      %v2269 = vpop.f32.mrf.mxu0
      %2270 = vdwg.mxu0
      %2271 = vmatpush.bf16.msra.mxu0 0
      %2272 = vmatpush.bf16.msra.mxu0 0
      %2273 = vmatpush.bf16.msra.mxu0 0
      %2274 = vmatpush.bf16.msra.mxu0 0
      %2275 = vmatpush.bf16.msra.mxu0 %v2180
      %2276 = vmatpush.bf16.msra.mxu0 %v2172
      %2277 = vmatpush.bf16.msra.mxu0 %v2164
      %2278 = vmatpush.bf16.msra.mxu0 %v2156
      %2279 = vmatmul.bf16.gmra.mxu0 %v2217
      %v2280 = vpop.f32.mrf.mxu0
      %v2281 = vadd.f32 0.0, %v2280
      %v2282 = vpop.f32.mrf.mxu0
      %2283 = vdwg.mxu0
      %2284 = vmatpush.bf16.msra.mxu0 0
      %2285 = vmatpush.bf16.msra.mxu0 0
      %2286 = vmatpush.bf16.msra.mxu0 0
      %2287 = vmatpush.bf16.msra.mxu0 0
      %2288 = vmatpush.bf16.msra.mxu0 %v2181
      %2289 = vmatpush.bf16.msra.mxu0 %v2173
      %2290 = vmatpush.bf16.msra.mxu0 %v2165
      %2291 = vmatpush.bf16.msra.mxu0 %v2157
      %2292 = vmatmul.bf16.gmra.mxu0 %v2217
      %v2293 = vpop.f32.mrf.mxu0
      %v2294 = vadd.f32 0.0, %v2293
      %v2295 = vpop.f32.mrf.mxu0
      %2296 = vdwg.mxu0
      %2297 = vmatpush.bf16.msra.mxu0 0
      %2298 = vmatpush.bf16.msra.mxu0 0
      %2299 = vmatpush.bf16.msra.mxu0 0
      %2300 = vmatpush.bf16.msra.mxu0 0
      %2301 = vmatpush.bf16.msra.mxu0 %v2182
      %2302 = vmatpush.bf16.msra.mxu0 %v2174
      %2303 = vmatpush.bf16.msra.mxu0 %v2166
      %2304 = vmatpush.bf16.msra.mxu0 %v2158
      %2305 = vmatmul.bf16.gmra.mxu0 %v2217
      %v2306 = vpop.f32.mrf.mxu0
      %v2307 = vadd.f32 0.0, %v2306
      %v2308 = vpop.f32.mrf.mxu0
      %2309 = vdwg.mxu0
      %2310 = vmatpush.bf16.msra.mxu0 0
      %2311 = vmatpush.bf16.msra.mxu0 0
      %2312 = vmatpush.bf16.msra.mxu0 0
      %2313 = vmatpush.bf16.msra.mxu0 0
      %2314 = vmatpush.bf16.msra.mxu0 %v2183
      %2315 = vmatpush.bf16.msra.mxu0 %v2175
      %2316 = vmatpush.bf16.msra.mxu0 %v2167
      %2317 = vmatpush.bf16.msra.mxu0 %v2159
      %2318 = vmatmul.bf16.gmra.mxu0 %v2217
      %v2319 = vpop.f32.mrf.mxu0
      %v2320 = vadd.f32 0.0, %v2319
      %v2321 = vpop.f32.mrf.mxu0
      %2322 = vdwg.mxu0
      %v2331 = vrot.slane %v2242, 6
      %v2332 = vrot.slane %v2255, 4
      %v2333 = vrot.slane %v2268, 2
      %v2334 = vrot.slane %v2294, 6
      %v2335 = vrot.slane %v2307, 4
      %v2336 = vrot.slane %v2320, 2
      %v2337 = vsel %vm198, %v2229, %v2331
      %v2338 = vsel %vm576, %v2332, %v2333
      %v2339 = vsel %vm578, %v2337, %v2338
      %v2340 = vsel %vm198, %v2281, %v2334
      %v2341 = vsel %vm576, %v2335, %v2336
      %v2342 = vsel %vm578, %v2340, %v2341
      %v2345 = vadd.f32 %v2018, %v2339
      %v2346 = vadd.f32 %v2019, %v2342
      %2347 = vst [vmem:[#allocation6] sm:$0xff] %v2345
      %2348 = vst [vmem:[#allocation6 + $0x8] sm:$0xff] %v2346
      %s2349 = sadd.s32 %s139, 5
      %s2350 = smul.u32 %s2349, 2
      %s2351 = smul.addr %s2350, 2
      %s2352 = scalar_lea.vmem %s0, %s2351
      %v2353 = vld [vmem:[%s2352] sm:$0xf]
      %v2354 = vld [vmem:[#allocation4] sm:$0x3]
      %v2356 = vsel %vm151, %v2354, 0
      %2358 = vmatpush.msra.mxu0 0.0
      %2359 = vmatpush.msra.mxu0 0.0
      %2360 = vmatpush.msra.mxu0 0.0
      %2361 = vmatpush.msra.mxu0 0.0
      %2362 = vmatpush.msra.mxu0 0.0
      %2363 = vmatpush.msra.mxu0 0.0
      %2364 = vmatpush.msra.mxu0 0.0
      %2365 = vmatpush.msra.mxu0 0.0
      %2366 = vmatpush.msra.mxu0 %v80
      %2367 = vmatpush.msra.mxu0 %v78
      %2368 = vmatpush.msra.mxu0 %v76
      %2369 = vmatpush.msra.mxu0 %v74
      %2370 = vmatpush.msra.mxu0 %v72
      %2371 = vmatpush.msra.mxu0 %v70
      %2372 = vmatpush.msra.mxu0 %v68
      %2373 = vmatpush.msra.mxu0 %v66
      %2374 = vmatmul.f32.gmra.mxu0 %v2356
      %v2375 = vpop.f32.mrf.mxu0
      %v2376 = vadd.f32 0.0, %v2375
      %2377 = vdwg.mxu0
      %2378 = vmatpush.msra.mxu0 0.0
      %2379 = vmatpush.msra.mxu0 0.0
      %2380 = vmatpush.msra.mxu0 0.0
      %2381 = vmatpush.msra.mxu0 0.0
      %2382 = vmatpush.msra.mxu0 0.0
      %2383 = vmatpush.msra.mxu0 0.0
      %2384 = vmatpush.msra.mxu0 0.0
      %2385 = vmatpush.msra.mxu0 0.0
      %2386 = vmatpush.msra.mxu0 %v81
      %2387 = vmatpush.msra.mxu0 %v79
      %2388 = vmatpush.msra.mxu0 %v77
      %2389 = vmatpush.msra.mxu0 %v75
      %2390 = vmatpush.msra.mxu0 %v73
      %2391 = vmatpush.msra.mxu0 %v71
      %2392 = vmatpush.msra.mxu0 %v69
      %2393 = vmatpush.msra.mxu0 %v67
      %2394 = vmatmul.f32.gmra.mxu0 %v2356
      %v2395 = vpop.f32.mrf.mxu0
      %v2396 = vadd.f32 0.0, %v2395
      %2397 = vdwg.mxu0
      %v2400 = vrot.slane %v2396, 6
      %v2401 = vsel %vm198, %v2376, %v2400
      %v2403 = vadd.f32 %v2353, %v2401
      %v2404 = vxor.u32 %v2403, 2147483648
      %v2405 = vmul.f32 %v2404, 1.442695
      %v2406 = vpow.pop %v2405
      %v2407 = vadd.f32 %v2406, 1.0
      %v2408 = vrcp.pop %v2407
      %v2409 = vmul.f32 %v2407, %v2408
      %v2410 = vsub.f32 1.0, %v2409
      %v2411 = vmul.f32 %v2408, %v2410
      %v2412 = vadd.f32 %v2408, %v2411
      %vm2413 = vweird.f32 %v2407
      %vm2414 = vweird.f32 %v2408
      %vm2415 = vmor %vm2413, %vm2414
      %v2416 = vsel %vm2415, %v2408, %v2412
      %v2417 = vand.u32 2147483647, %v2407
      %vm2418 = vcmp.eq.f32.partialorder %v2417, 8.507059e+37
      %v2419 = vand.u32 %v2407, 2147483648
      %v2420 = vor.u32 1.1754944e-38, %v2419
      %v2421 = vsel %vm2418, %v2420, %v2416
      %v2422 = vmul.f32 1.0, %v2421
      %v2424 = vrot.slane %v2422, 2
      %v2426 = vmul.f32 %v2424, 2.0
      %v2427 = vsub.f32 %v2426, 1.0
      %v2428 = vld [vmem:[#allocation5] sm:$0x3]
      %2430 = vrot.lane.b32.xlu0 %v2428, 64
      %v2431 = vpop.permute.xlu0 %2430
      %v2433 = vmul.f32 %v2422, %v2431
      %v2434 = vmul.f32 %v2422, %v2427
      %2436 = vrot.lane.b32.xlu0 %v2434, 64
      %v2437 = vpop.permute.xlu0 %2436
      %v2439 = vadd.f32 %v2433, %v2437
      %v2440 = vtanh.pop %v2439
      %2441 = vrot.lane.b32.xlu0 %v2422, 64
      %v2442 = vpop.permute.xlu0 %2441
      %v2443 = vrot.slane %v2442, 2
      %2446 = vrot.lane.b32.xlu0 %v2440, 64
      %v2447 = vpop.permute.xlu0 %2446
      %v2449 = vmul.f32 %v2443, %v2447
      %2451 = vst [vmem:[#allocation1] ss:$4 sm:$0xff] %v2439
      %v2452 = vld.sshfl [vmem:[#allocation1] sm:$0xff pattern:$0x73625140]
      %2453 = vrot.lane.b32.xlu0 %v2452, 64
      %v2454 = vpop.permute.xlu0 %2453
      %2456 = vst.msk [vmem:[#allocation5] sm:$0x3] %vm82, %v2454
      %2457 = vst.msk [vmem:[#allocation4] sm:$0x3] %vm82, %v2449
      %v2458 = vld [vmem:[#allocation6] sm:$0xff]
      %v2459 = vld [vmem:[#allocation6 + $0x8] sm:$0xff]
      %v2460 = vpack.c.bf16 %v2449, %v2449
      %s2461 = sadd.s32 320, %s259
      %s2462 = smul.addr %s2461, 4
      %s2463 = scalar_lea.vmem [#allocation2], %s2462
      %v2464 = vld [vmem:[%s2463] sm:$0xff]
      %v2465 = vld [vmem:[%s2463 + $0x8] sm:$0xff]
      %v2466 = vld [vmem:[%s2463 + $0x10] sm:$0xff]
      %v2467 = vld [vmem:[%s2463 + $0x18] sm:$0xff]
      %v2468 = vld [vmem:[%s2463 + $0x20] sm:$0xff]
      %v2469 = vld [vmem:[%s2463 + $0x28] sm:$0xff]
      %v2470 = vld [vmem:[%s2463 + $0x30] sm:$0xff]
      %v2471 = vld [vmem:[%s2463 + $0x38] sm:$0xff]
      %v2472 = vld [vmem:[%s2463 + $0x40] sm:$0xff]
      %v2473 = vld [vmem:[%s2463 + $0x48] sm:$0xff]
      %v2474 = vld [vmem:[%s2463 + $0x50] sm:$0xff]
      %v2475 = vld [vmem:[%s2463 + $0x58] sm:$0xff]
      %v2476 = vld [vmem:[%s2463 + $0x60] sm:$0xff]
      %v2477 = vld [vmem:[%s2463 + $0x68] sm:$0xff]
      %v2478 = vld [vmem:[%s2463 + $0x70] sm:$0xff]
      %v2479 = vld [vmem:[%s2463 + $0x78] sm:$0xff]
      %v2480 = vld [vmem:[%s2463 + $0x80] sm:$0xff]
      %v2481 = vld [vmem:[%s2463 + $0x88] sm:$0xff]
      %v2482 = vld [vmem:[%s2463 + $0x90] sm:$0xff]
      %v2483 = vld [vmem:[%s2463 + $0x98] sm:$0xff]
      %v2484 = vld [vmem:[%s2463 + $0xa0] sm:$0xff]
      %v2485 = vld [vmem:[%s2463 + $0xa8] sm:$0xff]
      %v2486 = vld [vmem:[%s2463 + $0xb0] sm:$0xff]
      %v2487 = vld [vmem:[%s2463 + $0xb8] sm:$0xff]
      %v2488 = vld [vmem:[%s2463 + $0xc0] sm:$0xff]
      %v2489 = vld [vmem:[%s2463 + $0xc8] sm:$0xff]
      %v2490 = vld [vmem:[%s2463 + $0xd0] sm:$0xff]
      %v2491 = vld [vmem:[%s2463 + $0xd8] sm:$0xff]
      %v2492 = vld [vmem:[%s2463 + $0xe0] sm:$0xff]
      %v2493 = vld [vmem:[%s2463 + $0xe8] sm:$0xff]
      %v2494 = vld [vmem:[%s2463 + $0xf0] sm:$0xff]
      %v2495 = vld [vmem:[%s2463 + $0xf8] sm:$0xff]
      %v2528 = vunpack.c.l.b16 %v2464
      %v2529 = vunpack.c.h.b16 %v2464
      %v2530 = vunpack.c.l.b16 %v2465
      %v2531 = vunpack.c.h.b16 %v2465
      %v2532 = vunpack.c.l.b16 %v2466
      %v2533 = vunpack.c.h.b16 %v2466
      %v2534 = vunpack.c.l.b16 %v2467
      %v2535 = vunpack.c.h.b16 %v2467
      %v2536 = vunpack.c.l.b16 %v2468
      %v2537 = vunpack.c.h.b16 %v2468
      %v2538 = vunpack.c.l.b16 %v2469
      %v2539 = vunpack.c.h.b16 %v2469
      %v2540 = vunpack.c.l.b16 %v2470
      %v2541 = vunpack.c.h.b16 %v2470
      %v2542 = vunpack.c.l.b16 %v2471
      %v2543 = vunpack.c.h.b16 %v2471
      %v2544 = vunpack.c.l.b16 %v2472
      %v2545 = vunpack.c.h.b16 %v2472
      %v2546 = vunpack.c.l.b16 %v2473
      %v2547 = vunpack.c.h.b16 %v2473
      %v2548 = vunpack.c.l.b16 %v2474
      %v2549 = vunpack.c.h.b16 %v2474
      %v2550 = vunpack.c.l.b16 %v2475
      %v2551 = vunpack.c.h.b16 %v2475
      %v2552 = vunpack.c.l.b16 %v2476
      %v2553 = vunpack.c.h.b16 %v2476
      %v2554 = vunpack.c.l.b16 %v2477
      %v2555 = vunpack.c.h.b16 %v2477
      %v2556 = vunpack.c.l.b16 %v2478
      %v2557 = vunpack.c.h.b16 %v2478
      %v2558 = vunpack.c.l.b16 %v2479
      %v2559 = vunpack.c.h.b16 %v2479
      %v2560 = vunpack.c.l.b16 %v2480
      %v2561 = vunpack.c.h.b16 %v2480
      %v2562 = vunpack.c.l.b16 %v2481
      %v2563 = vunpack.c.h.b16 %v2481
      %v2564 = vunpack.c.l.b16 %v2482
      %v2565 = vunpack.c.h.b16 %v2482
      %v2566 = vunpack.c.l.b16 %v2483
      %v2567 = vunpack.c.h.b16 %v2483
      %v2568 = vunpack.c.l.b16 %v2484
      %v2569 = vunpack.c.h.b16 %v2484
      %v2570 = vunpack.c.l.b16 %v2485
      %v2571 = vunpack.c.h.b16 %v2485
      %v2572 = vunpack.c.l.b16 %v2486
      %v2573 = vunpack.c.h.b16 %v2486
      %v2574 = vunpack.c.l.b16 %v2487
      %v2575 = vunpack.c.h.b16 %v2487
      %v2576 = vunpack.c.l.b16 %v2488
      %v2577 = vunpack.c.h.b16 %v2488
      %v2578 = vunpack.c.l.b16 %v2489
      %v2579 = vunpack.c.h.b16 %v2489
      %v2580 = vunpack.c.l.b16 %v2490
      %v2581 = vunpack.c.h.b16 %v2490
      %v2582 = vunpack.c.l.b16 %v2491
      %v2583 = vunpack.c.h.b16 %v2491
      %v2584 = vunpack.c.l.b16 %v2492
      %v2585 = vunpack.c.h.b16 %v2492
      %v2586 = vunpack.c.l.b16 %v2493
      %v2587 = vunpack.c.h.b16 %v2493
      %v2588 = vunpack.c.l.b16 %v2494
      %v2589 = vunpack.c.h.b16 %v2494
      %v2590 = vunpack.c.l.b16 %v2495
      %v2591 = vunpack.c.h.b16 %v2495
      %v2592 = vpack.c.b16 %v2536, %v2528
      %v2593 = vpack.c.b16 %v2537, %v2529
      %v2594 = vpack.c.b16 %v2538, %v2530
      %v2595 = vpack.c.b16 %v2539, %v2531
      %v2596 = vpack.c.b16 %v2540, %v2532
      %v2597 = vpack.c.b16 %v2541, %v2533
      %v2598 = vpack.c.b16 %v2542, %v2534
      %v2599 = vpack.c.b16 %v2543, %v2535
      %v2600 = vpack.c.b16 %v2552, %v2544
      %v2601 = vpack.c.b16 %v2553, %v2545
      %v2602 = vpack.c.b16 %v2554, %v2546
      %v2603 = vpack.c.b16 %v2555, %v2547
      %v2604 = vpack.c.b16 %v2556, %v2548
      %v2605 = vpack.c.b16 %v2557, %v2549
      %v2606 = vpack.c.b16 %v2558, %v2550
      %v2607 = vpack.c.b16 %v2559, %v2551
      %v2608 = vpack.c.b16 %v2568, %v2560
      %v2609 = vpack.c.b16 %v2569, %v2561
      %v2610 = vpack.c.b16 %v2570, %v2562
      %v2611 = vpack.c.b16 %v2571, %v2563
      %v2612 = vpack.c.b16 %v2572, %v2564
      %v2613 = vpack.c.b16 %v2573, %v2565
      %v2614 = vpack.c.b16 %v2574, %v2566
      %v2615 = vpack.c.b16 %v2575, %v2567
      %v2616 = vpack.c.b16 %v2584, %v2576
      %v2617 = vpack.c.b16 %v2585, %v2577
      %v2618 = vpack.c.b16 %v2586, %v2578
      %v2619 = vpack.c.b16 %v2587, %v2579
      %v2620 = vpack.c.b16 %v2588, %v2580
      %v2621 = vpack.c.b16 %v2589, %v2581
      %v2622 = vpack.c.b16 %v2590, %v2582
      %v2623 = vpack.c.b16 %v2591, %v2583
      %v2657 = vsel %vm151, %v2460, 0
      %2659 = vmatpush.bf16.msra.mxu0 0
      %2660 = vmatpush.bf16.msra.mxu0 0
      %2661 = vmatpush.bf16.msra.mxu0 0
      %2662 = vmatpush.bf16.msra.mxu0 0
      %2663 = vmatpush.bf16.msra.mxu0 %v2616
      %2664 = vmatpush.bf16.msra.mxu0 %v2608
      %2665 = vmatpush.bf16.msra.mxu0 %v2600
      %2666 = vmatpush.bf16.msra.mxu0 %v2592
      %2667 = vmatmul.bf16.gmra.mxu0 %v2657
      %v2668 = vpop.f32.mrf.mxu0
      %v2669 = vadd.f32 0.0, %v2668
      %v2670 = vpop.f32.mrf.mxu0
      %2671 = vdwg.mxu0
      %2672 = vmatpush.bf16.msra.mxu0 0
      %2673 = vmatpush.bf16.msra.mxu0 0
      %2674 = vmatpush.bf16.msra.mxu0 0
      %2675 = vmatpush.bf16.msra.mxu0 0
      %2676 = vmatpush.bf16.msra.mxu0 %v2617
      %2677 = vmatpush.bf16.msra.mxu0 %v2609
      %2678 = vmatpush.bf16.msra.mxu0 %v2601
      %2679 = vmatpush.bf16.msra.mxu0 %v2593
      %2680 = vmatmul.bf16.gmra.mxu0 %v2657
      %v2681 = vpop.f32.mrf.mxu0
      %v2682 = vadd.f32 0.0, %v2681
      %v2683 = vpop.f32.mrf.mxu0
      %2684 = vdwg.mxu0
      %2685 = vmatpush.bf16.msra.mxu0 0
      %2686 = vmatpush.bf16.msra.mxu0 0
      %2687 = vmatpush.bf16.msra.mxu0 0
      %2688 = vmatpush.bf16.msra.mxu0 0
      %2689 = vmatpush.bf16.msra.mxu0 %v2618
      %2690 = vmatpush.bf16.msra.mxu0 %v2610
      %2691 = vmatpush.bf16.msra.mxu0 %v2602
      %2692 = vmatpush.bf16.msra.mxu0 %v2594
      %2693 = vmatmul.bf16.gmra.mxu0 %v2657
      %v2694 = vpop.f32.mrf.mxu0
      %v2695 = vadd.f32 0.0, %v2694
      %v2696 = vpop.f32.mrf.mxu0
      %2697 = vdwg.mxu0
      %2698 = vmatpush.bf16.msra.mxu0 0
      %2699 = vmatpush.bf16.msra.mxu0 0
      %2700 = vmatpush.bf16.msra.mxu0 0
      %2701 = vmatpush.bf16.msra.mxu0 0
      %2702 = vmatpush.bf16.msra.mxu0 %v2619
      %2703 = vmatpush.bf16.msra.mxu0 %v2611
      %2704 = vmatpush.bf16.msra.mxu0 %v2603
      %2705 = vmatpush.bf16.msra.mxu0 %v2595
      %2706 = vmatmul.bf16.gmra.mxu0 %v2657
      %v2707 = vpop.f32.mrf.mxu0
      %v2708 = vadd.f32 0.0, %v2707
      %v2709 = vpop.f32.mrf.mxu0
      %2710 = vdwg.mxu0
      %2711 = vmatpush.bf16.msra.mxu0 0
      %2712 = vmatpush.bf16.msra.mxu0 0
      %2713 = vmatpush.bf16.msra.mxu0 0
      %2714 = vmatpush.bf16.msra.mxu0 0
      %2715 = vmatpush.bf16.msra.mxu0 %v2620
      %2716 = vmatpush.bf16.msra.mxu0 %v2612
      %2717 = vmatpush.bf16.msra.mxu0 %v2604
      %2718 = vmatpush.bf16.msra.mxu0 %v2596
      %2719 = vmatmul.bf16.gmra.mxu0 %v2657
      %v2720 = vpop.f32.mrf.mxu0
      %v2721 = vadd.f32 0.0, %v2720
      %v2722 = vpop.f32.mrf.mxu0
      %2723 = vdwg.mxu0
      %2724 = vmatpush.bf16.msra.mxu0 0
      %2725 = vmatpush.bf16.msra.mxu0 0
      %2726 = vmatpush.bf16.msra.mxu0 0
      %2727 = vmatpush.bf16.msra.mxu0 0
      %2728 = vmatpush.bf16.msra.mxu0 %v2621
      %2729 = vmatpush.bf16.msra.mxu0 %v2613
      %2730 = vmatpush.bf16.msra.mxu0 %v2605
      %2731 = vmatpush.bf16.msra.mxu0 %v2597
      %2732 = vmatmul.bf16.gmra.mxu0 %v2657
      %v2733 = vpop.f32.mrf.mxu0
      %v2734 = vadd.f32 0.0, %v2733
      %v2735 = vpop.f32.mrf.mxu0
      %2736 = vdwg.mxu0
      %2737 = vmatpush.bf16.msra.mxu0 0
      %2738 = vmatpush.bf16.msra.mxu0 0
      %2739 = vmatpush.bf16.msra.mxu0 0
      %2740 = vmatpush.bf16.msra.mxu0 0
      %2741 = vmatpush.bf16.msra.mxu0 %v2622
      %2742 = vmatpush.bf16.msra.mxu0 %v2614
      %2743 = vmatpush.bf16.msra.mxu0 %v2606
      %2744 = vmatpush.bf16.msra.mxu0 %v2598
      %2745 = vmatmul.bf16.gmra.mxu0 %v2657
      %v2746 = vpop.f32.mrf.mxu0
      %v2747 = vadd.f32 0.0, %v2746
      %v2748 = vpop.f32.mrf.mxu0
      %2749 = vdwg.mxu0
      %2750 = vmatpush.bf16.msra.mxu0 0
      %2751 = vmatpush.bf16.msra.mxu0 0
      %2752 = vmatpush.bf16.msra.mxu0 0
      %2753 = vmatpush.bf16.msra.mxu0 0
      %2754 = vmatpush.bf16.msra.mxu0 %v2623
      %2755 = vmatpush.bf16.msra.mxu0 %v2615
      %2756 = vmatpush.bf16.msra.mxu0 %v2607
      %2757 = vmatpush.bf16.msra.mxu0 %v2599
      %2758 = vmatmul.bf16.gmra.mxu0 %v2657
      %v2759 = vpop.f32.mrf.mxu0
      %v2760 = vadd.f32 0.0, %v2759
      %v2761 = vpop.f32.mrf.mxu0
      %2762 = vdwg.mxu0
      %v2771 = vrot.slane %v2682, 6
      %v2772 = vrot.slane %v2695, 4
      %v2773 = vrot.slane %v2708, 2
      %v2774 = vrot.slane %v2734, 6
      %v2775 = vrot.slane %v2747, 4
      %v2776 = vrot.slane %v2760, 2
      %v2777 = vsel %vm198, %v2669, %v2771
      %v2778 = vsel %vm576, %v2772, %v2773
      %v2779 = vsel %vm578, %v2777, %v2778
      %v2780 = vsel %vm198, %v2721, %v2774
      %v2781 = vsel %vm576, %v2775, %v2776
      %v2782 = vsel %vm578, %v2780, %v2781
      %v2785 = vadd.f32 %v2458, %v2779
      %v2786 = vadd.f32 %v2459, %v2782
      %2787 = vst [vmem:[#allocation6] sm:$0xff] %v2785
      %2788 = vst [vmem:[#allocation6 + $0x8] sm:$0xff] %v2786
      %s2789 = sadd.s32 %s139, 6
      %s2790 = smul.u32 %s2789, 2
      %s2791 = smul.addr %s2790, 2
      %s2792 = scalar_lea.vmem %s0, %s2791
      %v2793 = vld [vmem:[%s2792] sm:$0xf]
      %v2794 = vld [vmem:[#allocation4] sm:$0x3]
      %v2796 = vsel %vm151, %v2794, 0
      %2798 = vmatpush.msra.mxu0 0.0
      %2799 = vmatpush.msra.mxu0 0.0
      %2800 = vmatpush.msra.mxu0 0.0
      %2801 = vmatpush.msra.mxu0 0.0
      %2802 = vmatpush.msra.mxu0 0.0
      %2803 = vmatpush.msra.mxu0 0.0
      %2804 = vmatpush.msra.mxu0 0.0
      %2805 = vmatpush.msra.mxu0 0.0
      %2806 = vmatpush.msra.mxu0 %v80
      %2807 = vmatpush.msra.mxu0 %v78
      %2808 = vmatpush.msra.mxu0 %v76
      %2809 = vmatpush.msra.mxu0 %v74
      %2810 = vmatpush.msra.mxu0 %v72
      %2811 = vmatpush.msra.mxu0 %v70
      %2812 = vmatpush.msra.mxu0 %v68
      %2813 = vmatpush.msra.mxu0 %v66
      %2814 = vmatmul.f32.gmra.mxu0 %v2796
      %v2815 = vpop.f32.mrf.mxu0
      %v2816 = vadd.f32 0.0, %v2815
      %2817 = vdwg.mxu0
      %2818 = vmatpush.msra.mxu0 0.0
      %2819 = vmatpush.msra.mxu0 0.0
      %2820 = vmatpush.msra.mxu0 0.0
      %2821 = vmatpush.msra.mxu0 0.0
      %2822 = vmatpush.msra.mxu0 0.0
      %2823 = vmatpush.msra.mxu0 0.0
      %2824 = vmatpush.msra.mxu0 0.0
      %2825 = vmatpush.msra.mxu0 0.0
      %2826 = vmatpush.msra.mxu0 %v81
      %2827 = vmatpush.msra.mxu0 %v79
      %2828 = vmatpush.msra.mxu0 %v77
      %2829 = vmatpush.msra.mxu0 %v75
      %2830 = vmatpush.msra.mxu0 %v73
      %2831 = vmatpush.msra.mxu0 %v71
      %2832 = vmatpush.msra.mxu0 %v69
      %2833 = vmatpush.msra.mxu0 %v67
      %2834 = vmatmul.f32.gmra.mxu0 %v2796
      %v2835 = vpop.f32.mrf.mxu0
      %v2836 = vadd.f32 0.0, %v2835
      %2837 = vdwg.mxu0
      %v2840 = vrot.slane %v2836, 6
      %v2841 = vsel %vm198, %v2816, %v2840
      %v2843 = vadd.f32 %v2793, %v2841
      %v2844 = vxor.u32 %v2843, 2147483648
      %v2845 = vmul.f32 %v2844, 1.442695
      %v2846 = vpow.pop %v2845
      %v2847 = vadd.f32 %v2846, 1.0
      %v2848 = vrcp.pop %v2847
      %v2849 = vmul.f32 %v2847, %v2848
      %v2850 = vsub.f32 1.0, %v2849
      %v2851 = vmul.f32 %v2848, %v2850
      %v2852 = vadd.f32 %v2848, %v2851
      %vm2853 = vweird.f32 %v2847
      %vm2854 = vweird.f32 %v2848
      %vm2855 = vmor %vm2853, %vm2854
      %v2856 = vsel %vm2855, %v2848, %v2852
      %v2857 = vand.u32 2147483647, %v2847
      %vm2858 = vcmp.eq.f32.partialorder %v2857, 8.507059e+37
      %v2859 = vand.u32 %v2847, 2147483648
      %v2860 = vor.u32 1.1754944e-38, %v2859
      %v2861 = vsel %vm2858, %v2860, %v2856
      %v2862 = vmul.f32 1.0, %v2861
      %v2864 = vrot.slane %v2862, 2
      %v2866 = vmul.f32 %v2864, 2.0
      %v2867 = vsub.f32 %v2866, 1.0
      %v2868 = vld [vmem:[#allocation5] sm:$0x3]
      %2870 = vrot.lane.b32.xlu0 %v2868, 64
      %v2871 = vpop.permute.xlu0 %2870
      %v2873 = vmul.f32 %v2862, %v2871
      %v2874 = vmul.f32 %v2862, %v2867
      %2876 = vrot.lane.b32.xlu0 %v2874, 64
      %v2877 = vpop.permute.xlu0 %2876
      %v2879 = vadd.f32 %v2873, %v2877
      %v2880 = vtanh.pop %v2879
      %2881 = vrot.lane.b32.xlu0 %v2862, 64
      %v2882 = vpop.permute.xlu0 %2881
      %v2883 = vrot.slane %v2882, 2
      %2886 = vrot.lane.b32.xlu0 %v2880, 64
      %v2887 = vpop.permute.xlu0 %2886
      %v2889 = vmul.f32 %v2883, %v2887
      %2891 = vst [vmem:[#allocation1] ss:$4 sm:$0xff] %v2879
      %v2892 = vld.sshfl [vmem:[#allocation1] sm:$0xff pattern:$0x73625140]
      %2893 = vrot.lane.b32.xlu0 %v2892, 64
      %v2894 = vpop.permute.xlu0 %2893
      %2896 = vst.msk [vmem:[#allocation5] sm:$0x3] %vm82, %v2894
      %2897 = vst.msk [vmem:[#allocation4] sm:$0x3] %vm82, %v2889
      %v2898 = vld [vmem:[#allocation6] sm:$0xff]
      %v2899 = vld [vmem:[#allocation6 + $0x8] sm:$0xff]
      %v2900 = vpack.c.bf16 %v2889, %v2889
      %s2901 = sadd.s32 384, %s259
      %s2902 = smul.addr %s2901, 4
      %s2903 = scalar_lea.vmem [#allocation2], %s2902
      %v2904 = vld [vmem:[%s2903] sm:$0xff]
      %v2905 = vld [vmem:[%s2903 + $0x8] sm:$0xff]
      %v2906 = vld [vmem:[%s2903 + $0x10] sm:$0xff]
      %v2907 = vld [vmem:[%s2903 + $0x18] sm:$0xff]
      %v2908 = vld [vmem:[%s2903 + $0x20] sm:$0xff]
      %v2909 = vld [vmem:[%s2903 + $0x28] sm:$0xff]
      %v2910 = vld [vmem:[%s2903 + $0x30] sm:$0xff]
      %v2911 = vld [vmem:[%s2903 + $0x38] sm:$0xff]
      %v2912 = vld [vmem:[%s2903 + $0x40] sm:$0xff]
      %v2913 = vld [vmem:[%s2903 + $0x48] sm:$0xff]
      %v2914 = vld [vmem:[%s2903 + $0x50] sm:$0xff]
      %v2915 = vld [vmem:[%s2903 + $0x58] sm:$0xff]
      %v2916 = vld [vmem:[%s2903 + $0x60] sm:$0xff]
      %v2917 = vld [vmem:[%s2903 + $0x68] sm:$0xff]
      %v2918 = vld [vmem:[%s2903 + $0x70] sm:$0xff]
      %v2919 = vld [vmem:[%s2903 + $0x78] sm:$0xff]
      %v2920 = vld [vmem:[%s2903 + $0x80] sm:$0xff]
      %v2921 = vld [vmem:[%s2903 + $0x88] sm:$0xff]
      %v2922 = vld [vmem:[%s2903 + $0x90] sm:$0xff]
      %v2923 = vld [vmem:[%s2903 + $0x98] sm:$0xff]
      %v2924 = vld [vmem:[%s2903 + $0xa0] sm:$0xff]
      %v2925 = vld [vmem:[%s2903 + $0xa8] sm:$0xff]
      %v2926 = vld [vmem:[%s2903 + $0xb0] sm:$0xff]
      %v2927 = vld [vmem:[%s2903 + $0xb8] sm:$0xff]
      %v2928 = vld [vmem:[%s2903 + $0xc0] sm:$0xff]
      %v2929 = vld [vmem:[%s2903 + $0xc8] sm:$0xff]
      %v2930 = vld [vmem:[%s2903 + $0xd0] sm:$0xff]
      %v2931 = vld [vmem:[%s2903 + $0xd8] sm:$0xff]
      %v2932 = vld [vmem:[%s2903 + $0xe0] sm:$0xff]
      %v2933 = vld [vmem:[%s2903 + $0xe8] sm:$0xff]
      %v2934 = vld [vmem:[%s2903 + $0xf0] sm:$0xff]
      %v2935 = vld [vmem:[%s2903 + $0xf8] sm:$0xff]
      %v2968 = vunpack.c.l.b16 %v2904
      %v2969 = vunpack.c.h.b16 %v2904
      %v2970 = vunpack.c.l.b16 %v2905
      %v2971 = vunpack.c.h.b16 %v2905
      %v2972 = vunpack.c.l.b16 %v2906
      %v2973 = vunpack.c.h.b16 %v2906
      %v2974 = vunpack.c.l.b16 %v2907
      %v2975 = vunpack.c.h.b16 %v2907
      %v2976 = vunpack.c.l.b16 %v2908
      %v2977 = vunpack.c.h.b16 %v2908
      %v2978 = vunpack.c.l.b16 %v2909
      %v2979 = vunpack.c.h.b16 %v2909
      %v2980 = vunpack.c.l.b16 %v2910
      %v2981 = vunpack.c.h.b16 %v2910
      %v2982 = vunpack.c.l.b16 %v2911
      %v2983 = vunpack.c.h.b16 %v2911
      %v2984 = vunpack.c.l.b16 %v2912
      %v2985 = vunpack.c.h.b16 %v2912
      %v2986 = vunpack.c.l.b16 %v2913
      %v2987 = vunpack.c.h.b16 %v2913
      %v2988 = vunpack.c.l.b16 %v2914
      %v2989 = vunpack.c.h.b16 %v2914
      %v2990 = vunpack.c.l.b16 %v2915
      %v2991 = vunpack.c.h.b16 %v2915
      %v2992 = vunpack.c.l.b16 %v2916
      %v2993 = vunpack.c.h.b16 %v2916
      %v2994 = vunpack.c.l.b16 %v2917
      %v2995 = vunpack.c.h.b16 %v2917
      %v2996 = vunpack.c.l.b16 %v2918
      %v2997 = vunpack.c.h.b16 %v2918
      %v2998 = vunpack.c.l.b16 %v2919
      %v2999 = vunpack.c.h.b16 %v2919
      %v3000 = vunpack.c.l.b16 %v2920
      %v3001 = vunpack.c.h.b16 %v2920
      %v3002 = vunpack.c.l.b16 %v2921
      %v3003 = vunpack.c.h.b16 %v2921
      %v3004 = vunpack.c.l.b16 %v2922
      %v3005 = vunpack.c.h.b16 %v2922
      %v3006 = vunpack.c.l.b16 %v2923
      %v3007 = vunpack.c.h.b16 %v2923
      %v3008 = vunpack.c.l.b16 %v2924
      %v3009 = vunpack.c.h.b16 %v2924
      %v3010 = vunpack.c.l.b16 %v2925
      %v3011 = vunpack.c.h.b16 %v2925
      %v3012 = vunpack.c.l.b16 %v2926
      %v3013 = vunpack.c.h.b16 %v2926
      %v3014 = vunpack.c.l.b16 %v2927
      %v3015 = vunpack.c.h.b16 %v2927
      %v3016 = vunpack.c.l.b16 %v2928
      %v3017 = vunpack.c.h.b16 %v2928
      %v3018 = vunpack.c.l.b16 %v2929
      %v3019 = vunpack.c.h.b16 %v2929
      %v3020 = vunpack.c.l.b16 %v2930
      %v3021 = vunpack.c.h.b16 %v2930
      %v3022 = vunpack.c.l.b16 %v2931
      %v3023 = vunpack.c.h.b16 %v2931
      %v3024 = vunpack.c.l.b16 %v2932
      %v3025 = vunpack.c.h.b16 %v2932
      %v3026 = vunpack.c.l.b16 %v2933
      %v3027 = vunpack.c.h.b16 %v2933
      %v3028 = vunpack.c.l.b16 %v2934
      %v3029 = vunpack.c.h.b16 %v2934
      %v3030 = vunpack.c.l.b16 %v2935
      %v3031 = vunpack.c.h.b16 %v2935
      %v3032 = vpack.c.b16 %v2976, %v2968
      %v3033 = vpack.c.b16 %v2977, %v2969
      %v3034 = vpack.c.b16 %v2978, %v2970
      %v3035 = vpack.c.b16 %v2979, %v2971
      %v3036 = vpack.c.b16 %v2980, %v2972
      %v3037 = vpack.c.b16 %v2981, %v2973
      %v3038 = vpack.c.b16 %v2982, %v2974
      %v3039 = vpack.c.b16 %v2983, %v2975
      %v3040 = vpack.c.b16 %v2992, %v2984
      %v3041 = vpack.c.b16 %v2993, %v2985
      %v3042 = vpack.c.b16 %v2994, %v2986
      %v3043 = vpack.c.b16 %v2995, %v2987
      %v3044 = vpack.c.b16 %v2996, %v2988
      %v3045 = vpack.c.b16 %v2997, %v2989
      %v3046 = vpack.c.b16 %v2998, %v2990
      %v3047 = vpack.c.b16 %v2999, %v2991
      %v3048 = vpack.c.b16 %v3008, %v3000
      %v3049 = vpack.c.b16 %v3009, %v3001
      %v3050 = vpack.c.b16 %v3010, %v3002
      %v3051 = vpack.c.b16 %v3011, %v3003
      %v3052 = vpack.c.b16 %v3012, %v3004
      %v3053 = vpack.c.b16 %v3013, %v3005
      %v3054 = vpack.c.b16 %v3014, %v3006
      %v3055 = vpack.c.b16 %v3015, %v3007
      %v3056 = vpack.c.b16 %v3024, %v3016
      %v3057 = vpack.c.b16 %v3025, %v3017
      %v3058 = vpack.c.b16 %v3026, %v3018
      %v3059 = vpack.c.b16 %v3027, %v3019
      %v3060 = vpack.c.b16 %v3028, %v3020
      %v3061 = vpack.c.b16 %v3029, %v3021
      %v3062 = vpack.c.b16 %v3030, %v3022
      %v3063 = vpack.c.b16 %v3031, %v3023
      %v3097 = vsel %vm151, %v2900, 0
      %3099 = vmatpush.bf16.msra.mxu0 0
      %3100 = vmatpush.bf16.msra.mxu0 0
      %3101 = vmatpush.bf16.msra.mxu0 0
      %3102 = vmatpush.bf16.msra.mxu0 0
      %3103 = vmatpush.bf16.msra.mxu0 %v3056
      %3104 = vmatpush.bf16.msra.mxu0 %v3048
      %3105 = vmatpush.bf16.msra.mxu0 %v3040
      %3106 = vmatpush.bf16.msra.mxu0 %v3032
      %3107 = vmatmul.bf16.gmra.mxu0 %v3097
      %v3108 = vpop.f32.mrf.mxu0
      %v3109 = vadd.f32 0.0, %v3108
      %v3110 = vpop.f32.mrf.mxu0
      %3111 = vdwg.mxu0
      %3112 = vmatpush.bf16.msra.mxu0 0
      %3113 = vmatpush.bf16.msra.mxu0 0
      %3114 = vmatpush.bf16.msra.mxu0 0
      %3115 = vmatpush.bf16.msra.mxu0 0
      %3116 = vmatpush.bf16.msra.mxu0 %v3057
      %3117 = vmatpush.bf16.msra.mxu0 %v3049
      %3118 = vmatpush.bf16.msra.mxu0 %v3041
      %3119 = vmatpush.bf16.msra.mxu0 %v3033
      %3120 = vmatmul.bf16.gmra.mxu0 %v3097
      %v3121 = vpop.f32.mrf.mxu0
      %v3122 = vadd.f32 0.0, %v3121
      %v3123 = vpop.f32.mrf.mxu0
      %3124 = vdwg.mxu0
      %3125 = vmatpush.bf16.msra.mxu0 0
      %3126 = vmatpush.bf16.msra.mxu0 0
      %3127 = vmatpush.bf16.msra.mxu0 0
      %3128 = vmatpush.bf16.msra.mxu0 0
      %3129 = vmatpush.bf16.msra.mxu0 %v3058
      %3130 = vmatpush.bf16.msra.mxu0 %v3050
      %3131 = vmatpush.bf16.msra.mxu0 %v3042
      %3132 = vmatpush.bf16.msra.mxu0 %v3034
      %3133 = vmatmul.bf16.gmra.mxu0 %v3097
      %v3134 = vpop.f32.mrf.mxu0
      %v3135 = vadd.f32 0.0, %v3134
      %v3136 = vpop.f32.mrf.mxu0
      %3137 = vdwg.mxu0
      %3138 = vmatpush.bf16.msra.mxu0 0
      %3139 = vmatpush.bf16.msra.mxu0 0
      %3140 = vmatpush.bf16.msra.mxu0 0
      %3141 = vmatpush.bf16.msra.mxu0 0
      %3142 = vmatpush.bf16.msra.mxu0 %v3059
      %3143 = vmatpush.bf16.msra.mxu0 %v3051
      %3144 = vmatpush.bf16.msra.mxu0 %v3043
      %3145 = vmatpush.bf16.msra.mxu0 %v3035
      %3146 = vmatmul.bf16.gmra.mxu0 %v3097
      %v3147 = vpop.f32.mrf.mxu0
      %v3148 = vadd.f32 0.0, %v3147
      %v3149 = vpop.f32.mrf.mxu0
      %3150 = vdwg.mxu0
      %3151 = vmatpush.bf16.msra.mxu0 0
      %3152 = vmatpush.bf16.msra.mxu0 0
      %3153 = vmatpush.bf16.msra.mxu0 0
      %3154 = vmatpush.bf16.msra.mxu0 0
      %3155 = vmatpush.bf16.msra.mxu0 %v3060
      %3156 = vmatpush.bf16.msra.mxu0 %v3052
      %3157 = vmatpush.bf16.msra.mxu0 %v3044
      %3158 = vmatpush.bf16.msra.mxu0 %v3036
      %3159 = vmatmul.bf16.gmra.mxu0 %v3097
      %v3160 = vpop.f32.mrf.mxu0
      %v3161 = vadd.f32 0.0, %v3160
      %v3162 = vpop.f32.mrf.mxu0
      %3163 = vdwg.mxu0
      %3164 = vmatpush.bf16.msra.mxu0 0
      %3165 = vmatpush.bf16.msra.mxu0 0
      %3166 = vmatpush.bf16.msra.mxu0 0
      %3167 = vmatpush.bf16.msra.mxu0 0
      %3168 = vmatpush.bf16.msra.mxu0 %v3061
      %3169 = vmatpush.bf16.msra.mxu0 %v3053
      %3170 = vmatpush.bf16.msra.mxu0 %v3045
      %3171 = vmatpush.bf16.msra.mxu0 %v3037
      %3172 = vmatmul.bf16.gmra.mxu0 %v3097
      %v3173 = vpop.f32.mrf.mxu0
      %v3174 = vadd.f32 0.0, %v3173
      %v3175 = vpop.f32.mrf.mxu0
      %3176 = vdwg.mxu0
      %3177 = vmatpush.bf16.msra.mxu0 0
      %3178 = vmatpush.bf16.msra.mxu0 0
      %3179 = vmatpush.bf16.msra.mxu0 0
      %3180 = vmatpush.bf16.msra.mxu0 0
      %3181 = vmatpush.bf16.msra.mxu0 %v3062
      %3182 = vmatpush.bf16.msra.mxu0 %v3054
      %3183 = vmatpush.bf16.msra.mxu0 %v3046
      %3184 = vmatpush.bf16.msra.mxu0 %v3038
      %3185 = vmatmul.bf16.gmra.mxu0 %v3097
      %v3186 = vpop.f32.mrf.mxu0
      %v3187 = vadd.f32 0.0, %v3186
      %v3188 = vpop.f32.mrf.mxu0
      %3189 = vdwg.mxu0
      %3190 = vmatpush.bf16.msra.mxu0 0
      %3191 = vmatpush.bf16.msra.mxu0 0
      %3192 = vmatpush.bf16.msra.mxu0 0
      %3193 = vmatpush.bf16.msra.mxu0 0
      %3194 = vmatpush.bf16.msra.mxu0 %v3063
      %3195 = vmatpush.bf16.msra.mxu0 %v3055
      %3196 = vmatpush.bf16.msra.mxu0 %v3047
      %3197 = vmatpush.bf16.msra.mxu0 %v3039
      %3198 = vmatmul.bf16.gmra.mxu0 %v3097
      %v3199 = vpop.f32.mrf.mxu0
      %v3200 = vadd.f32 0.0, %v3199
      %v3201 = vpop.f32.mrf.mxu0
      %3202 = vdwg.mxu0
      %v3211 = vrot.slane %v3122, 6
      %v3212 = vrot.slane %v3135, 4
      %v3213 = vrot.slane %v3148, 2
      %v3214 = vrot.slane %v3174, 6
      %v3215 = vrot.slane %v3187, 4
      %v3216 = vrot.slane %v3200, 2
      %v3217 = vsel %vm198, %v3109, %v3211
      %v3218 = vsel %vm576, %v3212, %v3213
      %v3219 = vsel %vm578, %v3217, %v3218
      %v3220 = vsel %vm198, %v3161, %v3214
      %v3221 = vsel %vm576, %v3215, %v3216
      %v3222 = vsel %vm578, %v3220, %v3221
      %v3225 = vadd.f32 %v2898, %v3219
      %v3226 = vadd.f32 %v2899, %v3222
      %3227 = vst [vmem:[#allocation6] sm:$0xff] %v3225
      %3228 = vst [vmem:[#allocation6 + $0x8] sm:$0xff] %v3226
      %s3229 = sadd.s32 %s139, 7
      %s3230 = smul.u32 %s3229, 2
      %s3231 = smul.addr %s3230, 2
      %s3232 = scalar_lea.vmem %s0, %s3231
      %v3233 = vld [vmem:[%s3232] sm:$0xf]
      %v3234 = vld [vmem:[#allocation4] sm:$0x3]
      %v3236 = vsel %vm151, %v3234, 0
      %3238 = vmatpush.msra.mxu0 0.0
      %3239 = vmatpush.msra.mxu0 0.0
      %3240 = vmatpush.msra.mxu0 0.0
      %3241 = vmatpush.msra.mxu0 0.0
      %3242 = vmatpush.msra.mxu0 0.0
      %3243 = vmatpush.msra.mxu0 0.0
      %3244 = vmatpush.msra.mxu0 0.0
      %3245 = vmatpush.msra.mxu0 0.0
      %3246 = vmatpush.msra.mxu0 %v80
      %3247 = vmatpush.msra.mxu0 %v78
      %3248 = vmatpush.msra.mxu0 %v76
      %3249 = vmatpush.msra.mxu0 %v74
      %3250 = vmatpush.msra.mxu0 %v72
      %3251 = vmatpush.msra.mxu0 %v70
      %3252 = vmatpush.msra.mxu0 %v68
      %3253 = vmatpush.msra.mxu0 %v66
      %3254 = vmatmul.f32.gmra.mxu0 %v3236
      %v3255 = vpop.f32.mrf.mxu0
      %v3256 = vadd.f32 0.0, %v3255
      %3257 = vdwg.mxu0
      %3258 = vmatpush.msra.mxu0 0.0
      %3259 = vmatpush.msra.mxu0 0.0
      %3260 = vmatpush.msra.mxu0 0.0
      %3261 = vmatpush.msra.mxu0 0.0
      %3262 = vmatpush.msra.mxu0 0.0
      %3263 = vmatpush.msra.mxu0 0.0
      %3264 = vmatpush.msra.mxu0 0.0
      %3265 = vmatpush.msra.mxu0 0.0
      %3266 = vmatpush.msra.mxu0 %v81
      %3267 = vmatpush.msra.mxu0 %v79
      %3268 = vmatpush.msra.mxu0 %v77
      %3269 = vmatpush.msra.mxu0 %v75
      %3270 = vmatpush.msra.mxu0 %v73
      %3271 = vmatpush.msra.mxu0 %v71
      %3272 = vmatpush.msra.mxu0 %v69
      %3273 = vmatpush.msra.mxu0 %v67
      %3274 = vmatmul.f32.gmra.mxu0 %v3236
      %v3275 = vpop.f32.mrf.mxu0
      %v3276 = vadd.f32 0.0, %v3275
      %3277 = vdwg.mxu0
      %v3280 = vrot.slane %v3276, 6
      %v3281 = vsel %vm198, %v3256, %v3280
      %v3283 = vadd.f32 %v3233, %v3281
      %v3284 = vxor.u32 %v3283, 2147483648
      %v3285 = vmul.f32 %v3284, 1.442695
      %v3286 = vpow.pop %v3285
      %v3287 = vadd.f32 %v3286, 1.0
      %v3288 = vrcp.pop %v3287
      %v3289 = vmul.f32 %v3287, %v3288
      %v3290 = vsub.f32 1.0, %v3289
      %v3291 = vmul.f32 %v3288, %v3290
      %v3292 = vadd.f32 %v3288, %v3291
      %vm3293 = vweird.f32 %v3287
      %vm3294 = vweird.f32 %v3288
      %vm3295 = vmor %vm3293, %vm3294
      %v3296 = vsel %vm3295, %v3288, %v3292
      %v3297 = vand.u32 2147483647, %v3287
      %vm3298 = vcmp.eq.f32.partialorder %v3297, 8.507059e+37
      %v3299 = vand.u32 %v3287, 2147483648
      %v3300 = vor.u32 1.1754944e-38, %v3299
      %v3301 = vsel %vm3298, %v3300, %v3296
      %v3302 = vmul.f32 1.0, %v3301
      %v3304 = vrot.slane %v3302, 2
      %v3306 = vmul.f32 %v3304, 2.0
      %v3307 = vsub.f32 %v3306, 1.0
      %v3308 = vld [vmem:[#allocation5] sm:$0x3]
      %3310 = vrot.lane.b32.xlu0 %v3308, 64
      %v3311 = vpop.permute.xlu0 %3310
      %v3313 = vmul.f32 %v3302, %v3311
      %v3314 = vmul.f32 %v3302, %v3307
      %3316 = vrot.lane.b32.xlu0 %v3314, 64
      %v3317 = vpop.permute.xlu0 %3316
      %v3319 = vadd.f32 %v3313, %v3317
      %v3320 = vtanh.pop %v3319
      %3321 = vrot.lane.b32.xlu0 %v3302, 64
      %v3322 = vpop.permute.xlu0 %3321
      %v3323 = vrot.slane %v3322, 2
      %3326 = vrot.lane.b32.xlu0 %v3320, 64
      %v3327 = vpop.permute.xlu0 %3326
      %v3329 = vmul.f32 %v3323, %v3327
      %3331 = vst [vmem:[#allocation1] ss:$4 sm:$0xff] %v3319
      %v3332 = vld.sshfl [vmem:[#allocation1] sm:$0xff pattern:$0x73625140]
      %3333 = vrot.lane.b32.xlu0 %v3332, 64
      %v3334 = vpop.permute.xlu0 %3333
      %3336 = vst.msk [vmem:[#allocation5] sm:$0x3] %vm82, %v3334
      %3337 = vst.msk [vmem:[#allocation4] sm:$0x3] %vm82, %v3329
      %v3338 = vld [vmem:[#allocation6] sm:$0xff]
      %v3339 = vld [vmem:[#allocation6 + $0x8] sm:$0xff]
      %v3340 = vpack.c.bf16 %v3329, %v3329
      %s3341 = sadd.s32 448, %s259
      %s3342 = smul.addr %s3341, 4
      %s3343 = scalar_lea.vmem [#allocation2], %s3342
      %v3344 = vld [vmem:[%s3343] sm:$0xff]
      %v3345 = vld [vmem:[%s3343 + $0x8] sm:$0xff]
      %v3346 = vld [vmem:[%s3343 + $0x10] sm:$0xff]
      %v3347 = vld [vmem:[%s3343 + $0x18] sm:$0xff]
      %v3348 = vld [vmem:[%s3343 + $0x20] sm:$0xff]
      %v3349 = vld [vmem:[%s3343 + $0x28] sm:$0xff]
      %v3350 = vld [vmem:[%s3343 + $0x30] sm:$0xff]
      %v3351 = vld [vmem:[%s3343 + $0x38] sm:$0xff]
      %v3352 = vld [vmem:[%s3343 + $0x40] sm:$0xff]
      %v3353 = vld [vmem:[%s3343 + $0x48] sm:$0xff]
      %v3354 = vld [vmem:[%s3343 + $0x50] sm:$0xff]
      %v3355 = vld [vmem:[%s3343 + $0x58] sm:$0xff]
      %v3356 = vld [vmem:[%s3343 + $0x60] sm:$0xff]
      %v3357 = vld [vmem:[%s3343 + $0x68] sm:$0xff]
      %v3358 = vld [vmem:[%s3343 + $0x70] sm:$0xff]
      %v3359 = vld [vmem:[%s3343 + $0x78] sm:$0xff]
      %v3360 = vld [vmem:[%s3343 + $0x80] sm:$0xff]
      %v3361 = vld [vmem:[%s3343 + $0x88] sm:$0xff]
      %v3362 = vld [vmem:[%s3343 + $0x90] sm:$0xff]
      %v3363 = vld [vmem:[%s3343 + $0x98] sm:$0xff]
      %v3364 = vld [vmem:[%s3343 + $0xa0] sm:$0xff]
      %v3365 = vld [vmem:[%s3343 + $0xa8] sm:$0xff]
      %v3366 = vld [vmem:[%s3343 + $0xb0] sm:$0xff]
      %v3367 = vld [vmem:[%s3343 + $0xb8] sm:$0xff]
      %v3368 = vld [vmem:[%s3343 + $0xc0] sm:$0xff]
      %v3369 = vld [vmem:[%s3343 + $0xc8] sm:$0xff]
      %v3370 = vld [vmem:[%s3343 + $0xd0] sm:$0xff]
      %v3371 = vld [vmem:[%s3343 + $0xd8] sm:$0xff]
      %v3372 = vld [vmem:[%s3343 + $0xe0] sm:$0xff]
      %v3373 = vld [vmem:[%s3343 + $0xe8] sm:$0xff]
      %v3374 = vld [vmem:[%s3343 + $0xf0] sm:$0xff]
      %v3375 = vld [vmem:[%s3343 + $0xf8] sm:$0xff]
      %v3408 = vunpack.c.l.b16 %v3344
      %v3409 = vunpack.c.h.b16 %v3344
      %v3410 = vunpack.c.l.b16 %v3345
      %v3411 = vunpack.c.h.b16 %v3345
      %v3412 = vunpack.c.l.b16 %v3346
      %v3413 = vunpack.c.h.b16 %v3346
      %v3414 = vunpack.c.l.b16 %v3347
      %v3415 = vunpack.c.h.b16 %v3347
      %v3416 = vunpack.c.l.b16 %v3348
      %v3417 = vunpack.c.h.b16 %v3348
      %v3418 = vunpack.c.l.b16 %v3349
      %v3419 = vunpack.c.h.b16 %v3349
      %v3420 = vunpack.c.l.b16 %v3350
      %v3421 = vunpack.c.h.b16 %v3350
      %v3422 = vunpack.c.l.b16 %v3351
      %v3423 = vunpack.c.h.b16 %v3351
      %v3424 = vunpack.c.l.b16 %v3352
      %v3425 = vunpack.c.h.b16 %v3352
      %v3426 = vunpack.c.l.b16 %v3353
      %v3427 = vunpack.c.h.b16 %v3353
      %v3428 = vunpack.c.l.b16 %v3354
      %v3429 = vunpack.c.h.b16 %v3354
      %v3430 = vunpack.c.l.b16 %v3355
      %v3431 = vunpack.c.h.b16 %v3355
      %v3432 = vunpack.c.l.b16 %v3356
      %v3433 = vunpack.c.h.b16 %v3356
      %v3434 = vunpack.c.l.b16 %v3357
      %v3435 = vunpack.c.h.b16 %v3357
      %v3436 = vunpack.c.l.b16 %v3358
      %v3437 = vunpack.c.h.b16 %v3358
      %v3438 = vunpack.c.l.b16 %v3359
      %v3439 = vunpack.c.h.b16 %v3359
      %v3440 = vunpack.c.l.b16 %v3360
      %v3441 = vunpack.c.h.b16 %v3360
      %v3442 = vunpack.c.l.b16 %v3361
      %v3443 = vunpack.c.h.b16 %v3361
      %v3444 = vunpack.c.l.b16 %v3362
      %v3445 = vunpack.c.h.b16 %v3362
      %v3446 = vunpack.c.l.b16 %v3363
      %v3447 = vunpack.c.h.b16 %v3363
      %v3448 = vunpack.c.l.b16 %v3364
      %v3449 = vunpack.c.h.b16 %v3364
      %v3450 = vunpack.c.l.b16 %v3365
      %v3451 = vunpack.c.h.b16 %v3365
      %v3452 = vunpack.c.l.b16 %v3366
      %v3453 = vunpack.c.h.b16 %v3366
      %v3454 = vunpack.c.l.b16 %v3367
      %v3455 = vunpack.c.h.b16 %v3367
      %v3456 = vunpack.c.l.b16 %v3368
      %v3457 = vunpack.c.h.b16 %v3368
      %v3458 = vunpack.c.l.b16 %v3369
      %v3459 = vunpack.c.h.b16 %v3369
      %v3460 = vunpack.c.l.b16 %v3370
      %v3461 = vunpack.c.h.b16 %v3370
      %v3462 = vunpack.c.l.b16 %v3371
      %v3463 = vunpack.c.h.b16 %v3371
      %v3464 = vunpack.c.l.b16 %v3372
      %v3465 = vunpack.c.h.b16 %v3372
      %v3466 = vunpack.c.l.b16 %v3373
      %v3467 = vunpack.c.h.b16 %v3373
      %v3468 = vunpack.c.l.b16 %v3374
      %v3469 = vunpack.c.h.b16 %v3374
      %v3470 = vunpack.c.l.b16 %v3375
      %v3471 = vunpack.c.h.b16 %v3375
      %v3472 = vpack.c.b16 %v3416, %v3408
      %v3473 = vpack.c.b16 %v3417, %v3409
      %v3474 = vpack.c.b16 %v3418, %v3410
      %v3475 = vpack.c.b16 %v3419, %v3411
      %v3476 = vpack.c.b16 %v3420, %v3412
      %v3477 = vpack.c.b16 %v3421, %v3413
      %v3478 = vpack.c.b16 %v3422, %v3414
      %v3479 = vpack.c.b16 %v3423, %v3415
      %v3480 = vpack.c.b16 %v3432, %v3424
      %v3481 = vpack.c.b16 %v3433, %v3425
      %v3482 = vpack.c.b16 %v3434, %v3426
      %v3483 = vpack.c.b16 %v3435, %v3427
      %v3484 = vpack.c.b16 %v3436, %v3428
      %v3485 = vpack.c.b16 %v3437, %v3429
      %v3486 = vpack.c.b16 %v3438, %v3430
      %v3487 = vpack.c.b16 %v3439, %v3431
      %v3488 = vpack.c.b16 %v3448, %v3440
      %v3489 = vpack.c.b16 %v3449, %v3441
      %v3490 = vpack.c.b16 %v3450, %v3442
      %v3491 = vpack.c.b16 %v3451, %v3443
      %v3492 = vpack.c.b16 %v3452, %v3444
      %v3493 = vpack.c.b16 %v3453, %v3445
      %v3494 = vpack.c.b16 %v3454, %v3446
      %v3495 = vpack.c.b16 %v3455, %v3447
      %v3496 = vpack.c.b16 %v3464, %v3456
      %v3497 = vpack.c.b16 %v3465, %v3457
      %v3498 = vpack.c.b16 %v3466, %v3458
      %v3499 = vpack.c.b16 %v3467, %v3459
      %v3500 = vpack.c.b16 %v3468, %v3460
      %v3501 = vpack.c.b16 %v3469, %v3461
      %v3502 = vpack.c.b16 %v3470, %v3462
      %v3503 = vpack.c.b16 %v3471, %v3463
      %v3537 = vsel %vm151, %v3340, 0
      %3539 = vmatpush.bf16.msra.mxu0 0
      %3540 = vmatpush.bf16.msra.mxu0 0
      %3541 = vmatpush.bf16.msra.mxu0 0
      %3542 = vmatpush.bf16.msra.mxu0 0
      %3543 = vmatpush.bf16.msra.mxu0 %v3496
      %3544 = vmatpush.bf16.msra.mxu0 %v3488
      %3545 = vmatpush.bf16.msra.mxu0 %v3480
      %3546 = vmatpush.bf16.msra.mxu0 %v3472
      %3547 = vmatmul.bf16.gmra.mxu0 %v3537
      %v3548 = vpop.f32.mrf.mxu0
      %v3549 = vadd.f32 0.0, %v3548
      %v3550 = vpop.f32.mrf.mxu0
      %3551 = vdwg.mxu0
      %3552 = vmatpush.bf16.msra.mxu0 0
      %3553 = vmatpush.bf16.msra.mxu0 0
      %3554 = vmatpush.bf16.msra.mxu0 0
      %3555 = vmatpush.bf16.msra.mxu0 0
      %3556 = vmatpush.bf16.msra.mxu0 %v3497
      %3557 = vmatpush.bf16.msra.mxu0 %v3489
      %3558 = vmatpush.bf16.msra.mxu0 %v3481
      %3559 = vmatpush.bf16.msra.mxu0 %v3473
      %3560 = vmatmul.bf16.gmra.mxu0 %v3537
      %v3561 = vpop.f32.mrf.mxu0
      %v3562 = vadd.f32 0.0, %v3561
      %v3563 = vpop.f32.mrf.mxu0
      %3564 = vdwg.mxu0
      %3565 = vmatpush.bf16.msra.mxu0 0
      %3566 = vmatpush.bf16.msra.mxu0 0
      %3567 = vmatpush.bf16.msra.mxu0 0
      %3568 = vmatpush.bf16.msra.mxu0 0
      %3569 = vmatpush.bf16.msra.mxu0 %v3498
      %3570 = vmatpush.bf16.msra.mxu0 %v3490
      %3571 = vmatpush.bf16.msra.mxu0 %v3482
      %3572 = vmatpush.bf16.msra.mxu0 %v3474
      %3573 = vmatmul.bf16.gmra.mxu0 %v3537
      %v3574 = vpop.f32.mrf.mxu0
      %v3575 = vadd.f32 0.0, %v3574
      %v3576 = vpop.f32.mrf.mxu0
      %3577 = vdwg.mxu0
      %3578 = vmatpush.bf16.msra.mxu0 0
      %3579 = vmatpush.bf16.msra.mxu0 0
      %3580 = vmatpush.bf16.msra.mxu0 0
      %3581 = vmatpush.bf16.msra.mxu0 0
      %3582 = vmatpush.bf16.msra.mxu0 %v3499
      %3583 = vmatpush.bf16.msra.mxu0 %v3491
      %3584 = vmatpush.bf16.msra.mxu0 %v3483
      %3585 = vmatpush.bf16.msra.mxu0 %v3475
      %3586 = vmatmul.bf16.gmra.mxu0 %v3537
      %v3587 = vpop.f32.mrf.mxu0
      %v3588 = vadd.f32 0.0, %v3587
      %v3589 = vpop.f32.mrf.mxu0
      %3590 = vdwg.mxu0
      %3591 = vmatpush.bf16.msra.mxu0 0
      %3592 = vmatpush.bf16.msra.mxu0 0
      %3593 = vmatpush.bf16.msra.mxu0 0
      %3594 = vmatpush.bf16.msra.mxu0 0
      %3595 = vmatpush.bf16.msra.mxu0 %v3500
      %3596 = vmatpush.bf16.msra.mxu0 %v3492
      %3597 = vmatpush.bf16.msra.mxu0 %v3484
      %3598 = vmatpush.bf16.msra.mxu0 %v3476
      %3599 = vmatmul.bf16.gmra.mxu0 %v3537
      %v3600 = vpop.f32.mrf.mxu0
      %v3601 = vadd.f32 0.0, %v3600
      %v3602 = vpop.f32.mrf.mxu0
      %3603 = vdwg.mxu0
      %3604 = vmatpush.bf16.msra.mxu0 0
      %3605 = vmatpush.bf16.msra.mxu0 0
      %3606 = vmatpush.bf16.msra.mxu0 0
      %3607 = vmatpush.bf16.msra.mxu0 0
      %3608 = vmatpush.bf16.msra.mxu0 %v3501
      %3609 = vmatpush.bf16.msra.mxu0 %v3493
      %3610 = vmatpush.bf16.msra.mxu0 %v3485
      %3611 = vmatpush.bf16.msra.mxu0 %v3477
      %3612 = vmatmul.bf16.gmra.mxu0 %v3537
      %v3613 = vpop.f32.mrf.mxu0
      %v3614 = vadd.f32 0.0, %v3613
      %v3615 = vpop.f32.mrf.mxu0
      %3616 = vdwg.mxu0
      %3617 = vmatpush.bf16.msra.mxu0 0
      %3618 = vmatpush.bf16.msra.mxu0 0
      %3619 = vmatpush.bf16.msra.mxu0 0
      %3620 = vmatpush.bf16.msra.mxu0 0
      %3621 = vmatpush.bf16.msra.mxu0 %v3502
      %3622 = vmatpush.bf16.msra.mxu0 %v3494
      %3623 = vmatpush.bf16.msra.mxu0 %v3486
      %3624 = vmatpush.bf16.msra.mxu0 %v3478
      %3625 = vmatmul.bf16.gmra.mxu0 %v3537
      %v3626 = vpop.f32.mrf.mxu0
      %v3627 = vadd.f32 0.0, %v3626
      %v3628 = vpop.f32.mrf.mxu0
      %3629 = vdwg.mxu0
      %3630 = vmatpush.bf16.msra.mxu0 0
      %3631 = vmatpush.bf16.msra.mxu0 0
      %3632 = vmatpush.bf16.msra.mxu0 0
      %3633 = vmatpush.bf16.msra.mxu0 0
      %3634 = vmatpush.bf16.msra.mxu0 %v3503
      %3635 = vmatpush.bf16.msra.mxu0 %v3495
      %3636 = vmatpush.bf16.msra.mxu0 %v3487
      %3637 = vmatpush.bf16.msra.mxu0 %v3479
      %3638 = vmatmul.bf16.gmra.mxu0 %v3537
      %v3639 = vpop.f32.mrf.mxu0
      %v3640 = vadd.f32 0.0, %v3639
      %v3641 = vpop.f32.mrf.mxu0
      %3642 = vdwg.mxu0
      %v3651 = vrot.slane %v3562, 6
      %v3652 = vrot.slane %v3575, 4
      %v3653 = vrot.slane %v3588, 2
      %v3654 = vrot.slane %v3614, 6
      %v3655 = vrot.slane %v3627, 4
      %v3656 = vrot.slane %v3640, 2
      %v3657 = vsel %vm198, %v3549, %v3651
      %v3658 = vsel %vm576, %v3652, %v3653
      %v3659 = vsel %vm578, %v3657, %v3658
      %v3660 = vsel %vm198, %v3601, %v3654
      %v3661 = vsel %vm576, %v3655, %v3656
      %v3662 = vsel %vm578, %v3660, %v3661
      %v3665 = vadd.f32 %v3338, %v3659
      %v3666 = vadd.f32 %v3339, %v3662
      %3667 = vst [vmem:[#allocation6] sm:$0xff] %v3665
      %3668 = vst [vmem:[#allocation6 + $0x8] sm:$0xff] %v3666
      %s3669 = sadd.s32 %s139, 8
      %s3670 = smul.u32 %s3669, 2
      %s3671 = smul.addr %s3670, 2
      %s3672 = scalar_lea.vmem %s0, %s3671
      %v3673 = vld [vmem:[%s3672] sm:$0xf]
      %v3674 = vld [vmem:[#allocation4] sm:$0x3]
      %v3676 = vsel %vm151, %v3674, 0
      %3678 = vmatpush.msra.mxu0 0.0
      %3679 = vmatpush.msra.mxu0 0.0
      %3680 = vmatpush.msra.mxu0 0.0
      %3681 = vmatpush.msra.mxu0 0.0
      %3682 = vmatpush.msra.mxu0 0.0
      %3683 = vmatpush.msra.mxu0 0.0
      %3684 = vmatpush.msra.mxu0 0.0
      %3685 = vmatpush.msra.mxu0 0.0
      %3686 = vmatpush.msra.mxu0 %v80
      %3687 = vmatpush.msra.mxu0 %v78
      %3688 = vmatpush.msra.mxu0 %v76
      %3689 = vmatpush.msra.mxu0 %v74
      %3690 = vmatpush.msra.mxu0 %v72
      %3691 = vmatpush.msra.mxu0 %v70
      %3692 = vmatpush.msra.mxu0 %v68
      %3693 = vmatpush.msra.mxu0 %v66
      %3694 = vmatmul.f32.gmra.mxu0 %v3676
      %v3695 = vpop.f32.mrf.mxu0
      %v3696 = vadd.f32 0.0, %v3695
      %3697 = vdwg.mxu0
      %3698 = vmatpush.msra.mxu0 0.0
      %3699 = vmatpush.msra.mxu0 0.0
      %3700 = vmatpush.msra.mxu0 0.0
      %3701 = vmatpush.msra.mxu0 0.0
      %3702 = vmatpush.msra.mxu0 0.0
      %3703 = vmatpush.msra.mxu0 0.0
      %3704 = vmatpush.msra.mxu0 0.0
      %3705 = vmatpush.msra.mxu0 0.0
      %3706 = vmatpush.msra.mxu0 %v81
      %3707 = vmatpush.msra.mxu0 %v79
      %3708 = vmatpush.msra.mxu0 %v77
      %3709 = vmatpush.msra.mxu0 %v75
      %3710 = vmatpush.msra.mxu0 %v73
      %3711 = vmatpush.msra.mxu0 %v71
      %3712 = vmatpush.msra.mxu0 %v69
      %3713 = vmatpush.msra.mxu0 %v67
      %3714 = vmatmul.f32.gmra.mxu0 %v3676
      %v3715 = vpop.f32.mrf.mxu0
      %v3716 = vadd.f32 0.0, %v3715
      %3717 = vdwg.mxu0
      %v3720 = vrot.slane %v3716, 6
      %v3721 = vsel %vm198, %v3696, %v3720
      %v3723 = vadd.f32 %v3673, %v3721
      %v3724 = vxor.u32 %v3723, 2147483648
      %v3725 = vmul.f32 %v3724, 1.442695
      %v3726 = vpow.pop %v3725
      %v3727 = vadd.f32 %v3726, 1.0
      %v3728 = vrcp.pop %v3727
      %v3729 = vmul.f32 %v3727, %v3728
      %v3730 = vsub.f32 1.0, %v3729
      %v3731 = vmul.f32 %v3728, %v3730
      %v3732 = vadd.f32 %v3728, %v3731
      %vm3733 = vweird.f32 %v3727
      %vm3734 = vweird.f32 %v3728
      %vm3735 = vmor %vm3733, %vm3734
      %v3736 = vsel %vm3735, %v3728, %v3732
      %v3737 = vand.u32 2147483647, %v3727
      %vm3738 = vcmp.eq.f32.partialorder %v3737, 8.507059e+37
      %v3739 = vand.u32 %v3727, 2147483648
      %v3740 = vor.u32 1.1754944e-38, %v3739
      %v3741 = vsel %vm3738, %v3740, %v3736
      %v3742 = vmul.f32 1.0, %v3741
      %v3744 = vrot.slane %v3742, 2
      %v3746 = vmul.f32 %v3744, 2.0
      %v3747 = vsub.f32 %v3746, 1.0
      %v3748 = vld [vmem:[#allocation5] sm:$0x3]
      %3750 = vrot.lane.b32.xlu0 %v3748, 64
      %v3751 = vpop.permute.xlu0 %3750
      %v3753 = vmul.f32 %v3742, %v3751
      %v3754 = vmul.f32 %v3742, %v3747
      %3756 = vrot.lane.b32.xlu0 %v3754, 64
      %v3757 = vpop.permute.xlu0 %3756
      %v3759 = vadd.f32 %v3753, %v3757
      %v3760 = vtanh.pop %v3759
      %3761 = vrot.lane.b32.xlu0 %v3742, 64
      %v3762 = vpop.permute.xlu0 %3761
      %v3763 = vrot.slane %v3762, 2
      %3766 = vrot.lane.b32.xlu0 %v3760, 64
      %v3767 = vpop.permute.xlu0 %3766
      %v3769 = vmul.f32 %v3763, %v3767
      %3771 = vst [vmem:[#allocation1] ss:$4 sm:$0xff] %v3759
      %v3772 = vld.sshfl [vmem:[#allocation1] sm:$0xff pattern:$0x73625140]
      %3773 = vrot.lane.b32.xlu0 %v3772, 64
      %v3774 = vpop.permute.xlu0 %3773
      %3776 = vst.msk [vmem:[#allocation5] sm:$0x3] %vm82, %v3774
      %3777 = vst.msk [vmem:[#allocation4] sm:$0x3] %vm82, %v3769
      %v3778 = vld [vmem:[#allocation6] sm:$0xff]
      %v3779 = vld [vmem:[#allocation6 + $0x8] sm:$0xff]
      %v3780 = vpack.c.bf16 %v3769, %v3769
      %s3781 = sadd.s32 512, %s259
      %s3782 = smul.addr %s3781, 4
      %s3783 = scalar_lea.vmem [#allocation2], %s3782
      %v3784 = vld [vmem:[%s3783] sm:$0xff]
      %v3785 = vld [vmem:[%s3783 + $0x8] sm:$0xff]
      %v3786 = vld [vmem:[%s3783 + $0x10] sm:$0xff]
      %v3787 = vld [vmem:[%s3783 + $0x18] sm:$0xff]
      %v3788 = vld [vmem:[%s3783 + $0x20] sm:$0xff]
      %v3789 = vld [vmem:[%s3783 + $0x28] sm:$0xff]
      %v3790 = vld [vmem:[%s3783 + $0x30] sm:$0xff]
      %v3791 = vld [vmem:[%s3783 + $0x38] sm:$0xff]
      %v3792 = vld [vmem:[%s3783 + $0x40] sm:$0xff]
      %v3793 = vld [vmem:[%s3783 + $0x48] sm:$0xff]
      %v3794 = vld [vmem:[%s3783 + $0x50] sm:$0xff]
      %v3795 = vld [vmem:[%s3783 + $0x58] sm:$0xff]
      %v3796 = vld [vmem:[%s3783 + $0x60] sm:$0xff]
      %v3797 = vld [vmem:[%s3783 + $0x68] sm:$0xff]
      %v3798 = vld [vmem:[%s3783 + $0x70] sm:$0xff]
      %v3799 = vld [vmem:[%s3783 + $0x78] sm:$0xff]
      %v3800 = vld [vmem:[%s3783 + $0x80] sm:$0xff]
      %v3801 = vld [vmem:[%s3783 + $0x88] sm:$0xff]
      %v3802 = vld [vmem:[%s3783 + $0x90] sm:$0xff]
      %v3803 = vld [vmem:[%s3783 + $0x98] sm:$0xff]
      %v3804 = vld [vmem:[%s3783 + $0xa0] sm:$0xff]
      %v3805 = vld [vmem:[%s3783 + $0xa8] sm:$0xff]
      %v3806 = vld [vmem:[%s3783 + $0xb0] sm:$0xff]
      %v3807 = vld [vmem:[%s3783 + $0xb8] sm:$0xff]
      %v3808 = vld [vmem:[%s3783 + $0xc0] sm:$0xff]
      %v3809 = vld [vmem:[%s3783 + $0xc8] sm:$0xff]
      %v3810 = vld [vmem:[%s3783 + $0xd0] sm:$0xff]
      %v3811 = vld [vmem:[%s3783 + $0xd8] sm:$0xff]
      %v3812 = vld [vmem:[%s3783 + $0xe0] sm:$0xff]
      %v3813 = vld [vmem:[%s3783 + $0xe8] sm:$0xff]
      %v3814 = vld [vmem:[%s3783 + $0xf0] sm:$0xff]
      %v3815 = vld [vmem:[%s3783 + $0xf8] sm:$0xff]
      %v3848 = vunpack.c.l.b16 %v3784
      %v3849 = vunpack.c.h.b16 %v3784
      %v3850 = vunpack.c.l.b16 %v3785
      %v3851 = vunpack.c.h.b16 %v3785
      %v3852 = vunpack.c.l.b16 %v3786
      %v3853 = vunpack.c.h.b16 %v3786
      %v3854 = vunpack.c.l.b16 %v3787
      %v3855 = vunpack.c.h.b16 %v3787
      %v3856 = vunpack.c.l.b16 %v3788
      %v3857 = vunpack.c.h.b16 %v3788
      %v3858 = vunpack.c.l.b16 %v3789
      %v3859 = vunpack.c.h.b16 %v3789
      %v3860 = vunpack.c.l.b16 %v3790
      %v3861 = vunpack.c.h.b16 %v3790
      %v3862 = vunpack.c.l.b16 %v3791
      %v3863 = vunpack.c.h.b16 %v3791
      %v3864 = vunpack.c.l.b16 %v3792
      %v3865 = vunpack.c.h.b16 %v3792
      %v3866 = vunpack.c.l.b16 %v3793
      %v3867 = vunpack.c.h.b16 %v3793
      %v3868 = vunpack.c.l.b16 %v3794
      %v3869 = vunpack.c.h.b16 %v3794
      %v3870 = vunpack.c.l.b16 %v3795
      %v3871 = vunpack.c.h.b16 %v3795
      %v3872 = vunpack.c.l.b16 %v3796
      %v3873 = vunpack.c.h.b16 %v3796
      %v3874 = vunpack.c.l.b16 %v3797
      %v3875 = vunpack.c.h.b16 %v3797
      %v3876 = vunpack.c.l.b16 %v3798
      %v3877 = vunpack.c.h.b16 %v3798
      %v3878 = vunpack.c.l.b16 %v3799
      %v3879 = vunpack.c.h.b16 %v3799
      %v3880 = vunpack.c.l.b16 %v3800
      %v3881 = vunpack.c.h.b16 %v3800
      %v3882 = vunpack.c.l.b16 %v3801
      %v3883 = vunpack.c.h.b16 %v3801
      %v3884 = vunpack.c.l.b16 %v3802
      %v3885 = vunpack.c.h.b16 %v3802
      %v3886 = vunpack.c.l.b16 %v3803
      %v3887 = vunpack.c.h.b16 %v3803
      %v3888 = vunpack.c.l.b16 %v3804
      %v3889 = vunpack.c.h.b16 %v3804
      %v3890 = vunpack.c.l.b16 %v3805
      %v3891 = vunpack.c.h.b16 %v3805
      %v3892 = vunpack.c.l.b16 %v3806
      %v3893 = vunpack.c.h.b16 %v3806
      %v3894 = vunpack.c.l.b16 %v3807
      %v3895 = vunpack.c.h.b16 %v3807
      %v3896 = vunpack.c.l.b16 %v3808
      %v3897 = vunpack.c.h.b16 %v3808
      %v3898 = vunpack.c.l.b16 %v3809
      %v3899 = vunpack.c.h.b16 %v3809
      %v3900 = vunpack.c.l.b16 %v3810
      %v3901 = vunpack.c.h.b16 %v3810
      %v3902 = vunpack.c.l.b16 %v3811
      %v3903 = vunpack.c.h.b16 %v3811
      %v3904 = vunpack.c.l.b16 %v3812
      %v3905 = vunpack.c.h.b16 %v3812
      %v3906 = vunpack.c.l.b16 %v3813
      %v3907 = vunpack.c.h.b16 %v3813
      %v3908 = vunpack.c.l.b16 %v3814
      %v3909 = vunpack.c.h.b16 %v3814
      %v3910 = vunpack.c.l.b16 %v3815
      %v3911 = vunpack.c.h.b16 %v3815
      %v3912 = vpack.c.b16 %v3856, %v3848
      %v3913 = vpack.c.b16 %v3857, %v3849
      %v3914 = vpack.c.b16 %v3858, %v3850
      %v3915 = vpack.c.b16 %v3859, %v3851
      %v3916 = vpack.c.b16 %v3860, %v3852
      %v3917 = vpack.c.b16 %v3861, %v3853
      %v3918 = vpack.c.b16 %v3862, %v3854
      %v3919 = vpack.c.b16 %v3863, %v3855
      %v3920 = vpack.c.b16 %v3872, %v3864
      %v3921 = vpack.c.b16 %v3873, %v3865
      %v3922 = vpack.c.b16 %v3874, %v3866
      %v3923 = vpack.c.b16 %v3875, %v3867
      %v3924 = vpack.c.b16 %v3876, %v3868
      %v3925 = vpack.c.b16 %v3877, %v3869
      %v3926 = vpack.c.b16 %v3878, %v3870
      %v3927 = vpack.c.b16 %v3879, %v3871
      %v3928 = vpack.c.b16 %v3888, %v3880
      %v3929 = vpack.c.b16 %v3889, %v3881
      %v3930 = vpack.c.b16 %v3890, %v3882
      %v3931 = vpack.c.b16 %v3891, %v3883
      %v3932 = vpack.c.b16 %v3892, %v3884
      %v3933 = vpack.c.b16 %v3893, %v3885
      %v3934 = vpack.c.b16 %v3894, %v3886
      %v3935 = vpack.c.b16 %v3895, %v3887
      %v3936 = vpack.c.b16 %v3904, %v3896
      %v3937 = vpack.c.b16 %v3905, %v3897
      %v3938 = vpack.c.b16 %v3906, %v3898
      %v3939 = vpack.c.b16 %v3907, %v3899
      %v3940 = vpack.c.b16 %v3908, %v3900
      %v3941 = vpack.c.b16 %v3909, %v3901
      %v3942 = vpack.c.b16 %v3910, %v3902
      %v3943 = vpack.c.b16 %v3911, %v3903
      %v3977 = vsel %vm151, %v3780, 0
      %3979 = vmatpush.bf16.msra.mxu0 0
      %3980 = vmatpush.bf16.msra.mxu0 0
      %3981 = vmatpush.bf16.msra.mxu0 0
      %3982 = vmatpush.bf16.msra.mxu0 0
      %3983 = vmatpush.bf16.msra.mxu0 %v3936
      %3984 = vmatpush.bf16.msra.mxu0 %v3928
      %3985 = vmatpush.bf16.msra.mxu0 %v3920
      %3986 = vmatpush.bf16.msra.mxu0 %v3912
      %3987 = vmatmul.bf16.gmra.mxu0 %v3977
      %v3988 = vpop.f32.mrf.mxu0
      %v3989 = vadd.f32 0.0, %v3988
      %v3990 = vpop.f32.mrf.mxu0
      %3991 = vdwg.mxu0
      %3992 = vmatpush.bf16.msra.mxu0 0
      %3993 = vmatpush.bf16.msra.mxu0 0
      %3994 = vmatpush.bf16.msra.mxu0 0
      %3995 = vmatpush.bf16.msra.mxu0 0
      %3996 = vmatpush.bf16.msra.mxu0 %v3937
      %3997 = vmatpush.bf16.msra.mxu0 %v3929
      %3998 = vmatpush.bf16.msra.mxu0 %v3921
      %3999 = vmatpush.bf16.msra.mxu0 %v3913
      %4000 = vmatmul.bf16.gmra.mxu0 %v3977
      %v4001 = vpop.f32.mrf.mxu0
      %v4002 = vadd.f32 0.0, %v4001
      %v4003 = vpop.f32.mrf.mxu0
      %4004 = vdwg.mxu0
      %4005 = vmatpush.bf16.msra.mxu0 0
      %4006 = vmatpush.bf16.msra.mxu0 0
      %4007 = vmatpush.bf16.msra.mxu0 0
      %4008 = vmatpush.bf16.msra.mxu0 0
      %4009 = vmatpush.bf16.msra.mxu0 %v3938
      %4010 = vmatpush.bf16.msra.mxu0 %v3930
      %4011 = vmatpush.bf16.msra.mxu0 %v3922
      %4012 = vmatpush.bf16.msra.mxu0 %v3914
      %4013 = vmatmul.bf16.gmra.mxu0 %v3977
      %v4014 = vpop.f32.mrf.mxu0
      %v4015 = vadd.f32 0.0, %v4014
      %v4016 = vpop.f32.mrf.mxu0
      %4017 = vdwg.mxu0
      %4018 = vmatpush.bf16.msra.mxu0 0
      %4019 = vmatpush.bf16.msra.mxu0 0
      %4020 = vmatpush.bf16.msra.mxu0 0
      %4021 = vmatpush.bf16.msra.mxu0 0
      %4022 = vmatpush.bf16.msra.mxu0 %v3939
      %4023 = vmatpush.bf16.msra.mxu0 %v3931
      %4024 = vmatpush.bf16.msra.mxu0 %v3923
      %4025 = vmatpush.bf16.msra.mxu0 %v3915
      %4026 = vmatmul.bf16.gmra.mxu0 %v3977
      %v4027 = vpop.f32.mrf.mxu0
      %v4028 = vadd.f32 0.0, %v4027
      %v4029 = vpop.f32.mrf.mxu0
      %4030 = vdwg.mxu0
      %4031 = vmatpush.bf16.msra.mxu0 0
      %4032 = vmatpush.bf16.msra.mxu0 0
      %4033 = vmatpush.bf16.msra.mxu0 0
      %4034 = vmatpush.bf16.msra.mxu0 0
      %4035 = vmatpush.bf16.msra.mxu0 %v3940
      %4036 = vmatpush.bf16.msra.mxu0 %v3932
      %4037 = vmatpush.bf16.msra.mxu0 %v3924
      %4038 = vmatpush.bf16.msra.mxu0 %v3916
      %4039 = vmatmul.bf16.gmra.mxu0 %v3977
      %v4040 = vpop.f32.mrf.mxu0
      %v4041 = vadd.f32 0.0, %v4040
      %v4042 = vpop.f32.mrf.mxu0
      %4043 = vdwg.mxu0
      %4044 = vmatpush.bf16.msra.mxu0 0
      %4045 = vmatpush.bf16.msra.mxu0 0
      %4046 = vmatpush.bf16.msra.mxu0 0
      %4047 = vmatpush.bf16.msra.mxu0 0
      %4048 = vmatpush.bf16.msra.mxu0 %v3941
      %4049 = vmatpush.bf16.msra.mxu0 %v3933
      %4050 = vmatpush.bf16.msra.mxu0 %v3925
      %4051 = vmatpush.bf16.msra.mxu0 %v3917
      %4052 = vmatmul.bf16.gmra.mxu0 %v3977
      %v4053 = vpop.f32.mrf.mxu0
      %v4054 = vadd.f32 0.0, %v4053
      %v4055 = vpop.f32.mrf.mxu0
      %4056 = vdwg.mxu0
      %4057 = vmatpush.bf16.msra.mxu0 0
      %4058 = vmatpush.bf16.msra.mxu0 0
      %4059 = vmatpush.bf16.msra.mxu0 0
      %4060 = vmatpush.bf16.msra.mxu0 0
      %4061 = vmatpush.bf16.msra.mxu0 %v3942
      %4062 = vmatpush.bf16.msra.mxu0 %v3934
      %4063 = vmatpush.bf16.msra.mxu0 %v3926
      %4064 = vmatpush.bf16.msra.mxu0 %v3918
      %4065 = vmatmul.bf16.gmra.mxu0 %v3977
      %v4066 = vpop.f32.mrf.mxu0
      %v4067 = vadd.f32 0.0, %v4066
      %v4068 = vpop.f32.mrf.mxu0
      %4069 = vdwg.mxu0
      %4070 = vmatpush.bf16.msra.mxu0 0
      %4071 = vmatpush.bf16.msra.mxu0 0
      %4072 = vmatpush.bf16.msra.mxu0 0
      %4073 = vmatpush.bf16.msra.mxu0 0
      %4074 = vmatpush.bf16.msra.mxu0 %v3943
      %4075 = vmatpush.bf16.msra.mxu0 %v3935
      %4076 = vmatpush.bf16.msra.mxu0 %v3927
      %4077 = vmatpush.bf16.msra.mxu0 %v3919
      %4078 = vmatmul.bf16.gmra.mxu0 %v3977
      %v4079 = vpop.f32.mrf.mxu0
      %v4080 = vadd.f32 0.0, %v4079
      %v4081 = vpop.f32.mrf.mxu0
      %4082 = vdwg.mxu0
      %v4091 = vrot.slane %v4002, 6
      %v4092 = vrot.slane %v4015, 4
      %v4093 = vrot.slane %v4028, 2
      %v4094 = vrot.slane %v4054, 6
      %v4095 = vrot.slane %v4067, 4
      %v4096 = vrot.slane %v4080, 2
      %v4097 = vsel %vm198, %v3989, %v4091
      %v4098 = vsel %vm576, %v4092, %v4093
      %v4099 = vsel %vm578, %v4097, %v4098
      %v4100 = vsel %vm198, %v4041, %v4094
      %v4101 = vsel %vm576, %v4095, %v4096
      %v4102 = vsel %vm578, %v4100, %v4101
      %v4105 = vadd.f32 %v3778, %v4099
      %v4106 = vadd.f32 %v3779, %v4102
      %4107 = vst [vmem:[#allocation6] sm:$0xff] %v4105
      %4108 = vst [vmem:[#allocation6 + $0x8] sm:$0xff] %v4106
      %s4109 = sadd.s32 %s139, 9
      %s4110 = smul.u32 %s4109, 2
      %s4111 = smul.addr %s4110, 2
      %s4112 = scalar_lea.vmem %s0, %s4111
      %v4113 = vld [vmem:[%s4112] sm:$0xf]
      %v4114 = vld [vmem:[#allocation4] sm:$0x3]
      %v4116 = vsel %vm151, %v4114, 0
      %4118 = vmatpush.msra.mxu0 0.0
      %4119 = vmatpush.msra.mxu0 0.0
      %4120 = vmatpush.msra.mxu0 0.0
      %4121 = vmatpush.msra.mxu0 0.0
      %4122 = vmatpush.msra.mxu0 0.0
      %4123 = vmatpush.msra.mxu0 0.0
      %4124 = vmatpush.msra.mxu0 0.0
      %4125 = vmatpush.msra.mxu0 0.0
      %4126 = vmatpush.msra.mxu0 %v80
      %4127 = vmatpush.msra.mxu0 %v78
      %4128 = vmatpush.msra.mxu0 %v76
      %4129 = vmatpush.msra.mxu0 %v74
      %4130 = vmatpush.msra.mxu0 %v72
      %4131 = vmatpush.msra.mxu0 %v70
      %4132 = vmatpush.msra.mxu0 %v68
      %4133 = vmatpush.msra.mxu0 %v66
      %4134 = vmatmul.f32.gmra.mxu0 %v4116
      %v4135 = vpop.f32.mrf.mxu0
      %v4136 = vadd.f32 0.0, %v4135
      %4137 = vdwg.mxu0
      %4138 = vmatpush.msra.mxu0 0.0
      %4139 = vmatpush.msra.mxu0 0.0
      %4140 = vmatpush.msra.mxu0 0.0
      %4141 = vmatpush.msra.mxu0 0.0
      %4142 = vmatpush.msra.mxu0 0.0
      %4143 = vmatpush.msra.mxu0 0.0
      %4144 = vmatpush.msra.mxu0 0.0
      %4145 = vmatpush.msra.mxu0 0.0
      %4146 = vmatpush.msra.mxu0 %v81
      %4147 = vmatpush.msra.mxu0 %v79
      %4148 = vmatpush.msra.mxu0 %v77
      %4149 = vmatpush.msra.mxu0 %v75
      %4150 = vmatpush.msra.mxu0 %v73
      %4151 = vmatpush.msra.mxu0 %v71
      %4152 = vmatpush.msra.mxu0 %v69
      %4153 = vmatpush.msra.mxu0 %v67
      %4154 = vmatmul.f32.gmra.mxu0 %v4116
      %v4155 = vpop.f32.mrf.mxu0
      %v4156 = vadd.f32 0.0, %v4155
      %4157 = vdwg.mxu0
      %v4160 = vrot.slane %v4156, 6
      %v4161 = vsel %vm198, %v4136, %v4160
      %v4163 = vadd.f32 %v4113, %v4161
      %v4164 = vxor.u32 %v4163, 2147483648
      %v4165 = vmul.f32 %v4164, 1.442695
      %v4166 = vpow.pop %v4165
      %v4167 = vadd.f32 %v4166, 1.0
      %v4168 = vrcp.pop %v4167
      %v4169 = vmul.f32 %v4167, %v4168
      %v4170 = vsub.f32 1.0, %v4169
      %v4171 = vmul.f32 %v4168, %v4170
      %v4172 = vadd.f32 %v4168, %v4171
      %vm4173 = vweird.f32 %v4167
      %vm4174 = vweird.f32 %v4168
      %vm4175 = vmor %vm4173, %vm4174
      %v4176 = vsel %vm4175, %v4168, %v4172
      %v4177 = vand.u32 2147483647, %v4167
      %vm4178 = vcmp.eq.f32.partialorder %v4177, 8.507059e+37
      %v4179 = vand.u32 %v4167, 2147483648
      %v4180 = vor.u32 1.1754944e-38, %v4179
      %v4181 = vsel %vm4178, %v4180, %v4176
      %v4182 = vmul.f32 1.0, %v4181
      %v4184 = vrot.slane %v4182, 2
      %v4186 = vmul.f32 %v4184, 2.0
      %v4187 = vsub.f32 %v4186, 1.0
      %v4188 = vld [vmem:[#allocation5] sm:$0x3]
      %4190 = vrot.lane.b32.xlu0 %v4188, 64
      %v4191 = vpop.permute.xlu0 %4190
      %v4193 = vmul.f32 %v4182, %v4191
      %v4194 = vmul.f32 %v4182, %v4187
      %4196 = vrot.lane.b32.xlu0 %v4194, 64
      %v4197 = vpop.permute.xlu0 %4196
      %v4199 = vadd.f32 %v4193, %v4197
      %v4200 = vtanh.pop %v4199
      %4201 = vrot.lane.b32.xlu0 %v4182, 64
      %v4202 = vpop.permute.xlu0 %4201
      %v4203 = vrot.slane %v4202, 2
      %4206 = vrot.lane.b32.xlu0 %v4200, 64
      %v4207 = vpop.permute.xlu0 %4206
      %v4209 = vmul.f32 %v4203, %v4207
      %4211 = vst [vmem:[#allocation1] ss:$4 sm:$0xff] %v4199
      %v4212 = vld.sshfl [vmem:[#allocation1] sm:$0xff pattern:$0x73625140]
      %4213 = vrot.lane.b32.xlu0 %v4212, 64
      %v4214 = vpop.permute.xlu0 %4213
      %4216 = vst.msk [vmem:[#allocation5] sm:$0x3] %vm82, %v4214
      %4217 = vst.msk [vmem:[#allocation4] sm:$0x3] %vm82, %v4209
      %v4218 = vld [vmem:[#allocation6] sm:$0xff]
      %v4219 = vld [vmem:[#allocation6 + $0x8] sm:$0xff]
      %v4220 = vpack.c.bf16 %v4209, %v4209
      %s4221 = sadd.s32 576, %s259
      %s4222 = smul.addr %s4221, 4
      %s4223 = scalar_lea.vmem [#allocation2], %s4222
      %v4224 = vld [vmem:[%s4223] sm:$0xff]
      %v4225 = vld [vmem:[%s4223 + $0x8] sm:$0xff]
      %v4226 = vld [vmem:[%s4223 + $0x10] sm:$0xff]
      %v4227 = vld [vmem:[%s4223 + $0x18] sm:$0xff]
      %v4228 = vld [vmem:[%s4223 + $0x20] sm:$0xff]
      %v4229 = vld [vmem:[%s4223 + $0x28] sm:$0xff]
      %v4230 = vld [vmem:[%s4223 + $0x30] sm:$0xff]
      %v4231 = vld [vmem:[%s4223 + $0x38] sm:$0xff]
      %v4232 = vld [vmem:[%s4223 + $0x40] sm:$0xff]
      %v4233 = vld [vmem:[%s4223 + $0x48] sm:$0xff]
      %v4234 = vld [vmem:[%s4223 + $0x50] sm:$0xff]
      %v4235 = vld [vmem:[%s4223 + $0x58] sm:$0xff]
      %v4236 = vld [vmem:[%s4223 + $0x60] sm:$0xff]
      %v4237 = vld [vmem:[%s4223 + $0x68] sm:$0xff]
      %v4238 = vld [vmem:[%s4223 + $0x70] sm:$0xff]
      %v4239 = vld [vmem:[%s4223 + $0x78] sm:$0xff]
      %v4240 = vld [vmem:[%s4223 + $0x80] sm:$0xff]
      %v4241 = vld [vmem:[%s4223 + $0x88] sm:$0xff]
      %v4242 = vld [vmem:[%s4223 + $0x90] sm:$0xff]
      %v4243 = vld [vmem:[%s4223 + $0x98] sm:$0xff]
      %v4244 = vld [vmem:[%s4223 + $0xa0] sm:$0xff]
      %v4245 = vld [vmem:[%s4223 + $0xa8] sm:$0xff]
      %v4246 = vld [vmem:[%s4223 + $0xb0] sm:$0xff]
      %v4247 = vld [vmem:[%s4223 + $0xb8] sm:$0xff]
      %v4248 = vld [vmem:[%s4223 + $0xc0] sm:$0xff]
      %v4249 = vld [vmem:[%s4223 + $0xc8] sm:$0xff]
      %v4250 = vld [vmem:[%s4223 + $0xd0] sm:$0xff]
      %v4251 = vld [vmem:[%s4223 + $0xd8] sm:$0xff]
      %v4252 = vld [vmem:[%s4223 + $0xe0] sm:$0xff]
      %v4253 = vld [vmem:[%s4223 + $0xe8] sm:$0xff]
      %v4254 = vld [vmem:[%s4223 + $0xf0] sm:$0xff]
      %v4255 = vld [vmem:[%s4223 + $0xf8] sm:$0xff]
      %v4288 = vunpack.c.l.b16 %v4224
      %v4289 = vunpack.c.h.b16 %v4224
      %v4290 = vunpack.c.l.b16 %v4225
      %v4291 = vunpack.c.h.b16 %v4225
      %v4292 = vunpack.c.l.b16 %v4226
      %v4293 = vunpack.c.h.b16 %v4226
      %v4294 = vunpack.c.l.b16 %v4227
      %v4295 = vunpack.c.h.b16 %v4227
      %v4296 = vunpack.c.l.b16 %v4228
      %v4297 = vunpack.c.h.b16 %v4228
      %v4298 = vunpack.c.l.b16 %v4229
      %v4299 = vunpack.c.h.b16 %v4229
      %v4300 = vunpack.c.l.b16 %v4230
      %v4301 = vunpack.c.h.b16 %v4230
      %v4302 = vunpack.c.l.b16 %v4231
      %v4303 = vunpack.c.h.b16 %v4231
      %v4304 = vunpack.c.l.b16 %v4232
      %v4305 = vunpack.c.h.b16 %v4232
      %v4306 = vunpack.c.l.b16 %v4233
      %v4307 = vunpack.c.h.b16 %v4233
      %v4308 = vunpack.c.l.b16 %v4234
      %v4309 = vunpack.c.h.b16 %v4234
      %v4310 = vunpack.c.l.b16 %v4235
      %v4311 = vunpack.c.h.b16 %v4235
      %v4312 = vunpack.c.l.b16 %v4236
      %v4313 = vunpack.c.h.b16 %v4236
      %v4314 = vunpack.c.l.b16 %v4237
      %v4315 = vunpack.c.h.b16 %v4237
      %v4316 = vunpack.c.l.b16 %v4238
      %v4317 = vunpack.c.h.b16 %v4238
      %v4318 = vunpack.c.l.b16 %v4239
      %v4319 = vunpack.c.h.b16 %v4239
      %v4320 = vunpack.c.l.b16 %v4240
      %v4321 = vunpack.c.h.b16 %v4240
      %v4322 = vunpack.c.l.b16 %v4241
      %v4323 = vunpack.c.h.b16 %v4241
      %v4324 = vunpack.c.l.b16 %v4242
      %v4325 = vunpack.c.h.b16 %v4242
      %v4326 = vunpack.c.l.b16 %v4243
      %v4327 = vunpack.c.h.b16 %v4243
      %v4328 = vunpack.c.l.b16 %v4244
      %v4329 = vunpack.c.h.b16 %v4244
      %v4330 = vunpack.c.l.b16 %v4245
      %v4331 = vunpack.c.h.b16 %v4245
      %v4332 = vunpack.c.l.b16 %v4246
      %v4333 = vunpack.c.h.b16 %v4246
      %v4334 = vunpack.c.l.b16 %v4247
      %v4335 = vunpack.c.h.b16 %v4247
      %v4336 = vunpack.c.l.b16 %v4248
      %v4337 = vunpack.c.h.b16 %v4248
      %v4338 = vunpack.c.l.b16 %v4249
      %v4339 = vunpack.c.h.b16 %v4249
      %v4340 = vunpack.c.l.b16 %v4250
      %v4341 = vunpack.c.h.b16 %v4250
      %v4342 = vunpack.c.l.b16 %v4251
      %v4343 = vunpack.c.h.b16 %v4251
      %v4344 = vunpack.c.l.b16 %v4252
      %v4345 = vunpack.c.h.b16 %v4252
      %v4346 = vunpack.c.l.b16 %v4253
      %v4347 = vunpack.c.h.b16 %v4253
      %v4348 = vunpack.c.l.b16 %v4254
      %v4349 = vunpack.c.h.b16 %v4254
      %v4350 = vunpack.c.l.b16 %v4255
      %v4351 = vunpack.c.h.b16 %v4255
      %v4352 = vpack.c.b16 %v4296, %v4288
      %v4353 = vpack.c.b16 %v4297, %v4289
      %v4354 = vpack.c.b16 %v4298, %v4290
      %v4355 = vpack.c.b16 %v4299, %v4291
      %v4356 = vpack.c.b16 %v4300, %v4292
      %v4357 = vpack.c.b16 %v4301, %v4293
      %v4358 = vpack.c.b16 %v4302, %v4294
      %v4359 = vpack.c.b16 %v4303, %v4295
      %v4360 = vpack.c.b16 %v4312, %v4304
      %v4361 = vpack.c.b16 %v4313, %v4305
      %v4362 = vpack.c.b16 %v4314, %v4306
      %v4363 = vpack.c.b16 %v4315, %v4307
      %v4364 = vpack.c.b16 %v4316, %v4308
      %v4365 = vpack.c.b16 %v4317, %v4309
      %v4366 = vpack.c.b16 %v4318, %v4310
      %v4367 = vpack.c.b16 %v4319, %v4311
      %v4368 = vpack.c.b16 %v4328, %v4320
      %v4369 = vpack.c.b16 %v4329, %v4321
      %v4370 = vpack.c.b16 %v4330, %v4322
      %v4371 = vpack.c.b16 %v4331, %v4323
      %v4372 = vpack.c.b16 %v4332, %v4324
      %v4373 = vpack.c.b16 %v4333, %v4325
      %v4374 = vpack.c.b16 %v4334, %v4326
      %v4375 = vpack.c.b16 %v4335, %v4327
      %v4376 = vpack.c.b16 %v4344, %v4336
      %v4377 = vpack.c.b16 %v4345, %v4337
      %v4378 = vpack.c.b16 %v4346, %v4338
      %v4379 = vpack.c.b16 %v4347, %v4339
      %v4380 = vpack.c.b16 %v4348, %v4340
      %v4381 = vpack.c.b16 %v4349, %v4341
      %v4382 = vpack.c.b16 %v4350, %v4342
      %v4383 = vpack.c.b16 %v4351, %v4343
      %v4417 = vsel %vm151, %v4220, 0
      %4419 = vmatpush.bf16.msra.mxu0 0
      %4420 = vmatpush.bf16.msra.mxu0 0
      %4421 = vmatpush.bf16.msra.mxu0 0
      %4422 = vmatpush.bf16.msra.mxu0 0
      %4423 = vmatpush.bf16.msra.mxu0 %v4376
      %4424 = vmatpush.bf16.msra.mxu0 %v4368
      %4425 = vmatpush.bf16.msra.mxu0 %v4360
      %4426 = vmatpush.bf16.msra.mxu0 %v4352
      %4427 = vmatmul.bf16.gmra.mxu0 %v4417
      %v4428 = vpop.f32.mrf.mxu0
      %v4429 = vadd.f32 0.0, %v4428
      %v4430 = vpop.f32.mrf.mxu0
      %4431 = vdwg.mxu0
      %4432 = vmatpush.bf16.msra.mxu0 0
      %4433 = vmatpush.bf16.msra.mxu0 0
      %4434 = vmatpush.bf16.msra.mxu0 0
      %4435 = vmatpush.bf16.msra.mxu0 0
      %4436 = vmatpush.bf16.msra.mxu0 %v4377
      %4437 = vmatpush.bf16.msra.mxu0 %v4369
      %4438 = vmatpush.bf16.msra.mxu0 %v4361
      %4439 = vmatpush.bf16.msra.mxu0 %v4353
      %4440 = vmatmul.bf16.gmra.mxu0 %v4417
      %v4441 = vpop.f32.mrf.mxu0
      %v4442 = vadd.f32 0.0, %v4441
      %v4443 = vpop.f32.mrf.mxu0
      %4444 = vdwg.mxu0
      %4445 = vmatpush.bf16.msra.mxu0 0
      %4446 = vmatpush.bf16.msra.mxu0 0
      %4447 = vmatpush.bf16.msra.mxu0 0
      %4448 = vmatpush.bf16.msra.mxu0 0
      %4449 = vmatpush.bf16.msra.mxu0 %v4378
      %4450 = vmatpush.bf16.msra.mxu0 %v4370
      %4451 = vmatpush.bf16.msra.mxu0 %v4362
      %4452 = vmatpush.bf16.msra.mxu0 %v4354
      %4453 = vmatmul.bf16.gmra.mxu0 %v4417
      %v4454 = vpop.f32.mrf.mxu0
      %v4455 = vadd.f32 0.0, %v4454
      %v4456 = vpop.f32.mrf.mxu0
      %4457 = vdwg.mxu0
      %4458 = vmatpush.bf16.msra.mxu0 0
      %4459 = vmatpush.bf16.msra.mxu0 0
      %4460 = vmatpush.bf16.msra.mxu0 0
      %4461 = vmatpush.bf16.msra.mxu0 0
      %4462 = vmatpush.bf16.msra.mxu0 %v4379
      %4463 = vmatpush.bf16.msra.mxu0 %v4371
      %4464 = vmatpush.bf16.msra.mxu0 %v4363
      %4465 = vmatpush.bf16.msra.mxu0 %v4355
      %4466 = vmatmul.bf16.gmra.mxu0 %v4417
      %v4467 = vpop.f32.mrf.mxu0
      %v4468 = vadd.f32 0.0, %v4467
      %v4469 = vpop.f32.mrf.mxu0
      %4470 = vdwg.mxu0
      %4471 = vmatpush.bf16.msra.mxu0 0
      %4472 = vmatpush.bf16.msra.mxu0 0
      %4473 = vmatpush.bf16.msra.mxu0 0
      %4474 = vmatpush.bf16.msra.mxu0 0
      %4475 = vmatpush.bf16.msra.mxu0 %v4380
      %4476 = vmatpush.bf16.msra.mxu0 %v4372
      %4477 = vmatpush.bf16.msra.mxu0 %v4364
      %4478 = vmatpush.bf16.msra.mxu0 %v4356
      %4479 = vmatmul.bf16.gmra.mxu0 %v4417
      %v4480 = vpop.f32.mrf.mxu0
      %v4481 = vadd.f32 0.0, %v4480
      %v4482 = vpop.f32.mrf.mxu0
      %4483 = vdwg.mxu0
      %4484 = vmatpush.bf16.msra.mxu0 0
      %4485 = vmatpush.bf16.msra.mxu0 0
      %4486 = vmatpush.bf16.msra.mxu0 0
      %4487 = vmatpush.bf16.msra.mxu0 0
      %4488 = vmatpush.bf16.msra.mxu0 %v4381
      %4489 = vmatpush.bf16.msra.mxu0 %v4373
      %4490 = vmatpush.bf16.msra.mxu0 %v4365
      %4491 = vmatpush.bf16.msra.mxu0 %v4357
      %4492 = vmatmul.bf16.gmra.mxu0 %v4417
      %v4493 = vpop.f32.mrf.mxu0
      %v4494 = vadd.f32 0.0, %v4493
      %v4495 = vpop.f32.mrf.mxu0
      %4496 = vdwg.mxu0
      %4497 = vmatpush.bf16.msra.mxu0 0
      %4498 = vmatpush.bf16.msra.mxu0 0
      %4499 = vmatpush.bf16.msra.mxu0 0
      %4500 = vmatpush.bf16.msra.mxu0 0
      %4501 = vmatpush.bf16.msra.mxu0 %v4382
      %4502 = vmatpush.bf16.msra.mxu0 %v4374
      %4503 = vmatpush.bf16.msra.mxu0 %v4366
      %4504 = vmatpush.bf16.msra.mxu0 %v4358
      %4505 = vmatmul.bf16.gmra.mxu0 %v4417
      %v4506 = vpop.f32.mrf.mxu0
      %v4507 = vadd.f32 0.0, %v4506
      %v4508 = vpop.f32.mrf.mxu0
      %4509 = vdwg.mxu0
      %4510 = vmatpush.bf16.msra.mxu0 0
      %4511 = vmatpush.bf16.msra.mxu0 0
      %4512 = vmatpush.bf16.msra.mxu0 0
      %4513 = vmatpush.bf16.msra.mxu0 0
      %4514 = vmatpush.bf16.msra.mxu0 %v4383
      %4515 = vmatpush.bf16.msra.mxu0 %v4375
      %4516 = vmatpush.bf16.msra.mxu0 %v4367
      %4517 = vmatpush.bf16.msra.mxu0 %v4359
      %4518 = vmatmul.bf16.gmra.mxu0 %v4417
      %v4519 = vpop.f32.mrf.mxu0
      %v4520 = vadd.f32 0.0, %v4519
      %v4521 = vpop.f32.mrf.mxu0
      %4522 = vdwg.mxu0
      %v4531 = vrot.slane %v4442, 6
      %v4532 = vrot.slane %v4455, 4
      %v4533 = vrot.slane %v4468, 2
      %v4534 = vrot.slane %v4494, 6
      %v4535 = vrot.slane %v4507, 4
      %v4536 = vrot.slane %v4520, 2
      %v4537 = vsel %vm198, %v4429, %v4531
      %v4538 = vsel %vm576, %v4532, %v4533
      %v4539 = vsel %vm578, %v4537, %v4538
      %v4540 = vsel %vm198, %v4481, %v4534
      %v4541 = vsel %vm576, %v4535, %v4536
      %v4542 = vsel %vm578, %v4540, %v4541
      %v4545 = vadd.f32 %v4218, %v4539
      %v4546 = vadd.f32 %v4219, %v4542
      %4547 = vst [vmem:[#allocation6] sm:$0xff] %v4545
      %4548 = vst [vmem:[#allocation6 + $0x8] sm:$0xff] %v4546
    $region42: #{cnn_lstm_forward.3} parent=1 // loop_footer
      %s105 = sadd.s32 1, %s101
    $region43: #{cnn_lstm_forward.3} parent=1 // loop_footer_branch
      %100 = sbr.rel target = $region39
    $region44: #{cnn_lstm_forward.3} parent=1 // loop_exit
      _
    %v4549 = vld [vmem:[#allocation6] sm:$0xff]
    %v4550 = vld [vmem:[#allocation6 + $0x8] sm:$0xff]
    %v4551 = vld [vmem:[#allocation10] sm:$0xff]
    %v4553 = vperm.slane %v4551, 0
    %v4554 = vperm.slane %v4551, 1
    %v4555 = vperm.slane %v4551, 2
    %v4556 = vperm.slane %v4551, 3
    %v4557 = vperm.slane %v4551, 4
    %v4558 = vperm.slane %v4551, 5
    %v4559 = vperm.slane %v4551, 6
    %v4560 = vperm.slane %v4551, 7
    %v4561 = vrot.slane %v4554, 6
    %v4562 = vrot.slane %v4555, 4
    %v4563 = vrot.slane %v4556, 2
    %v4564 = vrot.slane %v4558, 6
    %v4565 = vrot.slane %v4559, 4
    %v4566 = vrot.slane %v4560, 2
    %vm4567 = vcmask 1041408
    %v4568 = vsel %vm4567, %v4553, %v4561
    %vm4569 = vcmask 1045508
    %v4570 = vsel %vm4569, %v4562, %v4563
    %vm4571 = vcmask 1043456
    %v4572 = vsel %vm4571, %v4568, %v4570
    %v4573 = vsel %vm4567, %v4557, %v4564
    %v4574 = vsel %vm4569, %v4565, %v4566
    %v4575 = vsel %vm4571, %v4573, %v4574
    %v4578 = vadd.f32 %v4549, %v4572
    %v4579 = vadd.f32 %v4550, %v4575
    %v4580 = vtanh.pop %v4578
    %v4581 = vtanh.pop %v4579
    %v4582 = vld [vmem:[%s4] sm:$0xff]
    %v4583 = vld [vmem:[%s4 + $0x8] sm:$0xff]
    %v4584 = vld [vmem:[%s4 + $0x10] sm:$0xff]
    %v4585 = vld [vmem:[%s4 + $0x18] sm:$0xff]
    %v4586 = vld [vmem:[%s4 + $0x20] sm:$0xff]
    %v4587 = vld [vmem:[%s4 + $0x28] sm:$0xff]
    %v4588 = vld [vmem:[%s4 + $0x30] sm:$0xff]
    %v4589 = vld [vmem:[%s4 + $0x38] sm:$0xff]
    %v4590 = vld [vmem:[%s4 + $0x40] sm:$0xff]
    %v4591 = vld [vmem:[%s4 + $0x48] sm:$0xff]
    %v4592 = vld [vmem:[%s4 + $0x50] sm:$0xff]
    %v4593 = vld [vmem:[%s4 + $0x58] sm:$0xff]
    %v4594 = vld [vmem:[%s4 + $0x60] sm:$0xff]
    %v4595 = vld [vmem:[%s4 + $0x68] sm:$0xff]
    %v4596 = vld [vmem:[%s4 + $0x70] sm:$0xff]
    %v4597 = vld [vmem:[%s4 + $0x78] sm:$0xff]
    %v4598 = vld [vmem:[%s4 + $0x80] sm:$0xff]
    %v4599 = vld [vmem:[%s4 + $0x88] sm:$0xff]
    %v4600 = vld [vmem:[%s4 + $0x90] sm:$0xff]
    %v4601 = vld [vmem:[%s4 + $0x98] sm:$0xff]
    %v4602 = vld [vmem:[%s4 + $0xa0] sm:$0xff]
    %v4603 = vld [vmem:[%s4 + $0xa8] sm:$0xff]
    %v4604 = vld [vmem:[%s4 + $0xb0] sm:$0xff]
    %v4605 = vld [vmem:[%s4 + $0xb8] sm:$0xff]
    %v4606 = vld [vmem:[%s4 + $0xc0] sm:$0xff]
    %v4607 = vld [vmem:[%s4 + $0xc8] sm:$0xff]
    %v4608 = vld [vmem:[%s4 + $0xd0] sm:$0xff]
    %v4609 = vld [vmem:[%s4 + $0xd8] sm:$0xff]
    %v4610 = vld [vmem:[%s4 + $0xe0] sm:$0xff]
    %v4611 = vld [vmem:[%s4 + $0xe8] sm:$0xff]
    %v4612 = vld [vmem:[%s4 + $0xf0] sm:$0xff]
    %v4613 = vld [vmem:[%s4 + $0xf8] sm:$0xff]
    %v4614 = vld [vmem:[%s4 + $0x100] sm:$0xff]
    %v4615 = vld [vmem:[%s4 + $0x108] sm:$0xff]
    %v4616 = vld [vmem:[%s4 + $0x110] sm:$0xff]
    %v4617 = vld [vmem:[%s4 + $0x118] sm:$0xff]
    %v4618 = vld [vmem:[%s4 + $0x120] sm:$0xff]
    %v4619 = vld [vmem:[%s4 + $0x128] sm:$0xff]
    %v4620 = vld [vmem:[%s4 + $0x130] sm:$0xff]
    %v4621 = vld [vmem:[%s4 + $0x138] sm:$0xff]
    %v4622 = vld [vmem:[%s4 + $0x140] sm:$0xff]
    %v4623 = vld [vmem:[%s4 + $0x148] sm:$0xff]
    %v4624 = vld [vmem:[%s4 + $0x150] sm:$0xff]
    %v4625 = vld [vmem:[%s4 + $0x158] sm:$0xff]
    %v4626 = vld [vmem:[%s4 + $0x160] sm:$0xff]
    %v4627 = vld [vmem:[%s4 + $0x168] sm:$0xff]
    %v4628 = vld [vmem:[%s4 + $0x170] sm:$0xff]
    %v4629 = vld [vmem:[%s4 + $0x178] sm:$0xff]
    %v4630 = vld [vmem:[%s4 + $0x180] sm:$0xff]
    %v4631 = vld [vmem:[%s4 + $0x188] sm:$0xff]
    %v4632 = vld [vmem:[%s4 + $0x190] sm:$0xff]
    %v4633 = vld [vmem:[%s4 + $0x198] sm:$0xff]
    %v4634 = vld [vmem:[%s4 + $0x1a0] sm:$0xff]
    %v4635 = vld [vmem:[%s4 + $0x1a8] sm:$0xff]
    %v4636 = vld [vmem:[%s4 + $0x1b0] sm:$0xff]
    %v4637 = vld [vmem:[%s4 + $0x1b8] sm:$0xff]
    %v4638 = vld [vmem:[%s4 + $0x1c0] sm:$0xff]
    %v4639 = vld [vmem:[%s4 + $0x1c8] sm:$0xff]
    %v4640 = vld [vmem:[%s4 + $0x1d0] sm:$0xff]
    %v4641 = vld [vmem:[%s4 + $0x1d8] sm:$0xff]
    %v4642 = vld [vmem:[%s4 + $0x1e0] sm:$0xff]
    %v4643 = vld [vmem:[%s4 + $0x1e8] sm:$0xff]
    %v4644 = vld [vmem:[%s4 + $0x1f0] sm:$0xff]
    %v4645 = vld [vmem:[%s4 + $0x1f8] sm:$0xff]
    %v4646 = vld [vmem:[%s4 + $0x200] sm:$0xff]
    %v4647 = vld [vmem:[%s4 + $0x208] sm:$0xff]
    %v4648 = vld [vmem:[%s4 + $0x210] sm:$0xff]
    %v4649 = vld [vmem:[%s4 + $0x218] sm:$0xff]
    %v4650 = vld [vmem:[%s4 + $0x220] sm:$0xff]
    %v4651 = vld [vmem:[%s4 + $0x228] sm:$0xff]
    %v4652 = vld [vmem:[%s4 + $0x230] sm:$0xff]
    %v4653 = vld [vmem:[%s4 + $0x238] sm:$0xff]
    %v4654 = vld [vmem:[%s4 + $0x240] sm:$0xff]
    %v4655 = vld [vmem:[%s4 + $0x248] sm:$0xff]
    %v4656 = vld [vmem:[%s4 + $0x250] sm:$0xff]
    %v4657 = vld [vmem:[%s4 + $0x258] sm:$0xff]
    %v4658 = vld [vmem:[%s4 + $0x260] sm:$0xff]
    %v4659 = vld [vmem:[%s4 + $0x268] sm:$0xff]
    %v4660 = vld [vmem:[%s4 + $0x270] sm:$0xff]
    %v4661 = vld [vmem:[%s4 + $0x278] sm:$0xff]
    %v4662 = vld [vmem:[%s4 + $0x280] sm:$0xff]
    %v4663 = vld [vmem:[%s4 + $0x288] sm:$0xff]
    %v4664 = vld [vmem:[%s4 + $0x290] sm:$0xff]
    %v4665 = vld [vmem:[%s4 + $0x298] sm:$0xff]
    %v4666 = vld [vmem:[%s4 + $0x2a0] sm:$0xff]
    %v4667 = vld [vmem:[%s4 + $0x2a8] sm:$0xff]
    %v4668 = vld [vmem:[%s4 + $0x2b0] sm:$0xff]
    %v4669 = vld [vmem:[%s4 + $0x2b8] sm:$0xff]
    %v4670 = vld [vmem:[%s4 + $0x2c0] sm:$0xff]
    %v4671 = vld [vmem:[%s4 + $0x2c8] sm:$0xff]
    %v4672 = vld [vmem:[%s4 + $0x2d0] sm:$0xff]
    %v4673 = vld [vmem:[%s4 + $0x2d8] sm:$0xff]
    %v4674 = vld [vmem:[%s4 + $0x2e0] sm:$0xff]
    %v4675 = vld [vmem:[%s4 + $0x2e8] sm:$0xff]
    %v4676 = vld [vmem:[%s4 + $0x2f0] sm:$0xff]
    %v4677 = vld [vmem:[%s4 + $0x2f8] sm:$0xff]
    %v4678 = vld [vmem:[%s4 + $0x300] sm:$0xff]
    %v4679 = vld [vmem:[%s4 + $0x308] sm:$0xff]
    %v4680 = vld [vmem:[%s4 + $0x310] sm:$0xff]
    %v4681 = vld [vmem:[%s4 + $0x318] sm:$0xff]
    %v4682 = vld [vmem:[%s4 + $0x320] sm:$0xff]
    %v4683 = vld [vmem:[%s4 + $0x328] sm:$0xff]
    %v4684 = vld [vmem:[%s4 + $0x330] sm:$0xff]
    %v4685 = vld [vmem:[%s4 + $0x338] sm:$0xff]
    %v4686 = vld [vmem:[%s4 + $0x340] sm:$0xff]
    %v4687 = vld [vmem:[%s4 + $0x348] sm:$0xff]
    %v4688 = vld [vmem:[%s4 + $0x350] sm:$0xff]
    %v4689 = vld [vmem:[%s4 + $0x358] sm:$0xff]
    %v4690 = vld [vmem:[%s4 + $0x360] sm:$0xff]
    %v4691 = vld [vmem:[%s4 + $0x368] sm:$0xff]
    %v4692 = vld [vmem:[%s4 + $0x370] sm:$0xff]
    %v4693 = vld [vmem:[%s4 + $0x378] sm:$0xff]
    %v4694 = vld [vmem:[%s4 + $0x380] sm:$0xff]
    %v4695 = vld [vmem:[%s4 + $0x388] sm:$0xff]
    %v4696 = vld [vmem:[%s4 + $0x390] sm:$0xff]
    %v4697 = vld [vmem:[%s4 + $0x398] sm:$0xff]
    %v4698 = vld [vmem:[%s4 + $0x3a0] sm:$0xff]
    %v4699 = vld [vmem:[%s4 + $0x3a8] sm:$0xff]
    %v4700 = vld [vmem:[%s4 + $0x3b0] sm:$0xff]
    %v4701 = vld [vmem:[%s4 + $0x3b8] sm:$0xff]
    %v4702 = vld [vmem:[%s4 + $0x3c0] sm:$0xff]
    %v4703 = vld [vmem:[%s4 + $0x3c8] sm:$0xff]
    %v4704 = vld [vmem:[%s4 + $0x3d0] sm:$0xff]
    %v4705 = vld [vmem:[%s4 + $0x3d8] sm:$0xff]
    %v4706 = vld [vmem:[%s4 + $0x3e0] sm:$0xff]
    %v4707 = vld [vmem:[%s4 + $0x3e8] sm:$0xff]
    %v4708 = vld [vmem:[%s4 + $0x3f0] sm:$0xff]
    %v4709 = vld [vmem:[%s4 + $0x3f8] sm:$0xff]
    %v4710 = vld [vmem:[#allocation12] sm:$0x1]
    %v4712 = vperm.slane %v4710, 0
    %4716 = vst [vmem:[#allocation1] ss:$4 sm:$0xff] %v4580
    %s4717 = scalar_lea.vmem [#allocation1], 32
    %4718 = vst [vmem:[%s4717] ss:$4 sm:$0xff] %v4581
    %v4719 = vld.sshfl [vmem:[#allocation1] sm:$0xff pattern:$0x73625140]
    %v4720 = vld.sshfl [vmem:[#allocation1 + $0x8] sm:$0xff pattern:$0x73625140]
    %v4721 = vld.sshfl [vmem:[#allocation1 + $0x10] sm:$0xff pattern:$0x73625140]
    %v4722 = vld.sshfl [vmem:[#allocation1 + $0x18] sm:$0xff pattern:$0x73625140]
    %v4723 = vld.sshfl [vmem:[#allocation1 + $0x20] sm:$0xff pattern:$0x73625140]
    %v4724 = vld.sshfl [vmem:[#allocation1 + $0x28] sm:$0xff pattern:$0x73625140]
    %v4725 = vld.sshfl [vmem:[#allocation1 + $0x30] sm:$0xff pattern:$0x73625140]
    %v4726 = vld.sshfl [vmem:[#allocation1 + $0x38] sm:$0xff pattern:$0x73625140]
    %4735 = vmatpush.msra.mxu0 %v4597
    %4736 = vmatpush.msra.mxu0 %v4596
    %4737 = vmatpush.msra.mxu0 %v4595
    %4738 = vmatpush.msra.mxu0 %v4594
    %4739 = vmatpush.msra.mxu0 %v4593
    %4740 = vmatpush.msra.mxu0 %v4592
    %4741 = vmatpush.msra.mxu0 %v4591
    %4742 = vmatpush.msra.mxu0 %v4590
    %4743 = vmatpush.msra.mxu0 %v4589
    %4744 = vmatpush.msra.mxu0 %v4588
    %4745 = vmatpush.msra.mxu0 %v4587
    %4746 = vmatpush.msra.mxu0 %v4586
    %4747 = vmatpush.msra.mxu0 %v4585
    %4748 = vmatpush.msra.mxu0 %v4584
    %4749 = vmatpush.msra.mxu0 %v4583
    %4750 = vmatpush.msra.mxu0 %v4582
    %4751 = vmatmul.f32.gmra.mxu0 %v4719
    %v4752 = vpop.f32.mrf.mxu0
    %v4753 = vadd.f32 %v4712, %v4752
    %4754 = vdwg.mxu0
    %4755 = vmatpush.msra.mxu0 %v4613
    %4756 = vmatpush.msra.mxu0 %v4612
    %4757 = vmatpush.msra.mxu0 %v4611
    %4758 = vmatpush.msra.mxu0 %v4610
    %4759 = vmatpush.msra.mxu0 %v4609
    %4760 = vmatpush.msra.mxu0 %v4608
    %4761 = vmatpush.msra.mxu0 %v4607
    %4762 = vmatpush.msra.mxu0 %v4606
    %4763 = vmatpush.msra.mxu0 %v4605
    %4764 = vmatpush.msra.mxu0 %v4604
    %4765 = vmatpush.msra.mxu0 %v4603
    %4766 = vmatpush.msra.mxu0 %v4602
    %4767 = vmatpush.msra.mxu0 %v4601
    %4768 = vmatpush.msra.mxu0 %v4600
    %4769 = vmatpush.msra.mxu0 %v4599
    %4770 = vmatpush.msra.mxu0 %v4598
    %4771 = vmatmul.f32.gmra.mxu0 %v4720
    %v4772 = vpop.f32.mrf.mxu0
    %v4773 = vadd.f32 %v4753, %v4772
    %4774 = vdwg.mxu0
    %4775 = vmatpush.msra.mxu0 %v4629
    %4776 = vmatpush.msra.mxu0 %v4628
    %4777 = vmatpush.msra.mxu0 %v4627
    %4778 = vmatpush.msra.mxu0 %v4626
    %4779 = vmatpush.msra.mxu0 %v4625
    %4780 = vmatpush.msra.mxu0 %v4624
    %4781 = vmatpush.msra.mxu0 %v4623
    %4782 = vmatpush.msra.mxu0 %v4622
    %4783 = vmatpush.msra.mxu0 %v4621
    %4784 = vmatpush.msra.mxu0 %v4620
    %4785 = vmatpush.msra.mxu0 %v4619
    %4786 = vmatpush.msra.mxu0 %v4618
    %4787 = vmatpush.msra.mxu0 %v4617
    %4788 = vmatpush.msra.mxu0 %v4616
    %4789 = vmatpush.msra.mxu0 %v4615
    %4790 = vmatpush.msra.mxu0 %v4614
    %4791 = vmatmul.f32.gmra.mxu0 %v4721
    %v4792 = vpop.f32.mrf.mxu0
    %v4793 = vadd.f32 %v4773, %v4792
    %4794 = vdwg.mxu0
    %4795 = vmatpush.msra.mxu0 %v4645
    %4796 = vmatpush.msra.mxu0 %v4644
    %4797 = vmatpush.msra.mxu0 %v4643
    %4798 = vmatpush.msra.mxu0 %v4642
    %4799 = vmatpush.msra.mxu0 %v4641
    %4800 = vmatpush.msra.mxu0 %v4640
    %4801 = vmatpush.msra.mxu0 %v4639
    %4802 = vmatpush.msra.mxu0 %v4638
    %4803 = vmatpush.msra.mxu0 %v4637
    %4804 = vmatpush.msra.mxu0 %v4636
    %4805 = vmatpush.msra.mxu0 %v4635
    %4806 = vmatpush.msra.mxu0 %v4634
    %4807 = vmatpush.msra.mxu0 %v4633
    %4808 = vmatpush.msra.mxu0 %v4632
    %4809 = vmatpush.msra.mxu0 %v4631
    %4810 = vmatpush.msra.mxu0 %v4630
    %4811 = vmatmul.f32.gmra.mxu0 %v4722
    %v4812 = vpop.f32.mrf.mxu0
    %v4813 = vadd.f32 %v4793, %v4812
    %4814 = vdwg.mxu0
    %4815 = vmatpush.msra.mxu0 %v4661
    %4816 = vmatpush.msra.mxu0 %v4660
    %4817 = vmatpush.msra.mxu0 %v4659
    %4818 = vmatpush.msra.mxu0 %v4658
    %4819 = vmatpush.msra.mxu0 %v4657
    %4820 = vmatpush.msra.mxu0 %v4656
    %4821 = vmatpush.msra.mxu0 %v4655
    %4822 = vmatpush.msra.mxu0 %v4654
    %4823 = vmatpush.msra.mxu0 %v4653
    %4824 = vmatpush.msra.mxu0 %v4652
    %4825 = vmatpush.msra.mxu0 %v4651
    %4826 = vmatpush.msra.mxu0 %v4650
    %4827 = vmatpush.msra.mxu0 %v4649
    %4828 = vmatpush.msra.mxu0 %v4648
    %4829 = vmatpush.msra.mxu0 %v4647
    %4830 = vmatpush.msra.mxu0 %v4646
    %4831 = vmatmul.f32.gmra.mxu0 %v4723
    %v4832 = vpop.f32.mrf.mxu0
    %v4833 = vadd.f32 %v4813, %v4832
    %4834 = vdwg.mxu0
    %4835 = vmatpush.msra.mxu0 %v4677
    %4836 = vmatpush.msra.mxu0 %v4676
    %4837 = vmatpush.msra.mxu0 %v4675
    %4838 = vmatpush.msra.mxu0 %v4674
    %4839 = vmatpush.msra.mxu0 %v4673
    %4840 = vmatpush.msra.mxu0 %v4672
    %4841 = vmatpush.msra.mxu0 %v4671
    %4842 = vmatpush.msra.mxu0 %v4670
    %4843 = vmatpush.msra.mxu0 %v4669
    %4844 = vmatpush.msra.mxu0 %v4668
    %4845 = vmatpush.msra.mxu0 %v4667
    %4846 = vmatpush.msra.mxu0 %v4666
    %4847 = vmatpush.msra.mxu0 %v4665
    %4848 = vmatpush.msra.mxu0 %v4664
    %4849 = vmatpush.msra.mxu0 %v4663
    %4850 = vmatpush.msra.mxu0 %v4662
    %4851 = vmatmul.f32.gmra.mxu0 %v4724
    %v4852 = vpop.f32.mrf.mxu0
    %v4853 = vadd.f32 %v4833, %v4852
    %4854 = vdwg.mxu0
    %4855 = vmatpush.msra.mxu0 %v4693
    %4856 = vmatpush.msra.mxu0 %v4692
    %4857 = vmatpush.msra.mxu0 %v4691
    %4858 = vmatpush.msra.mxu0 %v4690
    %4859 = vmatpush.msra.mxu0 %v4689
    %4860 = vmatpush.msra.mxu0 %v4688
    %4861 = vmatpush.msra.mxu0 %v4687
    %4862 = vmatpush.msra.mxu0 %v4686
    %4863 = vmatpush.msra.mxu0 %v4685
    %4864 = vmatpush.msra.mxu0 %v4684
    %4865 = vmatpush.msra.mxu0 %v4683
    %4866 = vmatpush.msra.mxu0 %v4682
    %4867 = vmatpush.msra.mxu0 %v4681
    %4868 = vmatpush.msra.mxu0 %v4680
    %4869 = vmatpush.msra.mxu0 %v4679
    %4870 = vmatpush.msra.mxu0 %v4678
    %4871 = vmatmul.f32.gmra.mxu0 %v4725
    %v4872 = vpop.f32.mrf.mxu0
    %v4873 = vadd.f32 %v4853, %v4872
    %4874 = vdwg.mxu0
    %4875 = vmatpush.msra.mxu0 %v4709
    %4876 = vmatpush.msra.mxu0 %v4708
    %4877 = vmatpush.msra.mxu0 %v4707
    %4878 = vmatpush.msra.mxu0 %v4706
    %4879 = vmatpush.msra.mxu0 %v4705
    %4880 = vmatpush.msra.mxu0 %v4704
    %4881 = vmatpush.msra.mxu0 %v4703
    %4882 = vmatpush.msra.mxu0 %v4702
    %4883 = vmatpush.msra.mxu0 %v4701
    %4884 = vmatpush.msra.mxu0 %v4700
    %4885 = vmatpush.msra.mxu0 %v4699
    %4886 = vmatpush.msra.mxu0 %v4698
    %4887 = vmatpush.msra.mxu0 %v4697
    %4888 = vmatpush.msra.mxu0 %v4696
    %4889 = vmatpush.msra.mxu0 %v4695
    %4890 = vmatpush.msra.mxu0 %v4694
    %4891 = vmatmul.f32.gmra.mxu0 %v4726
    %v4892 = vpop.f32.mrf.mxu0
    %v4893 = vadd.f32 %v4873, %v4892
    %4894 = vdwg.mxu0
    %vm4895 = vcmask 328704
    %4896 = vst.msk [vmem:[#allocation13] sm:$0x3] %vm4895, %v4893
    // Predicated region
    $region53: #{cnn_lstm_forward.3} parent=1 // pred_check
      _
    $region54: #{cnn_lstm_forward.3} parent=1 // pred_check_branch
      %4898 = sbr.rel (0) target = $region56
    $region55: #{cnn_lstm_forward.3} parent=1 // pred_region
      %4900 = vsyncadd [#allocation9], 0
      %s4902 = sshll.u32 [#allocation13], 4
      %s4903 = int_to_ptr.vmem [resolvable:$true] %s4902
      %s4904 = sshll.u32 %s6, 4
      %s4905 = int_to_ptr.hbm [resolvable:$true] %s4904
      %4907 = dma.vmem_to_hbm [thread:$0]  %s4903, 32, %s4905, [#allocation9]
    $region56: #{cnn_lstm_forward.3} parent=1 // pred_fallthru
      _
    // Predicated region
    $region57: #{cnn_lstm_forward.3} parent=1 // pred_check
      _
    $region58: #{cnn_lstm_forward.3} parent=1 // pred_check_branch
      %4909 = sbr.rel (0) target = $region60
    $region59: #{cnn_lstm_forward.3} parent=1 // pred_region
      %4911 = dma.done [#allocation9], 32
    $region60: #{cnn_lstm_forward.3} parent=1 // pred_fallthru
      _
    %4912 = vsyncpa [#allocation8], 1
    %4913 = vsyncpa [#allocation11], 1
    %4914 = vsyncpa [#allocation9], 1
  %4915 = vsyncmov [#allocation3]
  %s4916 = vpop.sfrf %4915
  %p4917 = scmp.eq.s32.totalorder %s4916, 0
  %p4918 = pneg %p4917
  %4920 = shalt.err (%p4918)
  %s4921 = scalar_lea.sflag [#allocation3], 1
  %4922 = vsyncmov %s4921
  %s4923 = vpop.sfrf %4922
  %p4924 = scmp.eq.s32.totalorder %s4923, 0
  %p4925 = pneg %p4924
  %4927 = shalt.err (%p4925)

// kernel: cnn_lstm_forward.2
$region0: #{cnn_lstm_forward.2}
  #allocation0 [shape = 'u32[]', space=smem, size = 0x4, offset = 0x4, fixed_abs, tag = 'smem constant byte address 0x4 - core index']
  #allocation1 [shape = 'u32[72,128]{1,0:T(1,128)}', space=vmem, size = 0x9000, scoped, tag = 'internal scratch']
  #allocation2 [shape = 'f32[800,96]{1,0:T(8,128)}', space=vmem, size = 0x64000, scoped, tag = 'scratch operand']
  #allocation3 [shape = 'f32[200,64]{1,0:T(8,128)}', space=vmem, size = 0x19000, scoped, tag = 'scratch operand']
  %s0 = inlined_call_operand.vmem [shape: f32[102,8], index: 0, kind: input, shape index: {}]
  %s1 = inlined_call_operand.hbm [shape: f32[3,32], index: 1, kind: input, shape index: {}]
  %s2 = inlined_call_operand.hbm [shape: f32[1,32], index: 2, kind: input, shape index: {}]
  %s3 = inlined_call_operand.vmem [shape: f32[96,64], index: 3, kind: input, shape index: {}]
  %s4 = inlined_call_operand.hbm [shape: f32[1,64], index: 4, kind: input, shape index: {}]
  %s5 = inlined_call_operand.hbm [shape: f32[64,256], index: 5, kind: input, shape index: {}]
  %s6 = inlined_call_operand.hbm [shape: f32[1,256], index: 6, kind: input, shape index: {}]
  %s7 = inlined_call_operand.vmem [shape: f32[100,2,256], index: 7, kind: output, shape index: {}]
  %s8 = sld [smem:[#allocation0]]
  $region58: #{cnn_lstm_forward.2} parent=0
    _
  %s10 = ssub.s32 1, %s8
  %s11 = scalar_select 0, %s10, %s8
  $region1: #{cnn_lstm_forward.2} parent=0
    #allocation4 [shape = 'u8[2048]{0}', space=vmem, size = 0x800, scoped, tag = 'input window, operand 1, single buffered']
    #allocation5 [shape = 's32[1]{0}', space=sflag, size = 0x4, scoped, tag = 'scoped memory for cnn_lstm_forward.2']
    #allocation6 [shape = 'u8[512]{0}', space=vmem, size = 0x400, scoped, tag = 'input window, operand 2, single buffered']
    #allocation7 [shape = 's32[1]{0}', space=sflag, size = 0x4, scoped, tag = 'scoped memory for cnn_lstm_forward.2']
    #allocation8 [shape = 'u8[512]{0}', space=vmem, size = 0x400, scoped, tag = 'input window, operand 4, single buffered']
    #allocation9 [shape = 'u8[65536]{0}', space=vmem, size = 0x10000, scoped, tag = 'input window, operand 5, single buffered']
    #allocation10 [shape = 's32[1]{0}', space=sflag, size = 0x4, scoped, tag = 'scoped memory for cnn_lstm_forward.2']
    #allocation11 [shape = 'u8[1024]{0}', space=vmem, size = 0x400, scoped, tag = 'input window, operand 6, single buffered']
    %12 = vsyncpa [#allocation5], 0
    %13 = vsyncpa [#allocation7], 0
    %14 = vsyncpa [#allocation10], 0
    // Predicated region
    $region2: #{cnn_lstm_forward.2} parent=1 // pred_check
      _
    $region3: #{cnn_lstm_forward.2} parent=1 // pred_check_branch
      %16 = sbr.rel (0) target = $region5
    $region4: #{cnn_lstm_forward.2} parent=1 // pred_region
      _
    $region5: #{cnn_lstm_forward.2} parent=1 // pred_fallthru
      _
    // Predicated region
    $region6: #{cnn_lstm_forward.2} parent=1 // pred_check
      _
    $region7: #{cnn_lstm_forward.2} parent=1 // pred_check_branch
      %18 = sbr.rel (0) target = $region9
    $region8: #{cnn_lstm_forward.2} parent=1 // pred_region
      %20 = vsyncadd [#allocation5], 0
      %s22 = sshll.u32 %s1, 4
      %s23 = int_to_ptr.hbm [resolvable:$true] %s22
      %s24 = sshll.u32 [#allocation4], 4
      %s25 = int_to_ptr.vmem [resolvable:$true] %s24
      %27 = dma.hbm_to_vmem [thread:$0]  %s23, 64, %s25, [#allocation5]
    $region9: #{cnn_lstm_forward.2} parent=1 // pred_fallthru
      _
    // Predicated region
    $region10: #{cnn_lstm_forward.2} parent=1 // pred_check
      _
    $region11: #{cnn_lstm_forward.2} parent=1 // pred_check_branch
      %29 = sbr.rel (0) target = $region13
    $region12: #{cnn_lstm_forward.2} parent=1 // pred_region
      %31 = vsyncadd [#allocation7], 0
      %s33 = sshll.u32 %s2, 4
      %s34 = int_to_ptr.hbm [resolvable:$true] %s33
      %s35 = sshll.u32 [#allocation6], 4
      %s36 = int_to_ptr.vmem [resolvable:$true] %s35
      %38 = dma.hbm_to_vmem [thread:$0]  %s34, 16, %s36, [#allocation7]
    $region13: #{cnn_lstm_forward.2} parent=1 // pred_fallthru
      _
    // Predicated region
    $region14: #{cnn_lstm_forward.2} parent=1 // pred_check
      _
    $region15: #{cnn_lstm_forward.2} parent=1 // pred_check_branch
      %40 = sbr.rel (0) target = $region17
    $region16: #{cnn_lstm_forward.2} parent=1 // pred_region
      _
    $region17: #{cnn_lstm_forward.2} parent=1 // pred_fallthru
      _
    // Predicated region
    $region18: #{cnn_lstm_forward.2} parent=1 // pred_check
      _
    $region19: #{cnn_lstm_forward.2} parent=1 // pred_check_branch
      %42 = sbr.rel (0) target = $region21
    $region20: #{cnn_lstm_forward.2} parent=1 // pred_region
      %44 = vsyncadd [#allocation7], 0
      %s46 = sshll.u32 %s4, 4
      %s47 = int_to_ptr.hbm [resolvable:$true] %s46
      %s48 = sshll.u32 [#allocation8], 4
      %s49 = int_to_ptr.vmem [resolvable:$true] %s48
      %51 = dma.hbm_to_vmem [thread:$0]  %s47, 16, %s49, [#allocation7]
    $region21: #{cnn_lstm_forward.2} parent=1 // pred_fallthru
      _
    // Predicated region
    $region22: #{cnn_lstm_forward.2} parent=1 // pred_check
      _
    $region23: #{cnn_lstm_forward.2} parent=1 // pred_check_branch
      %53 = sbr.rel (0) target = $region25
    $region24: #{cnn_lstm_forward.2} parent=1 // pred_region
      %55 = vsyncadd [#allocation10], 0
      %s56 = sshll.u32 %s5, 4
      %s57 = int_to_ptr.hbm [resolvable:$true] %s56
      %s58 = sshll.u32 [#allocation9], 4
      %s59 = int_to_ptr.vmem [resolvable:$true] %s58
      %64 = dma.hbm_to_vmem [thread:$0]  %s57, 2048, %s59, [#allocation10], 256, 256, 16
    $region25: #{cnn_lstm_forward.2} parent=1 // pred_fallthru
      _
    // Predicated region
    $region26: #{cnn_lstm_forward.2} parent=1 // pred_check
      _
    $region27: #{cnn_lstm_forward.2} parent=1 // pred_check_branch
      %66 = sbr.rel (0) target = $region29
    $region28: #{cnn_lstm_forward.2} parent=1 // pred_region
      %68 = vsyncadd [#allocation10], 0
      %s70 = sshll.u32 %s6, 4
      %s71 = int_to_ptr.hbm [resolvable:$true] %s70
      %s72 = sshll.u32 [#allocation11], 4
      %s73 = int_to_ptr.vmem [resolvable:$true] %s72
      %75 = dma.hbm_to_vmem [thread:$0]  %s71, 32, %s73, [#allocation10]
    $region29: #{cnn_lstm_forward.2} parent=1 // pred_fallthru
      _
    // Predicated region
    $region30: #{cnn_lstm_forward.2} parent=1 // pred_check
      _
    $region31: #{cnn_lstm_forward.2} parent=1 // pred_check_branch
      %77 = sbr.rel (0) target = $region33
    $region32: #{cnn_lstm_forward.2} parent=1 // pred_region
      %79 = dma.done [#allocation5], 64
    $region33: #{cnn_lstm_forward.2} parent=1 // pred_fallthru
      _
    // Predicated region
    $region34: #{cnn_lstm_forward.2} parent=1 // pred_check
      _
    $region35: #{cnn_lstm_forward.2} parent=1 // pred_check_branch
      %81 = sbr.rel (0) target = $region37
    $region36: #{cnn_lstm_forward.2} parent=1 // pred_region
      %83 = dma.done [#allocation7], 16
    $region37: #{cnn_lstm_forward.2} parent=1 // pred_fallthru
      _
    // Predicated region
    $region38: #{cnn_lstm_forward.2} parent=1 // pred_check
      _
    $region39: #{cnn_lstm_forward.2} parent=1 // pred_check_branch
      %85 = sbr.rel (0) target = $region41
    $region40: #{cnn_lstm_forward.2} parent=1 // pred_region
      %87 = dma.done [#allocation7], 16
    $region41: #{cnn_lstm_forward.2} parent=1 // pred_fallthru
      _
    // Predicated region
    $region42: #{cnn_lstm_forward.2} parent=1 // pred_check
      _
    $region43: #{cnn_lstm_forward.2} parent=1 // pred_check_branch
      %89 = sbr.rel (0) target = $region45
    $region44: #{cnn_lstm_forward.2} parent=1 // pred_region
      %91 = dma.done [#allocation10], 2048
    $region45: #{cnn_lstm_forward.2} parent=1 // pred_fallthru
      _
    // Predicated region
    $region46: #{cnn_lstm_forward.2} parent=1 // pred_check
      _
    $region47: #{cnn_lstm_forward.2} parent=1 // pred_check_branch
      %93 = sbr.rel (0) target = $region49
    $region48: #{cnn_lstm_forward.2} parent=1 // pred_region
      %95 = dma.done [#allocation10], 32
    $region49: #{cnn_lstm_forward.2} parent=1 // pred_fallthru
      _
    %v96 = vld [vmem:[#allocation4] sm:$0x1]
    %v97 = vld [vmem:[#allocation4 + $0x1] sm:$0x1]
    %v98 = vld [vmem:[#allocation4 + $0x2] sm:$0x1]
    %v99 = vld [vmem:[#allocation6] sm:$0x1]
    %v100 = vld [vmem:[%s0] sm:$0xff]
    %v101 = vld [vmem:[%s0 + $0x8] sm:$0xff]
    %v102 = vld [vmem:[%s0 + $0x10] sm:$0xff]
    %v103 = vld [vmem:[%s0 + $0x18] sm:$0xff]
    %v104 = vld [vmem:[%s0 + $0x20] sm:$0xff]
    %v105 = vld [vmem:[%s0 + $0x28] sm:$0xff]
    %v106 = vld [vmem:[%s0 + $0x30] sm:$0xff]
    %v107 = vld [vmem:[%s0 + $0x38] sm:$0xff]
    %v108 = vld [vmem:[%s0 + $0x40] sm:$0xff]
    %v109 = vld [vmem:[%s0 + $0x48] sm:$0xff]
    %v110 = vld [vmem:[%s0 + $0x50] sm:$0xff]
    %v111 = vld [vmem:[%s0 + $0x58] sm:$0xff]
    %v112 = vld [vmem:[%s0 + $0x60] sm:$0xf]
    %114 = vset.pattern.permute.xlu0 3
    %115 = vperm.xlu0 %114, %v100
    %v116 = vpop.permute.xlu0 %115
    %119 = vset.pattern.permute.xlu0 3
    %120 = vperm.xlu0 %119, %v101
    %v121 = vpop.permute.xlu0 %120
    %124 = vset.pattern.permute.xlu0 3
    %125 = vperm.xlu0 %124, %v102
    %v126 = vpop.permute.xlu0 %125
    %129 = vset.pattern.permute.xlu0 3
    %130 = vperm.xlu0 %129, %v103
    %v131 = vpop.permute.xlu0 %130
    %134 = vset.pattern.permute.xlu0 3
    %135 = vperm.xlu0 %134, %v104
    %v136 = vpop.permute.xlu0 %135
    %139 = vset.pattern.permute.xlu0 3
    %140 = vperm.xlu0 %139, %v105
    %v141 = vpop.permute.xlu0 %140
    %144 = vset.pattern.permute.xlu0 3
    %145 = vperm.xlu0 %144, %v106
    %v146 = vpop.permute.xlu0 %145
    %149 = vset.pattern.permute.xlu0 3
    %150 = vperm.xlu0 %149, %v107
    %v151 = vpop.permute.xlu0 %150
    %154 = vset.pattern.permute.xlu0 3
    %155 = vperm.xlu0 %154, %v108
    %v156 = vpop.permute.xlu0 %155
    %159 = vset.pattern.permute.xlu0 3
    %160 = vperm.xlu0 %159, %v109
    %v161 = vpop.permute.xlu0 %160
    %164 = vset.pattern.permute.xlu0 3
    %165 = vperm.xlu0 %164, %v110
    %v166 = vpop.permute.xlu0 %165
    %169 = vset.pattern.permute.xlu0 3
    %170 = vperm.xlu0 %169, %v111
    %v171 = vpop.permute.xlu0 %170
    %174 = vset.pattern.permute.xlu0 3
    %175 = vperm.xlu0 %174, %v112
    %v176 = vpop.permute.xlu0 %175
    %v178 = vperm.slane %v96, 0
    %v179 = vmul.f32 %v116, %v178
    %v180 = vmul.f32 %v121, %v178
    %v181 = vmul.f32 %v126, %v178
    %v182 = vmul.f32 %v131, %v178
    %v183 = vmul.f32 %v136, %v178
    %v184 = vmul.f32 %v141, %v178
    %v185 = vmul.f32 %v146, %v178
    %v186 = vmul.f32 %v151, %v178
    %v187 = vmul.f32 %v156, %v178
    %v188 = vmul.f32 %v161, %v178
    %v189 = vmul.f32 %v166, %v178
    %v190 = vmul.f32 %v171, %v178
    %v191 = vmul.f32 %v176, %v178
    %v192 = vld [vmem:[%s0 + $0x1] sm:$0xff]
    %v193 = vld [vmem:[%s0 + $0x9] sm:$0xff]
    %v194 = vld [vmem:[%s0 + $0x11] sm:$0xff]
    %v195 = vld [vmem:[%s0 + $0x19] sm:$0xff]
    %v196 = vld [vmem:[%s0 + $0x21] sm:$0xff]
    %v197 = vld [vmem:[%s0 + $0x29] sm:$0xff]
    %v198 = vld [vmem:[%s0 + $0x31] sm:$0xff]
    %v199 = vld [vmem:[%s0 + $0x39] sm:$0xff]
    %v200 = vld [vmem:[%s0 + $0x41] sm:$0xff]
    %v201 = vld [vmem:[%s0 + $0x49] sm:$0xff]
    %v202 = vld [vmem:[%s0 + $0x51] sm:$0xff]
    %v203 = vld [vmem:[%s0 + $0x59] sm:$0xff]
    %v204 = vld [vmem:[%s0 + $0x61] sm:$0xf]
    %206 = vset.pattern.permute.xlu0 0
    %207 = vperm.xlu0 %206, %v192
    %v208 = vpop.permute.xlu0 %207
    %211 = vset.pattern.permute.xlu0 0
    %212 = vperm.xlu0 %211, %v193
    %v213 = vpop.permute.xlu0 %212
    %216 = vset.pattern.permute.xlu0 0
    %217 = vperm.xlu0 %216, %v194
    %v218 = vpop.permute.xlu0 %217
    %221 = vset.pattern.permute.xlu0 0
    %222 = vperm.xlu0 %221, %v195
    %v223 = vpop.permute.xlu0 %222
    %226 = vset.pattern.permute.xlu0 0
    %227 = vperm.xlu0 %226, %v196
    %v228 = vpop.permute.xlu0 %227
    %231 = vset.pattern.permute.xlu0 0
    %232 = vperm.xlu0 %231, %v197
    %v233 = vpop.permute.xlu0 %232
    %236 = vset.pattern.permute.xlu0 0
    %237 = vperm.xlu0 %236, %v198
    %v238 = vpop.permute.xlu0 %237
    %241 = vset.pattern.permute.xlu0 0
    %242 = vperm.xlu0 %241, %v199
    %v243 = vpop.permute.xlu0 %242
    %246 = vset.pattern.permute.xlu0 0
    %247 = vperm.xlu0 %246, %v200
    %v248 = vpop.permute.xlu0 %247
    %251 = vset.pattern.permute.xlu0 0
    %252 = vperm.xlu0 %251, %v201
    %v253 = vpop.permute.xlu0 %252
    %256 = vset.pattern.permute.xlu0 0
    %257 = vperm.xlu0 %256, %v202
    %v258 = vpop.permute.xlu0 %257
    %261 = vset.pattern.permute.xlu0 0
    %262 = vperm.xlu0 %261, %v203
    %v263 = vpop.permute.xlu0 %262
    %266 = vset.pattern.permute.xlu0 0
    %267 = vperm.xlu0 %266, %v204
    %v268 = vpop.permute.xlu0 %267
    %v270 = vperm.slane %v97, 0
    %v271 = vmul.f32 %v208, %v270
    %v272 = vmul.f32 %v213, %v270
    %v273 = vmul.f32 %v218, %v270
    %v274 = vmul.f32 %v223, %v270
    %v275 = vmul.f32 %v228, %v270
    %v276 = vmul.f32 %v233, %v270
    %v277 = vmul.f32 %v238, %v270
    %v278 = vmul.f32 %v243, %v270
    %v279 = vmul.f32 %v248, %v270
    %v280 = vmul.f32 %v253, %v270
    %v281 = vmul.f32 %v258, %v270
    %v282 = vmul.f32 %v263, %v270
    %v283 = vmul.f32 %v268, %v270
    %v284 = vadd.f32 %v179, %v271
    %v285 = vadd.f32 %v180, %v272
    %v286 = vadd.f32 %v181, %v273
    %v287 = vadd.f32 %v182, %v274
    %v288 = vadd.f32 %v183, %v275
    %v289 = vadd.f32 %v184, %v276
    %v290 = vadd.f32 %v185, %v277
    %v291 = vadd.f32 %v186, %v278
    %v292 = vadd.f32 %v187, %v279
    %v293 = vadd.f32 %v188, %v280
    %v294 = vadd.f32 %v189, %v281
    %v295 = vadd.f32 %v190, %v282
    %v296 = vadd.f32 %v191, %v283
    %297 = vset.pattern.permute.xlu0 1
    %298 = vperm.xlu0 %297, %v192
    %v299 = vpop.permute.xlu0 %298
    %301 = vset.pattern.permute.xlu0 1
    %302 = vperm.xlu0 %301, %v193
    %v303 = vpop.permute.xlu0 %302
    %305 = vset.pattern.permute.xlu0 1
    %306 = vperm.xlu0 %305, %v194
    %v307 = vpop.permute.xlu0 %306
    %309 = vset.pattern.permute.xlu0 1
    %310 = vperm.xlu0 %309, %v195
    %v311 = vpop.permute.xlu0 %310
    %313 = vset.pattern.permute.xlu0 1
    %314 = vperm.xlu0 %313, %v196
    %v315 = vpop.permute.xlu0 %314
    %317 = vset.pattern.permute.xlu0 1
    %318 = vperm.xlu0 %317, %v197
    %v319 = vpop.permute.xlu0 %318
    %321 = vset.pattern.permute.xlu0 1
    %322 = vperm.xlu0 %321, %v198
    %v323 = vpop.permute.xlu0 %322
    %325 = vset.pattern.permute.xlu0 1
    %326 = vperm.xlu0 %325, %v199
    %v327 = vpop.permute.xlu0 %326
    %329 = vset.pattern.permute.xlu0 1
    %330 = vperm.xlu0 %329, %v200
    %v331 = vpop.permute.xlu0 %330
    %333 = vset.pattern.permute.xlu0 1
    %334 = vperm.xlu0 %333, %v201
    %v335 = vpop.permute.xlu0 %334
    %337 = vset.pattern.permute.xlu0 1
    %338 = vperm.xlu0 %337, %v202
    %v339 = vpop.permute.xlu0 %338
    %341 = vset.pattern.permute.xlu0 1
    %342 = vperm.xlu0 %341, %v203
    %v343 = vpop.permute.xlu0 %342
    %345 = vset.pattern.permute.xlu0 1
    %346 = vperm.xlu0 %345, %v204
    %v347 = vpop.permute.xlu0 %346
    %v349 = vperm.slane %v98, 0
    %v350 = vmul.f32 %v299, %v349
    %v351 = vmul.f32 %v303, %v349
    %v352 = vmul.f32 %v307, %v349
    %v353 = vmul.f32 %v311, %v349
    %v354 = vmul.f32 %v315, %v349
    %v355 = vmul.f32 %v319, %v349
    %v356 = vmul.f32 %v323, %v349
    %v357 = vmul.f32 %v327, %v349
    %v358 = vmul.f32 %v331, %v349
    %v359 = vmul.f32 %v335, %v349
    %v360 = vmul.f32 %v339, %v349
    %v361 = vmul.f32 %v343, %v349
    %v362 = vmul.f32 %v347, %v349
    %v363 = vadd.f32 %v284, %v350
    %v364 = vadd.f32 %v285, %v351
    %v365 = vadd.f32 %v286, %v352
    %v366 = vadd.f32 %v287, %v353
    %v367 = vadd.f32 %v288, %v354
    %v368 = vadd.f32 %v289, %v355
    %v369 = vadd.f32 %v290, %v356
    %v370 = vadd.f32 %v291, %v357
    %v371 = vadd.f32 %v292, %v358
    %v372 = vadd.f32 %v293, %v359
    %v373 = vadd.f32 %v294, %v360
    %v374 = vadd.f32 %v295, %v361
    %v375 = vadd.f32 %v296, %v362
    %v377 = vperm.slane %v99, 0
    %v379 = vadd.f32 %v363, %v377
    %v380 = vadd.f32 %v364, %v377
    %v381 = vadd.f32 %v365, %v377
    %v382 = vadd.f32 %v366, %v377
    %v383 = vadd.f32 %v367, %v377
    %v384 = vadd.f32 %v368, %v377
    %v385 = vadd.f32 %v369, %v377
    %v386 = vadd.f32 %v370, %v377
    %v387 = vadd.f32 %v371, %v377
    %v388 = vadd.f32 %v372, %v377
    %v389 = vadd.f32 %v373, %v377
    %v390 = vadd.f32 %v374, %v377
    %v391 = vadd.f32 %v375, %v377
    %v392 = vmax.f32 %v379, 0.0
    %v393 = vmax.f32 %v380, 0.0
    %v394 = vmax.f32 %v381, 0.0
    %v395 = vmax.f32 %v382, 0.0
    %v396 = vmax.f32 %v383, 0.0
    %v397 = vmax.f32 %v384, 0.0
    %v398 = vmax.f32 %v385, 0.0
    %v399 = vmax.f32 %v386, 0.0
    %v400 = vmax.f32 %v387, 0.0
    %v401 = vmax.f32 %v388, 0.0
    %v402 = vmax.f32 %v389, 0.0
    %v403 = vmax.f32 %v390, 0.0
    %v404 = vmax.f32 %v391, 0.0
    %v405 = vmul.f32 %v208, %v178
    %v406 = vmul.f32 %v213, %v178
    %v407 = vmul.f32 %v218, %v178
    %v408 = vmul.f32 %v223, %v178
    %v409 = vmul.f32 %v228, %v178
    %v410 = vmul.f32 %v233, %v178
    %v411 = vmul.f32 %v238, %v178
    %v412 = vmul.f32 %v243, %v178
    %v413 = vmul.f32 %v248, %v178
    %v414 = vmul.f32 %v253, %v178
    %v415 = vmul.f32 %v258, %v178
    %v416 = vmul.f32 %v263, %v178
    %v417 = vmul.f32 %v268, %v178
    %v418 = vmul.f32 %v299, %v270
    %v419 = vmul.f32 %v303, %v270
    %v420 = vmul.f32 %v307, %v270
    %v421 = vmul.f32 %v311, %v270
    %v422 = vmul.f32 %v315, %v270
    %v423 = vmul.f32 %v319, %v270
    %v424 = vmul.f32 %v323, %v270
    %v425 = vmul.f32 %v327, %v270
    %v426 = vmul.f32 %v331, %v270
    %v427 = vmul.f32 %v335, %v270
    %v428 = vmul.f32 %v339, %v270
    %v429 = vmul.f32 %v343, %v270
    %v430 = vmul.f32 %v347, %v270
    %v431 = vadd.f32 %v405, %v418
    %v432 = vadd.f32 %v406, %v419
    %v433 = vadd.f32 %v407, %v420
    %v434 = vadd.f32 %v408, %v421
    %v435 = vadd.f32 %v409, %v422
    %v436 = vadd.f32 %v410, %v423
    %v437 = vadd.f32 %v411, %v424
    %v438 = vadd.f32 %v412, %v425
    %v439 = vadd.f32 %v413, %v426
    %v440 = vadd.f32 %v414, %v427
    %v441 = vadd.f32 %v415, %v428
    %v442 = vadd.f32 %v416, %v429
    %v443 = vadd.f32 %v417, %v430
    %444 = vset.pattern.permute.xlu0 2
    %445 = vperm.xlu0 %444, %v192
    %v446 = vpop.permute.xlu0 %445
    %448 = vset.pattern.permute.xlu0 2
    %449 = vperm.xlu0 %448, %v193
    %v450 = vpop.permute.xlu0 %449
    %452 = vset.pattern.permute.xlu0 2
    %453 = vperm.xlu0 %452, %v194
    %v454 = vpop.permute.xlu0 %453
    %456 = vset.pattern.permute.xlu0 2
    %457 = vperm.xlu0 %456, %v195
    %v458 = vpop.permute.xlu0 %457
    %460 = vset.pattern.permute.xlu0 2
    %461 = vperm.xlu0 %460, %v196
    %v462 = vpop.permute.xlu0 %461
    %464 = vset.pattern.permute.xlu0 2
    %465 = vperm.xlu0 %464, %v197
    %v466 = vpop.permute.xlu0 %465
    %468 = vset.pattern.permute.xlu0 2
    %469 = vperm.xlu0 %468, %v198
    %v470 = vpop.permute.xlu0 %469
    %472 = vset.pattern.permute.xlu0 2
    %473 = vperm.xlu0 %472, %v199
    %v474 = vpop.permute.xlu0 %473
    %476 = vset.pattern.permute.xlu0 2
    %477 = vperm.xlu0 %476, %v200
    %v478 = vpop.permute.xlu0 %477
    %480 = vset.pattern.permute.xlu0 2
    %481 = vperm.xlu0 %480, %v201
    %v482 = vpop.permute.xlu0 %481
    %484 = vset.pattern.permute.xlu0 2
    %485 = vperm.xlu0 %484, %v202
    %v486 = vpop.permute.xlu0 %485
    %488 = vset.pattern.permute.xlu0 2
    %489 = vperm.xlu0 %488, %v203
    %v490 = vpop.permute.xlu0 %489
    %492 = vset.pattern.permute.xlu0 2
    %493 = vperm.xlu0 %492, %v204
    %v494 = vpop.permute.xlu0 %493
    %v496 = vmul.f32 %v446, %v349
    %v497 = vmul.f32 %v450, %v349
    %v498 = vmul.f32 %v454, %v349
    %v499 = vmul.f32 %v458, %v349
    %v500 = vmul.f32 %v462, %v349
    %v501 = vmul.f32 %v466, %v349
    %v502 = vmul.f32 %v470, %v349
    %v503 = vmul.f32 %v474, %v349
    %v504 = vmul.f32 %v478, %v349
    %v505 = vmul.f32 %v482, %v349
    %v506 = vmul.f32 %v486, %v349
    %v507 = vmul.f32 %v490, %v349
    %v508 = vmul.f32 %v494, %v349
    %v509 = vadd.f32 %v431, %v496
    %v510 = vadd.f32 %v432, %v497
    %v511 = vadd.f32 %v433, %v498
    %v512 = vadd.f32 %v434, %v499
    %v513 = vadd.f32 %v435, %v500
    %v514 = vadd.f32 %v436, %v501
    %v515 = vadd.f32 %v437, %v502
    %v516 = vadd.f32 %v438, %v503
    %v517 = vadd.f32 %v439, %v504
    %v518 = vadd.f32 %v440, %v505
    %v519 = vadd.f32 %v441, %v506
    %v520 = vadd.f32 %v442, %v507
    %v521 = vadd.f32 %v443, %v508
    %v522 = vadd.f32 %v509, %v377
    %v523 = vadd.f32 %v510, %v377
    %v524 = vadd.f32 %v511, %v377
    %v525 = vadd.f32 %v512, %v377
    %v526 = vadd.f32 %v513, %v377
    %v527 = vadd.f32 %v514, %v377
    %v528 = vadd.f32 %v515, %v377
    %v529 = vadd.f32 %v516, %v377
    %v530 = vadd.f32 %v517, %v377
    %v531 = vadd.f32 %v518, %v377
    %v532 = vadd.f32 %v519, %v377
    %v533 = vadd.f32 %v520, %v377
    %v534 = vadd.f32 %v521, %v377
    %v535 = vmax.f32 %v522, 0.0
    %v536 = vmax.f32 %v523, 0.0
    %v537 = vmax.f32 %v524, 0.0
    %v538 = vmax.f32 %v525, 0.0
    %v539 = vmax.f32 %v526, 0.0
    %v540 = vmax.f32 %v527, 0.0
    %v541 = vmax.f32 %v528, 0.0
    %v542 = vmax.f32 %v529, 0.0
    %v543 = vmax.f32 %v530, 0.0
    %v544 = vmax.f32 %v531, 0.0
    %v545 = vmax.f32 %v532, 0.0
    %v546 = vmax.f32 %v533, 0.0
    %v547 = vmax.f32 %v534, 0.0
    %v548 = vmul.f32 %v299, %v178
    %v549 = vmul.f32 %v303, %v178
    %v550 = vmul.f32 %v307, %v178
    %v551 = vmul.f32 %v311, %v178
    %v552 = vmul.f32 %v315, %v178
    %v553 = vmul.f32 %v319, %v178
    %v554 = vmul.f32 %v323, %v178
    %v555 = vmul.f32 %v327, %v178
    %v556 = vmul.f32 %v331, %v178
    %v557 = vmul.f32 %v335, %v178
    %v558 = vmul.f32 %v339, %v178
    %v559 = vmul.f32 %v343, %v178
    %v560 = vmul.f32 %v347, %v178
    %v561 = vmul.f32 %v446, %v270
    %v562 = vmul.f32 %v450, %v270
    %v563 = vmul.f32 %v454, %v270
    %v564 = vmul.f32 %v458, %v270
    %v565 = vmul.f32 %v462, %v270
    %v566 = vmul.f32 %v466, %v270
    %v567 = vmul.f32 %v470, %v270
    %v568 = vmul.f32 %v474, %v270
    %v569 = vmul.f32 %v478, %v270
    %v570 = vmul.f32 %v482, %v270
    %v571 = vmul.f32 %v486, %v270
    %v572 = vmul.f32 %v490, %v270
    %v573 = vmul.f32 %v494, %v270
    %v574 = vadd.f32 %v548, %v561
    %v575 = vadd.f32 %v549, %v562
    %v576 = vadd.f32 %v550, %v563
    %v577 = vadd.f32 %v551, %v564
    %v578 = vadd.f32 %v552, %v565
    %v579 = vadd.f32 %v553, %v566
    %v580 = vadd.f32 %v554, %v567
    %v581 = vadd.f32 %v555, %v568
    %v582 = vadd.f32 %v556, %v569
    %v583 = vadd.f32 %v557, %v570
    %v584 = vadd.f32 %v558, %v571
    %v585 = vadd.f32 %v559, %v572
    %v586 = vadd.f32 %v560, %v573
    %587 = vset.pattern.permute.xlu0 3
    %588 = vperm.xlu0 %587, %v192
    %v589 = vpop.permute.xlu0 %588
    %591 = vset.pattern.permute.xlu0 3
    %592 = vperm.xlu0 %591, %v193
    %v593 = vpop.permute.xlu0 %592
    %595 = vset.pattern.permute.xlu0 3
    %596 = vperm.xlu0 %595, %v194
    %v597 = vpop.permute.xlu0 %596
    %599 = vset.pattern.permute.xlu0 3
    %600 = vperm.xlu0 %599, %v195
    %v601 = vpop.permute.xlu0 %600
    %603 = vset.pattern.permute.xlu0 3
    %604 = vperm.xlu0 %603, %v196
    %v605 = vpop.permute.xlu0 %604
    %607 = vset.pattern.permute.xlu0 3
    %608 = vperm.xlu0 %607, %v197
    %v609 = vpop.permute.xlu0 %608
    %611 = vset.pattern.permute.xlu0 3
    %612 = vperm.xlu0 %611, %v198
    %v613 = vpop.permute.xlu0 %612
    %615 = vset.pattern.permute.xlu0 3
    %616 = vperm.xlu0 %615, %v199
    %v617 = vpop.permute.xlu0 %616
    %619 = vset.pattern.permute.xlu0 3
    %620 = vperm.xlu0 %619, %v200
    %v621 = vpop.permute.xlu0 %620
    %623 = vset.pattern.permute.xlu0 3
    %624 = vperm.xlu0 %623, %v201
    %v625 = vpop.permute.xlu0 %624
    %627 = vset.pattern.permute.xlu0 3
    %628 = vperm.xlu0 %627, %v202
    %v629 = vpop.permute.xlu0 %628
    %631 = vset.pattern.permute.xlu0 3
    %632 = vperm.xlu0 %631, %v203
    %v633 = vpop.permute.xlu0 %632
    %635 = vset.pattern.permute.xlu0 3
    %636 = vperm.xlu0 %635, %v204
    %v637 = vpop.permute.xlu0 %636
    %v639 = vmul.f32 %v589, %v349
    %v640 = vmul.f32 %v593, %v349
    %v641 = vmul.f32 %v597, %v349
    %v642 = vmul.f32 %v601, %v349
    %v643 = vmul.f32 %v605, %v349
    %v644 = vmul.f32 %v609, %v349
    %v645 = vmul.f32 %v613, %v349
    %v646 = vmul.f32 %v617, %v349
    %v647 = vmul.f32 %v621, %v349
    %v648 = vmul.f32 %v625, %v349
    %v649 = vmul.f32 %v629, %v349
    %v650 = vmul.f32 %v633, %v349
    %v651 = vmul.f32 %v637, %v349
    %v652 = vadd.f32 %v574, %v639
    %v653 = vadd.f32 %v575, %v640
    %v654 = vadd.f32 %v576, %v641
    %v655 = vadd.f32 %v577, %v642
    %v656 = vadd.f32 %v578, %v643
    %v657 = vadd.f32 %v579, %v644
    %v658 = vadd.f32 %v580, %v645
    %v659 = vadd.f32 %v581, %v646
    %v660 = vadd.f32 %v582, %v647
    %v661 = vadd.f32 %v583, %v648
    %v662 = vadd.f32 %v584, %v649
    %v663 = vadd.f32 %v585, %v650
    %v664 = vadd.f32 %v586, %v651
    %v665 = vadd.f32 %v652, %v377
    %v666 = vadd.f32 %v653, %v377
    %v667 = vadd.f32 %v654, %v377
    %v668 = vadd.f32 %v655, %v377
    %v669 = vadd.f32 %v656, %v377
    %v670 = vadd.f32 %v657, %v377
    %v671 = vadd.f32 %v658, %v377
    %v672 = vadd.f32 %v659, %v377
    %v673 = vadd.f32 %v660, %v377
    %v674 = vadd.f32 %v661, %v377
    %v675 = vadd.f32 %v662, %v377
    %v676 = vadd.f32 %v663, %v377
    %v677 = vadd.f32 %v664, %v377
    %v678 = vmax.f32 %v665, 0.0
    %v679 = vmax.f32 %v666, 0.0
    %v680 = vmax.f32 %v667, 0.0
    %v681 = vmax.f32 %v668, 0.0
    %v682 = vmax.f32 %v669, 0.0
    %v683 = vmax.f32 %v670, 0.0
    %v684 = vmax.f32 %v671, 0.0
    %v685 = vmax.f32 %v672, 0.0
    %v686 = vmax.f32 %v673, 0.0
    %v687 = vmax.f32 %v674, 0.0
    %v688 = vmax.f32 %v675, 0.0
    %v689 = vmax.f32 %v676, 0.0
    %v690 = vmax.f32 %v677, 0.0
    %v691 = vmul.f32 %v446, %v178
    %v692 = vmul.f32 %v450, %v178
    %v693 = vmul.f32 %v454, %v178
    %v694 = vmul.f32 %v458, %v178
    %v695 = vmul.f32 %v462, %v178
    %v696 = vmul.f32 %v466, %v178
    %v697 = vmul.f32 %v470, %v178
    %v698 = vmul.f32 %v474, %v178
    %v699 = vmul.f32 %v478, %v178
    %v700 = vmul.f32 %v482, %v178
    %v701 = vmul.f32 %v486, %v178
    %v702 = vmul.f32 %v490, %v178
    %v703 = vmul.f32 %v494, %v178
    %v704 = vmul.f32 %v589, %v270
    %v705 = vmul.f32 %v593, %v270
    %v706 = vmul.f32 %v597, %v270
    %v707 = vmul.f32 %v601, %v270
    %v708 = vmul.f32 %v605, %v270
    %v709 = vmul.f32 %v609, %v270
    %v710 = vmul.f32 %v613, %v270
    %v711 = vmul.f32 %v617, %v270
    %v712 = vmul.f32 %v621, %v270
    %v713 = vmul.f32 %v625, %v270
    %v714 = vmul.f32 %v629, %v270
    %v715 = vmul.f32 %v633, %v270
    %v716 = vmul.f32 %v637, %v270
    %v717 = vadd.f32 %v691, %v704
    %v718 = vadd.f32 %v692, %v705
    %v719 = vadd.f32 %v693, %v706
    %v720 = vadd.f32 %v694, %v707
    %v721 = vadd.f32 %v695, %v708
    %v722 = vadd.f32 %v696, %v709
    %v723 = vadd.f32 %v697, %v710
    %v724 = vadd.f32 %v698, %v711
    %v725 = vadd.f32 %v699, %v712
    %v726 = vadd.f32 %v700, %v713
    %v727 = vadd.f32 %v701, %v714
    %v728 = vadd.f32 %v702, %v715
    %v729 = vadd.f32 %v703, %v716
    %v730 = vld [vmem:[%s0 + $0x2] sm:$0xff]
    %v731 = vld [vmem:[%s0 + $0xa] sm:$0xff]
    %v732 = vld [vmem:[%s0 + $0x12] sm:$0xff]
    %v733 = vld [vmem:[%s0 + $0x1a] sm:$0xff]
    %v734 = vld [vmem:[%s0 + $0x22] sm:$0xff]
    %v735 = vld [vmem:[%s0 + $0x2a] sm:$0xff]
    %v736 = vld [vmem:[%s0 + $0x32] sm:$0xff]
    %v737 = vld [vmem:[%s0 + $0x3a] sm:$0xff]
    %v738 = vld [vmem:[%s0 + $0x42] sm:$0xff]
    %v739 = vld [vmem:[%s0 + $0x4a] sm:$0xff]
    %v740 = vld [vmem:[%s0 + $0x52] sm:$0xff]
    %v741 = vld [vmem:[%s0 + $0x5a] sm:$0xff]
    %v742 = vld [vmem:[%s0 + $0x62] sm:$0xf]
    %744 = vset.pattern.permute.xlu0 0
    %745 = vperm.xlu0 %744, %v730
    %v746 = vpop.permute.xlu0 %745
    %749 = vset.pattern.permute.xlu0 0
    %750 = vperm.xlu0 %749, %v731
    %v751 = vpop.permute.xlu0 %750
    %754 = vset.pattern.permute.xlu0 0
    %755 = vperm.xlu0 %754, %v732
    %v756 = vpop.permute.xlu0 %755
    %759 = vset.pattern.permute.xlu0 0
    %760 = vperm.xlu0 %759, %v733
    %v761 = vpop.permute.xlu0 %760
    %764 = vset.pattern.permute.xlu0 0
    %765 = vperm.xlu0 %764, %v734
    %v766 = vpop.permute.xlu0 %765
    %769 = vset.pattern.permute.xlu0 0
    %770 = vperm.xlu0 %769, %v735
    %v771 = vpop.permute.xlu0 %770
    %774 = vset.pattern.permute.xlu0 0
    %775 = vperm.xlu0 %774, %v736
    %v776 = vpop.permute.xlu0 %775
    %779 = vset.pattern.permute.xlu0 0
    %780 = vperm.xlu0 %779, %v737
    %v781 = vpop.permute.xlu0 %780
    %784 = vset.pattern.permute.xlu0 0
    %785 = vperm.xlu0 %784, %v738
    %v786 = vpop.permute.xlu0 %785
    %789 = vset.pattern.permute.xlu0 0
    %790 = vperm.xlu0 %789, %v739
    %v791 = vpop.permute.xlu0 %790
    %794 = vset.pattern.permute.xlu0 0
    %795 = vperm.xlu0 %794, %v740
    %v796 = vpop.permute.xlu0 %795
    %799 = vset.pattern.permute.xlu0 0
    %800 = vperm.xlu0 %799, %v741
    %v801 = vpop.permute.xlu0 %800
    %804 = vset.pattern.permute.xlu0 0
    %805 = vperm.xlu0 %804, %v742
    %v806 = vpop.permute.xlu0 %805
    %v808 = vmul.f32 %v746, %v349
    %v809 = vmul.f32 %v751, %v349
    %v810 = vmul.f32 %v756, %v349
    %v811 = vmul.f32 %v761, %v349
    %v812 = vmul.f32 %v766, %v349
    %v813 = vmul.f32 %v771, %v349
    %v814 = vmul.f32 %v776, %v349
    %v815 = vmul.f32 %v781, %v349
    %v816 = vmul.f32 %v786, %v349
    %v817 = vmul.f32 %v791, %v349
    %v818 = vmul.f32 %v796, %v349
    %v819 = vmul.f32 %v801, %v349
    %v820 = vmul.f32 %v806, %v349
    %v821 = vadd.f32 %v717, %v808
    %v822 = vadd.f32 %v718, %v809
    %v823 = vadd.f32 %v719, %v810
    %v824 = vadd.f32 %v720, %v811
    %v825 = vadd.f32 %v721, %v812
    %v826 = vadd.f32 %v722, %v813
    %v827 = vadd.f32 %v723, %v814
    %v828 = vadd.f32 %v724, %v815
    %v829 = vadd.f32 %v725, %v816
    %v830 = vadd.f32 %v726, %v817
    %v831 = vadd.f32 %v727, %v818
    %v832 = vadd.f32 %v728, %v819
    %v833 = vadd.f32 %v729, %v820
    %v834 = vadd.f32 %v821, %v377
    %v835 = vadd.f32 %v822, %v377
    %v836 = vadd.f32 %v823, %v377
    %v837 = vadd.f32 %v824, %v377
    %v838 = vadd.f32 %v825, %v377
    %v839 = vadd.f32 %v826, %v377
    %v840 = vadd.f32 %v827, %v377
    %v841 = vadd.f32 %v828, %v377
    %v842 = vadd.f32 %v829, %v377
    %v843 = vadd.f32 %v830, %v377
    %v844 = vadd.f32 %v831, %v377
    %v845 = vadd.f32 %v832, %v377
    %v846 = vadd.f32 %v833, %v377
    %v847 = vmax.f32 %v834, 0.0
    %v848 = vmax.f32 %v835, 0.0
    %v849 = vmax.f32 %v836, 0.0
    %v850 = vmax.f32 %v837, 0.0
    %v851 = vmax.f32 %v838, 0.0
    %v852 = vmax.f32 %v839, 0.0
    %v853 = vmax.f32 %v840, 0.0
    %v854 = vmax.f32 %v841, 0.0
    %v855 = vmax.f32 %v842, 0.0
    %v856 = vmax.f32 %v843, 0.0
    %v857 = vmax.f32 %v844, 0.0
    %v858 = vmax.f32 %v845, 0.0
    %v859 = vmax.f32 %v846, 0.0
    %vm860 = vcmask 253952
    %861 = vst.msk [vmem:[#allocation2] sm:$0x1] %vm860, 0.0
    %vm862 = vcmask 261120
    %863 = vst.msk [vmem:[#allocation2 + $0x1] sm:$0xff] %vm862, %v847
    %864 = vst.msk [vmem:[#allocation2 + $0x9] sm:$0xff] %vm862, %v848
    %865 = vst.msk [vmem:[#allocation2 + $0x11] sm:$0xff] %vm862, %v849
    %866 = vst.msk [vmem:[#allocation2 + $0x19] sm:$0xff] %vm862, %v850
    %867 = vst.msk [vmem:[#allocation2 + $0x21] sm:$0xff] %vm862, %v851
    %868 = vst.msk [vmem:[#allocation2 + $0x29] sm:$0xff] %vm862, %v852
    %869 = vst.msk [vmem:[#allocation2 + $0x31] sm:$0xff] %vm862, %v853
    %870 = vst.msk [vmem:[#allocation2 + $0x39] sm:$0xff] %vm862, %v854
    %871 = vst.msk [vmem:[#allocation2 + $0x41] sm:$0xff] %vm862, %v855
    %872 = vst.msk [vmem:[#allocation2 + $0x49] sm:$0xff] %vm862, %v856
    %873 = vst.msk [vmem:[#allocation2 + $0x51] sm:$0xff] %vm862, %v857
    %874 = vst.msk [vmem:[#allocation2 + $0x59] sm:$0xff] %vm862, %v858
    %vm875 = vcmask 256000
    %876 = vst.msk [vmem:[#allocation2 + $0x61] sm:$0x7] %vm875, %v859
    %890 = vrot.lane.b32.xlu0 %v392, 32
    %v891 = vpop.permute.xlu0 %890
    %892 = vrot.lane.b32.xlu0 %v393, 32
    %v893 = vpop.permute.xlu0 %892
    %894 = vrot.lane.b32.xlu0 %v394, 32
    %v895 = vpop.permute.xlu0 %894
    %896 = vrot.lane.b32.xlu0 %v395, 32
    %v897 = vpop.permute.xlu0 %896
    %898 = vrot.lane.b32.xlu0 %v396, 32
    %v899 = vpop.permute.xlu0 %898
    %900 = vrot.lane.b32.xlu0 %v397, 32
    %v901 = vpop.permute.xlu0 %900
    %902 = vrot.lane.b32.xlu0 %v398, 32
    %v903 = vpop.permute.xlu0 %902
    %904 = vrot.lane.b32.xlu0 %v399, 32
    %v905 = vpop.permute.xlu0 %904
    %906 = vrot.lane.b32.xlu0 %v400, 32
    %v907 = vpop.permute.xlu0 %906
    %908 = vrot.lane.b32.xlu0 %v401, 32
    %v909 = vpop.permute.xlu0 %908
    %910 = vrot.lane.b32.xlu0 %v402, 32
    %v911 = vpop.permute.xlu0 %910
    %912 = vrot.lane.b32.xlu0 %v403, 32
    %v913 = vpop.permute.xlu0 %912
    %914 = vrot.lane.b32.xlu0 %v404, 32
    %v915 = vpop.permute.xlu0 %914
    %vm929 = vcmask 523520
    %930 = vst.msk [vmem:[#allocation2] sm:$0xff] %vm929, %v891
    %931 = vst.msk [vmem:[#allocation2 + $0x8] sm:$0xff] %vm929, %v893
    %932 = vst.msk [vmem:[#allocation2 + $0x10] sm:$0xff] %vm929, %v895
    %933 = vst.msk [vmem:[#allocation2 + $0x18] sm:$0xff] %vm929, %v897
    %934 = vst.msk [vmem:[#allocation2 + $0x20] sm:$0xff] %vm929, %v899
    %935 = vst.msk [vmem:[#allocation2 + $0x28] sm:$0xff] %vm929, %v901
    %936 = vst.msk [vmem:[#allocation2 + $0x30] sm:$0xff] %vm929, %v903
    %937 = vst.msk [vmem:[#allocation2 + $0x38] sm:$0xff] %vm929, %v905
    %938 = vst.msk [vmem:[#allocation2 + $0x40] sm:$0xff] %vm929, %v907
    %939 = vst.msk [vmem:[#allocation2 + $0x48] sm:$0xff] %vm929, %v909
    %940 = vst.msk [vmem:[#allocation2 + $0x50] sm:$0xff] %vm929, %v911
    %941 = vst.msk [vmem:[#allocation2 + $0x58] sm:$0xff] %vm929, %v913
    %vm942 = vcmask 519424
    %943 = vst.msk [vmem:[#allocation2 + $0x60] sm:$0xf] %vm942, %v915
    %957 = vrot.lane.b32.xlu0 %v535, 64
    %v958 = vpop.permute.xlu0 %957
    %959 = vrot.lane.b32.xlu0 %v536, 64
    %v960 = vpop.permute.xlu0 %959
    %961 = vrot.lane.b32.xlu0 %v537, 64
    %v962 = vpop.permute.xlu0 %961
    %963 = vrot.lane.b32.xlu0 %v538, 64
    %v964 = vpop.permute.xlu0 %963
    %965 = vrot.lane.b32.xlu0 %v539, 64
    %v966 = vpop.permute.xlu0 %965
    %967 = vrot.lane.b32.xlu0 %v540, 64
    %v968 = vpop.permute.xlu0 %967
    %969 = vrot.lane.b32.xlu0 %v541, 64
    %v970 = vpop.permute.xlu0 %969
    %971 = vrot.lane.b32.xlu0 %v542, 64
    %v972 = vpop.permute.xlu0 %971
    %973 = vrot.lane.b32.xlu0 %v543, 64
    %v974 = vpop.permute.xlu0 %973
    %975 = vrot.lane.b32.xlu0 %v544, 64
    %v976 = vpop.permute.xlu0 %975
    %977 = vrot.lane.b32.xlu0 %v545, 64
    %v978 = vpop.permute.xlu0 %977
    %979 = vrot.lane.b32.xlu0 %v546, 64
    %v980 = vpop.permute.xlu0 %979
    %981 = vrot.lane.b32.xlu0 %v547, 64
    %v982 = vpop.permute.xlu0 %981
    %vm996 = vcmask 785920
    %997 = vst.msk [vmem:[#allocation2] sm:$0xff] %vm996, %v958
    %998 = vst.msk [vmem:[#allocation2 + $0x8] sm:$0xff] %vm996, %v960
    %999 = vst.msk [vmem:[#allocation2 + $0x10] sm:$0xff] %vm996, %v962
    %1000 = vst.msk [vmem:[#allocation2 + $0x18] sm:$0xff] %vm996, %v964
    %1001 = vst.msk [vmem:[#allocation2 + $0x20] sm:$0xff] %vm996, %v966
    %1002 = vst.msk [vmem:[#allocation2 + $0x28] sm:$0xff] %vm996, %v968
    %1003 = vst.msk [vmem:[#allocation2 + $0x30] sm:$0xff] %vm996, %v970
    %1004 = vst.msk [vmem:[#allocation2 + $0x38] sm:$0xff] %vm996, %v972
    %1005 = vst.msk [vmem:[#allocation2 + $0x40] sm:$0xff] %vm996, %v974
    %1006 = vst.msk [vmem:[#allocation2 + $0x48] sm:$0xff] %vm996, %v976
    %1007 = vst.msk [vmem:[#allocation2 + $0x50] sm:$0xff] %vm996, %v978
    %1008 = vst.msk [vmem:[#allocation2 + $0x58] sm:$0xff] %vm996, %v980
    %vm1009 = vcmask 781824
    %1010 = vst.msk [vmem:[#allocation2 + $0x60] sm:$0xf] %vm1009, %v982
    %1011 = vst.msk [vmem:[#allocation2 + $0x64] sm:$0xff] %vm862, %v392
    %1012 = vst.msk [vmem:[#allocation2 + $0x6c] sm:$0xff] %vm862, %v393
    %1013 = vst.msk [vmem:[#allocation2 + $0x74] sm:$0xff] %vm862, %v394
    %1014 = vst.msk [vmem:[#allocation2 + $0x7c] sm:$0xff] %vm862, %v395
    %1015 = vst.msk [vmem:[#allocation2 + $0x84] sm:$0xff] %vm862, %v396
    %1016 = vst.msk [vmem:[#allocation2 + $0x8c] sm:$0xff] %vm862, %v397
    %1017 = vst.msk [vmem:[#allocation2 + $0x94] sm:$0xff] %vm862, %v398
    %1018 = vst.msk [vmem:[#allocation2 + $0x9c] sm:$0xff] %vm862, %v399
    %1019 = vst.msk [vmem:[#allocation2 + $0xa4] sm:$0xff] %vm862, %v400
    %1020 = vst.msk [vmem:[#allocation2 + $0xac] sm:$0xff] %vm862, %v401
    %1021 = vst.msk [vmem:[#allocation2 + $0xb4] sm:$0xff] %vm862, %v402
    %1022 = vst.msk [vmem:[#allocation2 + $0xbc] sm:$0xff] %vm862, %v403
    %vm1023 = vcmask 257024
    %1024 = vst.msk [vmem:[#allocation2 + $0xc4] sm:$0xf] %vm1023, %v404
    %1025 = vrot.lane.b32.xlu0 %v535, 32
    %v1026 = vpop.permute.xlu0 %1025
    %1027 = vrot.lane.b32.xlu0 %v536, 32
    %v1028 = vpop.permute.xlu0 %1027
    %1029 = vrot.lane.b32.xlu0 %v537, 32
    %v1030 = vpop.permute.xlu0 %1029
    %1031 = vrot.lane.b32.xlu0 %v538, 32
    %v1032 = vpop.permute.xlu0 %1031
    %1033 = vrot.lane.b32.xlu0 %v539, 32
    %v1034 = vpop.permute.xlu0 %1033
    %1035 = vrot.lane.b32.xlu0 %v540, 32
    %v1036 = vpop.permute.xlu0 %1035
    %1037 = vrot.lane.b32.xlu0 %v541, 32
    %v1038 = vpop.permute.xlu0 %1037
    %1039 = vrot.lane.b32.xlu0 %v542, 32
    %v1040 = vpop.permute.xlu0 %1039
    %1041 = vrot.lane.b32.xlu0 %v543, 32
    %v1042 = vpop.permute.xlu0 %1041
    %1043 = vrot.lane.b32.xlu0 %v544, 32
    %v1044 = vpop.permute.xlu0 %1043
    %1045 = vrot.lane.b32.xlu0 %v545, 32
    %v1046 = vpop.permute.xlu0 %1045
    %1047 = vrot.lane.b32.xlu0 %v546, 32
    %v1048 = vpop.permute.xlu0 %1047
    %1049 = vrot.lane.b32.xlu0 %v547, 32
    %v1050 = vpop.permute.xlu0 %1049
    %1064 = vst.msk [vmem:[#allocation2 + $0x64] sm:$0xff] %vm929, %v1026
    %1065 = vst.msk [vmem:[#allocation2 + $0x6c] sm:$0xff] %vm929, %v1028
    %1066 = vst.msk [vmem:[#allocation2 + $0x74] sm:$0xff] %vm929, %v1030
    %1067 = vst.msk [vmem:[#allocation2 + $0x7c] sm:$0xff] %vm929, %v1032
    %1068 = vst.msk [vmem:[#allocation2 + $0x84] sm:$0xff] %vm929, %v1034
    %1069 = vst.msk [vmem:[#allocation2 + $0x8c] sm:$0xff] %vm929, %v1036
    %1070 = vst.msk [vmem:[#allocation2 + $0x94] sm:$0xff] %vm929, %v1038
    %1071 = vst.msk [vmem:[#allocation2 + $0x9c] sm:$0xff] %vm929, %v1040
    %1072 = vst.msk [vmem:[#allocation2 + $0xa4] sm:$0xff] %vm929, %v1042
    %1073 = vst.msk [vmem:[#allocation2 + $0xac] sm:$0xff] %vm929, %v1044
    %1074 = vst.msk [vmem:[#allocation2 + $0xb4] sm:$0xff] %vm929, %v1046
    %1075 = vst.msk [vmem:[#allocation2 + $0xbc] sm:$0xff] %vm929, %v1048
    %1076 = vst.msk [vmem:[#allocation2 + $0xc4] sm:$0xf] %vm942, %v1050
    %1090 = vrot.lane.b32.xlu0 %v678, 64
    %v1091 = vpop.permute.xlu0 %1090
    %1092 = vrot.lane.b32.xlu0 %v679, 64
    %v1093 = vpop.permute.xlu0 %1092
    %1094 = vrot.lane.b32.xlu0 %v680, 64
    %v1095 = vpop.permute.xlu0 %1094
    %1096 = vrot.lane.b32.xlu0 %v681, 64
    %v1097 = vpop.permute.xlu0 %1096
    %1098 = vrot.lane.b32.xlu0 %v682, 64
    %v1099 = vpop.permute.xlu0 %1098
    %1100 = vrot.lane.b32.xlu0 %v683, 64
    %v1101 = vpop.permute.xlu0 %1100
    %1102 = vrot.lane.b32.xlu0 %v684, 64
    %v1103 = vpop.permute.xlu0 %1102
    %1104 = vrot.lane.b32.xlu0 %v685, 64
    %v1105 = vpop.permute.xlu0 %1104
    %1106 = vrot.lane.b32.xlu0 %v686, 64
    %v1107 = vpop.permute.xlu0 %1106
    %1108 = vrot.lane.b32.xlu0 %v687, 64
    %v1109 = vpop.permute.xlu0 %1108
    %1110 = vrot.lane.b32.xlu0 %v688, 64
    %v1111 = vpop.permute.xlu0 %1110
    %1112 = vrot.lane.b32.xlu0 %v689, 64
    %v1113 = vpop.permute.xlu0 %1112
    %1114 = vrot.lane.b32.xlu0 %v690, 64
    %v1115 = vpop.permute.xlu0 %1114
    %1129 = vst.msk [vmem:[#allocation2 + $0x64] sm:$0xff] %vm996, %v1091
    %1130 = vst.msk [vmem:[#allocation2 + $0x6c] sm:$0xff] %vm996, %v1093
    %1131 = vst.msk [vmem:[#allocation2 + $0x74] sm:$0xff] %vm996, %v1095
    %1132 = vst.msk [vmem:[#allocation2 + $0x7c] sm:$0xff] %vm996, %v1097
    %1133 = vst.msk [vmem:[#allocation2 + $0x84] sm:$0xff] %vm996, %v1099
    %1134 = vst.msk [vmem:[#allocation2 + $0x8c] sm:$0xff] %vm996, %v1101
    %1135 = vst.msk [vmem:[#allocation2 + $0x94] sm:$0xff] %vm996, %v1103
    %1136 = vst.msk [vmem:[#allocation2 + $0x9c] sm:$0xff] %vm996, %v1105
    %1137 = vst.msk [vmem:[#allocation2 + $0xa4] sm:$0xff] %vm996, %v1107
    %1138 = vst.msk [vmem:[#allocation2 + $0xac] sm:$0xff] %vm996, %v1109
    %1139 = vst.msk [vmem:[#allocation2 + $0xb4] sm:$0xff] %vm996, %v1111
    %1140 = vst.msk [vmem:[#allocation2 + $0xbc] sm:$0xff] %vm996, %v1113
    %1141 = vst.msk [vmem:[#allocation2 + $0xc4] sm:$0xf] %vm1009, %v1115
    %1142 = vst.msk [vmem:[#allocation2 + $0xc8] sm:$0xff] %vm862, %v535
    %1143 = vst.msk [vmem:[#allocation2 + $0xd0] sm:$0xff] %vm862, %v536
    %1144 = vst.msk [vmem:[#allocation2 + $0xd8] sm:$0xff] %vm862, %v537
    %1145 = vst.msk [vmem:[#allocation2 + $0xe0] sm:$0xff] %vm862, %v538
    %1146 = vst.msk [vmem:[#allocation2 + $0xe8] sm:$0xff] %vm862, %v539
    %1147 = vst.msk [vmem:[#allocation2 + $0xf0] sm:$0xff] %vm862, %v540
    %1148 = vst.msk [vmem:[#allocation2 + $0xf8] sm:$0xff] %vm862, %v541
    %1149 = vst.msk [vmem:[#allocation2 + $0x100] sm:$0xff] %vm862, %v542
    %1150 = vst.msk [vmem:[#allocation2 + $0x108] sm:$0xff] %vm862, %v543
    %1151 = vst.msk [vmem:[#allocation2 + $0x110] sm:$0xff] %vm862, %v544
    %1152 = vst.msk [vmem:[#allocation2 + $0x118] sm:$0xff] %vm862, %v545
    %1153 = vst.msk [vmem:[#allocation2 + $0x120] sm:$0xff] %vm862, %v546
    %1154 = vst.msk [vmem:[#allocation2 + $0x128] sm:$0xf] %vm1023, %v547
    %1155 = vrot.lane.b32.xlu0 %v678, 32
    %v1156 = vpop.permute.xlu0 %1155
    %1157 = vrot.lane.b32.xlu0 %v679, 32
    %v1158 = vpop.permute.xlu0 %1157
    %1159 = vrot.lane.b32.xlu0 %v680, 32
    %v1160 = vpop.permute.xlu0 %1159
    %1161 = vrot.lane.b32.xlu0 %v681, 32
    %v1162 = vpop.permute.xlu0 %1161
    %1163 = vrot.lane.b32.xlu0 %v682, 32
    %v1164 = vpop.permute.xlu0 %1163
    %1165 = vrot.lane.b32.xlu0 %v683, 32
    %v1166 = vpop.permute.xlu0 %1165
    %1167 = vrot.lane.b32.xlu0 %v684, 32
    %v1168 = vpop.permute.xlu0 %1167
    %1169 = vrot.lane.b32.xlu0 %v685, 32
    %v1170 = vpop.permute.xlu0 %1169
    %1171 = vrot.lane.b32.xlu0 %v686, 32
    %v1172 = vpop.permute.xlu0 %1171
    %1173 = vrot.lane.b32.xlu0 %v687, 32
    %v1174 = vpop.permute.xlu0 %1173
    %1175 = vrot.lane.b32.xlu0 %v688, 32
    %v1176 = vpop.permute.xlu0 %1175
    %1177 = vrot.lane.b32.xlu0 %v689, 32
    %v1178 = vpop.permute.xlu0 %1177
    %1179 = vrot.lane.b32.xlu0 %v690, 32
    %v1180 = vpop.permute.xlu0 %1179
    %1194 = vst.msk [vmem:[#allocation2 + $0xc8] sm:$0xff] %vm929, %v1156
    %1195 = vst.msk [vmem:[#allocation2 + $0xd0] sm:$0xff] %vm929, %v1158
    %1196 = vst.msk [vmem:[#allocation2 + $0xd8] sm:$0xff] %vm929, %v1160
    %1197 = vst.msk [vmem:[#allocation2 + $0xe0] sm:$0xff] %vm929, %v1162
    %1198 = vst.msk [vmem:[#allocation2 + $0xe8] sm:$0xff] %vm929, %v1164
    %1199 = vst.msk [vmem:[#allocation2 + $0xf0] sm:$0xff] %vm929, %v1166
    %1200 = vst.msk [vmem:[#allocation2 + $0xf8] sm:$0xff] %vm929, %v1168
    %1201 = vst.msk [vmem:[#allocation2 + $0x100] sm:$0xff] %vm929, %v1170
    %1202 = vst.msk [vmem:[#allocation2 + $0x108] sm:$0xff] %vm929, %v1172
    %1203 = vst.msk [vmem:[#allocation2 + $0x110] sm:$0xff] %vm929, %v1174
    %1204 = vst.msk [vmem:[#allocation2 + $0x118] sm:$0xff] %vm929, %v1176
    %1205 = vst.msk [vmem:[#allocation2 + $0x120] sm:$0xff] %vm929, %v1178
    %1206 = vst.msk [vmem:[#allocation2 + $0x128] sm:$0xf] %vm942, %v1180
    %1220 = vrot.lane.b32.xlu0 %v847, 64
    %v1221 = vpop.permute.xlu0 %1220
    %1222 = vrot.lane.b32.xlu0 %v848, 64
    %v1223 = vpop.permute.xlu0 %1222
    %1224 = vrot.lane.b32.xlu0 %v849, 64
    %v1225 = vpop.permute.xlu0 %1224
    %1226 = vrot.lane.b32.xlu0 %v850, 64
    %v1227 = vpop.permute.xlu0 %1226
    %1228 = vrot.lane.b32.xlu0 %v851, 64
    %v1229 = vpop.permute.xlu0 %1228
    %1230 = vrot.lane.b32.xlu0 %v852, 64
    %v1231 = vpop.permute.xlu0 %1230
    %1232 = vrot.lane.b32.xlu0 %v853, 64
    %v1233 = vpop.permute.xlu0 %1232
    %1234 = vrot.lane.b32.xlu0 %v854, 64
    %v1235 = vpop.permute.xlu0 %1234
    %1236 = vrot.lane.b32.xlu0 %v855, 64
    %v1237 = vpop.permute.xlu0 %1236
    %1238 = vrot.lane.b32.xlu0 %v856, 64
    %v1239 = vpop.permute.xlu0 %1238
    %1240 = vrot.lane.b32.xlu0 %v857, 64
    %v1241 = vpop.permute.xlu0 %1240
    %1242 = vrot.lane.b32.xlu0 %v858, 64
    %v1243 = vpop.permute.xlu0 %1242
    %1244 = vrot.lane.b32.xlu0 %v859, 64
    %v1245 = vpop.permute.xlu0 %1244
    %1259 = vst.msk [vmem:[#allocation2 + $0xc8] sm:$0xff] %vm996, %v1221
    %1260 = vst.msk [vmem:[#allocation2 + $0xd0] sm:$0xff] %vm996, %v1223
    %1261 = vst.msk [vmem:[#allocation2 + $0xd8] sm:$0xff] %vm996, %v1225
    %1262 = vst.msk [vmem:[#allocation2 + $0xe0] sm:$0xff] %vm996, %v1227
    %1263 = vst.msk [vmem:[#allocation2 + $0xe8] sm:$0xff] %vm996, %v1229
    %1264 = vst.msk [vmem:[#allocation2 + $0xf0] sm:$0xff] %vm996, %v1231
    %1265 = vst.msk [vmem:[#allocation2 + $0xf8] sm:$0xff] %vm996, %v1233
    %1266 = vst.msk [vmem:[#allocation2 + $0x100] sm:$0xff] %vm996, %v1235
    %1267 = vst.msk [vmem:[#allocation2 + $0x108] sm:$0xff] %vm996, %v1237
    %1268 = vst.msk [vmem:[#allocation2 + $0x110] sm:$0xff] %vm996, %v1239
    %1269 = vst.msk [vmem:[#allocation2 + $0x118] sm:$0xff] %vm996, %v1241
    %1270 = vst.msk [vmem:[#allocation2 + $0x120] sm:$0xff] %vm996, %v1243
    %1271 = vst.msk [vmem:[#allocation2 + $0x128] sm:$0xf] %vm1009, %v1245
    %1272 = vst.msk [vmem:[#allocation2 + $0x12c] sm:$0xff] %vm862, %v678
    %1273 = vst.msk [vmem:[#allocation2 + $0x134] sm:$0xff] %vm862, %v679
    %1274 = vst.msk [vmem:[#allocation2 + $0x13c] sm:$0xff] %vm862, %v680
    %1275 = vst.msk [vmem:[#allocation2 + $0x144] sm:$0xff] %vm862, %v681
    %1276 = vst.msk [vmem:[#allocation2 + $0x14c] sm:$0xff] %vm862, %v682
    %1277 = vst.msk [vmem:[#allocation2 + $0x154] sm:$0xff] %vm862, %v683
    %1278 = vst.msk [vmem:[#allocation2 + $0x15c] sm:$0xff] %vm862, %v684
    %1279 = vst.msk [vmem:[#allocation2 + $0x164] sm:$0xff] %vm862, %v685
    %1280 = vst.msk [vmem:[#allocation2 + $0x16c] sm:$0xff] %vm862, %v686
    %1281 = vst.msk [vmem:[#allocation2 + $0x174] sm:$0xff] %vm862, %v687
    %1282 = vst.msk [vmem:[#allocation2 + $0x17c] sm:$0xff] %vm862, %v688
    %1283 = vst.msk [vmem:[#allocation2 + $0x184] sm:$0xff] %vm862, %v689
    %1284 = vst.msk [vmem:[#allocation2 + $0x18c] sm:$0xf] %vm1023, %v690
    %1285 = vrot.lane.b32.xlu0 %v847, 32
    %v1286 = vpop.permute.xlu0 %1285
    %1287 = vrot.lane.b32.xlu0 %v848, 32
    %v1288 = vpop.permute.xlu0 %1287
    %1289 = vrot.lane.b32.xlu0 %v849, 32
    %v1290 = vpop.permute.xlu0 %1289
    %1291 = vrot.lane.b32.xlu0 %v850, 32
    %v1292 = vpop.permute.xlu0 %1291
    %1293 = vrot.lane.b32.xlu0 %v851, 32
    %v1294 = vpop.permute.xlu0 %1293
    %1295 = vrot.lane.b32.xlu0 %v852, 32
    %v1296 = vpop.permute.xlu0 %1295
    %1297 = vrot.lane.b32.xlu0 %v853, 32
    %v1298 = vpop.permute.xlu0 %1297
    %1299 = vrot.lane.b32.xlu0 %v854, 32
    %v1300 = vpop.permute.xlu0 %1299
    %1301 = vrot.lane.b32.xlu0 %v855, 32
    %v1302 = vpop.permute.xlu0 %1301
    %1303 = vrot.lane.b32.xlu0 %v856, 32
    %v1304 = vpop.permute.xlu0 %1303
    %1305 = vrot.lane.b32.xlu0 %v857, 32
    %v1306 = vpop.permute.xlu0 %1305
    %1307 = vrot.lane.b32.xlu0 %v858, 32
    %v1308 = vpop.permute.xlu0 %1307
    %1309 = vrot.lane.b32.xlu0 %v859, 32
    %v1310 = vpop.permute.xlu0 %1309
    %1324 = vst.msk [vmem:[#allocation2 + $0x12c] sm:$0xff] %vm929, %v1286
    %1325 = vst.msk [vmem:[#allocation2 + $0x134] sm:$0xff] %vm929, %v1288
    %1326 = vst.msk [vmem:[#allocation2 + $0x13c] sm:$0xff] %vm929, %v1290
    %1327 = vst.msk [vmem:[#allocation2 + $0x144] sm:$0xff] %vm929, %v1292
    %1328 = vst.msk [vmem:[#allocation2 + $0x14c] sm:$0xff] %vm929, %v1294
    %1329 = vst.msk [vmem:[#allocation2 + $0x154] sm:$0xff] %vm929, %v1296
    %1330 = vst.msk [vmem:[#allocation2 + $0x15c] sm:$0xff] %vm929, %v1298
    %1331 = vst.msk [vmem:[#allocation2 + $0x164] sm:$0xff] %vm929, %v1300
    %1332 = vst.msk [vmem:[#allocation2 + $0x16c] sm:$0xff] %vm929, %v1302
    %1333 = vst.msk [vmem:[#allocation2 + $0x174] sm:$0xff] %vm929, %v1304
    %1334 = vst.msk [vmem:[#allocation2 + $0x17c] sm:$0xff] %vm929, %v1306
    %1335 = vst.msk [vmem:[#allocation2 + $0x184] sm:$0xff] %vm929, %v1308
    %1336 = vst.msk [vmem:[#allocation2 + $0x18c] sm:$0xf] %vm942, %v1310
    %1337 = vrot.lane.b32.xlu0 %v392, 64
    %v1338 = vpop.permute.xlu0 %1337
    %1339 = vrot.lane.b32.xlu0 %v393, 64
    %v1340 = vpop.permute.xlu0 %1339
    %1341 = vrot.lane.b32.xlu0 %v394, 64
    %v1342 = vpop.permute.xlu0 %1341
    %1343 = vrot.lane.b32.xlu0 %v395, 64
    %v1344 = vpop.permute.xlu0 %1343
    %1345 = vrot.lane.b32.xlu0 %v396, 64
    %v1346 = vpop.permute.xlu0 %1345
    %1347 = vrot.lane.b32.xlu0 %v397, 64
    %v1348 = vpop.permute.xlu0 %1347
    %1349 = vrot.lane.b32.xlu0 %v398, 64
    %v1350 = vpop.permute.xlu0 %1349
    %1351 = vrot.lane.b32.xlu0 %v399, 64
    %v1352 = vpop.permute.xlu0 %1351
    %1353 = vrot.lane.b32.xlu0 %v400, 64
    %v1354 = vpop.permute.xlu0 %1353
    %1355 = vrot.lane.b32.xlu0 %v401, 64
    %v1356 = vpop.permute.xlu0 %1355
    %1357 = vrot.lane.b32.xlu0 %v402, 64
    %v1358 = vpop.permute.xlu0 %1357
    %1359 = vrot.lane.b32.xlu0 %v403, 64
    %v1360 = vpop.permute.xlu0 %1359
    %1361 = vrot.lane.b32.xlu0 %v404, 64
    %v1362 = vpop.permute.xlu0 %1361
    %vm1376 = vcmask 785921
    %1377 = vst.msk [vmem:[#allocation2 + $0x12b] sm:$0xfe] %vm1376, %v1338
    %1378 = vst.msk [vmem:[#allocation2 + $0x133] sm:$0xff] %vm996, %v1340
    %1379 = vst.msk [vmem:[#allocation2 + $0x13b] sm:$0xff] %vm996, %v1342
    %1380 = vst.msk [vmem:[#allocation2 + $0x143] sm:$0xff] %vm996, %v1344
    %1381 = vst.msk [vmem:[#allocation2 + $0x14b] sm:$0xff] %vm996, %v1346
    %1382 = vst.msk [vmem:[#allocation2 + $0x153] sm:$0xff] %vm996, %v1348
    %1383 = vst.msk [vmem:[#allocation2 + $0x15b] sm:$0xff] %vm996, %v1350
    %1384 = vst.msk [vmem:[#allocation2 + $0x163] sm:$0xff] %vm996, %v1352
    %1385 = vst.msk [vmem:[#allocation2 + $0x16b] sm:$0xff] %vm996, %v1354
    %1386 = vst.msk [vmem:[#allocation2 + $0x173] sm:$0xff] %vm996, %v1356
    %1387 = vst.msk [vmem:[#allocation2 + $0x17b] sm:$0xff] %vm996, %v1358
    %1388 = vst.msk [vmem:[#allocation2 + $0x183] sm:$0xff] %vm996, %v1360
    %1389 = vst.msk [vmem:[#allocation2 + $0x18b] sm:$0xf] %vm1009, %v1362
    %vm1390 = vcmask 778752
    %1391 = vst.msk [vmem:[#allocation2 + $0x18f] sm:$0x1] %vm1390, 0.0
    %v1392 = vld [vmem:[%s0] sm:$0xff]
    %v1393 = vld [vmem:[%s0 + $0x8] sm:$0xff]
    %v1394 = vld [vmem:[%s0 + $0x10] sm:$0xff]
    %v1395 = vld [vmem:[%s0 + $0x18] sm:$0xff]
    %v1396 = vld [vmem:[%s0 + $0x20] sm:$0xff]
    %v1397 = vld [vmem:[%s0 + $0x28] sm:$0xff]
    %v1398 = vld [vmem:[%s0 + $0x30] sm:$0xff]
    %v1399 = vld [vmem:[%s0 + $0x38] sm:$0xff]
    %v1400 = vld [vmem:[%s0 + $0x40] sm:$0xff]
    %v1401 = vld [vmem:[%s0 + $0x48] sm:$0xff]
    %v1402 = vld [vmem:[%s0 + $0x50] sm:$0xff]
    %v1403 = vld [vmem:[%s0 + $0x58] sm:$0xff]
    %v1404 = vld [vmem:[%s0 + $0x60] sm:$0xf]
    %1406 = vset.pattern.permute.xlu0 7
    %1407 = vperm.xlu0 %1406, %v1392
    %v1408 = vpop.permute.xlu0 %1407
    %1411 = vset.pattern.permute.xlu0 7
    %1412 = vperm.xlu0 %1411, %v1393
    %v1413 = vpop.permute.xlu0 %1412
    %1416 = vset.pattern.permute.xlu0 7
    %1417 = vperm.xlu0 %1416, %v1394
    %v1418 = vpop.permute.xlu0 %1417
    %1421 = vset.pattern.permute.xlu0 7
    %1422 = vperm.xlu0 %1421, %v1395
    %v1423 = vpop.permute.xlu0 %1422
    %1426 = vset.pattern.permute.xlu0 7
    %1427 = vperm.xlu0 %1426, %v1396
    %v1428 = vpop.permute.xlu0 %1427
    %1431 = vset.pattern.permute.xlu0 7
    %1432 = vperm.xlu0 %1431, %v1397
    %v1433 = vpop.permute.xlu0 %1432
    %1436 = vset.pattern.permute.xlu0 7
    %1437 = vperm.xlu0 %1436, %v1398
    %v1438 = vpop.permute.xlu0 %1437
    %1441 = vset.pattern.permute.xlu0 7
    %1442 = vperm.xlu0 %1441, %v1399
    %v1443 = vpop.permute.xlu0 %1442
    %1446 = vset.pattern.permute.xlu0 7
    %1447 = vperm.xlu0 %1446, %v1400
    %v1448 = vpop.permute.xlu0 %1447
    %1451 = vset.pattern.permute.xlu0 7
    %1452 = vperm.xlu0 %1451, %v1401
    %v1453 = vpop.permute.xlu0 %1452
    %1456 = vset.pattern.permute.xlu0 7
    %1457 = vperm.xlu0 %1456, %v1402
    %v1458 = vpop.permute.xlu0 %1457
    %1461 = vset.pattern.permute.xlu0 7
    %1462 = vperm.xlu0 %1461, %v1403
    %v1463 = vpop.permute.xlu0 %1462
    %1466 = vset.pattern.permute.xlu0 7
    %1467 = vperm.xlu0 %1466, %v1404
    %v1468 = vpop.permute.xlu0 %1467
    %v1470 = vmul.f32 %v1408, %v178
    %v1471 = vmul.f32 %v1413, %v178
    %v1472 = vmul.f32 %v1418, %v178
    %v1473 = vmul.f32 %v1423, %v178
    %v1474 = vmul.f32 %v1428, %v178
    %v1475 = vmul.f32 %v1433, %v178
    %v1476 = vmul.f32 %v1438, %v178
    %v1477 = vmul.f32 %v1443, %v178
    %v1478 = vmul.f32 %v1448, %v178
    %v1479 = vmul.f32 %v1453, %v178
    %v1480 = vmul.f32 %v1458, %v178
    %v1481 = vmul.f32 %v1463, %v178
    %v1482 = vmul.f32 %v1468, %v178
    %v1483 = vld [vmem:[%s0 + $0x1] sm:$0xff]
    %v1484 = vld [vmem:[%s0 + $0x9] sm:$0xff]
    %v1485 = vld [vmem:[%s0 + $0x11] sm:$0xff]
    %v1486 = vld [vmem:[%s0 + $0x19] sm:$0xff]
    %v1487 = vld [vmem:[%s0 + $0x21] sm:$0xff]
    %v1488 = vld [vmem:[%s0 + $0x29] sm:$0xff]
    %v1489 = vld [vmem:[%s0 + $0x31] sm:$0xff]
    %v1490 = vld [vmem:[%s0 + $0x39] sm:$0xff]
    %v1491 = vld [vmem:[%s0 + $0x41] sm:$0xff]
    %v1492 = vld [vmem:[%s0 + $0x49] sm:$0xff]
    %v1493 = vld [vmem:[%s0 + $0x51] sm:$0xff]
    %v1494 = vld [vmem:[%s0 + $0x59] sm:$0xff]
    %v1495 = vld [vmem:[%s0 + $0x61] sm:$0xf]
    %1497 = vset.pattern.permute.xlu0 4
    %1498 = vperm.xlu0 %1497, %v1483
    %v1499 = vpop.permute.xlu0 %1498
    %1502 = vset.pattern.permute.xlu0 4
    %1503 = vperm.xlu0 %1502, %v1484
    %v1504 = vpop.permute.xlu0 %1503
    %1507 = vset.pattern.permute.xlu0 4
    %1508 = vperm.xlu0 %1507, %v1485
    %v1509 = vpop.permute.xlu0 %1508
    %1512 = vset.pattern.permute.xlu0 4
    %1513 = vperm.xlu0 %1512, %v1486
    %v1514 = vpop.permute.xlu0 %1513
    %1517 = vset.pattern.permute.xlu0 4
    %1518 = vperm.xlu0 %1517, %v1487
    %v1519 = vpop.permute.xlu0 %1518
    %1522 = vset.pattern.permute.xlu0 4
    %1523 = vperm.xlu0 %1522, %v1488
    %v1524 = vpop.permute.xlu0 %1523
    %1527 = vset.pattern.permute.xlu0 4
    %1528 = vperm.xlu0 %1527, %v1489
    %v1529 = vpop.permute.xlu0 %1528
    %1532 = vset.pattern.permute.xlu0 4
    %1533 = vperm.xlu0 %1532, %v1490
    %v1534 = vpop.permute.xlu0 %1533
    %1537 = vset.pattern.permute.xlu0 4
    %1538 = vperm.xlu0 %1537, %v1491
    %v1539 = vpop.permute.xlu0 %1538
    %1542 = vset.pattern.permute.xlu0 4
    %1543 = vperm.xlu0 %1542, %v1492
    %v1544 = vpop.permute.xlu0 %1543
    %1547 = vset.pattern.permute.xlu0 4
    %1548 = vperm.xlu0 %1547, %v1493
    %v1549 = vpop.permute.xlu0 %1548
    %1552 = vset.pattern.permute.xlu0 4
    %1553 = vperm.xlu0 %1552, %v1494
    %v1554 = vpop.permute.xlu0 %1553
    %1557 = vset.pattern.permute.xlu0 4
    %1558 = vperm.xlu0 %1557, %v1495
    %v1559 = vpop.permute.xlu0 %1558
    %v1561 = vmul.f32 %v1499, %v270
    %v1562 = vmul.f32 %v1504, %v270
    %v1563 = vmul.f32 %v1509, %v270
    %v1564 = vmul.f32 %v1514, %v270
    %v1565 = vmul.f32 %v1519, %v270
    %v1566 = vmul.f32 %v1524, %v270
    %v1567 = vmul.f32 %v1529, %v270
    %v1568 = vmul.f32 %v1534, %v270
    %v1569 = vmul.f32 %v1539, %v270
    %v1570 = vmul.f32 %v1544, %v270
    %v1571 = vmul.f32 %v1549, %v270
    %v1572 = vmul.f32 %v1554, %v270
    %v1573 = vmul.f32 %v1559, %v270
    %v1574 = vadd.f32 %v1470, %v1561
    %v1575 = vadd.f32 %v1471, %v1562
    %v1576 = vadd.f32 %v1472, %v1563
    %v1577 = vadd.f32 %v1473, %v1564
    %v1578 = vadd.f32 %v1474, %v1565
    %v1579 = vadd.f32 %v1475, %v1566
    %v1580 = vadd.f32 %v1476, %v1567
    %v1581 = vadd.f32 %v1477, %v1568
    %v1582 = vadd.f32 %v1478, %v1569
    %v1583 = vadd.f32 %v1479, %v1570
    %v1584 = vadd.f32 %v1480, %v1571
    %v1585 = vadd.f32 %v1481, %v1572
    %v1586 = vadd.f32 %v1482, %v1573
    %1587 = vset.pattern.permute.xlu0 5
    %1588 = vperm.xlu0 %1587, %v1483
    %v1589 = vpop.permute.xlu0 %1588
    %1591 = vset.pattern.permute.xlu0 5
    %1592 = vperm.xlu0 %1591, %v1484
    %v1593 = vpop.permute.xlu0 %1592
    %1595 = vset.pattern.permute.xlu0 5
    %1596 = vperm.xlu0 %1595, %v1485
    %v1597 = vpop.permute.xlu0 %1596
    %1599 = vset.pattern.permute.xlu0 5
    %1600 = vperm.xlu0 %1599, %v1486
    %v1601 = vpop.permute.xlu0 %1600
    %1603 = vset.pattern.permute.xlu0 5
    %1604 = vperm.xlu0 %1603, %v1487
    %v1605 = vpop.permute.xlu0 %1604
    %1607 = vset.pattern.permute.xlu0 5
    %1608 = vperm.xlu0 %1607, %v1488
    %v1609 = vpop.permute.xlu0 %1608
    %1611 = vset.pattern.permute.xlu0 5
    %1612 = vperm.xlu0 %1611, %v1489
    %v1613 = vpop.permute.xlu0 %1612
    %1615 = vset.pattern.permute.xlu0 5
    %1616 = vperm.xlu0 %1615, %v1490
    %v1617 = vpop.permute.xlu0 %1616
    %1619 = vset.pattern.permute.xlu0 5
    %1620 = vperm.xlu0 %1619, %v1491
    %v1621 = vpop.permute.xlu0 %1620
    %1623 = vset.pattern.permute.xlu0 5
    %1624 = vperm.xlu0 %1623, %v1492
    %v1625 = vpop.permute.xlu0 %1624
    %1627 = vset.pattern.permute.xlu0 5
    %1628 = vperm.xlu0 %1627, %v1493
    %v1629 = vpop.permute.xlu0 %1628
    %1631 = vset.pattern.permute.xlu0 5
    %1632 = vperm.xlu0 %1631, %v1494
    %v1633 = vpop.permute.xlu0 %1632
    %1635 = vset.pattern.permute.xlu0 5
    %1636 = vperm.xlu0 %1635, %v1495
    %v1637 = vpop.permute.xlu0 %1636
    %v1639 = vmul.f32 %v1589, %v349
    %v1640 = vmul.f32 %v1593, %v349
    %v1641 = vmul.f32 %v1597, %v349
    %v1642 = vmul.f32 %v1601, %v349
    %v1643 = vmul.f32 %v1605, %v349
    %v1644 = vmul.f32 %v1609, %v349
    %v1645 = vmul.f32 %v1613, %v349
    %v1646 = vmul.f32 %v1617, %v349
    %v1647 = vmul.f32 %v1621, %v349
    %v1648 = vmul.f32 %v1625, %v349
    %v1649 = vmul.f32 %v1629, %v349
    %v1650 = vmul.f32 %v1633, %v349
    %v1651 = vmul.f32 %v1637, %v349
    %v1652 = vadd.f32 %v1574, %v1639
    %v1653 = vadd.f32 %v1575, %v1640
    %v1654 = vadd.f32 %v1576, %v1641
    %v1655 = vadd.f32 %v1577, %v1642
    %v1656 = vadd.f32 %v1578, %v1643
    %v1657 = vadd.f32 %v1579, %v1644
    %v1658 = vadd.f32 %v1580, %v1645
    %v1659 = vadd.f32 %v1581, %v1646
    %v1660 = vadd.f32 %v1582, %v1647
    %v1661 = vadd.f32 %v1583, %v1648
    %v1662 = vadd.f32 %v1584, %v1649
    %v1663 = vadd.f32 %v1585, %v1650
    %v1664 = vadd.f32 %v1586, %v1651
    %v1665 = vadd.f32 %v1652, %v377
    %v1666 = vadd.f32 %v1653, %v377
    %v1667 = vadd.f32 %v1654, %v377
    %v1668 = vadd.f32 %v1655, %v377
    %v1669 = vadd.f32 %v1656, %v377
    %v1670 = vadd.f32 %v1657, %v377
    %v1671 = vadd.f32 %v1658, %v377
    %v1672 = vadd.f32 %v1659, %v377
    %v1673 = vadd.f32 %v1660, %v377
    %v1674 = vadd.f32 %v1661, %v377
    %v1675 = vadd.f32 %v1662, %v377
    %v1676 = vadd.f32 %v1663, %v377
    %v1677 = vadd.f32 %v1664, %v377
    %v1678 = vmax.f32 %v1665, 0.0
    %v1679 = vmax.f32 %v1666, 0.0
    %v1680 = vmax.f32 %v1667, 0.0
    %v1681 = vmax.f32 %v1668, 0.0
    %v1682 = vmax.f32 %v1669, 0.0
    %v1683 = vmax.f32 %v1670, 0.0
    %v1684 = vmax.f32 %v1671, 0.0
    %v1685 = vmax.f32 %v1672, 0.0
    %v1686 = vmax.f32 %v1673, 0.0
    %v1687 = vmax.f32 %v1674, 0.0
    %v1688 = vmax.f32 %v1675, 0.0
    %v1689 = vmax.f32 %v1676, 0.0
    %v1690 = vmax.f32 %v1677, 0.0
    %v1691 = vmul.f32 %v1499, %v178
    %v1692 = vmul.f32 %v1504, %v178
    %v1693 = vmul.f32 %v1509, %v178
    %v1694 = vmul.f32 %v1514, %v178
    %v1695 = vmul.f32 %v1519, %v178
    %v1696 = vmul.f32 %v1524, %v178
    %v1697 = vmul.f32 %v1529, %v178
    %v1698 = vmul.f32 %v1534, %v178
    %v1699 = vmul.f32 %v1539, %v178
    %v1700 = vmul.f32 %v1544, %v178
    %v1701 = vmul.f32 %v1549, %v178
    %v1702 = vmul.f32 %v1554, %v178
    %v1703 = vmul.f32 %v1559, %v178
    %v1704 = vmul.f32 %v1589, %v270
    %v1705 = vmul.f32 %v1593, %v270
    %v1706 = vmul.f32 %v1597, %v270
    %v1707 = vmul.f32 %v1601, %v270
    %v1708 = vmul.f32 %v1605, %v270
    %v1709 = vmul.f32 %v1609, %v270
    %v1710 = vmul.f32 %v1613, %v270
    %v1711 = vmul.f32 %v1617, %v270
    %v1712 = vmul.f32 %v1621, %v270
    %v1713 = vmul.f32 %v1625, %v270
    %v1714 = vmul.f32 %v1629, %v270
    %v1715 = vmul.f32 %v1633, %v270
    %v1716 = vmul.f32 %v1637, %v270
    %v1717 = vadd.f32 %v1691, %v1704
    %v1718 = vadd.f32 %v1692, %v1705
    %v1719 = vadd.f32 %v1693, %v1706
    %v1720 = vadd.f32 %v1694, %v1707
    %v1721 = vadd.f32 %v1695, %v1708
    %v1722 = vadd.f32 %v1696, %v1709
    %v1723 = vadd.f32 %v1697, %v1710
    %v1724 = vadd.f32 %v1698, %v1711
    %v1725 = vadd.f32 %v1699, %v1712
    %v1726 = vadd.f32 %v1700, %v1713
    %v1727 = vadd.f32 %v1701, %v1714
    %v1728 = vadd.f32 %v1702, %v1715
    %v1729 = vadd.f32 %v1703, %v1716
    %1730 = vset.pattern.permute.xlu0 6
    %1731 = vperm.xlu0 %1730, %v1483
    %v1732 = vpop.permute.xlu0 %1731
    %1734 = vset.pattern.permute.xlu0 6
    %1735 = vperm.xlu0 %1734, %v1484
    %v1736 = vpop.permute.xlu0 %1735
    %1738 = vset.pattern.permute.xlu0 6
    %1739 = vperm.xlu0 %1738, %v1485
    %v1740 = vpop.permute.xlu0 %1739
    %1742 = vset.pattern.permute.xlu0 6
    %1743 = vperm.xlu0 %1742, %v1486
    %v1744 = vpop.permute.xlu0 %1743
    %1746 = vset.pattern.permute.xlu0 6
    %1747 = vperm.xlu0 %1746, %v1487
    %v1748 = vpop.permute.xlu0 %1747
    %1750 = vset.pattern.permute.xlu0 6
    %1751 = vperm.xlu0 %1750, %v1488
    %v1752 = vpop.permute.xlu0 %1751
    %1754 = vset.pattern.permute.xlu0 6
    %1755 = vperm.xlu0 %1754, %v1489
    %v1756 = vpop.permute.xlu0 %1755
    %1758 = vset.pattern.permute.xlu0 6
    %1759 = vperm.xlu0 %1758, %v1490
    %v1760 = vpop.permute.xlu0 %1759
    %1762 = vset.pattern.permute.xlu0 6
    %1763 = vperm.xlu0 %1762, %v1491
    %v1764 = vpop.permute.xlu0 %1763
    %1766 = vset.pattern.permute.xlu0 6
    %1767 = vperm.xlu0 %1766, %v1492
    %v1768 = vpop.permute.xlu0 %1767
    %1770 = vset.pattern.permute.xlu0 6
    %1771 = vperm.xlu0 %1770, %v1493
    %v1772 = vpop.permute.xlu0 %1771
    %1774 = vset.pattern.permute.xlu0 6
    %1775 = vperm.xlu0 %1774, %v1494
    %v1776 = vpop.permute.xlu0 %1775
    %1778 = vset.pattern.permute.xlu0 6
    %1779 = vperm.xlu0 %1778, %v1495
    %v1780 = vpop.permute.xlu0 %1779
    %v1782 = vmul.f32 %v1732, %v349
    %v1783 = vmul.f32 %v1736, %v349
    %v1784 = vmul.f32 %v1740, %v349
    %v1785 = vmul.f32 %v1744, %v349
    %v1786 = vmul.f32 %v1748, %v349
    %v1787 = vmul.f32 %v1752, %v349
    %v1788 = vmul.f32 %v1756, %v349
    %v1789 = vmul.f32 %v1760, %v349
    %v1790 = vmul.f32 %v1764, %v349
    %v1791 = vmul.f32 %v1768, %v349
    %v1792 = vmul.f32 %v1772, %v349
    %v1793 = vmul.f32 %v1776, %v349
    %v1794 = vmul.f32 %v1780, %v349
    %v1795 = vadd.f32 %v1717, %v1782
    %v1796 = vadd.f32 %v1718, %v1783
    %v1797 = vadd.f32 %v1719, %v1784
    %v1798 = vadd.f32 %v1720, %v1785
    %v1799 = vadd.f32 %v1721, %v1786
    %v1800 = vadd.f32 %v1722, %v1787
    %v1801 = vadd.f32 %v1723, %v1788
    %v1802 = vadd.f32 %v1724, %v1789
    %v1803 = vadd.f32 %v1725, %v1790
    %v1804 = vadd.f32 %v1726, %v1791
    %v1805 = vadd.f32 %v1727, %v1792
    %v1806 = vadd.f32 %v1728, %v1793
    %v1807 = vadd.f32 %v1729, %v1794
    %v1808 = vadd.f32 %v1795, %v377
    %v1809 = vadd.f32 %v1796, %v377
    %v1810 = vadd.f32 %v1797, %v377
    %v1811 = vadd.f32 %v1798, %v377
    %v1812 = vadd.f32 %v1799, %v377
    %v1813 = vadd.f32 %v1800, %v377
    %v1814 = vadd.f32 %v1801, %v377
    %v1815 = vadd.f32 %v1802, %v377
    %v1816 = vadd.f32 %v1803, %v377
    %v1817 = vadd.f32 %v1804, %v377
    %v1818 = vadd.f32 %v1805, %v377
    %v1819 = vadd.f32 %v1806, %v377
    %v1820 = vadd.f32 %v1807, %v377
    %v1821 = vmax.f32 %v1808, 0.0
    %v1822 = vmax.f32 %v1809, 0.0
    %v1823 = vmax.f32 %v1810, 0.0
    %v1824 = vmax.f32 %v1811, 0.0
    %v1825 = vmax.f32 %v1812, 0.0
    %v1826 = vmax.f32 %v1813, 0.0
    %v1827 = vmax.f32 %v1814, 0.0
    %v1828 = vmax.f32 %v1815, 0.0
    %v1829 = vmax.f32 %v1816, 0.0
    %v1830 = vmax.f32 %v1817, 0.0
    %v1831 = vmax.f32 %v1818, 0.0
    %v1832 = vmax.f32 %v1819, 0.0
    %v1833 = vmax.f32 %v1820, 0.0
    %v1834 = vmul.f32 %v1589, %v178
    %v1835 = vmul.f32 %v1593, %v178
    %v1836 = vmul.f32 %v1597, %v178
    %v1837 = vmul.f32 %v1601, %v178
    %v1838 = vmul.f32 %v1605, %v178
    %v1839 = vmul.f32 %v1609, %v178
    %v1840 = vmul.f32 %v1613, %v178
    %v1841 = vmul.f32 %v1617, %v178
    %v1842 = vmul.f32 %v1621, %v178
    %v1843 = vmul.f32 %v1625, %v178
    %v1844 = vmul.f32 %v1629, %v178
    %v1845 = vmul.f32 %v1633, %v178
    %v1846 = vmul.f32 %v1637, %v178
    %v1847 = vmul.f32 %v1732, %v270
    %v1848 = vmul.f32 %v1736, %v270
    %v1849 = vmul.f32 %v1740, %v270
    %v1850 = vmul.f32 %v1744, %v270
    %v1851 = vmul.f32 %v1748, %v270
    %v1852 = vmul.f32 %v1752, %v270
    %v1853 = vmul.f32 %v1756, %v270
    %v1854 = vmul.f32 %v1760, %v270
    %v1855 = vmul.f32 %v1764, %v270
    %v1856 = vmul.f32 %v1768, %v270
    %v1857 = vmul.f32 %v1772, %v270
    %v1858 = vmul.f32 %v1776, %v270
    %v1859 = vmul.f32 %v1780, %v270
    %v1860 = vadd.f32 %v1834, %v1847
    %v1861 = vadd.f32 %v1835, %v1848
    %v1862 = vadd.f32 %v1836, %v1849
    %v1863 = vadd.f32 %v1837, %v1850
    %v1864 = vadd.f32 %v1838, %v1851
    %v1865 = vadd.f32 %v1839, %v1852
    %v1866 = vadd.f32 %v1840, %v1853
    %v1867 = vadd.f32 %v1841, %v1854
    %v1868 = vadd.f32 %v1842, %v1855
    %v1869 = vadd.f32 %v1843, %v1856
    %v1870 = vadd.f32 %v1844, %v1857
    %v1871 = vadd.f32 %v1845, %v1858
    %v1872 = vadd.f32 %v1846, %v1859
    %1873 = vset.pattern.permute.xlu0 7
    %1874 = vperm.xlu0 %1873, %v1483
    %v1875 = vpop.permute.xlu0 %1874
    %1877 = vset.pattern.permute.xlu0 7
    %1878 = vperm.xlu0 %1877, %v1484
    %v1879 = vpop.permute.xlu0 %1878
    %1881 = vset.pattern.permute.xlu0 7
    %1882 = vperm.xlu0 %1881, %v1485
    %v1883 = vpop.permute.xlu0 %1882
    %1885 = vset.pattern.permute.xlu0 7
    %1886 = vperm.xlu0 %1885, %v1486
    %v1887 = vpop.permute.xlu0 %1886
    %1889 = vset.pattern.permute.xlu0 7
    %1890 = vperm.xlu0 %1889, %v1487
    %v1891 = vpop.permute.xlu0 %1890
    %1893 = vset.pattern.permute.xlu0 7
    %1894 = vperm.xlu0 %1893, %v1488
    %v1895 = vpop.permute.xlu0 %1894
    %1897 = vset.pattern.permute.xlu0 7
    %1898 = vperm.xlu0 %1897, %v1489
    %v1899 = vpop.permute.xlu0 %1898
    %1901 = vset.pattern.permute.xlu0 7
    %1902 = vperm.xlu0 %1901, %v1490
    %v1903 = vpop.permute.xlu0 %1902
    %1905 = vset.pattern.permute.xlu0 7
    %1906 = vperm.xlu0 %1905, %v1491
    %v1907 = vpop.permute.xlu0 %1906
    %1909 = vset.pattern.permute.xlu0 7
    %1910 = vperm.xlu0 %1909, %v1492
    %v1911 = vpop.permute.xlu0 %1910
    %1913 = vset.pattern.permute.xlu0 7
    %1914 = vperm.xlu0 %1913, %v1493
    %v1915 = vpop.permute.xlu0 %1914
    %1917 = vset.pattern.permute.xlu0 7
    %1918 = vperm.xlu0 %1917, %v1494
    %v1919 = vpop.permute.xlu0 %1918
    %1921 = vset.pattern.permute.xlu0 7
    %1922 = vperm.xlu0 %1921, %v1495
    %v1923 = vpop.permute.xlu0 %1922
    %v1925 = vmul.f32 %v1875, %v349
    %v1926 = vmul.f32 %v1879, %v349
    %v1927 = vmul.f32 %v1883, %v349
    %v1928 = vmul.f32 %v1887, %v349
    %v1929 = vmul.f32 %v1891, %v349
    %v1930 = vmul.f32 %v1895, %v349
    %v1931 = vmul.f32 %v1899, %v349
    %v1932 = vmul.f32 %v1903, %v349
    %v1933 = vmul.f32 %v1907, %v349
    %v1934 = vmul.f32 %v1911, %v349
    %v1935 = vmul.f32 %v1915, %v349
    %v1936 = vmul.f32 %v1919, %v349
    %v1937 = vmul.f32 %v1923, %v349
    %v1938 = vadd.f32 %v1860, %v1925
    %v1939 = vadd.f32 %v1861, %v1926
    %v1940 = vadd.f32 %v1862, %v1927
    %v1941 = vadd.f32 %v1863, %v1928
    %v1942 = vadd.f32 %v1864, %v1929
    %v1943 = vadd.f32 %v1865, %v1930
    %v1944 = vadd.f32 %v1866, %v1931
    %v1945 = vadd.f32 %v1867, %v1932
    %v1946 = vadd.f32 %v1868, %v1933
    %v1947 = vadd.f32 %v1869, %v1934
    %v1948 = vadd.f32 %v1870, %v1935
    %v1949 = vadd.f32 %v1871, %v1936
    %v1950 = vadd.f32 %v1872, %v1937
    %v1951 = vadd.f32 %v1938, %v377
    %v1952 = vadd.f32 %v1939, %v377
    %v1953 = vadd.f32 %v1940, %v377
    %v1954 = vadd.f32 %v1941, %v377
    %v1955 = vadd.f32 %v1942, %v377
    %v1956 = vadd.f32 %v1943, %v377
    %v1957 = vadd.f32 %v1944, %v377
    %v1958 = vadd.f32 %v1945, %v377
    %v1959 = vadd.f32 %v1946, %v377
    %v1960 = vadd.f32 %v1947, %v377
    %v1961 = vadd.f32 %v1948, %v377
    %v1962 = vadd.f32 %v1949, %v377
    %v1963 = vadd.f32 %v1950, %v377
    %v1964 = vmax.f32 %v1951, 0.0
    %v1965 = vmax.f32 %v1952, 0.0
    %v1966 = vmax.f32 %v1953, 0.0
    %v1967 = vmax.f32 %v1954, 0.0
    %v1968 = vmax.f32 %v1955, 0.0
    %v1969 = vmax.f32 %v1956, 0.0
    %v1970 = vmax.f32 %v1957, 0.0
    %v1971 = vmax.f32 %v1958, 0.0
    %v1972 = vmax.f32 %v1959, 0.0
    %v1973 = vmax.f32 %v1960, 0.0
    %v1974 = vmax.f32 %v1961, 0.0
    %v1975 = vmax.f32 %v1962, 0.0
    %v1976 = vmax.f32 %v1963, 0.0
    %v1977 = vmul.f32 %v1732, %v178
    %v1978 = vmul.f32 %v1736, %v178
    %v1979 = vmul.f32 %v1740, %v178
    %v1980 = vmul.f32 %v1744, %v178
    %v1981 = vmul.f32 %v1748, %v178
    %v1982 = vmul.f32 %v1752, %v178
    %v1983 = vmul.f32 %v1756, %v178
    %v1984 = vmul.f32 %v1760, %v178
    %v1985 = vmul.f32 %v1764, %v178
    %v1986 = vmul.f32 %v1768, %v178
    %v1987 = vmul.f32 %v1772, %v178
    %v1988 = vmul.f32 %v1776, %v178
    %v1989 = vmul.f32 %v1780, %v178
    %v1990 = vmul.f32 %v1875, %v270
    %v1991 = vmul.f32 %v1879, %v270
    %v1992 = vmul.f32 %v1883, %v270
    %v1993 = vmul.f32 %v1887, %v270
    %v1994 = vmul.f32 %v1891, %v270
    %v1995 = vmul.f32 %v1895, %v270
    %v1996 = vmul.f32 %v1899, %v270
    %v1997 = vmul.f32 %v1903, %v270
    %v1998 = vmul.f32 %v1907, %v270
    %v1999 = vmul.f32 %v1911, %v270
    %v2000 = vmul.f32 %v1915, %v270
    %v2001 = vmul.f32 %v1919, %v270
    %v2002 = vmul.f32 %v1923, %v270
    %v2003 = vadd.f32 %v1977, %v1990
    %v2004 = vadd.f32 %v1978, %v1991
    %v2005 = vadd.f32 %v1979, %v1992
    %v2006 = vadd.f32 %v1980, %v1993
    %v2007 = vadd.f32 %v1981, %v1994
    %v2008 = vadd.f32 %v1982, %v1995
    %v2009 = vadd.f32 %v1983, %v1996
    %v2010 = vadd.f32 %v1984, %v1997
    %v2011 = vadd.f32 %v1985, %v1998
    %v2012 = vadd.f32 %v1986, %v1999
    %v2013 = vadd.f32 %v1987, %v2000
    %v2014 = vadd.f32 %v1988, %v2001
    %v2015 = vadd.f32 %v1989, %v2002
    %v2016 = vld [vmem:[%s0 + $0x2] sm:$0xff]
    %v2017 = vld [vmem:[%s0 + $0xa] sm:$0xff]
    %v2018 = vld [vmem:[%s0 + $0x12] sm:$0xff]
    %v2019 = vld [vmem:[%s0 + $0x1a] sm:$0xff]
    %v2020 = vld [vmem:[%s0 + $0x22] sm:$0xff]
    %v2021 = vld [vmem:[%s0 + $0x2a] sm:$0xff]
    %v2022 = vld [vmem:[%s0 + $0x32] sm:$0xff]
    %v2023 = vld [vmem:[%s0 + $0x3a] sm:$0xff]
    %v2024 = vld [vmem:[%s0 + $0x42] sm:$0xff]
    %v2025 = vld [vmem:[%s0 + $0x4a] sm:$0xff]
    %v2026 = vld [vmem:[%s0 + $0x52] sm:$0xff]
    %v2027 = vld [vmem:[%s0 + $0x5a] sm:$0xff]
    %v2028 = vld [vmem:[%s0 + $0x62] sm:$0xf]
    %2030 = vset.pattern.permute.xlu0 4
    %2031 = vperm.xlu0 %2030, %v2016
    %v2032 = vpop.permute.xlu0 %2031
    %2035 = vset.pattern.permute.xlu0 4
    %2036 = vperm.xlu0 %2035, %v2017
    %v2037 = vpop.permute.xlu0 %2036
    %2040 = vset.pattern.permute.xlu0 4
    %2041 = vperm.xlu0 %2040, %v2018
    %v2042 = vpop.permute.xlu0 %2041
    %2045 = vset.pattern.permute.xlu0 4
    %2046 = vperm.xlu0 %2045, %v2019
    %v2047 = vpop.permute.xlu0 %2046
    %2050 = vset.pattern.permute.xlu0 4
    %2051 = vperm.xlu0 %2050, %v2020
    %v2052 = vpop.permute.xlu0 %2051
    %2055 = vset.pattern.permute.xlu0 4
    %2056 = vperm.xlu0 %2055, %v2021
    %v2057 = vpop.permute.xlu0 %2056
    %2060 = vset.pattern.permute.xlu0 4
    %2061 = vperm.xlu0 %2060, %v2022
    %v2062 = vpop.permute.xlu0 %2061
    %2065 = vset.pattern.permute.xlu0 4
    %2066 = vperm.xlu0 %2065, %v2023
    %v2067 = vpop.permute.xlu0 %2066
    %2070 = vset.pattern.permute.xlu0 4
    %2071 = vperm.xlu0 %2070, %v2024
    %v2072 = vpop.permute.xlu0 %2071
    %2075 = vset.pattern.permute.xlu0 4
    %2076 = vperm.xlu0 %2075, %v2025
    %v2077 = vpop.permute.xlu0 %2076
    %2080 = vset.pattern.permute.xlu0 4
    %2081 = vperm.xlu0 %2080, %v2026
    %v2082 = vpop.permute.xlu0 %2081
    %2085 = vset.pattern.permute.xlu0 4
    %2086 = vperm.xlu0 %2085, %v2027
    %v2087 = vpop.permute.xlu0 %2086
    %2090 = vset.pattern.permute.xlu0 4
    %2091 = vperm.xlu0 %2090, %v2028
    %v2092 = vpop.permute.xlu0 %2091
    %v2094 = vmul.f32 %v2032, %v349
    %v2095 = vmul.f32 %v2037, %v349
    %v2096 = vmul.f32 %v2042, %v349
    %v2097 = vmul.f32 %v2047, %v349
    %v2098 = vmul.f32 %v2052, %v349
    %v2099 = vmul.f32 %v2057, %v349
    %v2100 = vmul.f32 %v2062, %v349
    %v2101 = vmul.f32 %v2067, %v349
    %v2102 = vmul.f32 %v2072, %v349
    %v2103 = vmul.f32 %v2077, %v349
    %v2104 = vmul.f32 %v2082, %v349
    %v2105 = vmul.f32 %v2087, %v349
    %v2106 = vmul.f32 %v2092, %v349
    %v2107 = vadd.f32 %v2003, %v2094
    %v2108 = vadd.f32 %v2004, %v2095
    %v2109 = vadd.f32 %v2005, %v2096
    %v2110 = vadd.f32 %v2006, %v2097
    %v2111 = vadd.f32 %v2007, %v2098
    %v2112 = vadd.f32 %v2008, %v2099
    %v2113 = vadd.f32 %v2009, %v2100
    %v2114 = vadd.f32 %v2010, %v2101
    %v2115 = vadd.f32 %v2011, %v2102
    %v2116 = vadd.f32 %v2012, %v2103
    %v2117 = vadd.f32 %v2013, %v2104
    %v2118 = vadd.f32 %v2014, %v2105
    %v2119 = vadd.f32 %v2015, %v2106
    %v2120 = vadd.f32 %v2107, %v377
    %v2121 = vadd.f32 %v2108, %v377
    %v2122 = vadd.f32 %v2109, %v377
    %v2123 = vadd.f32 %v2110, %v377
    %v2124 = vadd.f32 %v2111, %v377
    %v2125 = vadd.f32 %v2112, %v377
    %v2126 = vadd.f32 %v2113, %v377
    %v2127 = vadd.f32 %v2114, %v377
    %v2128 = vadd.f32 %v2115, %v377
    %v2129 = vadd.f32 %v2116, %v377
    %v2130 = vadd.f32 %v2117, %v377
    %v2131 = vadd.f32 %v2118, %v377
    %v2132 = vadd.f32 %v2119, %v377
    %v2133 = vmax.f32 %v2120, 0.0
    %v2134 = vmax.f32 %v2121, 0.0
    %v2135 = vmax.f32 %v2122, 0.0
    %v2136 = vmax.f32 %v2123, 0.0
    %v2137 = vmax.f32 %v2124, 0.0
    %v2138 = vmax.f32 %v2125, 0.0
    %v2139 = vmax.f32 %v2126, 0.0
    %v2140 = vmax.f32 %v2127, 0.0
    %v2141 = vmax.f32 %v2128, 0.0
    %v2142 = vmax.f32 %v2129, 0.0
    %v2143 = vmax.f32 %v2130, 0.0
    %v2144 = vmax.f32 %v2131, 0.0
    %v2145 = vmax.f32 %v2132, 0.0
    %2146 = vst.msk [vmem:[#allocation2 + $0x190] sm:$0x1] %vm860, 0.0
    %2147 = vst.msk [vmem:[#allocation2 + $0x191] sm:$0xff] %vm862, %v2133
    %2148 = vst.msk [vmem:[#allocation2 + $0x199] sm:$0xff] %vm862, %v2134
    %2149 = vst.msk [vmem:[#allocation2 + $0x1a1] sm:$0xff] %vm862, %v2135
    %2150 = vst.msk [vmem:[#allocation2 + $0x1a9] sm:$0xff] %vm862, %v2136
    %2151 = vst.msk [vmem:[#allocation2 + $0x1b1] sm:$0xff] %vm862, %v2137
    %2152 = vst.msk [vmem:[#allocation2 + $0x1b9] sm:$0xff] %vm862, %v2138
    %2153 = vst.msk [vmem:[#allocation2 + $0x1c1] sm:$0xff] %vm862, %v2139
    %2154 = vst.msk [vmem:[#allocation2 + $0x1c9] sm:$0xff] %vm862, %v2140
    %2155 = vst.msk [vmem:[#allocation2 + $0x1d1] sm:$0xff] %vm862, %v2141
    %2156 = vst.msk [vmem:[#allocation2 + $0x1d9] sm:$0xff] %vm862, %v2142
    %2157 = vst.msk [vmem:[#allocation2 + $0x1e1] sm:$0xff] %vm862, %v2143
    %2158 = vst.msk [vmem:[#allocation2 + $0x1e9] sm:$0xff] %vm862, %v2144
    %2159 = vst.msk [vmem:[#allocation2 + $0x1f1] sm:$0x7] %vm875, %v2145
    %2173 = vrot.lane.b32.xlu0 %v1678, 32
    %v2174 = vpop.permute.xlu0 %2173
    %2175 = vrot.lane.b32.xlu0 %v1679, 32
    %v2176 = vpop.permute.xlu0 %2175
    %2177 = vrot.lane.b32.xlu0 %v1680, 32
    %v2178 = vpop.permute.xlu0 %2177
    %2179 = vrot.lane.b32.xlu0 %v1681, 32
    %v2180 = vpop.permute.xlu0 %2179
    %2181 = vrot.lane.b32.xlu0 %v1682, 32
    %v2182 = vpop.permute.xlu0 %2181
    %2183 = vrot.lane.b32.xlu0 %v1683, 32
    %v2184 = vpop.permute.xlu0 %2183
    %2185 = vrot.lane.b32.xlu0 %v1684, 32
    %v2186 = vpop.permute.xlu0 %2185
    %2187 = vrot.lane.b32.xlu0 %v1685, 32
    %v2188 = vpop.permute.xlu0 %2187
    %2189 = vrot.lane.b32.xlu0 %v1686, 32
    %v2190 = vpop.permute.xlu0 %2189
    %2191 = vrot.lane.b32.xlu0 %v1687, 32
    %v2192 = vpop.permute.xlu0 %2191
    %2193 = vrot.lane.b32.xlu0 %v1688, 32
    %v2194 = vpop.permute.xlu0 %2193
    %2195 = vrot.lane.b32.xlu0 %v1689, 32
    %v2196 = vpop.permute.xlu0 %2195
    %2197 = vrot.lane.b32.xlu0 %v1690, 32
    %v2198 = vpop.permute.xlu0 %2197
    %2212 = vst.msk [vmem:[#allocation2 + $0x190] sm:$0xff] %vm929, %v2174
    %2213 = vst.msk [vmem:[#allocation2 + $0x198] sm:$0xff] %vm929, %v2176
    %2214 = vst.msk [vmem:[#allocation2 + $0x1a0] sm:$0xff] %vm929, %v2178
    %2215 = vst.msk [vmem:[#allocation2 + $0x1a8] sm:$0xff] %vm929, %v2180
    %2216 = vst.msk [vmem:[#allocation2 + $0x1b0] sm:$0xff] %vm929, %v2182
    %2217 = vst.msk [vmem:[#allocation2 + $0x1b8] sm:$0xff] %vm929, %v2184
    %2218 = vst.msk [vmem:[#allocation2 + $0x1c0] sm:$0xff] %vm929, %v2186
    %2219 = vst.msk [vmem:[#allocation2 + $0x1c8] sm:$0xff] %vm929, %v2188
    %2220 = vst.msk [vmem:[#allocation2 + $0x1d0] sm:$0xff] %vm929, %v2190
    %2221 = vst.msk [vmem:[#allocation2 + $0x1d8] sm:$0xff] %vm929, %v2192
    %2222 = vst.msk [vmem:[#allocation2 + $0x1e0] sm:$0xff] %vm929, %v2194
    %2223 = vst.msk [vmem:[#allocation2 + $0x1e8] sm:$0xff] %vm929, %v2196
    %2224 = vst.msk [vmem:[#allocation2 + $0x1f0] sm:$0xf] %vm942, %v2198
    %2238 = vrot.lane.b32.xlu0 %v1821, 64
    %v2239 = vpop.permute.xlu0 %2238
    %2240 = vrot.lane.b32.xlu0 %v1822, 64
    %v2241 = vpop.permute.xlu0 %2240
    %2242 = vrot.lane.b32.xlu0 %v1823, 64
    %v2243 = vpop.permute.xlu0 %2242
    %2244 = vrot.lane.b32.xlu0 %v1824, 64
    %v2245 = vpop.permute.xlu0 %2244
    %2246 = vrot.lane.b32.xlu0 %v1825, 64
    %v2247 = vpop.permute.xlu0 %2246
    %2248 = vrot.lane.b32.xlu0 %v1826, 64
    %v2249 = vpop.permute.xlu0 %2248
    %2250 = vrot.lane.b32.xlu0 %v1827, 64
    %v2251 = vpop.permute.xlu0 %2250
    %2252 = vrot.lane.b32.xlu0 %v1828, 64
    %v2253 = vpop.permute.xlu0 %2252
    %2254 = vrot.lane.b32.xlu0 %v1829, 64
    %v2255 = vpop.permute.xlu0 %2254
    %2256 = vrot.lane.b32.xlu0 %v1830, 64
    %v2257 = vpop.permute.xlu0 %2256
    %2258 = vrot.lane.b32.xlu0 %v1831, 64
    %v2259 = vpop.permute.xlu0 %2258
    %2260 = vrot.lane.b32.xlu0 %v1832, 64
    %v2261 = vpop.permute.xlu0 %2260
    %2262 = vrot.lane.b32.xlu0 %v1833, 64
    %v2263 = vpop.permute.xlu0 %2262
    %2277 = vst.msk [vmem:[#allocation2 + $0x190] sm:$0xff] %vm996, %v2239
    %2278 = vst.msk [vmem:[#allocation2 + $0x198] sm:$0xff] %vm996, %v2241
    %2279 = vst.msk [vmem:[#allocation2 + $0x1a0] sm:$0xff] %vm996, %v2243
    %2280 = vst.msk [vmem:[#allocation2 + $0x1a8] sm:$0xff] %vm996, %v2245
    %2281 = vst.msk [vmem:[#allocation2 + $0x1b0] sm:$0xff] %vm996, %v2247
    %2282 = vst.msk [vmem:[#allocation2 + $0x1b8] sm:$0xff] %vm996, %v2249
    %2283 = vst.msk [vmem:[#allocation2 + $0x1c0] sm:$0xff] %vm996, %v2251
    %2284 = vst.msk [vmem:[#allocation2 + $0x1c8] sm:$0xff] %vm996, %v2253
    %2285 = vst.msk [vmem:[#allocation2 + $0x1d0] sm:$0xff] %vm996, %v2255
    %2286 = vst.msk [vmem:[#allocation2 + $0x1d8] sm:$0xff] %vm996, %v2257
    %2287 = vst.msk [vmem:[#allocation2 + $0x1e0] sm:$0xff] %vm996, %v2259
    %2288 = vst.msk [vmem:[#allocation2 + $0x1e8] sm:$0xff] %vm996, %v2261
    %2289 = vst.msk [vmem:[#allocation2 + $0x1f0] sm:$0xf] %vm1009, %v2263
    %2290 = vst.msk [vmem:[#allocation2 + $0x1f4] sm:$0xff] %vm862, %v1678
    %2291 = vst.msk [vmem:[#allocation2 + $0x1fc] sm:$0xff] %vm862, %v1679
    %2292 = vst.msk [vmem:[#allocation2 + $0x204] sm:$0xff] %vm862, %v1680
    %2293 = vst.msk [vmem:[#allocation2 + $0x20c] sm:$0xff] %vm862, %v1681
    %2294 = vst.msk [vmem:[#allocation2 + $0x214] sm:$0xff] %vm862, %v1682
    %2295 = vst.msk [vmem:[#allocation2 + $0x21c] sm:$0xff] %vm862, %v1683
    %2296 = vst.msk [vmem:[#allocation2 + $0x224] sm:$0xff] %vm862, %v1684
    %2297 = vst.msk [vmem:[#allocation2 + $0x22c] sm:$0xff] %vm862, %v1685
    %2298 = vst.msk [vmem:[#allocation2 + $0x234] sm:$0xff] %vm862, %v1686
    %2299 = vst.msk [vmem:[#allocation2 + $0x23c] sm:$0xff] %vm862, %v1687
    %2300 = vst.msk [vmem:[#allocation2 + $0x244] sm:$0xff] %vm862, %v1688
    %2301 = vst.msk [vmem:[#allocation2 + $0x24c] sm:$0xff] %vm862, %v1689
    %2302 = vst.msk [vmem:[#allocation2 + $0x254] sm:$0xf] %vm1023, %v1690
    %2303 = vrot.lane.b32.xlu0 %v1821, 32
    %v2304 = vpop.permute.xlu0 %2303
    %2305 = vrot.lane.b32.xlu0 %v1822, 32
    %v2306 = vpop.permute.xlu0 %2305
    %2307 = vrot.lane.b32.xlu0 %v1823, 32
    %v2308 = vpop.permute.xlu0 %2307
    %2309 = vrot.lane.b32.xlu0 %v1824, 32
    %v2310 = vpop.permute.xlu0 %2309
    %2311 = vrot.lane.b32.xlu0 %v1825, 32
    %v2312 = vpop.permute.xlu0 %2311
    %2313 = vrot.lane.b32.xlu0 %v1826, 32
    %v2314 = vpop.permute.xlu0 %2313
    %2315 = vrot.lane.b32.xlu0 %v1827, 32
    %v2316 = vpop.permute.xlu0 %2315
    %2317 = vrot.lane.b32.xlu0 %v1828, 32
    %v2318 = vpop.permute.xlu0 %2317
    %2319 = vrot.lane.b32.xlu0 %v1829, 32
    %v2320 = vpop.permute.xlu0 %2319
    %2321 = vrot.lane.b32.xlu0 %v1830, 32
    %v2322 = vpop.permute.xlu0 %2321
    %2323 = vrot.lane.b32.xlu0 %v1831, 32
    %v2324 = vpop.permute.xlu0 %2323
    %2325 = vrot.lane.b32.xlu0 %v1832, 32
    %v2326 = vpop.permute.xlu0 %2325
    %2327 = vrot.lane.b32.xlu0 %v1833, 32
    %v2328 = vpop.permute.xlu0 %2327
    %2342 = vst.msk [vmem:[#allocation2 + $0x1f4] sm:$0xff] %vm929, %v2304
    %2343 = vst.msk [vmem:[#allocation2 + $0x1fc] sm:$0xff] %vm929, %v2306
    %2344 = vst.msk [vmem:[#allocation2 + $0x204] sm:$0xff] %vm929, %v2308
    %2345 = vst.msk [vmem:[#allocation2 + $0x20c] sm:$0xff] %vm929, %v2310
    %2346 = vst.msk [vmem:[#allocation2 + $0x214] sm:$0xff] %vm929, %v2312
    %2347 = vst.msk [vmem:[#allocation2 + $0x21c] sm:$0xff] %vm929, %v2314
    %2348 = vst.msk [vmem:[#allocation2 + $0x224] sm:$0xff] %vm929, %v2316
    %2349 = vst.msk [vmem:[#allocation2 + $0x22c] sm:$0xff] %vm929, %v2318
    %2350 = vst.msk [vmem:[#allocation2 + $0x234] sm:$0xff] %vm929, %v2320
    %2351 = vst.msk [vmem:[#allocation2 + $0x23c] sm:$0xff] %vm929, %v2322
    %2352 = vst.msk [vmem:[#allocation2 + $0x244] sm:$0xff] %vm929, %v2324
    %2353 = vst.msk [vmem:[#allocation2 + $0x24c] sm:$0xff] %vm929, %v2326
    %2354 = vst.msk [vmem:[#allocation2 + $0x254] sm:$0xf] %vm942, %v2328
    %2368 = vrot.lane.b32.xlu0 %v1964, 64
    %v2369 = vpop.permute.xlu0 %2368
    %2370 = vrot.lane.b32.xlu0 %v1965, 64
    %v2371 = vpop.permute.xlu0 %2370
    %2372 = vrot.lane.b32.xlu0 %v1966, 64
    %v2373 = vpop.permute.xlu0 %2372
    %2374 = vrot.lane.b32.xlu0 %v1967, 64
    %v2375 = vpop.permute.xlu0 %2374
    %2376 = vrot.lane.b32.xlu0 %v1968, 64
    %v2377 = vpop.permute.xlu0 %2376
    %2378 = vrot.lane.b32.xlu0 %v1969, 64
    %v2379 = vpop.permute.xlu0 %2378
    %2380 = vrot.lane.b32.xlu0 %v1970, 64
    %v2381 = vpop.permute.xlu0 %2380
    %2382 = vrot.lane.b32.xlu0 %v1971, 64
    %v2383 = vpop.permute.xlu0 %2382
    %2384 = vrot.lane.b32.xlu0 %v1972, 64
    %v2385 = vpop.permute.xlu0 %2384
    %2386 = vrot.lane.b32.xlu0 %v1973, 64
    %v2387 = vpop.permute.xlu0 %2386
    %2388 = vrot.lane.b32.xlu0 %v1974, 64
    %v2389 = vpop.permute.xlu0 %2388
    %2390 = vrot.lane.b32.xlu0 %v1975, 64
    %v2391 = vpop.permute.xlu0 %2390
    %2392 = vrot.lane.b32.xlu0 %v1976, 64
    %v2393 = vpop.permute.xlu0 %2392
    %2407 = vst.msk [vmem:[#allocation2 + $0x1f4] sm:$0xff] %vm996, %v2369
    %2408 = vst.msk [vmem:[#allocation2 + $0x1fc] sm:$0xff] %vm996, %v2371
    %2409 = vst.msk [vmem:[#allocation2 + $0x204] sm:$0xff] %vm996, %v2373
    %2410 = vst.msk [vmem:[#allocation2 + $0x20c] sm:$0xff] %vm996, %v2375
    %2411 = vst.msk [vmem:[#allocation2 + $0x214] sm:$0xff] %vm996, %v2377
    %2412 = vst.msk [vmem:[#allocation2 + $0x21c] sm:$0xff] %vm996, %v2379
    %2413 = vst.msk [vmem:[#allocation2 + $0x224] sm:$0xff] %vm996, %v2381
    %2414 = vst.msk [vmem:[#allocation2 + $0x22c] sm:$0xff] %vm996, %v2383
    %2415 = vst.msk [vmem:[#allocation2 + $0x234] sm:$0xff] %vm996, %v2385
    %2416 = vst.msk [vmem:[#allocation2 + $0x23c] sm:$0xff] %vm996, %v2387
    %2417 = vst.msk [vmem:[#allocation2 + $0x244] sm:$0xff] %vm996, %v2389
    %2418 = vst.msk [vmem:[#allocation2 + $0x24c] sm:$0xff] %vm996, %v2391
    %2419 = vst.msk [vmem:[#allocation2 + $0x254] sm:$0xf] %vm1009, %v2393
    %2420 = vst.msk [vmem:[#allocation2 + $0x258] sm:$0xff] %vm862, %v1821
    %2421 = vst.msk [vmem:[#allocation2 + $0x260] sm:$0xff] %vm862, %v1822
    %2422 = vst.msk [vmem:[#allocation2 + $0x268] sm:$0xff] %vm862, %v1823
    %2423 = vst.msk [vmem:[#allocation2 + $0x270] sm:$0xff] %vm862, %v1824
    %2424 = vst.msk [vmem:[#allocation2 + $0x278] sm:$0xff] %vm862, %v1825
    %2425 = vst.msk [vmem:[#allocation2 + $0x280] sm:$0xff] %vm862, %v1826
    %2426 = vst.msk [vmem:[#allocation2 + $0x288] sm:$0xff] %vm862, %v1827
    %2427 = vst.msk [vmem:[#allocation2 + $0x290] sm:$0xff] %vm862, %v1828
    %2428 = vst.msk [vmem:[#allocation2 + $0x298] sm:$0xff] %vm862, %v1829
    %2429 = vst.msk [vmem:[#allocation2 + $0x2a0] sm:$0xff] %vm862, %v1830
    %2430 = vst.msk [vmem:[#allocation2 + $0x2a8] sm:$0xff] %vm862, %v1831
    %2431 = vst.msk [vmem:[#allocation2 + $0x2b0] sm:$0xff] %vm862, %v1832
    %2432 = vst.msk [vmem:[#allocation2 + $0x2b8] sm:$0xf] %vm1023, %v1833
    %2433 = vrot.lane.b32.xlu0 %v1964, 32
    %v2434 = vpop.permute.xlu0 %2433
    %2435 = vrot.lane.b32.xlu0 %v1965, 32
    %v2436 = vpop.permute.xlu0 %2435
    %2437 = vrot.lane.b32.xlu0 %v1966, 32
    %v2438 = vpop.permute.xlu0 %2437
    %2439 = vrot.lane.b32.xlu0 %v1967, 32
    %v2440 = vpop.permute.xlu0 %2439
    %2441 = vrot.lane.b32.xlu0 %v1968, 32
    %v2442 = vpop.permute.xlu0 %2441
    %2443 = vrot.lane.b32.xlu0 %v1969, 32
    %v2444 = vpop.permute.xlu0 %2443
    %2445 = vrot.lane.b32.xlu0 %v1970, 32
    %v2446 = vpop.permute.xlu0 %2445
    %2447 = vrot.lane.b32.xlu0 %v1971, 32
    %v2448 = vpop.permute.xlu0 %2447
    %2449 = vrot.lane.b32.xlu0 %v1972, 32
    %v2450 = vpop.permute.xlu0 %2449
    %2451 = vrot.lane.b32.xlu0 %v1973, 32
    %v2452 = vpop.permute.xlu0 %2451
    %2453 = vrot.lane.b32.xlu0 %v1974, 32
    %v2454 = vpop.permute.xlu0 %2453
    %2455 = vrot.lane.b32.xlu0 %v1975, 32
    %v2456 = vpop.permute.xlu0 %2455
    %2457 = vrot.lane.b32.xlu0 %v1976, 32
    %v2458 = vpop.permute.xlu0 %2457
    %2472 = vst.msk [vmem:[#allocation2 + $0x258] sm:$0xff] %vm929, %v2434
    %2473 = vst.msk [vmem:[#allocation2 + $0x260] sm:$0xff] %vm929, %v2436
    %2474 = vst.msk [vmem:[#allocation2 + $0x268] sm:$0xff] %vm929, %v2438
    %2475 = vst.msk [vmem:[#allocation2 + $0x270] sm:$0xff] %vm929, %v2440
    %2476 = vst.msk [vmem:[#allocation2 + $0x278] sm:$0xff] %vm929, %v2442
    %2477 = vst.msk [vmem:[#allocation2 + $0x280] sm:$0xff] %vm929, %v2444
    %2478 = vst.msk [vmem:[#allocation2 + $0x288] sm:$0xff] %vm929, %v2446
    %2479 = vst.msk [vmem:[#allocation2 + $0x290] sm:$0xff] %vm929, %v2448
    %2480 = vst.msk [vmem:[#allocation2 + $0x298] sm:$0xff] %vm929, %v2450
    %2481 = vst.msk [vmem:[#allocation2 + $0x2a0] sm:$0xff] %vm929, %v2452
    %2482 = vst.msk [vmem:[#allocation2 + $0x2a8] sm:$0xff] %vm929, %v2454
    %2483 = vst.msk [vmem:[#allocation2 + $0x2b0] sm:$0xff] %vm929, %v2456
    %2484 = vst.msk [vmem:[#allocation2 + $0x2b8] sm:$0xf] %vm942, %v2458
    %2498 = vrot.lane.b32.xlu0 %v2133, 64
    %v2499 = vpop.permute.xlu0 %2498
    %2500 = vrot.lane.b32.xlu0 %v2134, 64
    %v2501 = vpop.permute.xlu0 %2500
    %2502 = vrot.lane.b32.xlu0 %v2135, 64
    %v2503 = vpop.permute.xlu0 %2502
    %2504 = vrot.lane.b32.xlu0 %v2136, 64
    %v2505 = vpop.permute.xlu0 %2504
    %2506 = vrot.lane.b32.xlu0 %v2137, 64
    %v2507 = vpop.permute.xlu0 %2506
    %2508 = vrot.lane.b32.xlu0 %v2138, 64
    %v2509 = vpop.permute.xlu0 %2508
    %2510 = vrot.lane.b32.xlu0 %v2139, 64
    %v2511 = vpop.permute.xlu0 %2510
    %2512 = vrot.lane.b32.xlu0 %v2140, 64
    %v2513 = vpop.permute.xlu0 %2512
    %2514 = vrot.lane.b32.xlu0 %v2141, 64
    %v2515 = vpop.permute.xlu0 %2514
    %2516 = vrot.lane.b32.xlu0 %v2142, 64
    %v2517 = vpop.permute.xlu0 %2516
    %2518 = vrot.lane.b32.xlu0 %v2143, 64
    %v2519 = vpop.permute.xlu0 %2518
    %2520 = vrot.lane.b32.xlu0 %v2144, 64
    %v2521 = vpop.permute.xlu0 %2520
    %2522 = vrot.lane.b32.xlu0 %v2145, 64
    %v2523 = vpop.permute.xlu0 %2522
    %2537 = vst.msk [vmem:[#allocation2 + $0x258] sm:$0xff] %vm996, %v2499
    %2538 = vst.msk [vmem:[#allocation2 + $0x260] sm:$0xff] %vm996, %v2501
    %2539 = vst.msk [vmem:[#allocation2 + $0x268] sm:$0xff] %vm996, %v2503
    %2540 = vst.msk [vmem:[#allocation2 + $0x270] sm:$0xff] %vm996, %v2505
    %2541 = vst.msk [vmem:[#allocation2 + $0x278] sm:$0xff] %vm996, %v2507
    %2542 = vst.msk [vmem:[#allocation2 + $0x280] sm:$0xff] %vm996, %v2509
    %2543 = vst.msk [vmem:[#allocation2 + $0x288] sm:$0xff] %vm996, %v2511
    %2544 = vst.msk [vmem:[#allocation2 + $0x290] sm:$0xff] %vm996, %v2513
    %2545 = vst.msk [vmem:[#allocation2 + $0x298] sm:$0xff] %vm996, %v2515
    %2546 = vst.msk [vmem:[#allocation2 + $0x2a0] sm:$0xff] %vm996, %v2517
    %2547 = vst.msk [vmem:[#allocation2 + $0x2a8] sm:$0xff] %vm996, %v2519
    %2548 = vst.msk [vmem:[#allocation2 + $0x2b0] sm:$0xff] %vm996, %v2521
    %2549 = vst.msk [vmem:[#allocation2 + $0x2b8] sm:$0xf] %vm1009, %v2523
    %2550 = vst.msk [vmem:[#allocation2 + $0x2bc] sm:$0xff] %vm862, %v1964
    %2551 = vst.msk [vmem:[#allocation2 + $0x2c4] sm:$0xff] %vm862, %v1965
    %2552 = vst.msk [vmem:[#allocation2 + $0x2cc] sm:$0xff] %vm862, %v1966
    %2553 = vst.msk [vmem:[#allocation2 + $0x2d4] sm:$0xff] %vm862, %v1967
    %2554 = vst.msk [vmem:[#allocation2 + $0x2dc] sm:$0xff] %vm862, %v1968
    %2555 = vst.msk [vmem:[#allocation2 + $0x2e4] sm:$0xff] %vm862, %v1969
    %2556 = vst.msk [vmem:[#allocation2 + $0x2ec] sm:$0xff] %vm862, %v1970
    %2557 = vst.msk [vmem:[#allocation2 + $0x2f4] sm:$0xff] %vm862, %v1971
    %2558 = vst.msk [vmem:[#allocation2 + $0x2fc] sm:$0xff] %vm862, %v1972
    %2559 = vst.msk [vmem:[#allocation2 + $0x304] sm:$0xff] %vm862, %v1973
    %2560 = vst.msk [vmem:[#allocation2 + $0x30c] sm:$0xff] %vm862, %v1974
    %2561 = vst.msk [vmem:[#allocation2 + $0x314] sm:$0xff] %vm862, %v1975
    %2562 = vst.msk [vmem:[#allocation2 + $0x31c] sm:$0xf] %vm1023, %v1976
    %2563 = vrot.lane.b32.xlu0 %v2133, 32
    %v2564 = vpop.permute.xlu0 %2563
    %2565 = vrot.lane.b32.xlu0 %v2134, 32
    %v2566 = vpop.permute.xlu0 %2565
    %2567 = vrot.lane.b32.xlu0 %v2135, 32
    %v2568 = vpop.permute.xlu0 %2567
    %2569 = vrot.lane.b32.xlu0 %v2136, 32
    %v2570 = vpop.permute.xlu0 %2569
    %2571 = vrot.lane.b32.xlu0 %v2137, 32
    %v2572 = vpop.permute.xlu0 %2571
    %2573 = vrot.lane.b32.xlu0 %v2138, 32
    %v2574 = vpop.permute.xlu0 %2573
    %2575 = vrot.lane.b32.xlu0 %v2139, 32
    %v2576 = vpop.permute.xlu0 %2575
    %2577 = vrot.lane.b32.xlu0 %v2140, 32
    %v2578 = vpop.permute.xlu0 %2577
    %2579 = vrot.lane.b32.xlu0 %v2141, 32
    %v2580 = vpop.permute.xlu0 %2579
    %2581 = vrot.lane.b32.xlu0 %v2142, 32
    %v2582 = vpop.permute.xlu0 %2581
    %2583 = vrot.lane.b32.xlu0 %v2143, 32
    %v2584 = vpop.permute.xlu0 %2583
    %2585 = vrot.lane.b32.xlu0 %v2144, 32
    %v2586 = vpop.permute.xlu0 %2585
    %2587 = vrot.lane.b32.xlu0 %v2145, 32
    %v2588 = vpop.permute.xlu0 %2587
    %2602 = vst.msk [vmem:[#allocation2 + $0x2bc] sm:$0xff] %vm929, %v2564
    %2603 = vst.msk [vmem:[#allocation2 + $0x2c4] sm:$0xff] %vm929, %v2566
    %2604 = vst.msk [vmem:[#allocation2 + $0x2cc] sm:$0xff] %vm929, %v2568
    %2605 = vst.msk [vmem:[#allocation2 + $0x2d4] sm:$0xff] %vm929, %v2570
    %2606 = vst.msk [vmem:[#allocation2 + $0x2dc] sm:$0xff] %vm929, %v2572
    %2607 = vst.msk [vmem:[#allocation2 + $0x2e4] sm:$0xff] %vm929, %v2574
    %2608 = vst.msk [vmem:[#allocation2 + $0x2ec] sm:$0xff] %vm929, %v2576
    %2609 = vst.msk [vmem:[#allocation2 + $0x2f4] sm:$0xff] %vm929, %v2578
    %2610 = vst.msk [vmem:[#allocation2 + $0x2fc] sm:$0xff] %vm929, %v2580
    %2611 = vst.msk [vmem:[#allocation2 + $0x304] sm:$0xff] %vm929, %v2582
    %2612 = vst.msk [vmem:[#allocation2 + $0x30c] sm:$0xff] %vm929, %v2584
    %2613 = vst.msk [vmem:[#allocation2 + $0x314] sm:$0xff] %vm929, %v2586
    %2614 = vst.msk [vmem:[#allocation2 + $0x31c] sm:$0xf] %vm942, %v2588
    %2615 = vrot.lane.b32.xlu0 %v1678, 64
    %v2616 = vpop.permute.xlu0 %2615
    %2617 = vrot.lane.b32.xlu0 %v1679, 64
    %v2618 = vpop.permute.xlu0 %2617
    %2619 = vrot.lane.b32.xlu0 %v1680, 64
    %v2620 = vpop.permute.xlu0 %2619
    %2621 = vrot.lane.b32.xlu0 %v1681, 64
    %v2622 = vpop.permute.xlu0 %2621
    %2623 = vrot.lane.b32.xlu0 %v1682, 64
    %v2624 = vpop.permute.xlu0 %2623
    %2625 = vrot.lane.b32.xlu0 %v1683, 64
    %v2626 = vpop.permute.xlu0 %2625
    %2627 = vrot.lane.b32.xlu0 %v1684, 64
    %v2628 = vpop.permute.xlu0 %2627
    %2629 = vrot.lane.b32.xlu0 %v1685, 64
    %v2630 = vpop.permute.xlu0 %2629
    %2631 = vrot.lane.b32.xlu0 %v1686, 64
    %v2632 = vpop.permute.xlu0 %2631
    %2633 = vrot.lane.b32.xlu0 %v1687, 64
    %v2634 = vpop.permute.xlu0 %2633
    %2635 = vrot.lane.b32.xlu0 %v1688, 64
    %v2636 = vpop.permute.xlu0 %2635
    %2637 = vrot.lane.b32.xlu0 %v1689, 64
    %v2638 = vpop.permute.xlu0 %2637
    %2639 = vrot.lane.b32.xlu0 %v1690, 64
    %v2640 = vpop.permute.xlu0 %2639
    %2654 = vst.msk [vmem:[#allocation2 + $0x2bb] sm:$0xfe] %vm1376, %v2616
    %2655 = vst.msk [vmem:[#allocation2 + $0x2c3] sm:$0xff] %vm996, %v2618
    %2656 = vst.msk [vmem:[#allocation2 + $0x2cb] sm:$0xff] %vm996, %v2620
    %2657 = vst.msk [vmem:[#allocation2 + $0x2d3] sm:$0xff] %vm996, %v2622
    %2658 = vst.msk [vmem:[#allocation2 + $0x2db] sm:$0xff] %vm996, %v2624
    %2659 = vst.msk [vmem:[#allocation2 + $0x2e3] sm:$0xff] %vm996, %v2626
    %2660 = vst.msk [vmem:[#allocation2 + $0x2eb] sm:$0xff] %vm996, %v2628
    %2661 = vst.msk [vmem:[#allocation2 + $0x2f3] sm:$0xff] %vm996, %v2630
    %2662 = vst.msk [vmem:[#allocation2 + $0x2fb] sm:$0xff] %vm996, %v2632
    %2663 = vst.msk [vmem:[#allocation2 + $0x303] sm:$0xff] %vm996, %v2634
    %2664 = vst.msk [vmem:[#allocation2 + $0x30b] sm:$0xff] %vm996, %v2636
    %2665 = vst.msk [vmem:[#allocation2 + $0x313] sm:$0xff] %vm996, %v2638
    %2666 = vst.msk [vmem:[#allocation2 + $0x31b] sm:$0xf] %vm1009, %v2640
    %2667 = vst.msk [vmem:[#allocation2 + $0x31f] sm:$0x1] %vm1390, 0.0
    %v2668 = vld [vmem:[#allocation2] sm:$0xff]
    %v2669 = vld [vmem:[#allocation2 + $0x8] sm:$0xff]
    %v2670 = vld [vmem:[#allocation2 + $0x10] sm:$0xff]
    %v2671 = vld [vmem:[#allocation2 + $0x18] sm:$0xff]
    %v2672 = vld [vmem:[#allocation2 + $0x20] sm:$0xff]
    %v2673 = vld [vmem:[#allocation2 + $0x28] sm:$0xff]
    %v2674 = vld [vmem:[#allocation2 + $0x30] sm:$0xff]
    %v2675 = vld [vmem:[#allocation2 + $0x38] sm:$0xff]
    %v2676 = vld [vmem:[#allocation2 + $0x40] sm:$0xff]
    %v2677 = vld [vmem:[#allocation2 + $0x48] sm:$0xff]
    %v2678 = vld [vmem:[#allocation2 + $0x50] sm:$0xff]
    %v2679 = vld [vmem:[#allocation2 + $0x58] sm:$0xff]
    %v2680 = vld [vmem:[#allocation2 + $0x60] sm:$0xff]
    %v2681 = vld [vmem:[#allocation2 + $0x68] sm:$0xff]
    %v2682 = vld [vmem:[#allocation2 + $0x70] sm:$0xff]
    %v2683 = vld [vmem:[#allocation2 + $0x78] sm:$0xff]
    %v2684 = vld [vmem:[#allocation2 + $0x80] sm:$0xff]
    %v2685 = vld [vmem:[#allocation2 + $0x88] sm:$0xff]
    %v2686 = vld [vmem:[#allocation2 + $0x90] sm:$0xff]
    %v2687 = vld [vmem:[#allocation2 + $0x98] sm:$0xff]
    %v2688 = vld [vmem:[#allocation2 + $0xa0] sm:$0xff]
    %v2689 = vld [vmem:[#allocation2 + $0xa8] sm:$0xff]
    %v2690 = vld [vmem:[#allocation2 + $0xb0] sm:$0xff]
    %v2691 = vld [vmem:[#allocation2 + $0xb8] sm:$0xff]
    %v2692 = vld [vmem:[#allocation2 + $0xc0] sm:$0xff]
    %v2693 = vld [vmem:[#allocation2 + $0xc8] sm:$0xff]
    %v2694 = vld [vmem:[#allocation2 + $0xd0] sm:$0xff]
    %v2695 = vld [vmem:[#allocation2 + $0xd8] sm:$0xff]
    %v2696 = vld [vmem:[#allocation2 + $0xe0] sm:$0xff]
    %v2697 = vld [vmem:[#allocation2 + $0xe8] sm:$0xff]
    %v2698 = vld [vmem:[#allocation2 + $0xf0] sm:$0xff]
    %v2699 = vld [vmem:[#allocation2 + $0xf8] sm:$0xff]
    %v2700 = vld [vmem:[#allocation2 + $0x100] sm:$0xff]
    %v2701 = vld [vmem:[#allocation2 + $0x108] sm:$0xff]
    %v2702 = vld [vmem:[#allocation2 + $0x110] sm:$0xff]
    %v2703 = vld [vmem:[#allocation2 + $0x118] sm:$0xff]
    %v2704 = vld [vmem:[#allocation2 + $0x120] sm:$0xff]
    %v2705 = vld [vmem:[#allocation2 + $0x128] sm:$0xff]
    %v2706 = vld [vmem:[#allocation2 + $0x130] sm:$0xff]
    %v2707 = vld [vmem:[#allocation2 + $0x138] sm:$0xff]
    %v2708 = vld [vmem:[#allocation2 + $0x140] sm:$0xff]
    %v2709 = vld [vmem:[#allocation2 + $0x148] sm:$0xff]
    %v2710 = vld [vmem:[#allocation2 + $0x150] sm:$0xff]
    %v2711 = vld [vmem:[#allocation2 + $0x158] sm:$0xff]
    %v2712 = vld [vmem:[#allocation2 + $0x160] sm:$0xff]
    %v2713 = vld [vmem:[#allocation2 + $0x168] sm:$0xff]
    %v2714 = vld [vmem:[#allocation2 + $0x170] sm:$0xff]
    %v2715 = vld [vmem:[#allocation2 + $0x178] sm:$0xff]
    %v2716 = vld [vmem:[#allocation2 + $0x180] sm:$0xff]
    %v2717 = vld [vmem:[#allocation2 + $0x188] sm:$0xff]
    %v2718 = vld [vmem:[#allocation2 + $0x190] sm:$0xff]
    %v2719 = vld [vmem:[#allocation2 + $0x198] sm:$0xff]
    %v2720 = vld [vmem:[#allocation2 + $0x1a0] sm:$0xff]
    %v2721 = vld [vmem:[#allocation2 + $0x1a8] sm:$0xff]
    %v2722 = vld [vmem:[#allocation2 + $0x1b0] sm:$0xff]
    %v2723 = vld [vmem:[#allocation2 + $0x1b8] sm:$0xff]
    %v2724 = vld [vmem:[#allocation2 + $0x1c0] sm:$0xff]
    %v2725 = vld [vmem:[#allocation2 + $0x1c8] sm:$0xff]
    %v2726 = vld [vmem:[#allocation2 + $0x1d0] sm:$0xff]
    %v2727 = vld [vmem:[#allocation2 + $0x1d8] sm:$0xff]
    %v2728 = vld [vmem:[#allocation2 + $0x1e0] sm:$0xff]
    %v2729 = vld [vmem:[#allocation2 + $0x1e8] sm:$0xff]
    %v2730 = vld [vmem:[#allocation2 + $0x1f0] sm:$0xff]
    %v2731 = vld [vmem:[#allocation2 + $0x1f8] sm:$0xff]
    %v2732 = vld [vmem:[#allocation2 + $0x200] sm:$0xff]
    %v2733 = vld [vmem:[#allocation2 + $0x208] sm:$0xff]
    %v2734 = vld [vmem:[#allocation2 + $0x210] sm:$0xff]
    %v2735 = vld [vmem:[#allocation2 + $0x218] sm:$0xff]
    %v2736 = vld [vmem:[#allocation2 + $0x220] sm:$0xff]
    %v2737 = vld [vmem:[#allocation2 + $0x228] sm:$0xff]
    %v2738 = vld [vmem:[#allocation2 + $0x230] sm:$0xff]
    %v2739 = vld [vmem:[#allocation2 + $0x238] sm:$0xff]
    %v2740 = vld [vmem:[#allocation2 + $0x240] sm:$0xff]
    %v2741 = vld [vmem:[#allocation2 + $0x248] sm:$0xff]
    %v2742 = vld [vmem:[#allocation2 + $0x250] sm:$0xff]
    %v2743 = vld [vmem:[#allocation2 + $0x258] sm:$0xff]
    %v2744 = vld [vmem:[#allocation2 + $0x260] sm:$0xff]
    %v2745 = vld [vmem:[#allocation2 + $0x268] sm:$0xff]
    %v2746 = vld [vmem:[#allocation2 + $0x270] sm:$0xff]
    %v2747 = vld [vmem:[#allocation2 + $0x278] sm:$0xff]
    %v2748 = vld [vmem:[#allocation2 + $0x280] sm:$0xff]
    %v2749 = vld [vmem:[#allocation2 + $0x288] sm:$0xff]
    %v2750 = vld [vmem:[#allocation2 + $0x290] sm:$0xff]
    %v2751 = vld [vmem:[#allocation2 + $0x298] sm:$0xff]
    %v2752 = vld [vmem:[#allocation2 + $0x2a0] sm:$0xff]
    %v2753 = vld [vmem:[#allocation2 + $0x2a8] sm:$0xff]
    %v2754 = vld [vmem:[#allocation2 + $0x2b0] sm:$0xff]
    %v2755 = vld [vmem:[#allocation2 + $0x2b8] sm:$0xff]
    %v2756 = vld [vmem:[#allocation2 + $0x2c0] sm:$0xff]
    %v2757 = vld [vmem:[#allocation2 + $0x2c8] sm:$0xff]
    %v2758 = vld [vmem:[#allocation2 + $0x2d0] sm:$0xff]
    %v2759 = vld [vmem:[#allocation2 + $0x2d8] sm:$0xff]
    %v2760 = vld [vmem:[#allocation2 + $0x2e0] sm:$0xff]
    %v2761 = vld [vmem:[#allocation2 + $0x2e8] sm:$0xff]
    %v2762 = vld [vmem:[#allocation2 + $0x2f0] sm:$0xff]
    %v2763 = vld [vmem:[#allocation2 + $0x2f8] sm:$0xff]
    %v2764 = vld [vmem:[#allocation2 + $0x300] sm:$0xff]
    %v2765 = vld [vmem:[#allocation2 + $0x308] sm:$0xff]
    %v2766 = vld [vmem:[#allocation2 + $0x310] sm:$0xff]
    %v2767 = vld [vmem:[#allocation2 + $0x318] sm:$0xff]
    %v2768 = vld [vmem:[%s3] sm:$0xff]
    %v2769 = vld [vmem:[%s3 + $0x8] sm:$0xff]
    %v2770 = vld [vmem:[%s3 + $0x10] sm:$0xff]
    %v2771 = vld [vmem:[%s3 + $0x18] sm:$0xff]
    %v2772 = vld [vmem:[%s3 + $0x20] sm:$0xff]
    %v2773 = vld [vmem:[%s3 + $0x28] sm:$0xff]
    %v2774 = vld [vmem:[%s3 + $0x30] sm:$0xff]
    %v2775 = vld [vmem:[%s3 + $0x38] sm:$0xff]
    %v2776 = vld [vmem:[%s3 + $0x40] sm:$0xff]
    %v2777 = vld [vmem:[%s3 + $0x48] sm:$0xff]
    %v2778 = vld [vmem:[%s3 + $0x50] sm:$0xff]
    %v2779 = vld [vmem:[%s3 + $0x58] sm:$0xff]
    %v2780 = vld [vmem:[#allocation8] sm:$0x1]
    %v2782 = vperm.slane %v2780, 0
    %vm2784 = vcmask 785408
    %v2786 = vsel %vm2784, %v2668, 0
    %v2789 = vsel %vm2784, %v2669, 0
    %v2792 = vsel %vm2784, %v2670, 0
    %v2795 = vsel %vm2784, %v2671, 0
    %v2798 = vsel %vm2784, %v2672, 0
    %v2801 = vsel %vm2784, %v2673, 0
    %v2804 = vsel %vm2784, %v2674, 0
    %v2807 = vsel %vm2784, %v2675, 0
    %v2810 = vsel %vm2784, %v2676, 0
    %v2813 = vsel %vm2784, %v2677, 0
    %v2816 = vsel %vm2784, %v2678, 0
    %v2819 = vsel %vm2784, %v2679, 0
    %v2822 = vsel %vm2784, %v2680, 0
    %v2825 = vsel %vm2784, %v2681, 0
    %v2828 = vsel %vm2784, %v2682, 0
    %v2831 = vsel %vm2784, %v2683, 0
    %v2834 = vsel %vm2784, %v2684, 0
    %v2837 = vsel %vm2784, %v2685, 0
    %v2840 = vsel %vm2784, %v2686, 0
    %v2843 = vsel %vm2784, %v2687, 0
    %v2846 = vsel %vm2784, %v2688, 0
    %v2849 = vsel %vm2784, %v2689, 0
    %v2852 = vsel %vm2784, %v2690, 0
    %v2855 = vsel %vm2784, %v2691, 0
    %v2858 = vsel %vm2784, %v2692, 0
    %v2861 = vsel %vm2784, %v2693, 0
    %v2864 = vsel %vm2784, %v2694, 0
    %v2867 = vsel %vm2784, %v2695, 0
    %v2870 = vsel %vm2784, %v2696, 0
    %v2873 = vsel %vm2784, %v2697, 0
    %v2876 = vsel %vm2784, %v2698, 0
    %v2879 = vsel %vm2784, %v2699, 0
    %v2882 = vsel %vm2784, %v2700, 0
    %v2885 = vsel %vm2784, %v2701, 0
    %v2888 = vsel %vm2784, %v2702, 0
    %v2891 = vsel %vm2784, %v2703, 0
    %v2894 = vsel %vm2784, %v2704, 0
    %v2897 = vsel %vm2784, %v2705, 0
    %v2900 = vsel %vm2784, %v2706, 0
    %v2903 = vsel %vm2784, %v2707, 0
    %v2906 = vsel %vm2784, %v2708, 0
    %v2909 = vsel %vm2784, %v2709, 0
    %v2912 = vsel %vm2784, %v2710, 0
    %v2915 = vsel %vm2784, %v2711, 0
    %v2918 = vsel %vm2784, %v2712, 0
    %v2921 = vsel %vm2784, %v2713, 0
    %v2924 = vsel %vm2784, %v2714, 0
    %v2927 = vsel %vm2784, %v2715, 0
    %v2930 = vsel %vm2784, %v2716, 0
    %v2933 = vsel %vm2784, %v2717, 0
    %v2936 = vsel %vm2784, %v2718, 0
    %v2939 = vsel %vm2784, %v2719, 0
    %v2942 = vsel %vm2784, %v2720, 0
    %v2945 = vsel %vm2784, %v2721, 0
    %v2948 = vsel %vm2784, %v2722, 0
    %v2951 = vsel %vm2784, %v2723, 0
    %v2954 = vsel %vm2784, %v2724, 0
    %v2957 = vsel %vm2784, %v2725, 0
    %v2960 = vsel %vm2784, %v2726, 0
    %v2963 = vsel %vm2784, %v2727, 0
    %v2966 = vsel %vm2784, %v2728, 0
    %v2969 = vsel %vm2784, %v2729, 0
    %v2972 = vsel %vm2784, %v2730, 0
    %v2975 = vsel %vm2784, %v2731, 0
    %v2978 = vsel %vm2784, %v2732, 0
    %v2981 = vsel %vm2784, %v2733, 0
    %v2984 = vsel %vm2784, %v2734, 0
    %v2987 = vsel %vm2784, %v2735, 0
    %v2990 = vsel %vm2784, %v2736, 0
    %v2993 = vsel %vm2784, %v2737, 0
    %v2996 = vsel %vm2784, %v2738, 0
    %v2999 = vsel %vm2784, %v2739, 0
    %v3002 = vsel %vm2784, %v2740, 0
    %v3005 = vsel %vm2784, %v2741, 0
    %v3008 = vsel %vm2784, %v2742, 0
    %v3011 = vsel %vm2784, %v2743, 0
    %v3014 = vsel %vm2784, %v2744, 0
    %v3017 = vsel %vm2784, %v2745, 0
    %v3020 = vsel %vm2784, %v2746, 0
    %v3023 = vsel %vm2784, %v2747, 0
    %v3026 = vsel %vm2784, %v2748, 0
    %v3029 = vsel %vm2784, %v2749, 0
    %v3032 = vsel %vm2784, %v2750, 0
    %v3035 = vsel %vm2784, %v2751, 0
    %v3038 = vsel %vm2784, %v2752, 0
    %v3041 = vsel %vm2784, %v2753, 0
    %v3044 = vsel %vm2784, %v2754, 0
    %v3047 = vsel %vm2784, %v2755, 0
    %v3050 = vsel %vm2784, %v2756, 0
    %v3053 = vsel %vm2784, %v2757, 0
    %v3056 = vsel %vm2784, %v2758, 0
    %v3059 = vsel %vm2784, %v2759, 0
    %v3062 = vsel %vm2784, %v2760, 0
    %v3065 = vsel %vm2784, %v2761, 0
    %v3068 = vsel %vm2784, %v2762, 0
    %v3071 = vsel %vm2784, %v2763, 0
    %v3074 = vsel %vm2784, %v2764, 0
    %v3077 = vsel %vm2784, %v2765, 0
    %v3080 = vsel %vm2784, %v2766, 0
    %v3083 = vsel %vm2784, %v2767, 0
    %3085 = vmatpush.msra.mxu0 0.0
    %3086 = vmatpush.msra.mxu0 0.0
    %3087 = vmatpush.msra.mxu0 0.0
    %3088 = vmatpush.msra.mxu0 0.0
    %3089 = vmatpush.msra.mxu0 %v2779
    %3090 = vmatpush.msra.mxu0 %v2778
    %3091 = vmatpush.msra.mxu0 %v2777
    %3092 = vmatpush.msra.mxu0 %v2776
    %3093 = vmatpush.msra.mxu0 %v2775
    %3094 = vmatpush.msra.mxu0 %v2774
    %3095 = vmatpush.msra.mxu0 %v2773
    %3096 = vmatpush.msra.mxu0 %v2772
    %3097 = vmatpush.msra.mxu0 %v2771
    %3098 = vmatpush.msra.mxu0 %v2770
    %3099 = vmatpush.msra.mxu0 %v2769
    %3100 = vmatpush.msra.mxu0 %v2768
    %3101 = vmatmul.f32.gmra.mxu0 %v2786
    %v3102 = vpop.f32.mrf.mxu0
    %v3103 = vadd.f32 %v2782, %v3102
    %3104 = vmatmul.f32.gmra.mxu0 %v2789
    %v3105 = vpop.f32.mrf.mxu0
    %v3106 = vadd.f32 %v2782, %v3105
    %3107 = vmatmul.f32.gmra.mxu0 %v2792
    %v3108 = vpop.f32.mrf.mxu0
    %v3109 = vadd.f32 %v2782, %v3108
    %3110 = vmatmul.f32.gmra.mxu0 %v2795
    %v3111 = vpop.f32.mrf.mxu0
    %v3112 = vadd.f32 %v2782, %v3111
    %3113 = vmatmul.f32.gmra.mxu0 %v2798
    %v3114 = vpop.f32.mrf.mxu0
    %v3115 = vadd.f32 %v2782, %v3114
    %3116 = vmatmul.f32.gmra.mxu0 %v2801
    %v3117 = vpop.f32.mrf.mxu0
    %v3118 = vadd.f32 %v2782, %v3117
    %3119 = vmatmul.f32.gmra.mxu0 %v2804
    %v3120 = vpop.f32.mrf.mxu0
    %v3121 = vadd.f32 %v2782, %v3120
    %3122 = vmatmul.f32.gmra.mxu0 %v2807
    %v3123 = vpop.f32.mrf.mxu0
    %v3124 = vadd.f32 %v2782, %v3123
    %3125 = vmatmul.f32.gmra.mxu0 %v2810
    %v3126 = vpop.f32.mrf.mxu0
    %v3127 = vadd.f32 %v2782, %v3126
    %3128 = vmatmul.f32.gmra.mxu0 %v2813
    %v3129 = vpop.f32.mrf.mxu0
    %v3130 = vadd.f32 %v2782, %v3129
    %3131 = vmatmul.f32.gmra.mxu0 %v2816
    %v3132 = vpop.f32.mrf.mxu0
    %v3133 = vadd.f32 %v2782, %v3132
    %3134 = vmatmul.f32.gmra.mxu0 %v2819
    %v3135 = vpop.f32.mrf.mxu0
    %v3136 = vadd.f32 %v2782, %v3135
    %3137 = vmatmul.f32.gmra.mxu0 %v2822
    %v3138 = vpop.f32.mrf.mxu0
    %v3139 = vadd.f32 %v2782, %v3138
    %3140 = vmatmul.f32.gmra.mxu0 %v2825
    %v3141 = vpop.f32.mrf.mxu0
    %v3142 = vadd.f32 %v2782, %v3141
    %3143 = vmatmul.f32.gmra.mxu0 %v2828
    %v3144 = vpop.f32.mrf.mxu0
    %v3145 = vadd.f32 %v2782, %v3144
    %3146 = vmatmul.f32.gmra.mxu0 %v2831
    %v3147 = vpop.f32.mrf.mxu0
    %v3148 = vadd.f32 %v2782, %v3147
    %3149 = vmatmul.f32.gmra.mxu0 %v2834
    %v3150 = vpop.f32.mrf.mxu0
    %v3151 = vadd.f32 %v2782, %v3150
    %3152 = vmatmul.f32.gmra.mxu0 %v2837
    %v3153 = vpop.f32.mrf.mxu0
    %v3154 = vadd.f32 %v2782, %v3153
    %3155 = vmatmul.f32.gmra.mxu0 %v2840
    %v3156 = vpop.f32.mrf.mxu0
    %v3157 = vadd.f32 %v2782, %v3156
    %3158 = vmatmul.f32.gmra.mxu0 %v2843
    %v3159 = vpop.f32.mrf.mxu0
    %v3160 = vadd.f32 %v2782, %v3159
    %3161 = vmatmul.f32.gmra.mxu0 %v2846
    %v3162 = vpop.f32.mrf.mxu0
    %v3163 = vadd.f32 %v2782, %v3162
    %3164 = vmatmul.f32.gmra.mxu0 %v2849
    %v3165 = vpop.f32.mrf.mxu0
    %v3166 = vadd.f32 %v2782, %v3165
    %3167 = vmatmul.f32.gmra.mxu0 %v2852
    %v3168 = vpop.f32.mrf.mxu0
    %v3169 = vadd.f32 %v2782, %v3168
    %3170 = vmatmul.f32.gmra.mxu0 %v2855
    %v3171 = vpop.f32.mrf.mxu0
    %v3172 = vadd.f32 %v2782, %v3171
    %3173 = vmatmul.f32.gmra.mxu0 %v2858
    %v3174 = vpop.f32.mrf.mxu0
    %v3175 = vadd.f32 %v2782, %v3174
    %3176 = vmatmul.f32.gmra.mxu0 %v2861
    %v3177 = vpop.f32.mrf.mxu0
    %v3178 = vadd.f32 %v2782, %v3177
    %3179 = vmatmul.f32.gmra.mxu0 %v2864
    %v3180 = vpop.f32.mrf.mxu0
    %v3181 = vadd.f32 %v2782, %v3180
    %3182 = vmatmul.f32.gmra.mxu0 %v2867
    %v3183 = vpop.f32.mrf.mxu0
    %v3184 = vadd.f32 %v2782, %v3183
    %3185 = vmatmul.f32.gmra.mxu0 %v2870
    %v3186 = vpop.f32.mrf.mxu0
    %v3187 = vadd.f32 %v2782, %v3186
    %3188 = vmatmul.f32.gmra.mxu0 %v2873
    %v3189 = vpop.f32.mrf.mxu0
    %v3190 = vadd.f32 %v2782, %v3189
    %3191 = vmatmul.f32.gmra.mxu0 %v2876
    %v3192 = vpop.f32.mrf.mxu0
    %v3193 = vadd.f32 %v2782, %v3192
    %3194 = vmatmul.f32.gmra.mxu0 %v2879
    %v3195 = vpop.f32.mrf.mxu0
    %v3196 = vadd.f32 %v2782, %v3195
    %3197 = vmatmul.f32.gmra.mxu0 %v2882
    %v3198 = vpop.f32.mrf.mxu0
    %v3199 = vadd.f32 %v2782, %v3198
    %3200 = vmatmul.f32.gmra.mxu0 %v2885
    %v3201 = vpop.f32.mrf.mxu0
    %v3202 = vadd.f32 %v2782, %v3201
    %3203 = vmatmul.f32.gmra.mxu0 %v2888
    %v3204 = vpop.f32.mrf.mxu0
    %v3205 = vadd.f32 %v2782, %v3204
    %3206 = vmatmul.f32.gmra.mxu0 %v2891
    %v3207 = vpop.f32.mrf.mxu0
    %v3208 = vadd.f32 %v2782, %v3207
    %3209 = vmatmul.f32.gmra.mxu0 %v2894
    %v3210 = vpop.f32.mrf.mxu0
    %v3211 = vadd.f32 %v2782, %v3210
    %3212 = vmatmul.f32.gmra.mxu0 %v2897
    %v3213 = vpop.f32.mrf.mxu0
    %v3214 = vadd.f32 %v2782, %v3213
    %3215 = vmatmul.f32.gmra.mxu0 %v2900
    %v3216 = vpop.f32.mrf.mxu0
    %v3217 = vadd.f32 %v2782, %v3216
    %3218 = vmatmul.f32.gmra.mxu0 %v2903
    %v3219 = vpop.f32.mrf.mxu0
    %v3220 = vadd.f32 %v2782, %v3219
    %3221 = vmatmul.f32.gmra.mxu0 %v2906
    %v3222 = vpop.f32.mrf.mxu0
    %v3223 = vadd.f32 %v2782, %v3222
    %3224 = vmatmul.f32.gmra.mxu0 %v2909
    %v3225 = vpop.f32.mrf.mxu0
    %v3226 = vadd.f32 %v2782, %v3225
    %3227 = vmatmul.f32.gmra.mxu0 %v2912
    %v3228 = vpop.f32.mrf.mxu0
    %v3229 = vadd.f32 %v2782, %v3228
    %3230 = vmatmul.f32.gmra.mxu0 %v2915
    %v3231 = vpop.f32.mrf.mxu0
    %v3232 = vadd.f32 %v2782, %v3231
    %3233 = vmatmul.f32.gmra.mxu0 %v2918
    %v3234 = vpop.f32.mrf.mxu0
    %v3235 = vadd.f32 %v2782, %v3234
    %3236 = vmatmul.f32.gmra.mxu0 %v2921
    %v3237 = vpop.f32.mrf.mxu0
    %v3238 = vadd.f32 %v2782, %v3237
    %3239 = vmatmul.f32.gmra.mxu0 %v2924
    %v3240 = vpop.f32.mrf.mxu0
    %v3241 = vadd.f32 %v2782, %v3240
    %3242 = vmatmul.f32.gmra.mxu0 %v2927
    %v3243 = vpop.f32.mrf.mxu0
    %v3244 = vadd.f32 %v2782, %v3243
    %3245 = vmatmul.f32.gmra.mxu0 %v2930
    %v3246 = vpop.f32.mrf.mxu0
    %v3247 = vadd.f32 %v2782, %v3246
    %3248 = vmatmul.f32.gmra.mxu0 %v2933
    %v3249 = vpop.f32.mrf.mxu0
    %v3250 = vadd.f32 %v2782, %v3249
    %3251 = vmatmul.f32.gmra.mxu0 %v2936
    %v3252 = vpop.f32.mrf.mxu0
    %v3253 = vadd.f32 %v2782, %v3252
    %3254 = vmatmul.f32.gmra.mxu0 %v2939
    %v3255 = vpop.f32.mrf.mxu0
    %v3256 = vadd.f32 %v2782, %v3255
    %3257 = vmatmul.f32.gmra.mxu0 %v2942
    %v3258 = vpop.f32.mrf.mxu0
    %v3259 = vadd.f32 %v2782, %v3258
    %3260 = vmatmul.f32.gmra.mxu0 %v2945
    %v3261 = vpop.f32.mrf.mxu0
    %v3262 = vadd.f32 %v2782, %v3261
    %3263 = vmatmul.f32.gmra.mxu0 %v2948
    %v3264 = vpop.f32.mrf.mxu0
    %v3265 = vadd.f32 %v2782, %v3264
    %3266 = vmatmul.f32.gmra.mxu0 %v2951
    %v3267 = vpop.f32.mrf.mxu0
    %v3268 = vadd.f32 %v2782, %v3267
    %3269 = vmatmul.f32.gmra.mxu0 %v2954
    %v3270 = vpop.f32.mrf.mxu0
    %v3271 = vadd.f32 %v2782, %v3270
    %3272 = vmatmul.f32.gmra.mxu0 %v2957
    %v3273 = vpop.f32.mrf.mxu0
    %v3274 = vadd.f32 %v2782, %v3273
    %3275 = vmatmul.f32.gmra.mxu0 %v2960
    %v3276 = vpop.f32.mrf.mxu0
    %v3277 = vadd.f32 %v2782, %v3276
    %3278 = vmatmul.f32.gmra.mxu0 %v2963
    %v3279 = vpop.f32.mrf.mxu0
    %v3280 = vadd.f32 %v2782, %v3279
    %3281 = vmatmul.f32.gmra.mxu0 %v2966
    %v3282 = vpop.f32.mrf.mxu0
    %v3283 = vadd.f32 %v2782, %v3282
    %3284 = vmatmul.f32.gmra.mxu0 %v2969
    %v3285 = vpop.f32.mrf.mxu0
    %v3286 = vadd.f32 %v2782, %v3285
    %3287 = vmatmul.f32.gmra.mxu0 %v2972
    %v3288 = vpop.f32.mrf.mxu0
    %v3289 = vadd.f32 %v2782, %v3288
    %3290 = vmatmul.f32.gmra.mxu0 %v2975
    %v3291 = vpop.f32.mrf.mxu0
    %v3292 = vadd.f32 %v2782, %v3291
    %3293 = vmatmul.f32.gmra.mxu0 %v2978
    %v3294 = vpop.f32.mrf.mxu0
    %v3295 = vadd.f32 %v2782, %v3294
    %3296 = vmatmul.f32.gmra.mxu0 %v2981
    %v3297 = vpop.f32.mrf.mxu0
    %v3298 = vadd.f32 %v2782, %v3297
    %3299 = vmatmul.f32.gmra.mxu0 %v2984
    %v3300 = vpop.f32.mrf.mxu0
    %v3301 = vadd.f32 %v2782, %v3300
    %3302 = vmatmul.f32.gmra.mxu0 %v2987
    %v3303 = vpop.f32.mrf.mxu0
    %v3304 = vadd.f32 %v2782, %v3303
    %3305 = vmatmul.f32.gmra.mxu0 %v2990
    %v3306 = vpop.f32.mrf.mxu0
    %v3307 = vadd.f32 %v2782, %v3306
    %3308 = vmatmul.f32.gmra.mxu0 %v2993
    %v3309 = vpop.f32.mrf.mxu0
    %v3310 = vadd.f32 %v2782, %v3309
    %3311 = vmatmul.f32.gmra.mxu0 %v2996
    %v3312 = vpop.f32.mrf.mxu0
    %v3313 = vadd.f32 %v2782, %v3312
    %3314 = vmatmul.f32.gmra.mxu0 %v2999
    %v3315 = vpop.f32.mrf.mxu0
    %v3316 = vadd.f32 %v2782, %v3315
    %3317 = vmatmul.f32.gmra.mxu0 %v3002
    %v3318 = vpop.f32.mrf.mxu0
    %v3319 = vadd.f32 %v2782, %v3318
    %3320 = vmatmul.f32.gmra.mxu0 %v3005
    %v3321 = vpop.f32.mrf.mxu0
    %v3322 = vadd.f32 %v2782, %v3321
    %3323 = vmatmul.f32.gmra.mxu0 %v3008
    %v3324 = vpop.f32.mrf.mxu0
    %v3325 = vadd.f32 %v2782, %v3324
    %3326 = vmatmul.f32.gmra.mxu0 %v3011
    %v3327 = vpop.f32.mrf.mxu0
    %v3328 = vadd.f32 %v2782, %v3327
    %3329 = vmatmul.f32.gmra.mxu0 %v3014
    %v3330 = vpop.f32.mrf.mxu0
    %v3331 = vadd.f32 %v2782, %v3330
    %3332 = vmatmul.f32.gmra.mxu0 %v3017
    %v3333 = vpop.f32.mrf.mxu0
    %v3334 = vadd.f32 %v2782, %v3333
    %3335 = vmatmul.f32.gmra.mxu0 %v3020
    %v3336 = vpop.f32.mrf.mxu0
    %v3337 = vadd.f32 %v2782, %v3336
    %3338 = vmatmul.f32.gmra.mxu0 %v3023
    %v3339 = vpop.f32.mrf.mxu0
    %v3340 = vadd.f32 %v2782, %v3339
    %3341 = vmatmul.f32.gmra.mxu0 %v3026
    %v3342 = vpop.f32.mrf.mxu0
    %v3343 = vadd.f32 %v2782, %v3342
    %3344 = vmatmul.f32.gmra.mxu0 %v3029
    %v3345 = vpop.f32.mrf.mxu0
    %v3346 = vadd.f32 %v2782, %v3345
    %3347 = vmatmul.f32.gmra.mxu0 %v3032
    %v3348 = vpop.f32.mrf.mxu0
    %v3349 = vadd.f32 %v2782, %v3348
    %3350 = vmatmul.f32.gmra.mxu0 %v3035
    %v3351 = vpop.f32.mrf.mxu0
    %v3352 = vadd.f32 %v2782, %v3351
    %3353 = vmatmul.f32.gmra.mxu0 %v3038
    %v3354 = vpop.f32.mrf.mxu0
    %v3355 = vadd.f32 %v2782, %v3354
    %3356 = vmatmul.f32.gmra.mxu0 %v3041
    %v3357 = vpop.f32.mrf.mxu0
    %v3358 = vadd.f32 %v2782, %v3357
    %3359 = vmatmul.f32.gmra.mxu0 %v3044
    %v3360 = vpop.f32.mrf.mxu0
    %v3361 = vadd.f32 %v2782, %v3360
    %3362 = vmatmul.f32.gmra.mxu0 %v3047
    %v3363 = vpop.f32.mrf.mxu0
    %v3364 = vadd.f32 %v2782, %v3363
    %3365 = vmatmul.f32.gmra.mxu0 %v3050
    %v3366 = vpop.f32.mrf.mxu0
    %v3367 = vadd.f32 %v2782, %v3366
    %3368 = vmatmul.f32.gmra.mxu0 %v3053
    %v3369 = vpop.f32.mrf.mxu0
    %v3370 = vadd.f32 %v2782, %v3369
    %3371 = vmatmul.f32.gmra.mxu0 %v3056
    %v3372 = vpop.f32.mrf.mxu0
    %v3373 = vadd.f32 %v2782, %v3372
    %3374 = vmatmul.f32.gmra.mxu0 %v3059
    %v3375 = vpop.f32.mrf.mxu0
    %v3376 = vadd.f32 %v2782, %v3375
    %3377 = vmatmul.f32.gmra.mxu0 %v3062
    %v3378 = vpop.f32.mrf.mxu0
    %v3379 = vadd.f32 %v2782, %v3378
    %3380 = vmatmul.f32.gmra.mxu0 %v3065
    %v3381 = vpop.f32.mrf.mxu0
    %v3382 = vadd.f32 %v2782, %v3381
    %3383 = vmatmul.f32.gmra.mxu0 %v3068
    %v3384 = vpop.f32.mrf.mxu0
    %v3385 = vadd.f32 %v2782, %v3384
    %3386 = vmatmul.f32.gmra.mxu0 %v3071
    %v3387 = vpop.f32.mrf.mxu0
    %v3388 = vadd.f32 %v2782, %v3387
    %3389 = vmatmul.f32.gmra.mxu0 %v3074
    %v3390 = vpop.f32.mrf.mxu0
    %v3391 = vadd.f32 %v2782, %v3390
    %3392 = vmatmul.f32.gmra.mxu0 %v3077
    %v3393 = vpop.f32.mrf.mxu0
    %v3394 = vadd.f32 %v2782, %v3393
    %3395 = vmatmul.f32.gmra.mxu0 %v3080
    %v3396 = vpop.f32.mrf.mxu0
    %v3397 = vadd.f32 %v2782, %v3396
    %3398 = vmatmul.f32.gmra.mxu0 %v3083
    %v3399 = vpop.f32.mrf.mxu0
    %v3400 = vadd.f32 %v2782, %v3399
    %3401 = vdwg.mxu0
    %vm3415 = vcmask 1043456
    %v3416 = vrot.slane %v3139, 4
    %v3417 = vrot.slane %v3142, 4
    %v3418 = vsel %vm3415, %v3416, %v3417
    %v3419 = vrot.slane %v3145, 4
    %v3420 = vsel %vm3415, %v3417, %v3419
    %v3421 = vrot.slane %v3148, 4
    %v3422 = vsel %vm3415, %v3419, %v3421
    %v3423 = vrot.slane %v3151, 4
    %v3424 = vsel %vm3415, %v3421, %v3423
    %v3425 = vrot.slane %v3154, 4
    %v3426 = vsel %vm3415, %v3423, %v3425
    %v3427 = vrot.slane %v3157, 4
    %v3428 = vsel %vm3415, %v3425, %v3427
    %v3429 = vrot.slane %v3160, 4
    %v3430 = vsel %vm3415, %v3427, %v3429
    %v3431 = vrot.slane %v3163, 4
    %v3432 = vsel %vm3415, %v3429, %v3431
    %v3433 = vrot.slane %v3166, 4
    %v3434 = vsel %vm3415, %v3431, %v3433
    %v3435 = vrot.slane %v3169, 4
    %v3436 = vsel %vm3415, %v3433, %v3435
    %v3437 = vrot.slane %v3172, 4
    %v3438 = vsel %vm3415, %v3435, %v3437
    %v3439 = vrot.slane %v3175, 4
    %v3440 = vsel %vm3415, %v3437, %v3439
    %v3454 = vmax.f32 %v3103, %v3418
    %v3455 = vmax.f32 %v3106, %v3420
    %v3456 = vmax.f32 %v3109, %v3422
    %v3457 = vmax.f32 %v3112, %v3424
    %v3458 = vmax.f32 %v3115, %v3426
    %v3459 = vmax.f32 %v3118, %v3428
    %v3460 = vmax.f32 %v3121, %v3430
    %v3461 = vmax.f32 %v3124, %v3432
    %v3462 = vmax.f32 %v3127, %v3434
    %v3463 = vmax.f32 %v3130, %v3436
    %v3464 = vmax.f32 %v3133, %v3438
    %v3465 = vmax.f32 %v3136, %v3440
    %v3466 = vmax.f32 %v3139, %v3439
    %v3480 = vrot.slane %v3214, 4
    %v3481 = vrot.slane %v3217, 4
    %v3482 = vsel %vm3415, %v3480, %v3481
    %v3483 = vrot.slane %v3220, 4
    %v3484 = vsel %vm3415, %v3481, %v3483
    %v3485 = vrot.slane %v3223, 4
    %v3486 = vsel %vm3415, %v3483, %v3485
    %v3487 = vrot.slane %v3226, 4
    %v3488 = vsel %vm3415, %v3485, %v3487
    %v3489 = vrot.slane %v3229, 4
    %v3490 = vsel %vm3415, %v3487, %v3489
    %v3491 = vrot.slane %v3232, 4
    %v3492 = vsel %vm3415, %v3489, %v3491
    %v3493 = vrot.slane %v3235, 4
    %v3494 = vsel %vm3415, %v3491, %v3493
    %v3495 = vrot.slane %v3238, 4
    %v3496 = vsel %vm3415, %v3493, %v3495
    %v3497 = vrot.slane %v3241, 4
    %v3498 = vsel %vm3415, %v3495, %v3497
    %v3499 = vrot.slane %v3244, 4
    %v3500 = vsel %vm3415, %v3497, %v3499
    %v3501 = vrot.slane %v3247, 4
    %v3502 = vsel %vm3415, %v3499, %v3501
    %v3503 = vrot.slane %v3250, 4
    %v3504 = vsel %vm3415, %v3501, %v3503
    %v3518 = vmax.f32 %v3178, %v3482
    %v3519 = vmax.f32 %v3181, %v3484
    %v3520 = vmax.f32 %v3184, %v3486
    %v3521 = vmax.f32 %v3187, %v3488
    %v3522 = vmax.f32 %v3190, %v3490
    %v3523 = vmax.f32 %v3193, %v3492
    %v3524 = vmax.f32 %v3196, %v3494
    %v3525 = vmax.f32 %v3199, %v3496
    %v3526 = vmax.f32 %v3202, %v3498
    %v3527 = vmax.f32 %v3205, %v3500
    %v3528 = vmax.f32 %v3208, %v3502
    %v3529 = vmax.f32 %v3211, %v3504
    %v3530 = vmax.f32 %v3214, %v3503
    %v3531 = vmax.f32 %v3454, %v3518
    %v3532 = vmax.f32 %v3455, %v3519
    %v3533 = vmax.f32 %v3456, %v3520
    %v3534 = vmax.f32 %v3457, %v3521
    %v3535 = vmax.f32 %v3458, %v3522
    %v3536 = vmax.f32 %v3459, %v3523
    %v3537 = vmax.f32 %v3460, %v3524
    %v3538 = vmax.f32 %v3461, %v3525
    %v3539 = vmax.f32 %v3462, %v3526
    %v3540 = vmax.f32 %v3463, %v3527
    %v3541 = vmax.f32 %v3464, %v3528
    %v3542 = vmax.f32 %v3465, %v3529
    %v3543 = vmax.f32 %v3466, %v3530
    %v3544 = vtanh.pop %v3531
    %v3545 = vtanh.pop %v3532
    %v3546 = vtanh.pop %v3533
    %v3547 = vtanh.pop %v3534
    %v3548 = vtanh.pop %v3535
    %v3549 = vtanh.pop %v3536
    %v3550 = vtanh.pop %v3537
    %v3551 = vtanh.pop %v3538
    %v3552 = vtanh.pop %v3539
    %v3553 = vtanh.pop %v3540
    %v3554 = vtanh.pop %v3541
    %v3555 = vtanh.pop %v3542
    %v3556 = vtanh.pop %v3543
    %vm3557 = vcmask 523264
    %3558 = vst.msk [vmem:[#allocation3] sm:$0xff] %vm3557, %v3544
    %3559 = vst.msk [vmem:[#allocation3 + $0x8] sm:$0xff] %vm3557, %v3545
    %3560 = vst.msk [vmem:[#allocation3 + $0x10] sm:$0xff] %vm3557, %v3546
    %3561 = vst.msk [vmem:[#allocation3 + $0x18] sm:$0xff] %vm3557, %v3547
    %3562 = vst.msk [vmem:[#allocation3 + $0x20] sm:$0xff] %vm3557, %v3548
    %3563 = vst.msk [vmem:[#allocation3 + $0x28] sm:$0xff] %vm3557, %v3549
    %3564 = vst.msk [vmem:[#allocation3 + $0x30] sm:$0xff] %vm3557, %v3550
    %3565 = vst.msk [vmem:[#allocation3 + $0x38] sm:$0xff] %vm3557, %v3551
    %3566 = vst.msk [vmem:[#allocation3 + $0x40] sm:$0xff] %vm3557, %v3552
    %3567 = vst.msk [vmem:[#allocation3 + $0x48] sm:$0xff] %vm3557, %v3553
    %3568 = vst.msk [vmem:[#allocation3 + $0x50] sm:$0xff] %vm3557, %v3554
    %3569 = vst.msk [vmem:[#allocation3 + $0x58] sm:$0xff] %vm3557, %v3555
    %vm3570 = vcmask 519168
    %3571 = vst.msk [vmem:[#allocation3 + $0x60] sm:$0xf] %vm3570, %v3556
    %v3585 = vrot.slane %v3289, 4
    %v3586 = vrot.slane %v3292, 4
    %v3587 = vsel %vm3415, %v3585, %v3586
    %v3588 = vrot.slane %v3295, 4
    %v3589 = vsel %vm3415, %v3586, %v3588
    %v3590 = vrot.slane %v3298, 4
    %v3591 = vsel %vm3415, %v3588, %v3590
    %v3592 = vrot.slane %v3301, 4
    %v3593 = vsel %vm3415, %v3590, %v3592
    %v3594 = vrot.slane %v3304, 4
    %v3595 = vsel %vm3415, %v3592, %v3594
    %v3596 = vrot.slane %v3307, 4
    %v3597 = vsel %vm3415, %v3594, %v3596
    %v3598 = vrot.slane %v3310, 4
    %v3599 = vsel %vm3415, %v3596, %v3598
    %v3600 = vrot.slane %v3313, 4
    %v3601 = vsel %vm3415, %v3598, %v3600
    %v3602 = vrot.slane %v3316, 4
    %v3603 = vsel %vm3415, %v3600, %v3602
    %v3604 = vrot.slane %v3319, 4
    %v3605 = vsel %vm3415, %v3602, %v3604
    %v3606 = vrot.slane %v3322, 4
    %v3607 = vsel %vm3415, %v3604, %v3606
    %v3608 = vrot.slane %v3325, 4
    %v3609 = vsel %vm3415, %v3606, %v3608
    %v3623 = vmax.f32 %v3253, %v3587
    %v3624 = vmax.f32 %v3256, %v3589
    %v3625 = vmax.f32 %v3259, %v3591
    %v3626 = vmax.f32 %v3262, %v3593
    %v3627 = vmax.f32 %v3265, %v3595
    %v3628 = vmax.f32 %v3268, %v3597
    %v3629 = vmax.f32 %v3271, %v3599
    %v3630 = vmax.f32 %v3274, %v3601
    %v3631 = vmax.f32 %v3277, %v3603
    %v3632 = vmax.f32 %v3280, %v3605
    %v3633 = vmax.f32 %v3283, %v3607
    %v3634 = vmax.f32 %v3286, %v3609
    %v3635 = vmax.f32 %v3289, %v3608
    %v3649 = vrot.slane %v3364, 4
    %v3650 = vrot.slane %v3367, 4
    %v3651 = vsel %vm3415, %v3649, %v3650
    %v3652 = vrot.slane %v3370, 4
    %v3653 = vsel %vm3415, %v3650, %v3652
    %v3654 = vrot.slane %v3373, 4
    %v3655 = vsel %vm3415, %v3652, %v3654
    %v3656 = vrot.slane %v3376, 4
    %v3657 = vsel %vm3415, %v3654, %v3656
    %v3658 = vrot.slane %v3379, 4
    %v3659 = vsel %vm3415, %v3656, %v3658
    %v3660 = vrot.slane %v3382, 4
    %v3661 = vsel %vm3415, %v3658, %v3660
    %v3662 = vrot.slane %v3385, 4
    %v3663 = vsel %vm3415, %v3660, %v3662
    %v3664 = vrot.slane %v3388, 4
    %v3665 = vsel %vm3415, %v3662, %v3664
    %v3666 = vrot.slane %v3391, 4
    %v3667 = vsel %vm3415, %v3664, %v3666
    %v3668 = vrot.slane %v3394, 4
    %v3669 = vsel %vm3415, %v3666, %v3668
    %v3670 = vrot.slane %v3397, 4
    %v3671 = vsel %vm3415, %v3668, %v3670
    %v3672 = vrot.slane %v3400, 4
    %v3673 = vsel %vm3415, %v3670, %v3672
    %v3687 = vmax.f32 %v3328, %v3651
    %v3688 = vmax.f32 %v3331, %v3653
    %v3689 = vmax.f32 %v3334, %v3655
    %v3690 = vmax.f32 %v3337, %v3657
    %v3691 = vmax.f32 %v3340, %v3659
    %v3692 = vmax.f32 %v3343, %v3661
    %v3693 = vmax.f32 %v3346, %v3663
    %v3694 = vmax.f32 %v3349, %v3665
    %v3695 = vmax.f32 %v3352, %v3667
    %v3696 = vmax.f32 %v3355, %v3669
    %v3697 = vmax.f32 %v3358, %v3671
    %v3698 = vmax.f32 %v3361, %v3673
    %v3699 = vmax.f32 %v3364, %v3672
    %v3700 = vmax.f32 %v3623, %v3687
    %v3701 = vmax.f32 %v3624, %v3688
    %v3702 = vmax.f32 %v3625, %v3689
    %v3703 = vmax.f32 %v3626, %v3690
    %v3704 = vmax.f32 %v3627, %v3691
    %v3705 = vmax.f32 %v3628, %v3692
    %v3706 = vmax.f32 %v3629, %v3693
    %v3707 = vmax.f32 %v3630, %v3694
    %v3708 = vmax.f32 %v3631, %v3695
    %v3709 = vmax.f32 %v3632, %v3696
    %v3710 = vmax.f32 %v3633, %v3697
    %v3711 = vmax.f32 %v3634, %v3698
    %v3712 = vmax.f32 %v3635, %v3699
    %v3713 = vtanh.pop %v3700
    %v3714 = vtanh.pop %v3701
    %v3715 = vtanh.pop %v3702
    %v3716 = vtanh.pop %v3703
    %v3717 = vtanh.pop %v3704
    %v3718 = vtanh.pop %v3705
    %v3719 = vtanh.pop %v3706
    %v3720 = vtanh.pop %v3707
    %v3721 = vtanh.pop %v3708
    %v3722 = vtanh.pop %v3709
    %v3723 = vtanh.pop %v3710
    %v3724 = vtanh.pop %v3711
    %v3725 = vtanh.pop %v3712
    %3726 = vst.msk [vmem:[#allocation3 + $0x64] sm:$0xff] %vm3557, %v3713
    %3727 = vst.msk [vmem:[#allocation3 + $0x6c] sm:$0xff] %vm3557, %v3714
    %3728 = vst.msk [vmem:[#allocation3 + $0x74] sm:$0xff] %vm3557, %v3715
    %3729 = vst.msk [vmem:[#allocation3 + $0x7c] sm:$0xff] %vm3557, %v3716
    %3730 = vst.msk [vmem:[#allocation3 + $0x84] sm:$0xff] %vm3557, %v3717
    %3731 = vst.msk [vmem:[#allocation3 + $0x8c] sm:$0xff] %vm3557, %v3718
    %3732 = vst.msk [vmem:[#allocation3 + $0x94] sm:$0xff] %vm3557, %v3719
    %3733 = vst.msk [vmem:[#allocation3 + $0x9c] sm:$0xff] %vm3557, %v3720
    %3734 = vst.msk [vmem:[#allocation3 + $0xa4] sm:$0xff] %vm3557, %v3721
    %3735 = vst.msk [vmem:[#allocation3 + $0xac] sm:$0xff] %vm3557, %v3722
    %3736 = vst.msk [vmem:[#allocation3 + $0xb4] sm:$0xff] %vm3557, %v3723
    %3737 = vst.msk [vmem:[#allocation3 + $0xbc] sm:$0xff] %vm3557, %v3724
    %3738 = vst.msk [vmem:[#allocation3 + $0xc4] sm:$0xf] %vm3570, %v3725
    %v3739 = vld [vmem:[#allocation3] sm:$0xff]
    %v3740 = vld [vmem:[#allocation3 + $0x8] sm:$0xff]
    %v3741 = vld [vmem:[#allocation3 + $0x10] sm:$0xff]
    %v3742 = vld [vmem:[#allocation3 + $0x18] sm:$0xff]
    %v3743 = vld [vmem:[#allocation3 + $0x20] sm:$0xff]
    %v3744 = vld [vmem:[#allocation3 + $0x28] sm:$0xff]
    %v3745 = vld [vmem:[#allocation3 + $0x30] sm:$0xff]
    %v3746 = vld [vmem:[#allocation3 + $0x38] sm:$0xff]
    %v3747 = vld [vmem:[#allocation3 + $0x40] sm:$0xff]
    %v3748 = vld [vmem:[#allocation3 + $0x48] sm:$0xff]
    %v3749 = vld [vmem:[#allocation3 + $0x50] sm:$0xff]
    %v3750 = vld [vmem:[#allocation3 + $0x58] sm:$0xff]
    %v3751 = vld [vmem:[#allocation3 + $0x60] sm:$0xff]
    %v3752 = vld [vmem:[#allocation3 + $0x68] sm:$0xff]
    %v3753 = vld [vmem:[#allocation3 + $0x70] sm:$0xff]
    %v3754 = vld [vmem:[#allocation3 + $0x78] sm:$0xff]
    %v3755 = vld [vmem:[#allocation3 + $0x80] sm:$0xff]
    %v3756 = vld [vmem:[#allocation3 + $0x88] sm:$0xff]
    %v3757 = vld [vmem:[#allocation3 + $0x90] sm:$0xff]
    %v3758 = vld [vmem:[#allocation3 + $0x98] sm:$0xff]
    %v3759 = vld [vmem:[#allocation3 + $0xa0] sm:$0xff]
    %v3760 = vld [vmem:[#allocation3 + $0xa8] sm:$0xff]
    %v3761 = vld [vmem:[#allocation3 + $0xb0] sm:$0xff]
    %v3762 = vld [vmem:[#allocation3 + $0xb8] sm:$0xff]
    %v3763 = vld [vmem:[#allocation3 + $0xc0] sm:$0xff]
    %v3764 = vld [vmem:[#allocation9] sm:$0xff]
    %v3765 = vld [vmem:[#allocation9 + $0x8] sm:$0xff]
    %v3766 = vld [vmem:[#allocation9 + $0x10] sm:$0xff]
    %v3767 = vld [vmem:[#allocation9 + $0x18] sm:$0xff]
    %v3768 = vld [vmem:[#allocation9 + $0x20] sm:$0xff]
    %v3769 = vld [vmem:[#allocation9 + $0x28] sm:$0xff]
    %v3770 = vld [vmem:[#allocation9 + $0x30] sm:$0xff]
    %v3771 = vld [vmem:[#allocation9 + $0x38] sm:$0xff]
    %v3772 = vld [vmem:[#allocation9 + $0x40] sm:$0xff]
    %v3773 = vld [vmem:[#allocation9 + $0x48] sm:$0xff]
    %v3774 = vld [vmem:[#allocation9 + $0x50] sm:$0xff]
    %v3775 = vld [vmem:[#allocation9 + $0x58] sm:$0xff]
    %v3776 = vld [vmem:[#allocation9 + $0x60] sm:$0xff]
    %v3777 = vld [vmem:[#allocation9 + $0x68] sm:$0xff]
    %v3778 = vld [vmem:[#allocation9 + $0x70] sm:$0xff]
    %v3779 = vld [vmem:[#allocation9 + $0x78] sm:$0xff]
    %v3780 = vld [vmem:[#allocation11] sm:$0x3]
    %v3782 = vperm.slane %v3780, 0
    %v3783 = vperm.slane %v3780, 1
    %v3787 = vsel %vm3557, %v3739, 0
    %v3790 = vsel %vm3557, %v3740, 0
    %v3793 = vsel %vm3557, %v3741, 0
    %v3796 = vsel %vm3557, %v3742, 0
    %v3799 = vsel %vm3557, %v3743, 0
    %v3802 = vsel %vm3557, %v3744, 0
    %v3805 = vsel %vm3557, %v3745, 0
    %v3808 = vsel %vm3557, %v3746, 0
    %v3811 = vsel %vm3557, %v3747, 0
    %v3814 = vsel %vm3557, %v3748, 0
    %v3817 = vsel %vm3557, %v3749, 0
    %v3820 = vsel %vm3557, %v3750, 0
    %v3823 = vsel %vm3557, %v3751, 0
    %v3826 = vsel %vm3557, %v3752, 0
    %v3829 = vsel %vm3557, %v3753, 0
    %v3832 = vsel %vm3557, %v3754, 0
    %v3835 = vsel %vm3557, %v3755, 0
    %v3838 = vsel %vm3557, %v3756, 0
    %v3841 = vsel %vm3557, %v3757, 0
    %v3844 = vsel %vm3557, %v3758, 0
    %v3847 = vsel %vm3557, %v3759, 0
    %v3850 = vsel %vm3557, %v3760, 0
    %v3853 = vsel %vm3557, %v3761, 0
    %v3856 = vsel %vm3557, %v3762, 0
    %v3859 = vsel %vm3557, %v3763, 0
    %3861 = vmatpush.msra.mxu0 0.0
    %3862 = vmatpush.msra.mxu0 0.0
    %3863 = vmatpush.msra.mxu0 0.0
    %3864 = vmatpush.msra.mxu0 0.0
    %3865 = vmatpush.msra.mxu0 0.0
    %3866 = vmatpush.msra.mxu0 0.0
    %3867 = vmatpush.msra.mxu0 0.0
    %3868 = vmatpush.msra.mxu0 0.0
    %3869 = vmatpush.msra.mxu0 %v3778
    %3870 = vmatpush.msra.mxu0 %v3776
    %3871 = vmatpush.msra.mxu0 %v3774
    %3872 = vmatpush.msra.mxu0 %v3772
    %3873 = vmatpush.msra.mxu0 %v3770
    %3874 = vmatpush.msra.mxu0 %v3768
    %3875 = vmatpush.msra.mxu0 %v3766
    %3876 = vmatpush.msra.mxu0 %v3764
    %3877 = vmatmul.f32.gmra.mxu0 %v3787
    %v3878 = vpop.f32.mrf.mxu0
    %v3879 = vadd.f32 %v3782, %v3878
    %3880 = vmatmul.f32.gmra.mxu0 %v3790
    %v3881 = vpop.f32.mrf.mxu0
    %v3882 = vadd.f32 %v3782, %v3881
    %3883 = vmatmul.f32.gmra.mxu0 %v3793
    %v3884 = vpop.f32.mrf.mxu0
    %v3885 = vadd.f32 %v3782, %v3884
    %3886 = vmatmul.f32.gmra.mxu0 %v3796
    %v3887 = vpop.f32.mrf.mxu0
    %v3888 = vadd.f32 %v3782, %v3887
    %3889 = vmatmul.f32.gmra.mxu0 %v3799
    %v3890 = vpop.f32.mrf.mxu0
    %v3891 = vadd.f32 %v3782, %v3890
    %3892 = vmatmul.f32.gmra.mxu0 %v3802
    %v3893 = vpop.f32.mrf.mxu0
    %v3894 = vadd.f32 %v3782, %v3893
    %3895 = vmatmul.f32.gmra.mxu0 %v3805
    %v3896 = vpop.f32.mrf.mxu0
    %v3897 = vadd.f32 %v3782, %v3896
    %3898 = vmatmul.f32.gmra.mxu0 %v3808
    %v3899 = vpop.f32.mrf.mxu0
    %v3900 = vadd.f32 %v3782, %v3899
    %3901 = vmatmul.f32.gmra.mxu0 %v3811
    %v3902 = vpop.f32.mrf.mxu0
    %v3903 = vadd.f32 %v3782, %v3902
    %3904 = vmatmul.f32.gmra.mxu0 %v3814
    %v3905 = vpop.f32.mrf.mxu0
    %v3906 = vadd.f32 %v3782, %v3905
    %3907 = vmatmul.f32.gmra.mxu0 %v3817
    %v3908 = vpop.f32.mrf.mxu0
    %v3909 = vadd.f32 %v3782, %v3908
    %3910 = vmatmul.f32.gmra.mxu0 %v3820
    %v3911 = vpop.f32.mrf.mxu0
    %v3912 = vadd.f32 %v3782, %v3911
    %3913 = vmatmul.f32.gmra.mxu0 %v3823
    %v3914 = vpop.f32.mrf.mxu0
    %v3915 = vadd.f32 %v3782, %v3914
    %3916 = vmatmul.f32.gmra.mxu0 %v3826
    %v3917 = vpop.f32.mrf.mxu0
    %v3918 = vadd.f32 %v3782, %v3917
    %3919 = vmatmul.f32.gmra.mxu0 %v3829
    %v3920 = vpop.f32.mrf.mxu0
    %v3921 = vadd.f32 %v3782, %v3920
    %3922 = vmatmul.f32.gmra.mxu0 %v3832
    %v3923 = vpop.f32.mrf.mxu0
    %v3924 = vadd.f32 %v3782, %v3923
    %3925 = vmatmul.f32.gmra.mxu0 %v3835
    %v3926 = vpop.f32.mrf.mxu0
    %v3927 = vadd.f32 %v3782, %v3926
    %3928 = vmatmul.f32.gmra.mxu0 %v3838
    %v3929 = vpop.f32.mrf.mxu0
    %v3930 = vadd.f32 %v3782, %v3929
    %3931 = vmatmul.f32.gmra.mxu0 %v3841
    %v3932 = vpop.f32.mrf.mxu0
    %v3933 = vadd.f32 %v3782, %v3932
    %3934 = vmatmul.f32.gmra.mxu0 %v3844
    %v3935 = vpop.f32.mrf.mxu0
    %v3936 = vadd.f32 %v3782, %v3935
    %3937 = vmatmul.f32.gmra.mxu0 %v3847
    %v3938 = vpop.f32.mrf.mxu0
    %v3939 = vadd.f32 %v3782, %v3938
    %3940 = vmatmul.f32.gmra.mxu0 %v3850
    %v3941 = vpop.f32.mrf.mxu0
    %v3942 = vadd.f32 %v3782, %v3941
    %3943 = vmatmul.f32.gmra.mxu0 %v3853
    %v3944 = vpop.f32.mrf.mxu0
    %v3945 = vadd.f32 %v3782, %v3944
    %3946 = vmatmul.f32.gmra.mxu0 %v3856
    %v3947 = vpop.f32.mrf.mxu0
    %v3948 = vadd.f32 %v3782, %v3947
    %3949 = vmatmul.f32.gmra.mxu0 %v3859
    %v3950 = vpop.f32.mrf.mxu0
    %v3951 = vadd.f32 %v3782, %v3950
    %3952 = vdwg.mxu0
    %3953 = vmatpush.msra.mxu0 0.0
    %3954 = vmatpush.msra.mxu0 0.0
    %3955 = vmatpush.msra.mxu0 0.0
    %3956 = vmatpush.msra.mxu0 0.0
    %3957 = vmatpush.msra.mxu0 0.0
    %3958 = vmatpush.msra.mxu0 0.0
    %3959 = vmatpush.msra.mxu0 0.0
    %3960 = vmatpush.msra.mxu0 0.0
    %3961 = vmatpush.msra.mxu0 %v3779
    %3962 = vmatpush.msra.mxu0 %v3777
    %3963 = vmatpush.msra.mxu0 %v3775
    %3964 = vmatpush.msra.mxu0 %v3773
    %3965 = vmatpush.msra.mxu0 %v3771
    %3966 = vmatpush.msra.mxu0 %v3769
    %3967 = vmatpush.msra.mxu0 %v3767
    %3968 = vmatpush.msra.mxu0 %v3765
    %3969 = vmatmul.f32.gmra.mxu0 %v3787
    %v3970 = vpop.f32.mrf.mxu0
    %v3971 = vadd.f32 %v3783, %v3970
    %3972 = vmatmul.f32.gmra.mxu0 %v3790
    %v3973 = vpop.f32.mrf.mxu0
    %v3974 = vadd.f32 %v3783, %v3973
    %3975 = vmatmul.f32.gmra.mxu0 %v3793
    %v3976 = vpop.f32.mrf.mxu0
    %v3977 = vadd.f32 %v3783, %v3976
    %3978 = vmatmul.f32.gmra.mxu0 %v3796
    %v3979 = vpop.f32.mrf.mxu0
    %v3980 = vadd.f32 %v3783, %v3979
    %3981 = vmatmul.f32.gmra.mxu0 %v3799
    %v3982 = vpop.f32.mrf.mxu0
    %v3983 = vadd.f32 %v3783, %v3982
    %3984 = vmatmul.f32.gmra.mxu0 %v3802
    %v3985 = vpop.f32.mrf.mxu0
    %v3986 = vadd.f32 %v3783, %v3985
    %3987 = vmatmul.f32.gmra.mxu0 %v3805
    %v3988 = vpop.f32.mrf.mxu0
    %v3989 = vadd.f32 %v3783, %v3988
    %3990 = vmatmul.f32.gmra.mxu0 %v3808
    %v3991 = vpop.f32.mrf.mxu0
    %v3992 = vadd.f32 %v3783, %v3991
    %3993 = vmatmul.f32.gmra.mxu0 %v3811
    %v3994 = vpop.f32.mrf.mxu0
    %v3995 = vadd.f32 %v3783, %v3994
    %3996 = vmatmul.f32.gmra.mxu0 %v3814
    %v3997 = vpop.f32.mrf.mxu0
    %v3998 = vadd.f32 %v3783, %v3997
    %3999 = vmatmul.f32.gmra.mxu0 %v3817
    %v4000 = vpop.f32.mrf.mxu0
    %v4001 = vadd.f32 %v3783, %v4000
    %4002 = vmatmul.f32.gmra.mxu0 %v3820
    %v4003 = vpop.f32.mrf.mxu0
    %v4004 = vadd.f32 %v3783, %v4003
    %4005 = vmatmul.f32.gmra.mxu0 %v3823
    %v4006 = vpop.f32.mrf.mxu0
    %v4007 = vadd.f32 %v3783, %v4006
    %4008 = vmatmul.f32.gmra.mxu0 %v3826
    %v4009 = vpop.f32.mrf.mxu0
    %v4010 = vadd.f32 %v3783, %v4009
    %4011 = vmatmul.f32.gmra.mxu0 %v3829
    %v4012 = vpop.f32.mrf.mxu0
    %v4013 = vadd.f32 %v3783, %v4012
    %4014 = vmatmul.f32.gmra.mxu0 %v3832
    %v4015 = vpop.f32.mrf.mxu0
    %v4016 = vadd.f32 %v3783, %v4015
    %4017 = vmatmul.f32.gmra.mxu0 %v3835
    %v4018 = vpop.f32.mrf.mxu0
    %v4019 = vadd.f32 %v3783, %v4018
    %4020 = vmatmul.f32.gmra.mxu0 %v3838
    %v4021 = vpop.f32.mrf.mxu0
    %v4022 = vadd.f32 %v3783, %v4021
    %4023 = vmatmul.f32.gmra.mxu0 %v3841
    %v4024 = vpop.f32.mrf.mxu0
    %v4025 = vadd.f32 %v3783, %v4024
    %4026 = vmatmul.f32.gmra.mxu0 %v3844
    %v4027 = vpop.f32.mrf.mxu0
    %v4028 = vadd.f32 %v3783, %v4027
    %4029 = vmatmul.f32.gmra.mxu0 %v3847
    %v4030 = vpop.f32.mrf.mxu0
    %v4031 = vadd.f32 %v3783, %v4030
    %4032 = vmatmul.f32.gmra.mxu0 %v3850
    %v4033 = vpop.f32.mrf.mxu0
    %v4034 = vadd.f32 %v3783, %v4033
    %4035 = vmatmul.f32.gmra.mxu0 %v3853
    %v4036 = vpop.f32.mrf.mxu0
    %v4037 = vadd.f32 %v3783, %v4036
    %4038 = vmatmul.f32.gmra.mxu0 %v3856
    %v4039 = vpop.f32.mrf.mxu0
    %v4040 = vadd.f32 %v3783, %v4039
    %4041 = vmatmul.f32.gmra.mxu0 %v3859
    %v4042 = vpop.f32.mrf.mxu0
    %v4043 = vadd.f32 %v3783, %v4042
    %4044 = vdwg.mxu0
    %v4071 = vrot.slane %v3971, 7
    %v4072 = vrot.slane %v3974, 7
    %v4073 = vrot.slane %v3977, 7
    %v4074 = vrot.slane %v3980, 7
    %v4075 = vrot.slane %v3983, 7
    %v4076 = vrot.slane %v3986, 7
    %v4077 = vrot.slane %v3989, 7
    %v4078 = vrot.slane %v3992, 7
    %v4079 = vrot.slane %v3995, 7
    %v4080 = vrot.slane %v3998, 7
    %v4081 = vrot.slane %v4001, 7
    %v4082 = vrot.slane %v4004, 7
    %v4083 = vrot.slane %v4007, 7
    %vm4084 = vcmask 1040384
    %v4085 = vsel %vm4084, %v3879, %v4071
    %vm4086 = vcmask 1041409
    %v4087 = vsel %vm4086, %v3879, %v4071
    %v4088 = vrot.slane %v4087, 1
    %vm4089 = vcmask 1042434
    %v4090 = vsel %vm4089, %v3879, %v4071
    %v4091 = vrot.slane %v4090, 2
    %vm4092 = vcmask 1043459
    %v4093 = vsel %vm4092, %v3879, %v4071
    %v4094 = vrot.slane %v4093, 3
    %vm4095 = vcmask 1044484
    %v4096 = vsel %vm4095, %v3879, %v4071
    %v4097 = vrot.slane %v4096, 4
    %vm4098 = vcmask 1045509
    %v4099 = vsel %vm4098, %v3879, %v4071
    %v4100 = vrot.slane %v4099, 5
    %vm4101 = vcmask 1046534
    %v4102 = vsel %vm4101, %v3879, %v4071
    %v4103 = vrot.slane %v4102, 6
    %vm4104 = vcmask 1046528
    %v4105 = vsel %vm4104, %v4071, %v3879
    %v4106 = vrot.slane %v4105, 7
    %v4107 = vsel %vm4084, %v3882, %v4072
    %v4108 = vsel %vm4086, %v3882, %v4072
    %v4109 = vrot.slane %v4108, 1
    %v4110 = vsel %vm4089, %v3882, %v4072
    %v4111 = vrot.slane %v4110, 2
    %v4112 = vsel %vm4092, %v3882, %v4072
    %v4113 = vrot.slane %v4112, 3
    %v4114 = vsel %vm4095, %v3882, %v4072
    %v4115 = vrot.slane %v4114, 4
    %v4116 = vsel %vm4098, %v3882, %v4072
    %v4117 = vrot.slane %v4116, 5
    %v4118 = vsel %vm4101, %v3882, %v4072
    %v4119 = vrot.slane %v4118, 6
    %v4120 = vsel %vm4104, %v4072, %v3882
    %v4121 = vrot.slane %v4120, 7
    %v4122 = vsel %vm4084, %v3885, %v4073
    %v4123 = vsel %vm4086, %v3885, %v4073
    %v4124 = vrot.slane %v4123, 1
    %v4125 = vsel %vm4089, %v3885, %v4073
    %v4126 = vrot.slane %v4125, 2
    %v4127 = vsel %vm4092, %v3885, %v4073
    %v4128 = vrot.slane %v4127, 3
    %v4129 = vsel %vm4095, %v3885, %v4073
    %v4130 = vrot.slane %v4129, 4
    %v4131 = vsel %vm4098, %v3885, %v4073
    %v4132 = vrot.slane %v4131, 5
    %v4133 = vsel %vm4101, %v3885, %v4073
    %v4134 = vrot.slane %v4133, 6
    %v4135 = vsel %vm4104, %v4073, %v3885
    %v4136 = vrot.slane %v4135, 7
    %v4137 = vsel %vm4084, %v3888, %v4074
    %v4138 = vsel %vm4086, %v3888, %v4074
    %v4139 = vrot.slane %v4138, 1
    %v4140 = vsel %vm4089, %v3888, %v4074
    %v4141 = vrot.slane %v4140, 2
    %v4142 = vsel %vm4092, %v3888, %v4074
    %v4143 = vrot.slane %v4142, 3
    %v4144 = vsel %vm4095, %v3888, %v4074
    %v4145 = vrot.slane %v4144, 4
    %v4146 = vsel %vm4098, %v3888, %v4074
    %v4147 = vrot.slane %v4146, 5
    %v4148 = vsel %vm4101, %v3888, %v4074
    %v4149 = vrot.slane %v4148, 6
    %v4150 = vsel %vm4104, %v4074, %v3888
    %v4151 = vrot.slane %v4150, 7
    %v4152 = vsel %vm4084, %v3891, %v4075
    %v4153 = vsel %vm4086, %v3891, %v4075
    %v4154 = vrot.slane %v4153, 1
    %v4155 = vsel %vm4089, %v3891, %v4075
    %v4156 = vrot.slane %v4155, 2
    %v4157 = vsel %vm4092, %v3891, %v4075
    %v4158 = vrot.slane %v4157, 3
    %v4159 = vsel %vm4095, %v3891, %v4075
    %v4160 = vrot.slane %v4159, 4
    %v4161 = vsel %vm4098, %v3891, %v4075
    %v4162 = vrot.slane %v4161, 5
    %v4163 = vsel %vm4101, %v3891, %v4075
    %v4164 = vrot.slane %v4163, 6
    %v4165 = vsel %vm4104, %v4075, %v3891
    %v4166 = vrot.slane %v4165, 7
    %v4167 = vsel %vm4084, %v3894, %v4076
    %v4168 = vsel %vm4086, %v3894, %v4076
    %v4169 = vrot.slane %v4168, 1
    %v4170 = vsel %vm4089, %v3894, %v4076
    %v4171 = vrot.slane %v4170, 2
    %v4172 = vsel %vm4092, %v3894, %v4076
    %v4173 = vrot.slane %v4172, 3
    %v4174 = vsel %vm4095, %v3894, %v4076
    %v4175 = vrot.slane %v4174, 4
    %v4176 = vsel %vm4098, %v3894, %v4076
    %v4177 = vrot.slane %v4176, 5
    %v4178 = vsel %vm4101, %v3894, %v4076
    %v4179 = vrot.slane %v4178, 6
    %v4180 = vsel %vm4104, %v4076, %v3894
    %v4181 = vrot.slane %v4180, 7
    %v4182 = vsel %vm4084, %v3897, %v4077
    %v4183 = vsel %vm4086, %v3897, %v4077
    %v4184 = vrot.slane %v4183, 1
    %v4185 = vsel %vm4089, %v3897, %v4077
    %v4186 = vrot.slane %v4185, 2
    %v4187 = vsel %vm4092, %v3897, %v4077
    %v4188 = vrot.slane %v4187, 3
    %v4189 = vsel %vm4095, %v3897, %v4077
    %v4190 = vrot.slane %v4189, 4
    %v4191 = vsel %vm4098, %v3897, %v4077
    %v4192 = vrot.slane %v4191, 5
    %v4193 = vsel %vm4101, %v3897, %v4077
    %v4194 = vrot.slane %v4193, 6
    %v4195 = vsel %vm4104, %v4077, %v3897
    %v4196 = vrot.slane %v4195, 7
    %v4197 = vsel %vm4084, %v3900, %v4078
    %v4198 = vsel %vm4086, %v3900, %v4078
    %v4199 = vrot.slane %v4198, 1
    %v4200 = vsel %vm4089, %v3900, %v4078
    %v4201 = vrot.slane %v4200, 2
    %v4202 = vsel %vm4092, %v3900, %v4078
    %v4203 = vrot.slane %v4202, 3
    %v4204 = vsel %vm4095, %v3900, %v4078
    %v4205 = vrot.slane %v4204, 4
    %v4206 = vsel %vm4098, %v3900, %v4078
    %v4207 = vrot.slane %v4206, 5
    %v4208 = vsel %vm4101, %v3900, %v4078
    %v4209 = vrot.slane %v4208, 6
    %v4210 = vsel %vm4104, %v4078, %v3900
    %v4211 = vrot.slane %v4210, 7
    %v4212 = vsel %vm4084, %v3903, %v4079
    %v4213 = vsel %vm4086, %v3903, %v4079
    %v4214 = vrot.slane %v4213, 1
    %v4215 = vsel %vm4089, %v3903, %v4079
    %v4216 = vrot.slane %v4215, 2
    %v4217 = vsel %vm4092, %v3903, %v4079
    %v4218 = vrot.slane %v4217, 3
    %v4219 = vsel %vm4095, %v3903, %v4079
    %v4220 = vrot.slane %v4219, 4
    %v4221 = vsel %vm4098, %v3903, %v4079
    %v4222 = vrot.slane %v4221, 5
    %v4223 = vsel %vm4101, %v3903, %v4079
    %v4224 = vrot.slane %v4223, 6
    %v4225 = vsel %vm4104, %v4079, %v3903
    %v4226 = vrot.slane %v4225, 7
    %v4227 = vsel %vm4084, %v3906, %v4080
    %v4228 = vsel %vm4086, %v3906, %v4080
    %v4229 = vrot.slane %v4228, 1
    %v4230 = vsel %vm4089, %v3906, %v4080
    %v4231 = vrot.slane %v4230, 2
    %v4232 = vsel %vm4092, %v3906, %v4080
    %v4233 = vrot.slane %v4232, 3
    %v4234 = vsel %vm4095, %v3906, %v4080
    %v4235 = vrot.slane %v4234, 4
    %v4236 = vsel %vm4098, %v3906, %v4080
    %v4237 = vrot.slane %v4236, 5
    %v4238 = vsel %vm4101, %v3906, %v4080
    %v4239 = vrot.slane %v4238, 6
    %v4240 = vsel %vm4104, %v4080, %v3906
    %v4241 = vrot.slane %v4240, 7
    %v4242 = vsel %vm4084, %v3909, %v4081
    %v4243 = vsel %vm4086, %v3909, %v4081
    %v4244 = vrot.slane %v4243, 1
    %v4245 = vsel %vm4089, %v3909, %v4081
    %v4246 = vrot.slane %v4245, 2
    %v4247 = vsel %vm4092, %v3909, %v4081
    %v4248 = vrot.slane %v4247, 3
    %v4249 = vsel %vm4095, %v3909, %v4081
    %v4250 = vrot.slane %v4249, 4
    %v4251 = vsel %vm4098, %v3909, %v4081
    %v4252 = vrot.slane %v4251, 5
    %v4253 = vsel %vm4101, %v3909, %v4081
    %v4254 = vrot.slane %v4253, 6
    %v4255 = vsel %vm4104, %v4081, %v3909
    %v4256 = vrot.slane %v4255, 7
    %v4257 = vsel %vm4084, %v3912, %v4082
    %v4258 = vsel %vm4086, %v3912, %v4082
    %v4259 = vrot.slane %v4258, 1
    %v4260 = vsel %vm4089, %v3912, %v4082
    %v4261 = vrot.slane %v4260, 2
    %v4262 = vsel %vm4092, %v3912, %v4082
    %v4263 = vrot.slane %v4262, 3
    %v4264 = vsel %vm4095, %v3912, %v4082
    %v4265 = vrot.slane %v4264, 4
    %v4266 = vsel %vm4098, %v3912, %v4082
    %v4267 = vrot.slane %v4266, 5
    %v4268 = vsel %vm4101, %v3912, %v4082
    %v4269 = vrot.slane %v4268, 6
    %v4270 = vsel %vm4104, %v4082, %v3912
    %v4271 = vrot.slane %v4270, 7
    %v4272 = vsel %vm4084, %v3915, %v4083
    %v4273 = vsel %vm4086, %v3915, %v4083
    %v4274 = vrot.slane %v4273, 1
    %v4275 = vsel %vm4089, %v3915, %v4083
    %v4276 = vrot.slane %v4275, 2
    %v4277 = vsel %vm4092, %v3915, %v4083
    %v4278 = vrot.slane %v4277, 3
    %v4379 = vlaneseq
    %vm4380 = vcmp.ge.s32.totalorder %v4379, 0
    %vm4381 = vcmp.lt.s32.totalorder %v4379, 256
    %vm4382 = vmand %vm4380, %vm4381
    %4383 = vst.msk [vmem:[%s7] ss:$2 sm:$0x3] %vm4382, %v4085
    %s4384 = scalar_lea.vmem %s7, 4
    %4385 = vst.msk [vmem:[%s4384] ss:$2 sm:$0x3] %vm4382, %v4088
    %s4386 = scalar_lea.vmem %s7, 8
    %4387 = vst.msk [vmem:[%s4386] ss:$2 sm:$0x3] %vm4382, %v4091
    %s4388 = scalar_lea.vmem %s7, 12
    %4389 = vst.msk [vmem:[%s4388] ss:$2 sm:$0x3] %vm4382, %v4094
    %s4390 = scalar_lea.vmem %s7, 16
    %4391 = vst.msk [vmem:[%s4390] ss:$2 sm:$0x3] %vm4382, %v4097
    %s4392 = scalar_lea.vmem %s7, 20
    %4393 = vst.msk [vmem:[%s4392] ss:$2 sm:$0x3] %vm4382, %v4100
    %s4394 = scalar_lea.vmem %s7, 24
    %4395 = vst.msk [vmem:[%s4394] ss:$2 sm:$0x3] %vm4382, %v4103
    %s4396 = scalar_lea.vmem %s7, 28
    %4397 = vst.msk [vmem:[%s4396] ss:$2 sm:$0x3] %vm4382, %v4106
    %s4398 = scalar_lea.vmem %s7, 32
    %4399 = vst.msk [vmem:[%s4398] ss:$2 sm:$0x3] %vm4382, %v4107
    %s4400 = scalar_lea.vmem %s7, 36
    %4401 = vst.msk [vmem:[%s4400] ss:$2 sm:$0x3] %vm4382, %v4109
    %s4402 = scalar_lea.vmem %s7, 40
    %4403 = vst.msk [vmem:[%s4402] ss:$2 sm:$0x3] %vm4382, %v4111
    %s4404 = scalar_lea.vmem %s7, 44
    %4405 = vst.msk [vmem:[%s4404] ss:$2 sm:$0x3] %vm4382, %v4113
    %s4406 = scalar_lea.vmem %s7, 48
    %4407 = vst.msk [vmem:[%s4406] ss:$2 sm:$0x3] %vm4382, %v4115
    %s4408 = scalar_lea.vmem %s7, 52
    %4409 = vst.msk [vmem:[%s4408] ss:$2 sm:$0x3] %vm4382, %v4117
    %s4410 = scalar_lea.vmem %s7, 56
    %4411 = vst.msk [vmem:[%s4410] ss:$2 sm:$0x3] %vm4382, %v4119
    %s4412 = scalar_lea.vmem %s7, 60
    %4413 = vst.msk [vmem:[%s4412] ss:$2 sm:$0x3] %vm4382, %v4121
    %s4414 = scalar_lea.vmem %s7, 64
    %4415 = vst.msk [vmem:[%s4414] ss:$2 sm:$0x3] %vm4382, %v4122
    %s4416 = scalar_lea.vmem %s7, 68
    %4417 = vst.msk [vmem:[%s4416] ss:$2 sm:$0x3] %vm4382, %v4124
    %s4418 = scalar_lea.vmem %s7, 72
    %4419 = vst.msk [vmem:[%s4418] ss:$2 sm:$0x3] %vm4382, %v4126
    %s4420 = scalar_lea.vmem %s7, 76
    %4421 = vst.msk [vmem:[%s4420] ss:$2 sm:$0x3] %vm4382, %v4128
    %s4422 = scalar_lea.vmem %s7, 80
    %4423 = vst.msk [vmem:[%s4422] ss:$2 sm:$0x3] %vm4382, %v4130
    %s4424 = scalar_lea.vmem %s7, 84
    %4425 = vst.msk [vmem:[%s4424] ss:$2 sm:$0x3] %vm4382, %v4132
    %s4426 = scalar_lea.vmem %s7, 88
    %4427 = vst.msk [vmem:[%s4426] ss:$2 sm:$0x3] %vm4382, %v4134
    %s4428 = scalar_lea.vmem %s7, 92
    %4429 = vst.msk [vmem:[%s4428] ss:$2 sm:$0x3] %vm4382, %v4136
    %s4430 = scalar_lea.vmem %s7, 96
    %4431 = vst.msk [vmem:[%s4430] ss:$2 sm:$0x3] %vm4382, %v4137
    %s4432 = scalar_lea.vmem %s7, 100
    %4433 = vst.msk [vmem:[%s4432] ss:$2 sm:$0x3] %vm4382, %v4139
    %s4434 = scalar_lea.vmem %s7, 104
    %4435 = vst.msk [vmem:[%s4434] ss:$2 sm:$0x3] %vm4382, %v4141
    %s4436 = scalar_lea.vmem %s7, 108
    %4437 = vst.msk [vmem:[%s4436] ss:$2 sm:$0x3] %vm4382, %v4143
    %s4438 = scalar_lea.vmem %s7, 112
    %4439 = vst.msk [vmem:[%s4438] ss:$2 sm:$0x3] %vm4382, %v4145
    %s4440 = scalar_lea.vmem %s7, 116
    %4441 = vst.msk [vmem:[%s4440] ss:$2 sm:$0x3] %vm4382, %v4147
    %s4442 = scalar_lea.vmem %s7, 120
    %4443 = vst.msk [vmem:[%s4442] ss:$2 sm:$0x3] %vm4382, %v4149
    %s4444 = scalar_lea.vmem %s7, 124
    %4445 = vst.msk [vmem:[%s4444] ss:$2 sm:$0x3] %vm4382, %v4151
    %s4446 = scalar_lea.vmem %s7, 128
    %4447 = vst.msk [vmem:[%s4446] ss:$2 sm:$0x3] %vm4382, %v4152
    %s4448 = scalar_lea.vmem %s7, 132
    %4449 = vst.msk [vmem:[%s4448] ss:$2 sm:$0x3] %vm4382, %v4154
    %s4450 = scalar_lea.vmem %s7, 136
    %4451 = vst.msk [vmem:[%s4450] ss:$2 sm:$0x3] %vm4382, %v4156
    %s4452 = scalar_lea.vmem %s7, 140
    %4453 = vst.msk [vmem:[%s4452] ss:$2 sm:$0x3] %vm4382, %v4158
    %s4454 = scalar_lea.vmem %s7, 144
    %4455 = vst.msk [vmem:[%s4454] ss:$2 sm:$0x3] %vm4382, %v4160
    %s4456 = scalar_lea.vmem %s7, 148
    %4457 = vst.msk [vmem:[%s4456] ss:$2 sm:$0x3] %vm4382, %v4162
    %s4458 = scalar_lea.vmem %s7, 152
    %4459 = vst.msk [vmem:[%s4458] ss:$2 sm:$0x3] %vm4382, %v4164
    %s4460 = scalar_lea.vmem %s7, 156
    %4461 = vst.msk [vmem:[%s4460] ss:$2 sm:$0x3] %vm4382, %v4166
    %s4462 = scalar_lea.vmem %s7, 160
    %4463 = vst.msk [vmem:[%s4462] ss:$2 sm:$0x3] %vm4382, %v4167
    %s4464 = scalar_lea.vmem %s7, 164
    %4465 = vst.msk [vmem:[%s4464] ss:$2 sm:$0x3] %vm4382, %v4169
    %s4466 = scalar_lea.vmem %s7, 168
    %4467 = vst.msk [vmem:[%s4466] ss:$2 sm:$0x3] %vm4382, %v4171
    %s4468 = scalar_lea.vmem %s7, 172
    %4469 = vst.msk [vmem:[%s4468] ss:$2 sm:$0x3] %vm4382, %v4173
    %s4470 = scalar_lea.vmem %s7, 176
    %4471 = vst.msk [vmem:[%s4470] ss:$2 sm:$0x3] %vm4382, %v4175
    %s4472 = scalar_lea.vmem %s7, 180
    %4473 = vst.msk [vmem:[%s4472] ss:$2 sm:$0x3] %vm4382, %v4177
    %s4474 = scalar_lea.vmem %s7, 184
    %4475 = vst.msk [vmem:[%s4474] ss:$2 sm:$0x3] %vm4382, %v4179
    %s4476 = scalar_lea.vmem %s7, 188
    %4477 = vst.msk [vmem:[%s4476] ss:$2 sm:$0x3] %vm4382, %v4181
    %s4478 = scalar_lea.vmem %s7, 192
    %4479 = vst.msk [vmem:[%s4478] ss:$2 sm:$0x3] %vm4382, %v4182
    %s4480 = scalar_lea.vmem %s7, 196
    %4481 = vst.msk [vmem:[%s4480] ss:$2 sm:$0x3] %vm4382, %v4184
    %s4482 = scalar_lea.vmem %s7, 200
    %4483 = vst.msk [vmem:[%s4482] ss:$2 sm:$0x3] %vm4382, %v4186
    %s4484 = scalar_lea.vmem %s7, 204
    %4485 = vst.msk [vmem:[%s4484] ss:$2 sm:$0x3] %vm4382, %v4188
    %s4486 = scalar_lea.vmem %s7, 208
    %4487 = vst.msk [vmem:[%s4486] ss:$2 sm:$0x3] %vm4382, %v4190
    %s4488 = scalar_lea.vmem %s7, 212
    %4489 = vst.msk [vmem:[%s4488] ss:$2 sm:$0x3] %vm4382, %v4192
    %s4490 = scalar_lea.vmem %s7, 216
    %4491 = vst.msk [vmem:[%s4490] ss:$2 sm:$0x3] %vm4382, %v4194
    %s4492 = scalar_lea.vmem %s7, 220
    %4493 = vst.msk [vmem:[%s4492] ss:$2 sm:$0x3] %vm4382, %v4196
    %s4494 = scalar_lea.vmem %s7, 224
    %4495 = vst.msk [vmem:[%s4494] ss:$2 sm:$0x3] %vm4382, %v4197
    %s4496 = scalar_lea.vmem %s7, 228
    %4497 = vst.msk [vmem:[%s4496] ss:$2 sm:$0x3] %vm4382, %v4199
    %s4498 = scalar_lea.vmem %s7, 232
    %4499 = vst.msk [vmem:[%s4498] ss:$2 sm:$0x3] %vm4382, %v4201
    %s4500 = scalar_lea.vmem %s7, 236
    %4501 = vst.msk [vmem:[%s4500] ss:$2 sm:$0x3] %vm4382, %v4203
    %s4502 = scalar_lea.vmem %s7, 240
    %4503 = vst.msk [vmem:[%s4502] ss:$2 sm:$0x3] %vm4382, %v4205
    %s4504 = scalar_lea.vmem %s7, 244
    %4505 = vst.msk [vmem:[%s4504] ss:$2 sm:$0x3] %vm4382, %v4207
    %s4506 = scalar_lea.vmem %s7, 248
    %4507 = vst.msk [vmem:[%s4506] ss:$2 sm:$0x3] %vm4382, %v4209
    %s4508 = scalar_lea.vmem %s7, 252
    %4509 = vst.msk [vmem:[%s4508] ss:$2 sm:$0x3] %vm4382, %v4211
    %s4510 = scalar_lea.vmem %s7, 256
    %4511 = vst.msk [vmem:[%s4510] ss:$2 sm:$0x3] %vm4382, %v4212
    %s4512 = scalar_lea.vmem %s7, 260
    %4513 = vst.msk [vmem:[%s4512] ss:$2 sm:$0x3] %vm4382, %v4214
    %s4514 = scalar_lea.vmem %s7, 264
    %4515 = vst.msk [vmem:[%s4514] ss:$2 sm:$0x3] %vm4382, %v4216
    %s4516 = scalar_lea.vmem %s7, 268
    %4517 = vst.msk [vmem:[%s4516] ss:$2 sm:$0x3] %vm4382, %v4218
    %s4518 = scalar_lea.vmem %s7, 272
    %4519 = vst.msk [vmem:[%s4518] ss:$2 sm:$0x3] %vm4382, %v4220
    %s4520 = scalar_lea.vmem %s7, 276
    %4521 = vst.msk [vmem:[%s4520] ss:$2 sm:$0x3] %vm4382, %v4222
    %s4522 = scalar_lea.vmem %s7, 280
    %4523 = vst.msk [vmem:[%s4522] ss:$2 sm:$0x3] %vm4382, %v4224
    %s4524 = scalar_lea.vmem %s7, 284
    %4525 = vst.msk [vmem:[%s4524] ss:$2 sm:$0x3] %vm4382, %v4226
    %s4526 = scalar_lea.vmem %s7, 288
    %4527 = vst.msk [vmem:[%s4526] ss:$2 sm:$0x3] %vm4382, %v4227
    %s4528 = scalar_lea.vmem %s7, 292
    %4529 = vst.msk [vmem:[%s4528] ss:$2 sm:$0x3] %vm4382, %v4229
    %s4530 = scalar_lea.vmem %s7, 296
    %4531 = vst.msk [vmem:[%s4530] ss:$2 sm:$0x3] %vm4382, %v4231
    %s4532 = scalar_lea.vmem %s7, 300
    %4533 = vst.msk [vmem:[%s4532] ss:$2 sm:$0x3] %vm4382, %v4233
    %s4534 = scalar_lea.vmem %s7, 304
    %4535 = vst.msk [vmem:[%s4534] ss:$2 sm:$0x3] %vm4382, %v4235
    %s4536 = scalar_lea.vmem %s7, 308
    %4537 = vst.msk [vmem:[%s4536] ss:$2 sm:$0x3] %vm4382, %v4237
    %s4538 = scalar_lea.vmem %s7, 312
    %4539 = vst.msk [vmem:[%s4538] ss:$2 sm:$0x3] %vm4382, %v4239
    %s4540 = scalar_lea.vmem %s7, 316
    %4541 = vst.msk [vmem:[%s4540] ss:$2 sm:$0x3] %vm4382, %v4241
    %s4542 = scalar_lea.vmem %s7, 320
    %4543 = vst.msk [vmem:[%s4542] ss:$2 sm:$0x3] %vm4382, %v4242
    %s4544 = scalar_lea.vmem %s7, 324
    %4545 = vst.msk [vmem:[%s4544] ss:$2 sm:$0x3] %vm4382, %v4244
    %s4546 = scalar_lea.vmem %s7, 328
    %4547 = vst.msk [vmem:[%s4546] ss:$2 sm:$0x3] %vm4382, %v4246
    %s4548 = scalar_lea.vmem %s7, 332
    %4549 = vst.msk [vmem:[%s4548] ss:$2 sm:$0x3] %vm4382, %v4248
    %s4550 = scalar_lea.vmem %s7, 336
    %4551 = vst.msk [vmem:[%s4550] ss:$2 sm:$0x3] %vm4382, %v4250
    %s4552 = scalar_lea.vmem %s7, 340
    %4553 = vst.msk [vmem:[%s4552] ss:$2 sm:$0x3] %vm4382, %v4252
    %s4554 = scalar_lea.vmem %s7, 344
    %4555 = vst.msk [vmem:[%s4554] ss:$2 sm:$0x3] %vm4382, %v4254
    %s4556 = scalar_lea.vmem %s7, 348
    %4557 = vst.msk [vmem:[%s4556] ss:$2 sm:$0x3] %vm4382, %v4256
    %s4558 = scalar_lea.vmem %s7, 352
    %4559 = vst.msk [vmem:[%s4558] ss:$2 sm:$0x3] %vm4382, %v4257
    %s4560 = scalar_lea.vmem %s7, 356
    %4561 = vst.msk [vmem:[%s4560] ss:$2 sm:$0x3] %vm4382, %v4259
    %s4562 = scalar_lea.vmem %s7, 360
    %4563 = vst.msk [vmem:[%s4562] ss:$2 sm:$0x3] %vm4382, %v4261
    %s4564 = scalar_lea.vmem %s7, 364
    %4565 = vst.msk [vmem:[%s4564] ss:$2 sm:$0x3] %vm4382, %v4263
    %s4566 = scalar_lea.vmem %s7, 368
    %4567 = vst.msk [vmem:[%s4566] ss:$2 sm:$0x3] %vm4382, %v4265
    %s4568 = scalar_lea.vmem %s7, 372
    %4569 = vst.msk [vmem:[%s4568] ss:$2 sm:$0x3] %vm4382, %v4267
    %s4570 = scalar_lea.vmem %s7, 376
    %4571 = vst.msk [vmem:[%s4570] ss:$2 sm:$0x3] %vm4382, %v4269
    %s4572 = scalar_lea.vmem %s7, 380
    %4573 = vst.msk [vmem:[%s4572] ss:$2 sm:$0x3] %vm4382, %v4271
    %s4574 = scalar_lea.vmem %s7, 384
    %4575 = vst.msk [vmem:[%s4574] ss:$2 sm:$0x3] %vm4382, %v4272
    %s4576 = scalar_lea.vmem %s7, 388
    %4577 = vst.msk [vmem:[%s4576] ss:$2 sm:$0x3] %vm4382, %v4274
    %s4578 = scalar_lea.vmem %s7, 392
    %4579 = vst.msk [vmem:[%s4578] ss:$2 sm:$0x3] %vm4382, %v4276
    %s4580 = scalar_lea.vmem %s7, 396
    %4581 = vst.msk [vmem:[%s4580] ss:$2 sm:$0x3] %vm4382, %v4278
    %4606 = vst [vmem:[#allocation1] sm:$0xff] %v3915
    %4607 = vst [vmem:[#allocation1 + $0x9] sm:$0xff] %v4007
    %s4608 = scalar_lea.vmem [#allocation1], 4
    %v4609 = vld [vmem:[%s4608] ss:$9 sm:$0xff]
    %s4610 = scalar_lea.vmem [#allocation1], 5
    %v4611 = vld [vmem:[%s4610] ss:$9 sm:$0xff]
    %s4612 = scalar_lea.vmem [#allocation1], 6
    %v4613 = vld [vmem:[%s4612] ss:$9 sm:$0xff]
    %s4614 = scalar_lea.vmem [#allocation1], 7
    %v4615 = vld [vmem:[%s4614] ss:$9 sm:$0xff]
    %4616 = vst [vmem:[#allocation1] sm:$0xff] %v3918
    %4617 = vst [vmem:[#allocation1 + $0x9] sm:$0xff] %v4010
    %v4618 = vld [vmem:[#allocation1] ss:$9 sm:$0xff]
    %s4619 = scalar_lea.vmem [#allocation1], 1
    %v4620 = vld [vmem:[%s4619] ss:$9 sm:$0xff]
    %s4621 = scalar_lea.vmem [#allocation1], 2
    %v4622 = vld [vmem:[%s4621] ss:$9 sm:$0xff]
    %s4623 = scalar_lea.vmem [#allocation1], 3
    %v4624 = vld [vmem:[%s4623] ss:$9 sm:$0xff]
    %v4625 = vld [vmem:[%s4608] ss:$9 sm:$0xff]
    %v4626 = vld [vmem:[%s4610] ss:$9 sm:$0xff]
    %v4627 = vld [vmem:[%s4612] ss:$9 sm:$0xff]
    %v4628 = vld [vmem:[%s4614] ss:$9 sm:$0xff]
    %4629 = vst [vmem:[#allocation1] sm:$0xff] %v3921
    %4630 = vst [vmem:[#allocation1 + $0x9] sm:$0xff] %v4013
    %v4631 = vld [vmem:[#allocation1] ss:$9 sm:$0xff]
    %v4632 = vld [vmem:[%s4619] ss:$9 sm:$0xff]
    %v4633 = vld [vmem:[%s4621] ss:$9 sm:$0xff]
    %v4634 = vld [vmem:[%s4623] ss:$9 sm:$0xff]
    %v4635 = vld [vmem:[%s4608] ss:$9 sm:$0xff]
    %v4636 = vld [vmem:[%s4610] ss:$9 sm:$0xff]
    %v4637 = vld [vmem:[%s4612] ss:$9 sm:$0xff]
    %v4638 = vld [vmem:[%s4614] ss:$9 sm:$0xff]
    %4639 = vst [vmem:[#allocation1] sm:$0xff] %v3924
    %4640 = vst [vmem:[#allocation1 + $0x9] sm:$0xff] %v4016
    %v4641 = vld [vmem:[#allocation1] ss:$9 sm:$0xff]
    %v4642 = vld [vmem:[%s4619] ss:$9 sm:$0xff]
    %v4643 = vld [vmem:[%s4621] ss:$9 sm:$0xff]
    %v4644 = vld [vmem:[%s4623] ss:$9 sm:$0xff]
    %v4645 = vld [vmem:[%s4608] ss:$9 sm:$0xff]
    %v4646 = vld [vmem:[%s4610] ss:$9 sm:$0xff]
    %v4647 = vld [vmem:[%s4612] ss:$9 sm:$0xff]
    %v4648 = vld [vmem:[%s4614] ss:$9 sm:$0xff]
    %4649 = vst [vmem:[#allocation1] sm:$0xff] %v3927
    %4650 = vst [vmem:[#allocation1 + $0x9] sm:$0xff] %v4019
    %v4651 = vld [vmem:[#allocation1] ss:$9 sm:$0xff]
    %v4652 = vld [vmem:[%s4619] ss:$9 sm:$0xff]
    %v4653 = vld [vmem:[%s4621] ss:$9 sm:$0xff]
    %v4654 = vld [vmem:[%s4623] ss:$9 sm:$0xff]
    %v4655 = vld [vmem:[%s4608] ss:$9 sm:$0xff]
    %v4656 = vld [vmem:[%s4610] ss:$9 sm:$0xff]
    %v4657 = vld [vmem:[%s4612] ss:$9 sm:$0xff]
    %v4658 = vld [vmem:[%s4614] ss:$9 sm:$0xff]
    %4659 = vst [vmem:[#allocation1] sm:$0xff] %v3930
    %4660 = vst [vmem:[#allocation1 + $0x9] sm:$0xff] %v4022
    %v4661 = vld [vmem:[#allocation1] ss:$9 sm:$0xff]
    %v4662 = vld [vmem:[%s4619] ss:$9 sm:$0xff]
    %v4663 = vld [vmem:[%s4621] ss:$9 sm:$0xff]
    %v4664 = vld [vmem:[%s4623] ss:$9 sm:$0xff]
    %v4665 = vld [vmem:[%s4608] ss:$9 sm:$0xff]
    %v4666 = vld [vmem:[%s4610] ss:$9 sm:$0xff]
    %v4667 = vld [vmem:[%s4612] ss:$9 sm:$0xff]
    %v4668 = vld [vmem:[%s4614] ss:$9 sm:$0xff]
    %4669 = vst [vmem:[#allocation1] sm:$0xff] %v3933
    %4670 = vst [vmem:[#allocation1 + $0x9] sm:$0xff] %v4025
    %v4671 = vld [vmem:[#allocation1] ss:$9 sm:$0xff]
    %v4672 = vld [vmem:[%s4619] ss:$9 sm:$0xff]
    %v4673 = vld [vmem:[%s4621] ss:$9 sm:$0xff]
    %v4674 = vld [vmem:[%s4623] ss:$9 sm:$0xff]
    %v4675 = vld [vmem:[%s4608] ss:$9 sm:$0xff]
    %v4676 = vld [vmem:[%s4610] ss:$9 sm:$0xff]
    %v4677 = vld [vmem:[%s4612] ss:$9 sm:$0xff]
    %v4678 = vld [vmem:[%s4614] ss:$9 sm:$0xff]
    %4679 = vst [vmem:[#allocation1] sm:$0xff] %v3936
    %4680 = vst [vmem:[#allocation1 + $0x9] sm:$0xff] %v4028
    %v4681 = vld [vmem:[#allocation1] ss:$9 sm:$0xff]
    %v4682 = vld [vmem:[%s4619] ss:$9 sm:$0xff]
    %v4683 = vld [vmem:[%s4621] ss:$9 sm:$0xff]
    %v4684 = vld [vmem:[%s4623] ss:$9 sm:$0xff]
    %v4685 = vld [vmem:[%s4608] ss:$9 sm:$0xff]
    %v4686 = vld [vmem:[%s4610] ss:$9 sm:$0xff]
    %v4687 = vld [vmem:[%s4612] ss:$9 sm:$0xff]
    %v4688 = vld [vmem:[%s4614] ss:$9 sm:$0xff]
    %4689 = vst [vmem:[#allocation1] sm:$0xff] %v3939
    %4690 = vst [vmem:[#allocation1 + $0x9] sm:$0xff] %v4031
    %v4691 = vld [vmem:[#allocation1] ss:$9 sm:$0xff]
    %v4692 = vld [vmem:[%s4619] ss:$9 sm:$0xff]
    %v4693 = vld [vmem:[%s4621] ss:$9 sm:$0xff]
    %v4694 = vld [vmem:[%s4623] ss:$9 sm:$0xff]
    %v4695 = vld [vmem:[%s4608] ss:$9 sm:$0xff]
    %v4696 = vld [vmem:[%s4610] ss:$9 sm:$0xff]
    %v4697 = vld [vmem:[%s4612] ss:$9 sm:$0xff]
    %v4698 = vld [vmem:[%s4614] ss:$9 sm:$0xff]
    %4699 = vst [vmem:[#allocation1] sm:$0xff] %v3942
    %4700 = vst [vmem:[#allocation1 + $0x9] sm:$0xff] %v4034
    %v4701 = vld [vmem:[#allocation1] ss:$9 sm:$0xff]
    %v4702 = vld [vmem:[%s4619] ss:$9 sm:$0xff]
    %v4703 = vld [vmem:[%s4621] ss:$9 sm:$0xff]
    %v4704 = vld [vmem:[%s4623] ss:$9 sm:$0xff]
    %v4705 = vld [vmem:[%s4608] ss:$9 sm:$0xff]
    %v4706 = vld [vmem:[%s4610] ss:$9 sm:$0xff]
    %v4707 = vld [vmem:[%s4612] ss:$9 sm:$0xff]
    %v4708 = vld [vmem:[%s4614] ss:$9 sm:$0xff]
    %4709 = vst [vmem:[#allocation1] sm:$0xff] %v3945
    %4710 = vst [vmem:[#allocation1 + $0x9] sm:$0xff] %v4037
    %v4711 = vld [vmem:[#allocation1] ss:$9 sm:$0xff]
    %v4712 = vld [vmem:[%s4619] ss:$9 sm:$0xff]
    %v4713 = vld [vmem:[%s4621] ss:$9 sm:$0xff]
    %v4714 = vld [vmem:[%s4623] ss:$9 sm:$0xff]
    %v4715 = vld [vmem:[%s4608] ss:$9 sm:$0xff]
    %v4716 = vld [vmem:[%s4610] ss:$9 sm:$0xff]
    %v4717 = vld [vmem:[%s4612] ss:$9 sm:$0xff]
    %v4718 = vld [vmem:[%s4614] ss:$9 sm:$0xff]
    %4719 = vst [vmem:[#allocation1] sm:$0xff] %v3948
    %4720 = vst [vmem:[#allocation1 + $0x9] sm:$0xff] %v4040
    %v4721 = vld [vmem:[#allocation1] ss:$9 sm:$0xff]
    %v4722 = vld [vmem:[%s4619] ss:$9 sm:$0xff]
    %v4723 = vld [vmem:[%s4621] ss:$9 sm:$0xff]
    %v4724 = vld [vmem:[%s4623] ss:$9 sm:$0xff]
    %v4725 = vld [vmem:[%s4608] ss:$9 sm:$0xff]
    %v4726 = vld [vmem:[%s4610] ss:$9 sm:$0xff]
    %v4727 = vld [vmem:[%s4612] ss:$9 sm:$0xff]
    %v4728 = vld [vmem:[%s4614] ss:$9 sm:$0xff]
    %4729 = vst [vmem:[#allocation1] sm:$0xff] %v3951
    %4730 = vst [vmem:[#allocation1 + $0x9] sm:$0xff] %v4043
    %v4731 = vld [vmem:[#allocation1] ss:$9 sm:$0xff]
    %v4732 = vld [vmem:[%s4619] ss:$9 sm:$0xff]
    %v4733 = vld [vmem:[%s4621] ss:$9 sm:$0xff]
    %v4734 = vld [vmem:[%s4623] ss:$9 sm:$0xff]
    %v4735 = vld [vmem:[%s4608] ss:$9 sm:$0xff]
    %v4736 = vld [vmem:[%s4610] ss:$9 sm:$0xff]
    %v4737 = vld [vmem:[%s4612] ss:$9 sm:$0xff]
    %v4738 = vld [vmem:[%s4614] ss:$9 sm:$0xff]
    %s4839 = scalar_lea.vmem %s7, 1
    %4840 = vst.msk [vmem:[%s4839] ss:$2 sm:$0x3] %vm4382, %v4609
    %s4841 = scalar_lea.vmem %s7, 5
    %4842 = vst.msk [vmem:[%s4841] ss:$2 sm:$0x3] %vm4382, %v4611
    %s4843 = scalar_lea.vmem %s7, 9
    %4844 = vst.msk [vmem:[%s4843] ss:$2 sm:$0x3] %vm4382, %v4613
    %s4845 = scalar_lea.vmem %s7, 13
    %4846 = vst.msk [vmem:[%s4845] ss:$2 sm:$0x3] %vm4382, %v4615
    %s4847 = scalar_lea.vmem %s7, 17
    %4848 = vst.msk [vmem:[%s4847] ss:$2 sm:$0x3] %vm4382, %v4618
    %s4849 = scalar_lea.vmem %s7, 21
    %4850 = vst.msk [vmem:[%s4849] ss:$2 sm:$0x3] %vm4382, %v4620
    %s4851 = scalar_lea.vmem %s7, 25
    %4852 = vst.msk [vmem:[%s4851] ss:$2 sm:$0x3] %vm4382, %v4622
    %s4853 = scalar_lea.vmem %s7, 29
    %4854 = vst.msk [vmem:[%s4853] ss:$2 sm:$0x3] %vm4382, %v4624
    %s4855 = scalar_lea.vmem %s7, 33
    %4856 = vst.msk [vmem:[%s4855] ss:$2 sm:$0x3] %vm4382, %v4625
    %s4857 = scalar_lea.vmem %s7, 37
    %4858 = vst.msk [vmem:[%s4857] ss:$2 sm:$0x3] %vm4382, %v4626
    %s4859 = scalar_lea.vmem %s7, 41
    %4860 = vst.msk [vmem:[%s4859] ss:$2 sm:$0x3] %vm4382, %v4627
    %s4861 = scalar_lea.vmem %s7, 45
    %4862 = vst.msk [vmem:[%s4861] ss:$2 sm:$0x3] %vm4382, %v4628
    %s4863 = scalar_lea.vmem %s7, 49
    %4864 = vst.msk [vmem:[%s4863] ss:$2 sm:$0x3] %vm4382, %v4631
    %s4865 = scalar_lea.vmem %s7, 53
    %4866 = vst.msk [vmem:[%s4865] ss:$2 sm:$0x3] %vm4382, %v4632
    %s4867 = scalar_lea.vmem %s7, 57
    %4868 = vst.msk [vmem:[%s4867] ss:$2 sm:$0x3] %vm4382, %v4633
    %s4869 = scalar_lea.vmem %s7, 61
    %4870 = vst.msk [vmem:[%s4869] ss:$2 sm:$0x3] %vm4382, %v4634
    %s4871 = scalar_lea.vmem %s7, 65
    %4872 = vst.msk [vmem:[%s4871] ss:$2 sm:$0x3] %vm4382, %v4635
    %s4873 = scalar_lea.vmem %s7, 69
    %4874 = vst.msk [vmem:[%s4873] ss:$2 sm:$0x3] %vm4382, %v4636
    %s4875 = scalar_lea.vmem %s7, 73
    %4876 = vst.msk [vmem:[%s4875] ss:$2 sm:$0x3] %vm4382, %v4637
    %s4877 = scalar_lea.vmem %s7, 77
    %4878 = vst.msk [vmem:[%s4877] ss:$2 sm:$0x3] %vm4382, %v4638
    %s4879 = scalar_lea.vmem %s7, 81
    %4880 = vst.msk [vmem:[%s4879] ss:$2 sm:$0x3] %vm4382, %v4641
    %s4881 = scalar_lea.vmem %s7, 85
    %4882 = vst.msk [vmem:[%s4881] ss:$2 sm:$0x3] %vm4382, %v4642
    %s4883 = scalar_lea.vmem %s7, 89
    %4884 = vst.msk [vmem:[%s4883] ss:$2 sm:$0x3] %vm4382, %v4643
    %s4885 = scalar_lea.vmem %s7, 93
    %4886 = vst.msk [vmem:[%s4885] ss:$2 sm:$0x3] %vm4382, %v4644
    %s4887 = scalar_lea.vmem %s7, 97
    %4888 = vst.msk [vmem:[%s4887] ss:$2 sm:$0x3] %vm4382, %v4645
    %s4889 = scalar_lea.vmem %s7, 101
    %4890 = vst.msk [vmem:[%s4889] ss:$2 sm:$0x3] %vm4382, %v4646
    %s4891 = scalar_lea.vmem %s7, 105
    %4892 = vst.msk [vmem:[%s4891] ss:$2 sm:$0x3] %vm4382, %v4647
    %s4893 = scalar_lea.vmem %s7, 109
    %4894 = vst.msk [vmem:[%s4893] ss:$2 sm:$0x3] %vm4382, %v4648
    %s4895 = scalar_lea.vmem %s7, 113
    %4896 = vst.msk [vmem:[%s4895] ss:$2 sm:$0x3] %vm4382, %v4651
    %s4897 = scalar_lea.vmem %s7, 117
    %4898 = vst.msk [vmem:[%s4897] ss:$2 sm:$0x3] %vm4382, %v4652
    %s4899 = scalar_lea.vmem %s7, 121
    %4900 = vst.msk [vmem:[%s4899] ss:$2 sm:$0x3] %vm4382, %v4653
    %s4901 = scalar_lea.vmem %s7, 125
    %4902 = vst.msk [vmem:[%s4901] ss:$2 sm:$0x3] %vm4382, %v4654
    %s4903 = scalar_lea.vmem %s7, 129
    %4904 = vst.msk [vmem:[%s4903] ss:$2 sm:$0x3] %vm4382, %v4655
    %s4905 = scalar_lea.vmem %s7, 133
    %4906 = vst.msk [vmem:[%s4905] ss:$2 sm:$0x3] %vm4382, %v4656
    %s4907 = scalar_lea.vmem %s7, 137
    %4908 = vst.msk [vmem:[%s4907] ss:$2 sm:$0x3] %vm4382, %v4657
    %s4909 = scalar_lea.vmem %s7, 141
    %4910 = vst.msk [vmem:[%s4909] ss:$2 sm:$0x3] %vm4382, %v4658
    %s4911 = scalar_lea.vmem %s7, 145
    %4912 = vst.msk [vmem:[%s4911] ss:$2 sm:$0x3] %vm4382, %v4661
    %s4913 = scalar_lea.vmem %s7, 149
    %4914 = vst.msk [vmem:[%s4913] ss:$2 sm:$0x3] %vm4382, %v4662
    %s4915 = scalar_lea.vmem %s7, 153
    %4916 = vst.msk [vmem:[%s4915] ss:$2 sm:$0x3] %vm4382, %v4663
    %s4917 = scalar_lea.vmem %s7, 157
    %4918 = vst.msk [vmem:[%s4917] ss:$2 sm:$0x3] %vm4382, %v4664
    %s4919 = scalar_lea.vmem %s7, 161
    %4920 = vst.msk [vmem:[%s4919] ss:$2 sm:$0x3] %vm4382, %v4665
    %s4921 = scalar_lea.vmem %s7, 165
    %4922 = vst.msk [vmem:[%s4921] ss:$2 sm:$0x3] %vm4382, %v4666
    %s4923 = scalar_lea.vmem %s7, 169
    %4924 = vst.msk [vmem:[%s4923] ss:$2 sm:$0x3] %vm4382, %v4667
    %s4925 = scalar_lea.vmem %s7, 173
    %4926 = vst.msk [vmem:[%s4925] ss:$2 sm:$0x3] %vm4382, %v4668
    %s4927 = scalar_lea.vmem %s7, 177
    %4928 = vst.msk [vmem:[%s4927] ss:$2 sm:$0x3] %vm4382, %v4671
    %s4929 = scalar_lea.vmem %s7, 181
    %4930 = vst.msk [vmem:[%s4929] ss:$2 sm:$0x3] %vm4382, %v4672
    %s4931 = scalar_lea.vmem %s7, 185
    %4932 = vst.msk [vmem:[%s4931] ss:$2 sm:$0x3] %vm4382, %v4673
    %s4933 = scalar_lea.vmem %s7, 189
    %4934 = vst.msk [vmem:[%s4933] ss:$2 sm:$0x3] %vm4382, %v4674
    %s4935 = scalar_lea.vmem %s7, 193
    %4936 = vst.msk [vmem:[%s4935] ss:$2 sm:$0x3] %vm4382, %v4675
    %s4937 = scalar_lea.vmem %s7, 197
    %4938 = vst.msk [vmem:[%s4937] ss:$2 sm:$0x3] %vm4382, %v4676
    %s4939 = scalar_lea.vmem %s7, 201
    %4940 = vst.msk [vmem:[%s4939] ss:$2 sm:$0x3] %vm4382, %v4677
    %s4941 = scalar_lea.vmem %s7, 205
    %4942 = vst.msk [vmem:[%s4941] ss:$2 sm:$0x3] %vm4382, %v4678
    %s4943 = scalar_lea.vmem %s7, 209
    %4944 = vst.msk [vmem:[%s4943] ss:$2 sm:$0x3] %vm4382, %v4681
    %s4945 = scalar_lea.vmem %s7, 213
    %4946 = vst.msk [vmem:[%s4945] ss:$2 sm:$0x3] %vm4382, %v4682
    %s4947 = scalar_lea.vmem %s7, 217
    %4948 = vst.msk [vmem:[%s4947] ss:$2 sm:$0x3] %vm4382, %v4683
    %s4949 = scalar_lea.vmem %s7, 221
    %4950 = vst.msk [vmem:[%s4949] ss:$2 sm:$0x3] %vm4382, %v4684
    %s4951 = scalar_lea.vmem %s7, 225
    %4952 = vst.msk [vmem:[%s4951] ss:$2 sm:$0x3] %vm4382, %v4685
    %s4953 = scalar_lea.vmem %s7, 229
    %4954 = vst.msk [vmem:[%s4953] ss:$2 sm:$0x3] %vm4382, %v4686
    %s4955 = scalar_lea.vmem %s7, 233
    %4956 = vst.msk [vmem:[%s4955] ss:$2 sm:$0x3] %vm4382, %v4687
    %s4957 = scalar_lea.vmem %s7, 237
    %4958 = vst.msk [vmem:[%s4957] ss:$2 sm:$0x3] %vm4382, %v4688
    %s4959 = scalar_lea.vmem %s7, 241
    %4960 = vst.msk [vmem:[%s4959] ss:$2 sm:$0x3] %vm4382, %v4691
    %s4961 = scalar_lea.vmem %s7, 245
    %4962 = vst.msk [vmem:[%s4961] ss:$2 sm:$0x3] %vm4382, %v4692
    %s4963 = scalar_lea.vmem %s7, 249
    %4964 = vst.msk [vmem:[%s4963] ss:$2 sm:$0x3] %vm4382, %v4693
    %s4965 = scalar_lea.vmem %s7, 253
    %4966 = vst.msk [vmem:[%s4965] ss:$2 sm:$0x3] %vm4382, %v4694
    %s4967 = scalar_lea.vmem %s7, 257
    %4968 = vst.msk [vmem:[%s4967] ss:$2 sm:$0x3] %vm4382, %v4695
    %s4969 = scalar_lea.vmem %s7, 261
    %4970 = vst.msk [vmem:[%s4969] ss:$2 sm:$0x3] %vm4382, %v4696
    %s4971 = scalar_lea.vmem %s7, 265
    %4972 = vst.msk [vmem:[%s4971] ss:$2 sm:$0x3] %vm4382, %v4697
    %s4973 = scalar_lea.vmem %s7, 269
    %4974 = vst.msk [vmem:[%s4973] ss:$2 sm:$0x3] %vm4382, %v4698
    %s4975 = scalar_lea.vmem %s7, 273
    %4976 = vst.msk [vmem:[%s4975] ss:$2 sm:$0x3] %vm4382, %v4701
    %s4977 = scalar_lea.vmem %s7, 277
    %4978 = vst.msk [vmem:[%s4977] ss:$2 sm:$0x3] %vm4382, %v4702
    %s4979 = scalar_lea.vmem %s7, 281
    %4980 = vst.msk [vmem:[%s4979] ss:$2 sm:$0x3] %vm4382, %v4703
    %s4981 = scalar_lea.vmem %s7, 285
    %4982 = vst.msk [vmem:[%s4981] ss:$2 sm:$0x3] %vm4382, %v4704
    %s4983 = scalar_lea.vmem %s7, 289
    %4984 = vst.msk [vmem:[%s4983] ss:$2 sm:$0x3] %vm4382, %v4705
    %s4985 = scalar_lea.vmem %s7, 293
    %4986 = vst.msk [vmem:[%s4985] ss:$2 sm:$0x3] %vm4382, %v4706
    %s4987 = scalar_lea.vmem %s7, 297
    %4988 = vst.msk [vmem:[%s4987] ss:$2 sm:$0x3] %vm4382, %v4707
    %s4989 = scalar_lea.vmem %s7, 301
    %4990 = vst.msk [vmem:[%s4989] ss:$2 sm:$0x3] %vm4382, %v4708
    %s4991 = scalar_lea.vmem %s7, 305
    %4992 = vst.msk [vmem:[%s4991] ss:$2 sm:$0x3] %vm4382, %v4711
    %s4993 = scalar_lea.vmem %s7, 309
    %4994 = vst.msk [vmem:[%s4993] ss:$2 sm:$0x3] %vm4382, %v4712
    %s4995 = scalar_lea.vmem %s7, 313
    %4996 = vst.msk [vmem:[%s4995] ss:$2 sm:$0x3] %vm4382, %v4713
    %s4997 = scalar_lea.vmem %s7, 317
    %4998 = vst.msk [vmem:[%s4997] ss:$2 sm:$0x3] %vm4382, %v4714
    %s4999 = scalar_lea.vmem %s7, 321
    %5000 = vst.msk [vmem:[%s4999] ss:$2 sm:$0x3] %vm4382, %v4715
    %s5001 = scalar_lea.vmem %s7, 325
    %5002 = vst.msk [vmem:[%s5001] ss:$2 sm:$0x3] %vm4382, %v4716
    %s5003 = scalar_lea.vmem %s7, 329
    %5004 = vst.msk [vmem:[%s5003] ss:$2 sm:$0x3] %vm4382, %v4717
    %s5005 = scalar_lea.vmem %s7, 333
    %5006 = vst.msk [vmem:[%s5005] ss:$2 sm:$0x3] %vm4382, %v4718
    %s5007 = scalar_lea.vmem %s7, 337
    %5008 = vst.msk [vmem:[%s5007] ss:$2 sm:$0x3] %vm4382, %v4721
    %s5009 = scalar_lea.vmem %s7, 341
    %5010 = vst.msk [vmem:[%s5009] ss:$2 sm:$0x3] %vm4382, %v4722
    %s5011 = scalar_lea.vmem %s7, 345
    %5012 = vst.msk [vmem:[%s5011] ss:$2 sm:$0x3] %vm4382, %v4723
    %s5013 = scalar_lea.vmem %s7, 349
    %5014 = vst.msk [vmem:[%s5013] ss:$2 sm:$0x3] %vm4382, %v4724
    %s5015 = scalar_lea.vmem %s7, 353
    %5016 = vst.msk [vmem:[%s5015] ss:$2 sm:$0x3] %vm4382, %v4725
    %s5017 = scalar_lea.vmem %s7, 357
    %5018 = vst.msk [vmem:[%s5017] ss:$2 sm:$0x3] %vm4382, %v4726
    %s5019 = scalar_lea.vmem %s7, 361
    %5020 = vst.msk [vmem:[%s5019] ss:$2 sm:$0x3] %vm4382, %v4727
    %s5021 = scalar_lea.vmem %s7, 365
    %5022 = vst.msk [vmem:[%s5021] ss:$2 sm:$0x3] %vm4382, %v4728
    %s5023 = scalar_lea.vmem %s7, 369
    %5024 = vst.msk [vmem:[%s5023] ss:$2 sm:$0x3] %vm4382, %v4731
    %s5025 = scalar_lea.vmem %s7, 373
    %5026 = vst.msk [vmem:[%s5025] ss:$2 sm:$0x3] %vm4382, %v4732
    %s5027 = scalar_lea.vmem %s7, 377
    %5028 = vst.msk [vmem:[%s5027] ss:$2 sm:$0x3] %vm4382, %v4733
    %s5029 = scalar_lea.vmem %s7, 381
    %5030 = vst.msk [vmem:[%s5029] ss:$2 sm:$0x3] %vm4382, %v4734
    %s5031 = scalar_lea.vmem %s7, 385
    %5032 = vst.msk [vmem:[%s5031] ss:$2 sm:$0x3] %vm4382, %v4735
    %s5033 = scalar_lea.vmem %s7, 389
    %5034 = vst.msk [vmem:[%s5033] ss:$2 sm:$0x3] %vm4382, %v4736
    %s5035 = scalar_lea.vmem %s7, 393
    %5036 = vst.msk [vmem:[%s5035] ss:$2 sm:$0x3] %vm4382, %v4737
    %s5037 = scalar_lea.vmem %s7, 397
    %5038 = vst.msk [vmem:[%s5037] ss:$2 sm:$0x3] %vm4382, %v4738
    // Predicated region
    $region50: #{cnn_lstm_forward.2} parent=1 // pred_check
      _
    $region51: #{cnn_lstm_forward.2} parent=1 // pred_check_branch
      %5040 = sbr.rel (0) target = $region53
    $region52: #{cnn_lstm_forward.2} parent=1 // pred_region
      _
    $region53: #{cnn_lstm_forward.2} parent=1 // pred_fallthru
      _
    // Predicated region
    $region54: #{cnn_lstm_forward.2} parent=1 // pred_check
      _
    $region55: #{cnn_lstm_forward.2} parent=1 // pred_check_branch
      %5042 = sbr.rel (0) target = $region57
    $region56: #{cnn_lstm_forward.2} parent=1 // pred_region
      _
    $region57: #{cnn_lstm_forward.2} parent=1 // pred_fallthru
      _
    %5043 = vsyncpa [#allocation5], 1
    %5044 = vsyncpa [#allocation7], 1
    %5045 = vsyncpa [#allocation10], 1

</llo_original>
